<compile_context>
chip_gen: v7x
topology: tpu7x:2x2x1
jax: 0.10.0
libtpu: 0.0.40
codegen_flags: <defaults>
</compile_context>

<pallas_src>
import jax
import jax.numpy as jnp
from jax.experimental import pallas as pl
from jax.experimental.pallas import tpu as pltpu


def relu_conv1x1_kernel(x_ref, w_ref, o_ref):
    # x_ref: (C_in, hw_tile)      activation slab slice for one image
    # w_ref: (co_tile, C_in)      slice of the weight matrix
    # o_ref: (co_tile, hw_tile)   output slice -- already in NCHW element order
    x = jnp.maximum(x_ref[...], 0.0).astype(jnp.bfloat16)   # ReLU (VPU) + cast (free)
    w = w_ref[...].astype(jnp.bfloat16)
    o_ref[...] = jnp.dot(w, x,                               # MXU, bf16 in / f32 acc
                         preferred_element_type=jnp.float32).astype(o_ref.dtype)


def _tensorcores_per_chip() -> int:
    """2 for v7x (two TensorCores per chip), else 1. Safe fallback on failure."""
    try:
        kind = jax.devices()[0].device_kind.lower()
    except Exception:
        return 1
    return 2 if ("v7" in kind or "7x" in kind) else 1


def _vmem_budget_bytes() -> int:
    try:
        vmem = pltpu.get_tpu_info().vmem_capacity_bytes
    except Exception:
        vmem = 128 * 1024 * 1024
    # Stay well under the default scoped-VMEM limit on every generation.
    return min(vmem // 4, 24 * 1024 * 1024)


def _pick_hw_tile(HW, C_in, co_tile, itemsize, budget):
    """Largest HW tile whose (double-buffered) VMEM footprint fits the budget.

    Prefers the full HW (no padding constraint); otherwise looks for a divisor
    of HW that is a multiple of 128. Falls back to full HW if none exists.
    """
    def footprint(hw):
        # double-buffered x block + out block, plus double-buffered weight
        return (2 * (C_in + co_tile) * hw + 2 * co_tile * C_in) * itemsize

    if footprint(HW) <= budget:
        return HW
    hw = (HW // 128) * 128
    while hw >= 128:
        if HW % hw == 0 and footprint(hw) <= budget:
            return hw
        hw -= 128
    # TODO(synk): if this still overflows VMEM, HW must be padded upstream.
    return HW


def relu_conv1x1(x_nchw: jax.Array, w_oihw: jax.Array) -> jax.Array:
    """ReLU followed by a 1x1 stride-1 bias-free Conv2d, NCHW in / NCHW out."""
    N, C_in, H, W = x_nchw.shape
    C_out = w_oihw.shape[0]
    assert w_oihw.shape == (C_out, C_in, 1, 1)
    HW = H * W
    itemsize = jnp.dtype(x_nchw.dtype).itemsize

    # Zero-cost views, no data movement in the wrapper.
    x3d = x_nchw.reshape(N, C_in, HW)          # (N, C_in, HW)
    w2d = w_oihw.reshape(C_out, C_in)          # (C_out, C_in)

    # Split C_out only where it helps: v7x (2 TensorCores) with a single image.
    # On 1-TC chips (v5e/v6e) a single full-C_out block avoids MXU row-pass
    # padding, an extra grid step, a duplicate ReLU pass and weight re-DMA.
    n_tc = _tensorcores_per_chip()
    if n_tc >= 2 and N == 1 and C_out % 2 == 0 and (C_out // 2) % 8 == 0:
        co_tile = C_out // 2
    else:
        co_tile = C_out
    n_co = C_out // co_tile

    # VMEM guard (mainly for v7x's smaller VMEM at larger spatial sizes).
    hw_tile = _pick_hw_tile(HW, C_in, co_tile, itemsize, _vmem_budget_bytes())
    n_hw = HW // hw_tile

    grid = (N, n_co, n_hw)

    cost = pl.CostEstimate(
        flops=2 * N * C_out * C_in * HW,
        transcendentals=0,
        bytes_accessed=(N * C_in * HW + C_out * C_in + N * C_out * HW) * itemsize,
    )

    y3d = pl.pallas_call(
        relu_conv1x1_kernel,
        out_shape=jax.ShapeDtypeStruct((N, C_out, HW), x_nchw.dtype),
        grid_spec=pltpu.PrefetchScalarGridSpec(
            num_scalar_prefetch=0,
            grid=grid,
            in_specs=[
                # Activation slab for image n; index constant over the C_out
                # axis -> fetched once per (image, hw-tile), stays in VMEM.
                pl.BlockSpec((None, C_in, hw_tile), lambda n, j, h: (n, 0, h)),
                # Weight slice; with n_co == 1 the index is constant over the
                # whole grid, so it is DMA'd exactly once.
                pl.BlockSpec((co_tile, C_in), lambda n, j, h: (j, 0)),
            ],
            out_specs=pl.BlockSpec((None, co_tile, hw_tile),
                                   lambda n, j, h: (n, j, h)),
        ),
        compiler_params=pltpu.CompilerParams(
            dimension_semantics=("parallel", "parallel", "parallel"),
        ),
        cost_estimate=cost,
    )(x3d, w2d)

    # (N, C_out, HW) -> NCHW, zero-cost reshape.
    return y3d.reshape(N, C_out, H, W)


if __name__ == "__main__":
    key = jax.random.PRNGKey(0)
    k_x, k_w = jax.random.split(key)

    # Shapes implied by the module: Conv2d(672, 672, 1x1), input [1, 672, 28, 28]
    N, C, H, W = 1, 672, 28, 28
    x = jax.random.normal(k_x, (N, C, H, W), dtype=jnp.float32)

    # Deterministic weight init (kaiming-uniform-like bound for 1x1 conv)
    fan_in = C * 1 * 1
    bound = 1.0 / (fan_in ** 0.5)
    w = jax.random.uniform(k_w, (C, C, 1, 1), dtype=jnp.float32,
                           minval=-bound, maxval=bound)

    y = jax.block_until_ready(relu_conv1x1(x, w))

    # Sanity check against a pure-JAX f32 reference. Tolerance accounts for the
    # intentional bf16 cast of the matmul operands (f32 accumulation is kept).
    x_relu = jnp.maximum(x, 0.0)
    ref = jnp.einsum('nchw,oc->nohw', x_relu, w.reshape(C, C))
    assert y.shape == (N, C, H, W)
    err = float(jnp.max(jnp.abs(y - ref)))
    assert jnp.allclose(y, ref, atol=3e-2, rtol=3e-2), err

    print("KERNEL_OK")
</pallas_src>

<mosaic_0001>
module attributes {stable_mosaic.version = 11 : i64} {
  func.func @relu_conv1x1_kernel(%arg0: i32, %arg1: i32, %arg2: i32, %arg3: memref<1x672x784xf32, #tpu.memory_space<vmem>>, %arg4: memref<672x672xf32, #tpu.memory_space<vmem>>, %arg5: memref<1x672x784xf32, #tpu.memory_space<vmem>>) attributes {dimension_semantics = [#tpu.dimension_semantics<parallel>, #tpu.dimension_semantics<parallel>, #tpu.dimension_semantics<parallel>], iteration_bounds = array<i64: 1, 1, 1>, scalar_prefetch = 0 : i64, scratch_operands = 0 : i64, tpu.core_type = #tpu.core_type<tc>, window_params = [{transform_indices = @transform_0, window_bounds = array<i64: 1, 672, 784>}, {transform_indices = @transform_1, window_bounds = array<i64: 672, 672>}, {transform_indices = @transform_2, window_bounds = array<i64: 1, 672, 784>}]} {
    %c0 = arith.constant 0 : index
    %c0_0 = arith.constant 0 : index
    %c0_1 = arith.constant 0 : index
    %0 = vector.load %arg3[%c0, %c0_0, %c0_1] : memref<1x672x784xf32, #tpu.memory_space<vmem>>, vector<1x672x784xf32>
    %1 = vector.shape_cast %0 : vector<1x672x784xf32> to vector<672x784xf32>
    %cst = arith.constant 0.000000e+00 : f32
    %2 = vector.broadcast %cst : f32 to vector<672x784xf32>
    %3 = arith.maximumf %1, %2 : vector<672x784xf32>
    %4 = arith.truncf %3 : vector<672x784xf32> to vector<672x784xbf16>
    %c0_2 = arith.constant 0 : index
    %c0_3 = arith.constant 0 : index
    %5 = vector.load %arg4[%c0_2, %c0_3] : memref<672x672xf32, #tpu.memory_space<vmem>>, vector<672x672xf32>
    %6 = arith.truncf %5 : vector<672x672xf32> to vector<672x672xbf16>
    %cst_4 = arith.constant dense<0.000000e+00> : vector<672x784xf32>
    %7 = tpu.matmul %6, %4, %cst_4 {dimension_numbers = #tpu.dot_dimension_numbers<[1], [0], [0], [1], [0, 0, 1, 1], [], []>} : vector<672x672xbf16>, vector<672x784xbf16>, vector<672x784xf32> -> vector<672x784xf32>
    %c0_5 = arith.constant 0 : index
    %c0_6 = arith.constant 0 : index
    %c0_7 = arith.constant 0 : index
    %8 = vector.load %arg5[%c0_5, %c0_6, %c0_7] : memref<1x672x784xf32, #tpu.memory_space<vmem>>, vector<1x672x784xf32>
    %9 = vector.shape_cast %8 : vector<1x672x784xf32> to vector<672x784xf32>
    %10 = vector.shape_cast %7 : vector<672x784xf32> to vector<1x672x784xf32>
    tpu.vector_store %arg5[%c0_5, %c0_6, %c0_7], %10 {strides = array<i32>} : memref<1x672x784xf32, #tpu.memory_space<vmem>>, vector<1x672x784xf32>,
    return
  }
  func.func @transform_0(%arg0: i32, %arg1: i32, %arg2: i32) -> (i32, i32, i32) {
    %c0_i32 = arith.constant 0 : i32
    %c0_i32_0 = arith.constant 0 : i32
    return %arg0, %c0_i32, %arg2 : i32, i32, i32
  }
  func.func @transform_1(%arg0: i32, %arg1: i32, %arg2: i32) -> (i32, i32) {
    %c0_i32 = arith.constant 0 : i32
    %c0_i32_0 = arith.constant 0 : i32
    return %arg1, %c0_i32 : i32, i32
  }
  func.func @transform_2(%arg0: i32, %arg1: i32, %arg2: i32) -> (i32, i32, i32) {
    %c0_i32 = arith.constant 0 : i32
    return %arg0, %arg1, %arg2 : i32, i32, i32
  }
}

</mosaic_0001>

<llo_original>
// kernel: tpu_custom_call.1
$region0: #{tpu_custom_call.1}
  #allocation0 [shape = 'u32[]', space=smem, size = 0x4, offset = 0x4, fixed_abs, tag = 'smem constant byte address 0x4 - core index']
  #allocation1 [shape = 'u32[144,128]{1,0:T(1,128)}', space=vmem, size = 0x12000, scoped, tag = 'internal scratch']
  %s0 = inlined_call_operand.hbm [shape: f32[1,672,784], index: 0, kind: input, shape index: {}]
  %s1 = inlined_call_operand.hbm [shape: f32[672,672], index: 1, kind: input, shape index: {}]
  %s2 = inlined_call_operand.hbm [shape: f32[1,672,784], index: 2, kind: output, shape index: {}]
  %s3 = sld [smem:[#allocation0]]
  $region26: #{tpu_custom_call.1} parent=0
    _
  %s5 = ssub.s32 1, %s3
  %s6 = scalar_select 0, %s5, %s3
  $region1: #{tpu_custom_call.1} parent=0
    #allocation2 [shape = 'u8[2408448]{0}', space=vmem, size = 0x24c000, scoped, tag = 'input window, operand 0, single buffered']
    #allocation3 [shape = 's32[1]{0}', space=sflag, size = 0x4, scoped, tag = 'scoped memory for tpu_custom_call.1']
    #allocation4 [shape = 's32[1]{0}', space=sflag, size = 0x4, scoped, tag = 'scoped memory for tpu_custom_call.1']
    #allocation5 [shape = 'u8[2064384]{0}', space=vmem, size = 0x1f8000, scoped, tag = 'input window, operand 1, single buffered']
    #allocation6 [shape = 's32[1]{0}', space=sflag, size = 0x4, scoped, tag = 'scoped memory for tpu_custom_call.1']
    #allocation7 [shape = 'u8[2408448]{0}', space=vmem, size = 0x24c000, scoped, tag = 'output window, operand 0, single buffered']
    %7 = vsyncpa [#allocation3], 0
    %8 = vsyncpa [#allocation6], 0
    %9 = vsyncpa [#allocation4], 0
    // Predicated region
    $region2: #{tpu_custom_call.1} parent=1 // pred_check
      _
    $region3: #{tpu_custom_call.1} parent=1 // pred_check_branch
      %11 = sbr.rel (0) target = $region5
    $region4: #{tpu_custom_call.1} parent=1 // pred_region
      %s13 = ssub.s32 75264, 75264
      %14 = vsyncadd [#allocation3], %s13
      %s15 = sshll.u32 [#allocation2], 4
      %s16 = int_to_ptr.vmem [resolvable:$true] %s15
      %21 = dma.hbm_to_vmem [thread:$0]  %s0, 75264, %s16, [#allocation3], 896, 896, 56
    $region5: #{tpu_custom_call.1} parent=1 // pred_fallthru
      _
    // Predicated region
    $region6: #{tpu_custom_call.1} parent=1 // pred_check
      _
    $region7: #{tpu_custom_call.1} parent=1 // pred_check_branch
      %23 = sbr.rel (0) target = $region9
    $region8: #{tpu_custom_call.1} parent=1 // pred_region
      %s25 = ssub.s32 64512, 64512
      %26 = vsyncadd [#allocation6], %s25
      %s27 = sshll.u32 [#allocation5], 4
      %s28 = int_to_ptr.vmem [resolvable:$true] %s27
      %33 = dma.hbm_to_vmem [thread:$0]  %s1, 64512, %s28, [#allocation6], 768, 768, 48
    $region9: #{tpu_custom_call.1} parent=1 // pred_fallthru
      _
    // Predicated region
    $region10: #{tpu_custom_call.1} parent=1 // pred_check
      _
    $region11: #{tpu_custom_call.1} parent=1 // pred_check_branch
      %35 = sbr.rel (0) target = $region13
    $region12: #{tpu_custom_call.1} parent=1 // pred_region
      %36 = dma.done [#allocation3], 75264
    $region13: #{tpu_custom_call.1} parent=1 // pred_fallthru
      _
    // Predicated region
    $region14: #{tpu_custom_call.1} parent=1 // pred_check
      _
    $region15: #{tpu_custom_call.1} parent=1 // pred_check_branch
      %38 = sbr.rel (0) target = $region17
    $region16: #{tpu_custom_call.1} parent=1 // pred_region
      %39 = dma.done [#allocation6], 64512
    $region17: #{tpu_custom_call.1} parent=1 // pred_fallthru
      _
    %v41 = vld [vmem:[#allocation2] sm:$0xff]
    %v42 = vld [vmem:[#allocation2 + $0x8] sm:$0xff]
    %v43 = vld [vmem:[#allocation2 + $0x10] sm:$0xff]
    %v44 = vld [vmem:[#allocation2 + $0x18] sm:$0xff]
    %v45 = vld [vmem:[#allocation2 + $0x20] sm:$0xff]
    %v46 = vld [vmem:[#allocation2 + $0x28] sm:$0xff]
    %v47 = vld [vmem:[#allocation2 + $0x30] sm:$0xff]
    %v48 = vld [vmem:[#allocation2 + $0x38] sm:$0xff]
    %v49 = vld [vmem:[#allocation2 + $0x40] sm:$0xff]
    %v50 = vld [vmem:[#allocation2 + $0x48] sm:$0xff]
    %v51 = vld [vmem:[#allocation2 + $0x50] sm:$0xff]
    %v52 = vld [vmem:[#allocation2 + $0x58] sm:$0xff]
    %v53 = vld [vmem:[#allocation2 + $0x60] sm:$0xff]
    %v54 = vld [vmem:[#allocation2 + $0x68] sm:$0xff]
    %v55 = vld [vmem:[#allocation2 + $0x70] sm:$0xff]
    %v56 = vld [vmem:[#allocation2 + $0x78] sm:$0xff]
    %v57 = vld [vmem:[#allocation2 + $0x80] sm:$0xff]
    %v58 = vld [vmem:[#allocation2 + $0x88] sm:$0xff]
    %v59 = vld [vmem:[#allocation2 + $0x90] sm:$0xff]
    %v60 = vld [vmem:[#allocation2 + $0x98] sm:$0xff]
    %v61 = vld [vmem:[#allocation2 + $0xa0] sm:$0xff]
    %v62 = vld [vmem:[#allocation2 + $0xa8] sm:$0xff]
    %v63 = vld [vmem:[#allocation2 + $0xb0] sm:$0xff]
    %v64 = vld [vmem:[#allocation2 + $0xb8] sm:$0xff]
    %v65 = vld [vmem:[#allocation2 + $0xc0] sm:$0xff]
    %v66 = vld [vmem:[#allocation2 + $0xc8] sm:$0xff]
    %v67 = vld [vmem:[#allocation2 + $0xd0] sm:$0xff]
    %v68 = vld [vmem:[#allocation2 + $0xd8] sm:$0xff]
    %v69 = vld [vmem:[#allocation2 + $0xe0] sm:$0xff]
    %v70 = vld [vmem:[#allocation2 + $0xe8] sm:$0xff]
    %v71 = vld [vmem:[#allocation2 + $0xf0] sm:$0xff]
    %v72 = vld [vmem:[#allocation2 + $0xf8] sm:$0xff]
    %v73 = vld [vmem:[#allocation2 + $0x100] sm:$0xff]
    %v74 = vld [vmem:[#allocation2 + $0x108] sm:$0xff]
    %v75 = vld [vmem:[#allocation2 + $0x110] sm:$0xff]
    %v76 = vld [vmem:[#allocation2 + $0x118] sm:$0xff]
    %v77 = vld [vmem:[#allocation2 + $0x120] sm:$0xff]
    %v78 = vld [vmem:[#allocation2 + $0x128] sm:$0xff]
    %v79 = vld [vmem:[#allocation2 + $0x130] sm:$0xff]
    %v80 = vld [vmem:[#allocation2 + $0x138] sm:$0xff]
    %v81 = vld [vmem:[#allocation2 + $0x140] sm:$0xff]
    %v82 = vld [vmem:[#allocation2 + $0x148] sm:$0xff]
    %v83 = vld [vmem:[#allocation2 + $0x150] sm:$0xff]
    %v84 = vld [vmem:[#allocation2 + $0x158] sm:$0xff]
    %v85 = vld [vmem:[#allocation2 + $0x160] sm:$0xff]
    %v86 = vld [vmem:[#allocation2 + $0x168] sm:$0xff]
    %v87 = vld [vmem:[#allocation2 + $0x170] sm:$0xff]
    %v88 = vld [vmem:[#allocation2 + $0x178] sm:$0xff]
    %v89 = vld [vmem:[#allocation2 + $0x180] sm:$0xff]
    %v90 = vld [vmem:[#allocation2 + $0x188] sm:$0xff]
    %v91 = vld [vmem:[#allocation2 + $0x190] sm:$0xff]
    %v92 = vld [vmem:[#allocation2 + $0x198] sm:$0xff]
    %v93 = vld [vmem:[#allocation2 + $0x1a0] sm:$0xff]
    %v94 = vld [vmem:[#allocation2 + $0x1a8] sm:$0xff]
    %v95 = vld [vmem:[#allocation2 + $0x1b0] sm:$0xff]
    %v96 = vld [vmem:[#allocation2 + $0x1b8] sm:$0xff]
    %v97 = vld [vmem:[#allocation2 + $0x1c0] sm:$0xff]
    %v98 = vld [vmem:[#allocation2 + $0x1c8] sm:$0xff]
    %v99 = vld [vmem:[#allocation2 + $0x1d0] sm:$0xff]
    %v100 = vld [vmem:[#allocation2 + $0x1d8] sm:$0xff]
    %v101 = vld [vmem:[#allocation2 + $0x1e0] sm:$0xff]
    %v102 = vld [vmem:[#allocation2 + $0x1e8] sm:$0xff]
    %v103 = vld [vmem:[#allocation2 + $0x1f0] sm:$0xff]
    %v104 = vld [vmem:[#allocation2 + $0x1f8] sm:$0xff]
    %v105 = vld [vmem:[#allocation2 + $0x200] sm:$0xff]
    %v106 = vld [vmem:[#allocation2 + $0x208] sm:$0xff]
    %v107 = vld [vmem:[#allocation2 + $0x210] sm:$0xff]
    %v108 = vld [vmem:[#allocation2 + $0x218] sm:$0xff]
    %v109 = vld [vmem:[#allocation2 + $0x220] sm:$0xff]
    %v110 = vld [vmem:[#allocation2 + $0x228] sm:$0xff]
    %v111 = vld [vmem:[#allocation2 + $0x230] sm:$0xff]
    %v112 = vld [vmem:[#allocation2 + $0x238] sm:$0xff]
    %v113 = vld [vmem:[#allocation2 + $0x240] sm:$0xff]
    %v114 = vld [vmem:[#allocation2 + $0x248] sm:$0xff]
    %v115 = vld [vmem:[#allocation2 + $0x250] sm:$0xff]
    %v116 = vld [vmem:[#allocation2 + $0x258] sm:$0xff]
    %v117 = vld [vmem:[#allocation2 + $0x260] sm:$0xff]
    %v118 = vld [vmem:[#allocation2 + $0x268] sm:$0xff]
    %v119 = vld [vmem:[#allocation2 + $0x270] sm:$0xff]
    %v120 = vld [vmem:[#allocation2 + $0x278] sm:$0xff]
    %v121 = vld [vmem:[#allocation2 + $0x280] sm:$0xff]
    %v122 = vld [vmem:[#allocation2 + $0x288] sm:$0xff]
    %v123 = vld [vmem:[#allocation2 + $0x290] sm:$0xff]
    %v124 = vld [vmem:[#allocation2 + $0x298] sm:$0xff]
    %v125 = vld [vmem:[#allocation2 + $0x2a0] sm:$0xff]
    %v126 = vld [vmem:[#allocation2 + $0x2a8] sm:$0xff]
    %v127 = vld [vmem:[#allocation2 + $0x2b0] sm:$0xff]
    %v128 = vld [vmem:[#allocation2 + $0x2b8] sm:$0xff]
    %v129 = vld [vmem:[#allocation2 + $0x2c0] sm:$0xff]
    %v130 = vld [vmem:[#allocation2 + $0x2c8] sm:$0xff]
    %v131 = vld [vmem:[#allocation2 + $0x2d0] sm:$0xff]
    %v132 = vld [vmem:[#allocation2 + $0x2d8] sm:$0xff]
    %v133 = vld [vmem:[#allocation2 + $0x2e0] sm:$0xff]
    %v134 = vld [vmem:[#allocation2 + $0x2e8] sm:$0xff]
    %v135 = vld [vmem:[#allocation2 + $0x2f0] sm:$0xff]
    %v136 = vld [vmem:[#allocation2 + $0x2f8] sm:$0xff]
    %v137 = vld [vmem:[#allocation2 + $0x300] sm:$0xff]
    %v138 = vld [vmem:[#allocation2 + $0x308] sm:$0xff]
    %v139 = vld [vmem:[#allocation2 + $0x310] sm:$0xff]
    %v140 = vld [vmem:[#allocation2 + $0x318] sm:$0xff]
    %v141 = vld [vmem:[#allocation2 + $0x320] sm:$0xff]
    %v142 = vld [vmem:[#allocation2 + $0x328] sm:$0xff]
    %v143 = vld [vmem:[#allocation2 + $0x330] sm:$0xff]
    %v144 = vld [vmem:[#allocation2 + $0x338] sm:$0xff]
    %v145 = vld [vmem:[#allocation2 + $0x340] sm:$0xff]
    %v146 = vld [vmem:[#allocation2 + $0x348] sm:$0xff]
    %v147 = vld [vmem:[#allocation2 + $0x350] sm:$0xff]
    %v148 = vld [vmem:[#allocation2 + $0x358] sm:$0xff]
    %v149 = vld [vmem:[#allocation2 + $0x360] sm:$0xff]
    %v150 = vld [vmem:[#allocation2 + $0x368] sm:$0xff]
    %v151 = vld [vmem:[#allocation2 + $0x370] sm:$0xff]
    %v152 = vld [vmem:[#allocation2 + $0x378] sm:$0xff]
    %v153 = vld [vmem:[#allocation2 + $0x380] sm:$0xff]
    %v154 = vld [vmem:[#allocation2 + $0x388] sm:$0xff]
    %v155 = vld [vmem:[#allocation2 + $0x390] sm:$0xff]
    %v156 = vld [vmem:[#allocation2 + $0x398] sm:$0xff]
    %v157 = vld [vmem:[#allocation2 + $0x3a0] sm:$0xff]
    %v158 = vld [vmem:[#allocation2 + $0x3a8] sm:$0xff]
    %v159 = vld [vmem:[#allocation2 + $0x3b0] sm:$0xff]
    %v160 = vld [vmem:[#allocation2 + $0x3b8] sm:$0xff]
    %v161 = vld [vmem:[#allocation2 + $0x3c0] sm:$0xff]
    %v162 = vld [vmem:[#allocation2 + $0x3c8] sm:$0xff]
    %v163 = vld [vmem:[#allocation2 + $0x3d0] sm:$0xff]
    %v164 = vld [vmem:[#allocation2 + $0x3d8] sm:$0xff]
    %v165 = vld [vmem:[#allocation2 + $0x3e0] sm:$0xff]
    %v166 = vld [vmem:[#allocation2 + $0x3e8] sm:$0xff]
    %v167 = vld [vmem:[#allocation2 + $0x3f0] sm:$0xff]
    %v168 = vld [vmem:[#allocation2 + $0x3f8] sm:$0xff]
    %v169 = vld [vmem:[#allocation2 + $0x400] sm:$0xff]
    %v170 = vld [vmem:[#allocation2 + $0x408] sm:$0xff]
    %v171 = vld [vmem:[#allocation2 + $0x410] sm:$0xff]
    %v172 = vld [vmem:[#allocation2 + $0x418] sm:$0xff]
    %v173 = vld [vmem:[#allocation2 + $0x420] sm:$0xff]
    %v174 = vld [vmem:[#allocation2 + $0x428] sm:$0xff]
    %v175 = vld [vmem:[#allocation2 + $0x430] sm:$0xff]
    %v176 = vld [vmem:[#allocation2 + $0x438] sm:$0xff]
    %v177 = vld [vmem:[#allocation2 + $0x440] sm:$0xff]
    %v178 = vld [vmem:[#allocation2 + $0x448] sm:$0xff]
    %v179 = vld [vmem:[#allocation2 + $0x450] sm:$0xff]
    %v180 = vld [vmem:[#allocation2 + $0x458] sm:$0xff]
    %v181 = vld [vmem:[#allocation2 + $0x460] sm:$0xff]
    %v182 = vld [vmem:[#allocation2 + $0x468] sm:$0xff]
    %v183 = vld [vmem:[#allocation2 + $0x470] sm:$0xff]
    %v184 = vld [vmem:[#allocation2 + $0x478] sm:$0xff]
    %v185 = vld [vmem:[#allocation2 + $0x480] sm:$0xff]
    %v186 = vld [vmem:[#allocation2 + $0x488] sm:$0xff]
    %v187 = vld [vmem:[#allocation2 + $0x490] sm:$0xff]
    %v188 = vld [vmem:[#allocation2 + $0x498] sm:$0xff]
    %v189 = vld [vmem:[#allocation2 + $0x4a0] sm:$0xff]
    %v190 = vld [vmem:[#allocation2 + $0x4a8] sm:$0xff]
    %v191 = vld [vmem:[#allocation2 + $0x4b0] sm:$0xff]
    %v192 = vld [vmem:[#allocation2 + $0x4b8] sm:$0xff]
    %v193 = vld [vmem:[#allocation2 + $0x4c0] sm:$0xff]
    %v194 = vld [vmem:[#allocation2 + $0x4c8] sm:$0xff]
    %v195 = vld [vmem:[#allocation2 + $0x4d0] sm:$0xff]
    %v196 = vld [vmem:[#allocation2 + $0x4d8] sm:$0xff]
    %v197 = vld [vmem:[#allocation2 + $0x4e0] sm:$0xff]
    %v198 = vld [vmem:[#allocation2 + $0x4e8] sm:$0xff]
    %v199 = vld [vmem:[#allocation2 + $0x4f0] sm:$0xff]
    %v200 = vld [vmem:[#allocation2 + $0x4f8] sm:$0xff]
    %v201 = vld [vmem:[#allocation2 + $0x500] sm:$0xff]
    %v202 = vld [vmem:[#allocation2 + $0x508] sm:$0xff]
    %v203 = vld [vmem:[#allocation2 + $0x510] sm:$0xff]
    %v204 = vld [vmem:[#allocation2 + $0x518] sm:$0xff]
    %v205 = vld [vmem:[#allocation2 + $0x520] sm:$0xff]
    %v206 = vld [vmem:[#allocation2 + $0x528] sm:$0xff]
    %v207 = vld [vmem:[#allocation2 + $0x530] sm:$0xff]
    %v208 = vld [vmem:[#allocation2 + $0x538] sm:$0xff]
    %v209 = vld [vmem:[#allocation2 + $0x540] sm:$0xff]
    %v210 = vld [vmem:[#allocation2 + $0x548] sm:$0xff]
    %v211 = vld [vmem:[#allocation2 + $0x550] sm:$0xff]
    %v212 = vld [vmem:[#allocation2 + $0x558] sm:$0xff]
    %v213 = vld [vmem:[#allocation2 + $0x560] sm:$0xff]
    %v214 = vld [vmem:[#allocation2 + $0x568] sm:$0xff]
    %v215 = vld [vmem:[#allocation2 + $0x570] sm:$0xff]
    %v216 = vld [vmem:[#allocation2 + $0x578] sm:$0xff]
    %v217 = vld [vmem:[#allocation2 + $0x580] sm:$0xff]
    %v218 = vld [vmem:[#allocation2 + $0x588] sm:$0xff]
    %v219 = vld [vmem:[#allocation2 + $0x590] sm:$0xff]
    %v220 = vld [vmem:[#allocation2 + $0x598] sm:$0xff]
    %v221 = vld [vmem:[#allocation2 + $0x5a0] sm:$0xff]
    %v222 = vld [vmem:[#allocation2 + $0x5a8] sm:$0xff]
    %v223 = vld [vmem:[#allocation2 + $0x5b0] sm:$0xff]
    %v224 = vld [vmem:[#allocation2 + $0x5b8] sm:$0xff]
    %v225 = vld [vmem:[#allocation2 + $0x5c0] sm:$0xff]
    %v226 = vld [vmem:[#allocation2 + $0x5c8] sm:$0xff]
    %v227 = vld [vmem:[#allocation2 + $0x5d0] sm:$0xff]
    %v228 = vld [vmem:[#allocation2 + $0x5d8] sm:$0xff]
    %v229 = vld [vmem:[#allocation2 + $0x5e0] sm:$0xff]
    %v230 = vld [vmem:[#allocation2 + $0x5e8] sm:$0xff]
    %v231 = vld [vmem:[#allocation2 + $0x5f0] sm:$0xff]
    %v232 = vld [vmem:[#allocation2 + $0x5f8] sm:$0xff]
    %v233 = vld [vmem:[#allocation2 + $0x600] sm:$0xff]
    %v234 = vld [vmem:[#allocation2 + $0x608] sm:$0xff]
    %v235 = vld [vmem:[#allocation2 + $0x610] sm:$0xff]
    %v236 = vld [vmem:[#allocation2 + $0x618] sm:$0xff]
    %v237 = vld [vmem:[#allocation2 + $0x620] sm:$0xff]
    %v238 = vld [vmem:[#allocation2 + $0x628] sm:$0xff]
    %v239 = vld [vmem:[#allocation2 + $0x630] sm:$0xff]
    %v240 = vld [vmem:[#allocation2 + $0x638] sm:$0xff]
    %v241 = vld [vmem:[#allocation2 + $0x640] sm:$0xff]
    %v242 = vld [vmem:[#allocation2 + $0x648] sm:$0xff]
    %v243 = vld [vmem:[#allocation2 + $0x650] sm:$0xff]
    %v244 = vld [vmem:[#allocation2 + $0x658] sm:$0xff]
    %v245 = vld [vmem:[#allocation2 + $0x660] sm:$0xff]
    %v246 = vld [vmem:[#allocation2 + $0x668] sm:$0xff]
    %v247 = vld [vmem:[#allocation2 + $0x670] sm:$0xff]
    %v248 = vld [vmem:[#allocation2 + $0x678] sm:$0xff]
    %v249 = vld [vmem:[#allocation2 + $0x680] sm:$0xff]
    %v250 = vld [vmem:[#allocation2 + $0x688] sm:$0xff]
    %v251 = vld [vmem:[#allocation2 + $0x690] sm:$0xff]
    %v252 = vld [vmem:[#allocation2 + $0x698] sm:$0xff]
    %v253 = vld [vmem:[#allocation2 + $0x6a0] sm:$0xff]
    %v254 = vld [vmem:[#allocation2 + $0x6a8] sm:$0xff]
    %v255 = vld [vmem:[#allocation2 + $0x6b0] sm:$0xff]
    %v256 = vld [vmem:[#allocation2 + $0x6b8] sm:$0xff]
    %v257 = vld [vmem:[#allocation2 + $0x6c0] sm:$0xff]
    %v258 = vld [vmem:[#allocation2 + $0x6c8] sm:$0xff]
    %v259 = vld [vmem:[#allocation2 + $0x6d0] sm:$0xff]
    %v260 = vld [vmem:[#allocation2 + $0x6d8] sm:$0xff]
    %v261 = vld [vmem:[#allocation2 + $0x6e0] sm:$0xff]
    %v262 = vld [vmem:[#allocation2 + $0x6e8] sm:$0xff]
    %v263 = vld [vmem:[#allocation2 + $0x6f0] sm:$0xff]
    %v264 = vld [vmem:[#allocation2 + $0x6f8] sm:$0xff]
    %v265 = vld [vmem:[#allocation2 + $0x700] sm:$0xff]
    %v266 = vld [vmem:[#allocation2 + $0x708] sm:$0xff]
    %v267 = vld [vmem:[#allocation2 + $0x710] sm:$0xff]
    %v268 = vld [vmem:[#allocation2 + $0x718] sm:$0xff]
    %v269 = vld [vmem:[#allocation2 + $0x720] sm:$0xff]
    %v270 = vld [vmem:[#allocation2 + $0x728] sm:$0xff]
    %v271 = vld [vmem:[#allocation2 + $0x730] sm:$0xff]
    %v272 = vld [vmem:[#allocation2 + $0x738] sm:$0xff]
    %v273 = vld [vmem:[#allocation2 + $0x740] sm:$0xff]
    %v274 = vld [vmem:[#allocation2 + $0x748] sm:$0xff]
    %v275 = vld [vmem:[#allocation2 + $0x750] sm:$0xff]
    %v276 = vld [vmem:[#allocation2 + $0x758] sm:$0xff]
    %v277 = vld [vmem:[#allocation2 + $0x760] sm:$0xff]
    %v278 = vld [vmem:[#allocation2 + $0x768] sm:$0xff]
    %v279 = vld [vmem:[#allocation2 + $0x770] sm:$0xff]
    %v280 = vld [vmem:[#allocation2 + $0x778] sm:$0xff]
    %v281 = vld [vmem:[#allocation2 + $0x780] sm:$0xff]
    %v282 = vld [vmem:[#allocation2 + $0x788] sm:$0xff]
    %v283 = vld [vmem:[#allocation2 + $0x790] sm:$0xff]
    %v284 = vld [vmem:[#allocation2 + $0x798] sm:$0xff]
    %v285 = vld [vmem:[#allocation2 + $0x7a0] sm:$0xff]
    %v286 = vld [vmem:[#allocation2 + $0x7a8] sm:$0xff]
    %v287 = vld [vmem:[#allocation2 + $0x7b0] sm:$0xff]
    %v288 = vld [vmem:[#allocation2 + $0x7b8] sm:$0xff]
    %v289 = vld [vmem:[#allocation2 + $0x7c0] sm:$0xff]
    %v290 = vld [vmem:[#allocation2 + $0x7c8] sm:$0xff]
    %v291 = vld [vmem:[#allocation2 + $0x7d0] sm:$0xff]
    %v292 = vld [vmem:[#allocation2 + $0x7d8] sm:$0xff]
    %v293 = vld [vmem:[#allocation2 + $0x7e0] sm:$0xff]
    %v294 = vld [vmem:[#allocation2 + $0x7e8] sm:$0xff]
    %v295 = vld [vmem:[#allocation2 + $0x7f0] sm:$0xff]
    %v296 = vld [vmem:[#allocation2 + $0x7f8] sm:$0xff]
    %v297 = vld [vmem:[#allocation2 + $0x800] sm:$0xff]
    %v298 = vld [vmem:[#allocation2 + $0x808] sm:$0xff]
    %v299 = vld [vmem:[#allocation2 + $0x810] sm:$0xff]
    %v300 = vld [vmem:[#allocation2 + $0x818] sm:$0xff]
    %v301 = vld [vmem:[#allocation2 + $0x820] sm:$0xff]
    %v302 = vld [vmem:[#allocation2 + $0x828] sm:$0xff]
    %v303 = vld [vmem:[#allocation2 + $0x830] sm:$0xff]
    %v304 = vld [vmem:[#allocation2 + $0x838] sm:$0xff]
    %v305 = vld [vmem:[#allocation2 + $0x840] sm:$0xff]
    %v306 = vld [vmem:[#allocation2 + $0x848] sm:$0xff]
    %v307 = vld [vmem:[#allocation2 + $0x850] sm:$0xff]
    %v308 = vld [vmem:[#allocation2 + $0x858] sm:$0xff]
    %v309 = vld [vmem:[#allocation2 + $0x860] sm:$0xff]
    %v310 = vld [vmem:[#allocation2 + $0x868] sm:$0xff]
    %v311 = vld [vmem:[#allocation2 + $0x870] sm:$0xff]
    %v312 = vld [vmem:[#allocation2 + $0x878] sm:$0xff]
    %v313 = vld [vmem:[#allocation2 + $0x880] sm:$0xff]
    %v314 = vld [vmem:[#allocation2 + $0x888] sm:$0xff]
    %v315 = vld [vmem:[#allocation2 + $0x890] sm:$0xff]
    %v316 = vld [vmem:[#allocation2 + $0x898] sm:$0xff]
    %v317 = vld [vmem:[#allocation2 + $0x8a0] sm:$0xff]
    %v318 = vld [vmem:[#allocation2 + $0x8a8] sm:$0xff]
    %v319 = vld [vmem:[#allocation2 + $0x8b0] sm:$0xff]
    %v320 = vld [vmem:[#allocation2 + $0x8b8] sm:$0xff]
    %v321 = vld [vmem:[#allocation2 + $0x8c0] sm:$0xff]
    %v322 = vld [vmem:[#allocation2 + $0x8c8] sm:$0xff]
    %v323 = vld [vmem:[#allocation2 + $0x8d0] sm:$0xff]
    %v324 = vld [vmem:[#allocation2 + $0x8d8] sm:$0xff]
    %v325 = vld [vmem:[#allocation2 + $0x8e0] sm:$0xff]
    %v326 = vld [vmem:[#allocation2 + $0x8e8] sm:$0xff]
    %v327 = vld [vmem:[#allocation2 + $0x8f0] sm:$0xff]
    %v328 = vld [vmem:[#allocation2 + $0x8f8] sm:$0xff]
    %v329 = vld [vmem:[#allocation2 + $0x900] sm:$0xff]
    %v330 = vld [vmem:[#allocation2 + $0x908] sm:$0xff]
    %v331 = vld [vmem:[#allocation2 + $0x910] sm:$0xff]
    %v332 = vld [vmem:[#allocation2 + $0x918] sm:$0xff]
    %v333 = vld [vmem:[#allocation2 + $0x920] sm:$0xff]
    %v334 = vld [vmem:[#allocation2 + $0x928] sm:$0xff]
    %v335 = vld [vmem:[#allocation2 + $0x930] sm:$0xff]
    %v336 = vld [vmem:[#allocation2 + $0x938] sm:$0xff]
    %v337 = vld [vmem:[#allocation2 + $0x940] sm:$0xff]
    %v338 = vld [vmem:[#allocation2 + $0x948] sm:$0xff]
    %v339 = vld [vmem:[#allocation2 + $0x950] sm:$0xff]
    %v340 = vld [vmem:[#allocation2 + $0x958] sm:$0xff]
    %v341 = vld [vmem:[#allocation2 + $0x960] sm:$0xff]
    %v342 = vld [vmem:[#allocation2 + $0x968] sm:$0xff]
    %v343 = vld [vmem:[#allocation2 + $0x970] sm:$0xff]
    %v344 = vld [vmem:[#allocation2 + $0x978] sm:$0xff]
    %v345 = vld [vmem:[#allocation2 + $0x980] sm:$0xff]
    %v346 = vld [vmem:[#allocation2 + $0x988] sm:$0xff]
    %v347 = vld [vmem:[#allocation2 + $0x990] sm:$0xff]
    %v348 = vld [vmem:[#allocation2 + $0x998] sm:$0xff]
    %v349 = vld [vmem:[#allocation2 + $0x9a0] sm:$0xff]
    %v350 = vld [vmem:[#allocation2 + $0x9a8] sm:$0xff]
    %v351 = vld [vmem:[#allocation2 + $0x9b0] sm:$0xff]
    %v352 = vld [vmem:[#allocation2 + $0x9b8] sm:$0xff]
    %v353 = vld [vmem:[#allocation2 + $0x9c0] sm:$0xff]
    %v354 = vld [vmem:[#allocation2 + $0x9c8] sm:$0xff]
    %v355 = vld [vmem:[#allocation2 + $0x9d0] sm:$0xff]
    %v356 = vld [vmem:[#allocation2 + $0x9d8] sm:$0xff]
    %v357 = vld [vmem:[#allocation2 + $0x9e0] sm:$0xff]
    %v358 = vld [vmem:[#allocation2 + $0x9e8] sm:$0xff]
    %v359 = vld [vmem:[#allocation2 + $0x9f0] sm:$0xff]
    %v360 = vld [vmem:[#allocation2 + $0x9f8] sm:$0xff]
    %v361 = vld [vmem:[#allocation2 + $0xa00] sm:$0xff]
    %v362 = vld [vmem:[#allocation2 + $0xa08] sm:$0xff]
    %v363 = vld [vmem:[#allocation2 + $0xa10] sm:$0xff]
    %v364 = vld [vmem:[#allocation2 + $0xa18] sm:$0xff]
    %v365 = vld [vmem:[#allocation2 + $0xa20] sm:$0xff]
    %v366 = vld [vmem:[#allocation2 + $0xa28] sm:$0xff]
    %v367 = vld [vmem:[#allocation2 + $0xa30] sm:$0xff]
    %v368 = vld [vmem:[#allocation2 + $0xa38] sm:$0xff]
    %v369 = vld [vmem:[#allocation2 + $0xa40] sm:$0xff]
    %v370 = vld [vmem:[#allocation2 + $0xa48] sm:$0xff]
    %v371 = vld [vmem:[#allocation2 + $0xa50] sm:$0xff]
    %v372 = vld [vmem:[#allocation2 + $0xa58] sm:$0xff]
    %v373 = vld [vmem:[#allocation2 + $0xa60] sm:$0xff]
    %v374 = vld [vmem:[#allocation2 + $0xa68] sm:$0xff]
    %v375 = vld [vmem:[#allocation2 + $0xa70] sm:$0xff]
    %v376 = vld [vmem:[#allocation2 + $0xa78] sm:$0xff]
    %v377 = vld [vmem:[#allocation2 + $0xa80] sm:$0xff]
    %v378 = vld [vmem:[#allocation2 + $0xa88] sm:$0xff]
    %v379 = vld [vmem:[#allocation2 + $0xa90] sm:$0xff]
    %v380 = vld [vmem:[#allocation2 + $0xa98] sm:$0xff]
    %v381 = vld [vmem:[#allocation2 + $0xaa0] sm:$0xff]
    %v382 = vld [vmem:[#allocation2 + $0xaa8] sm:$0xff]
    %v383 = vld [vmem:[#allocation2 + $0xab0] sm:$0xff]
    %v384 = vld [vmem:[#allocation2 + $0xab8] sm:$0xff]
    %v385 = vld [vmem:[#allocation2 + $0xac0] sm:$0xff]
    %v386 = vld [vmem:[#allocation2 + $0xac8] sm:$0xff]
    %v387 = vld [vmem:[#allocation2 + $0xad0] sm:$0xff]
    %v388 = vld [vmem:[#allocation2 + $0xad8] sm:$0xff]
    %v389 = vld [vmem:[#allocation2 + $0xae0] sm:$0xff]
    %v390 = vld [vmem:[#allocation2 + $0xae8] sm:$0xff]
    %v391 = vld [vmem:[#allocation2 + $0xaf0] sm:$0xff]
    %v392 = vld [vmem:[#allocation2 + $0xaf8] sm:$0xff]
    %v393 = vld [vmem:[#allocation2 + $0xb00] sm:$0xff]
    %v394 = vld [vmem:[#allocation2 + $0xb08] sm:$0xff]
    %v395 = vld [vmem:[#allocation2 + $0xb10] sm:$0xff]
    %v396 = vld [vmem:[#allocation2 + $0xb18] sm:$0xff]
    %v397 = vld [vmem:[#allocation2 + $0xb20] sm:$0xff]
    %v398 = vld [vmem:[#allocation2 + $0xb28] sm:$0xff]
    %v399 = vld [vmem:[#allocation2 + $0xb30] sm:$0xff]
    %v400 = vld [vmem:[#allocation2 + $0xb38] sm:$0xff]
    %v401 = vld [vmem:[#allocation2 + $0xb40] sm:$0xff]
    %v402 = vld [vmem:[#allocation2 + $0xb48] sm:$0xff]
    %v403 = vld [vmem:[#allocation2 + $0xb50] sm:$0xff]
    %v404 = vld [vmem:[#allocation2 + $0xb58] sm:$0xff]
    %v405 = vld [vmem:[#allocation2 + $0xb60] sm:$0xff]
    %v406 = vld [vmem:[#allocation2 + $0xb68] sm:$0xff]
    %v407 = vld [vmem:[#allocation2 + $0xb70] sm:$0xff]
    %v408 = vld [vmem:[#allocation2 + $0xb78] sm:$0xff]
    %v409 = vld [vmem:[#allocation2 + $0xb80] sm:$0xff]
    %v410 = vld [vmem:[#allocation2 + $0xb88] sm:$0xff]
    %v411 = vld [vmem:[#allocation2 + $0xb90] sm:$0xff]
    %v412 = vld [vmem:[#allocation2 + $0xb98] sm:$0xff]
    %v413 = vld [vmem:[#allocation2 + $0xba0] sm:$0xff]
    %v414 = vld [vmem:[#allocation2 + $0xba8] sm:$0xff]
    %v415 = vld [vmem:[#allocation2 + $0xbb0] sm:$0xff]
    %v416 = vld [vmem:[#allocation2 + $0xbb8] sm:$0xff]
    %v417 = vld [vmem:[#allocation2 + $0xbc0] sm:$0xff]
    %v418 = vld [vmem:[#allocation2 + $0xbc8] sm:$0xff]
    %v419 = vld [vmem:[#allocation2 + $0xbd0] sm:$0xff]
    %v420 = vld [vmem:[#allocation2 + $0xbd8] sm:$0xff]
    %v421 = vld [vmem:[#allocation2 + $0xbe0] sm:$0xff]
    %v422 = vld [vmem:[#allocation2 + $0xbe8] sm:$0xff]
    %v423 = vld [vmem:[#allocation2 + $0xbf0] sm:$0xff]
    %v424 = vld [vmem:[#allocation2 + $0xbf8] sm:$0xff]
    %v425 = vld [vmem:[#allocation2 + $0xc00] sm:$0xff]
    %v426 = vld [vmem:[#allocation2 + $0xc08] sm:$0xff]
    %v427 = vld [vmem:[#allocation2 + $0xc10] sm:$0xff]
    %v428 = vld [vmem:[#allocation2 + $0xc18] sm:$0xff]
    %v429 = vld [vmem:[#allocation2 + $0xc20] sm:$0xff]
    %v430 = vld [vmem:[#allocation2 + $0xc28] sm:$0xff]
    %v431 = vld [vmem:[#allocation2 + $0xc30] sm:$0xff]
    %v432 = vld [vmem:[#allocation2 + $0xc38] sm:$0xff]
    %v433 = vld [vmem:[#allocation2 + $0xc40] sm:$0xff]
    %v434 = vld [vmem:[#allocation2 + $0xc48] sm:$0xff]
    %v435 = vld [vmem:[#allocation2 + $0xc50] sm:$0xff]
    %v436 = vld [vmem:[#allocation2 + $0xc58] sm:$0xff]
    %v437 = vld [vmem:[#allocation2 + $0xc60] sm:$0xff]
    %v438 = vld [vmem:[#allocation2 + $0xc68] sm:$0xff]
    %v439 = vld [vmem:[#allocation2 + $0xc70] sm:$0xff]
    %v440 = vld [vmem:[#allocation2 + $0xc78] sm:$0xff]
    %v441 = vld [vmem:[#allocation2 + $0xc80] sm:$0xff]
    %v442 = vld [vmem:[#allocation2 + $0xc88] sm:$0xff]
    %v443 = vld [vmem:[#allocation2 + $0xc90] sm:$0xff]
    %v444 = vld [vmem:[#allocation2 + $0xc98] sm:$0xff]
    %v445 = vld [vmem:[#allocation2 + $0xca0] sm:$0xff]
    %v446 = vld [vmem:[#allocation2 + $0xca8] sm:$0xff]
    %v447 = vld [vmem:[#allocation2 + $0xcb0] sm:$0xff]
    %v448 = vld [vmem:[#allocation2 + $0xcb8] sm:$0xff]
    %v449 = vld [vmem:[#allocation2 + $0xcc0] sm:$0xff]
    %v450 = vld [vmem:[#allocation2 + $0xcc8] sm:$0xff]
    %v451 = vld [vmem:[#allocation2 + $0xcd0] sm:$0xff]
    %v452 = vld [vmem:[#allocation2 + $0xcd8] sm:$0xff]
    %v453 = vld [vmem:[#allocation2 + $0xce0] sm:$0xff]
    %v454 = vld [vmem:[#allocation2 + $0xce8] sm:$0xff]
    %v455 = vld [vmem:[#allocation2 + $0xcf0] sm:$0xff]
    %v456 = vld [vmem:[#allocation2 + $0xcf8] sm:$0xff]
    %v457 = vld [vmem:[#allocation2 + $0xd00] sm:$0xff]
    %v458 = vld [vmem:[#allocation2 + $0xd08] sm:$0xff]
    %v459 = vld [vmem:[#allocation2 + $0xd10] sm:$0xff]
    %v460 = vld [vmem:[#allocation2 + $0xd18] sm:$0xff]
    %v461 = vld [vmem:[#allocation2 + $0xd20] sm:$0xff]
    %v462 = vld [vmem:[#allocation2 + $0xd28] sm:$0xff]
    %v463 = vld [vmem:[#allocation2 + $0xd30] sm:$0xff]
    %v464 = vld [vmem:[#allocation2 + $0xd38] sm:$0xff]
    %v465 = vld [vmem:[#allocation2 + $0xd40] sm:$0xff]
    %v466 = vld [vmem:[#allocation2 + $0xd48] sm:$0xff]
    %v467 = vld [vmem:[#allocation2 + $0xd50] sm:$0xff]
    %v468 = vld [vmem:[#allocation2 + $0xd58] sm:$0xff]
    %v469 = vld [vmem:[#allocation2 + $0xd60] sm:$0xff]
    %v470 = vld [vmem:[#allocation2 + $0xd68] sm:$0xff]
    %v471 = vld [vmem:[#allocation2 + $0xd70] sm:$0xff]
    %v472 = vld [vmem:[#allocation2 + $0xd78] sm:$0xff]
    %v473 = vld [vmem:[#allocation2 + $0xd80] sm:$0xff]
    %v474 = vld [vmem:[#allocation2 + $0xd88] sm:$0xff]
    %v475 = vld [vmem:[#allocation2 + $0xd90] sm:$0xff]
    %v476 = vld [vmem:[#allocation2 + $0xd98] sm:$0xff]
    %v477 = vld [vmem:[#allocation2 + $0xda0] sm:$0xff]
    %v478 = vld [vmem:[#allocation2 + $0xda8] sm:$0xff]
    %v479 = vld [vmem:[#allocation2 + $0xdb0] sm:$0xff]
    %v480 = vld [vmem:[#allocation2 + $0xdb8] sm:$0xff]
    %v481 = vld [vmem:[#allocation2 + $0xdc0] sm:$0xff]
    %v482 = vld [vmem:[#allocation2 + $0xdc8] sm:$0xff]
    %v483 = vld [vmem:[#allocation2 + $0xdd0] sm:$0xff]
    %v484 = vld [vmem:[#allocation2 + $0xdd8] sm:$0xff]
    %v485 = vld [vmem:[#allocation2 + $0xde0] sm:$0xff]
    %v486 = vld [vmem:[#allocation2 + $0xde8] sm:$0xff]
    %v487 = vld [vmem:[#allocation2 + $0xdf0] sm:$0xff]
    %v488 = vld [vmem:[#allocation2 + $0xdf8] sm:$0xff]
    %v489 = vld [vmem:[#allocation2 + $0xe00] sm:$0xff]
    %v490 = vld [vmem:[#allocation2 + $0xe08] sm:$0xff]
    %v491 = vld [vmem:[#allocation2 + $0xe10] sm:$0xff]
    %v492 = vld [vmem:[#allocation2 + $0xe18] sm:$0xff]
    %v493 = vld [vmem:[#allocation2 + $0xe20] sm:$0xff]
    %v494 = vld [vmem:[#allocation2 + $0xe28] sm:$0xff]
    %v495 = vld [vmem:[#allocation2 + $0xe30] sm:$0xff]
    %v496 = vld [vmem:[#allocation2 + $0xe38] sm:$0xff]
    %v497 = vld [vmem:[#allocation2 + $0xe40] sm:$0xff]
    %v498 = vld [vmem:[#allocation2 + $0xe48] sm:$0xff]
    %v499 = vld [vmem:[#allocation2 + $0xe50] sm:$0xff]
    %v500 = vld [vmem:[#allocation2 + $0xe58] sm:$0xff]
    %v501 = vld [vmem:[#allocation2 + $0xe60] sm:$0xff]
    %v502 = vld [vmem:[#allocation2 + $0xe68] sm:$0xff]
    %v503 = vld [vmem:[#allocation2 + $0xe70] sm:$0xff]
    %v504 = vld [vmem:[#allocation2 + $0xe78] sm:$0xff]
    %v505 = vld [vmem:[#allocation2 + $0xe80] sm:$0xff]
    %v506 = vld [vmem:[#allocation2 + $0xe88] sm:$0xff]
    %v507 = vld [vmem:[#allocation2 + $0xe90] sm:$0xff]
    %v508 = vld [vmem:[#allocation2 + $0xe98] sm:$0xff]
    %v509 = vld [vmem:[#allocation2 + $0xea0] sm:$0xff]
    %v510 = vld [vmem:[#allocation2 + $0xea8] sm:$0xff]
    %v511 = vld [vmem:[#allocation2 + $0xeb0] sm:$0xff]
    %v512 = vld [vmem:[#allocation2 + $0xeb8] sm:$0xff]
    %v513 = vld [vmem:[#allocation2 + $0xec0] sm:$0xff]
    %v514 = vld [vmem:[#allocation2 + $0xec8] sm:$0xff]
    %v515 = vld [vmem:[#allocation2 + $0xed0] sm:$0xff]
    %v516 = vld [vmem:[#allocation2 + $0xed8] sm:$0xff]
    %v517 = vld [vmem:[#allocation2 + $0xee0] sm:$0xff]
    %v518 = vld [vmem:[#allocation2 + $0xee8] sm:$0xff]
    %v519 = vld [vmem:[#allocation2 + $0xef0] sm:$0xff]
    %v520 = vld [vmem:[#allocation2 + $0xef8] sm:$0xff]
    %v521 = vld [vmem:[#allocation2 + $0xf00] sm:$0xff]
    %v522 = vld [vmem:[#allocation2 + $0xf08] sm:$0xff]
    %v523 = vld [vmem:[#allocation2 + $0xf10] sm:$0xff]
    %v524 = vld [vmem:[#allocation2 + $0xf18] sm:$0xff]
    %v525 = vld [vmem:[#allocation2 + $0xf20] sm:$0xff]
    %v526 = vld [vmem:[#allocation2 + $0xf28] sm:$0xff]
    %v527 = vld [vmem:[#allocation2 + $0xf30] sm:$0xff]
    %v528 = vld [vmem:[#allocation2 + $0xf38] sm:$0xff]
    %v529 = vld [vmem:[#allocation2 + $0xf40] sm:$0xff]
    %v530 = vld [vmem:[#allocation2 + $0xf48] sm:$0xff]
    %v531 = vld [vmem:[#allocation2 + $0xf50] sm:$0xff]
    %v532 = vld [vmem:[#allocation2 + $0xf58] sm:$0xff]
    %v533 = vld [vmem:[#allocation2 + $0xf60] sm:$0xff]
    %v534 = vld [vmem:[#allocation2 + $0xf68] sm:$0xff]
    %v535 = vld [vmem:[#allocation2 + $0xf70] sm:$0xff]
    %v536 = vld [vmem:[#allocation2 + $0xf78] sm:$0xff]
    %v537 = vld [vmem:[#allocation2 + $0xf80] sm:$0xff]
    %v538 = vld [vmem:[#allocation2 + $0xf88] sm:$0xff]
    %v539 = vld [vmem:[#allocation2 + $0xf90] sm:$0xff]
    %v540 = vld [vmem:[#allocation2 + $0xf98] sm:$0xff]
    %v541 = vld [vmem:[#allocation2 + $0xfa0] sm:$0xff]
    %v542 = vld [vmem:[#allocation2 + $0xfa8] sm:$0xff]
    %v543 = vld [vmem:[#allocation2 + $0xfb0] sm:$0xff]
    %v544 = vld [vmem:[#allocation2 + $0xfb8] sm:$0xff]
    %v545 = vld [vmem:[#allocation2 + $0xfc0] sm:$0xff]
    %v546 = vld [vmem:[#allocation2 + $0xfc8] sm:$0xff]
    %v547 = vld [vmem:[#allocation2 + $0xfd0] sm:$0xff]
    %v548 = vld [vmem:[#allocation2 + $0xfd8] sm:$0xff]
    %v549 = vld [vmem:[#allocation2 + $0xfe0] sm:$0xff]
    %v550 = vld [vmem:[#allocation2 + $0xfe8] sm:$0xff]
    %v551 = vld [vmem:[#allocation2 + $0xff0] sm:$0xff]
    %v552 = vld [vmem:[#allocation2 + $0xff8] sm:$0xff]
    %v553 = vld [vmem:[#allocation2 + $0x1000] sm:$0xff]
    %v554 = vld [vmem:[#allocation2 + $0x1008] sm:$0xff]
    %v555 = vld [vmem:[#allocation2 + $0x1010] sm:$0xff]
    %v556 = vld [vmem:[#allocation2 + $0x1018] sm:$0xff]
    %v557 = vld [vmem:[#allocation2 + $0x1020] sm:$0xff]
    %v558 = vld [vmem:[#allocation2 + $0x1028] sm:$0xff]
    %v559 = vld [vmem:[#allocation2 + $0x1030] sm:$0xff]
    %v560 = vld [vmem:[#allocation2 + $0x1038] sm:$0xff]
    %v561 = vld [vmem:[#allocation2 + $0x1040] sm:$0xff]
    %v562 = vld [vmem:[#allocation2 + $0x1048] sm:$0xff]
    %v563 = vld [vmem:[#allocation2 + $0x1050] sm:$0xff]
    %v564 = vld [vmem:[#allocation2 + $0x1058] sm:$0xff]
    %v565 = vld [vmem:[#allocation2 + $0x1060] sm:$0xff]
    %v566 = vld [vmem:[#allocation2 + $0x1068] sm:$0xff]
    %v567 = vld [vmem:[#allocation2 + $0x1070] sm:$0xff]
    %v568 = vld [vmem:[#allocation2 + $0x1078] sm:$0xff]
    %v569 = vld [vmem:[#allocation2 + $0x1080] sm:$0xff]
    %v570 = vld [vmem:[#allocation2 + $0x1088] sm:$0xff]
    %v571 = vld [vmem:[#allocation2 + $0x1090] sm:$0xff]
    %v572 = vld [vmem:[#allocation2 + $0x1098] sm:$0xff]
    %v573 = vld [vmem:[#allocation2 + $0x10a0] sm:$0xff]
    %v574 = vld [vmem:[#allocation2 + $0x10a8] sm:$0xff]
    %v575 = vld [vmem:[#allocation2 + $0x10b0] sm:$0xff]
    %v576 = vld [vmem:[#allocation2 + $0x10b8] sm:$0xff]
    %v577 = vld [vmem:[#allocation2 + $0x10c0] sm:$0xff]
    %v578 = vld [vmem:[#allocation2 + $0x10c8] sm:$0xff]
    %v579 = vld [vmem:[#allocation2 + $0x10d0] sm:$0xff]
    %v580 = vld [vmem:[#allocation2 + $0x10d8] sm:$0xff]
    %v581 = vld [vmem:[#allocation2 + $0x10e0] sm:$0xff]
    %v582 = vld [vmem:[#allocation2 + $0x10e8] sm:$0xff]
    %v583 = vld [vmem:[#allocation2 + $0x10f0] sm:$0xff]
    %v584 = vld [vmem:[#allocation2 + $0x10f8] sm:$0xff]
    %v585 = vld [vmem:[#allocation2 + $0x1100] sm:$0xff]
    %v586 = vld [vmem:[#allocation2 + $0x1108] sm:$0xff]
    %v587 = vld [vmem:[#allocation2 + $0x1110] sm:$0xff]
    %v588 = vld [vmem:[#allocation2 + $0x1118] sm:$0xff]
    %v589 = vld [vmem:[#allocation2 + $0x1120] sm:$0xff]
    %v590 = vld [vmem:[#allocation2 + $0x1128] sm:$0xff]
    %v591 = vld [vmem:[#allocation2 + $0x1130] sm:$0xff]
    %v592 = vld [vmem:[#allocation2 + $0x1138] sm:$0xff]
    %v593 = vld [vmem:[#allocation2 + $0x1140] sm:$0xff]
    %v594 = vld [vmem:[#allocation2 + $0x1148] sm:$0xff]
    %v595 = vld [vmem:[#allocation2 + $0x1150] sm:$0xff]
    %v596 = vld [vmem:[#allocation2 + $0x1158] sm:$0xff]
    %v597 = vld [vmem:[#allocation2 + $0x1160] sm:$0xff]
    %v598 = vld [vmem:[#allocation2 + $0x1168] sm:$0xff]
    %v599 = vld [vmem:[#allocation2 + $0x1170] sm:$0xff]
    %v600 = vld [vmem:[#allocation2 + $0x1178] sm:$0xff]
    %v601 = vld [vmem:[#allocation2 + $0x1180] sm:$0xff]
    %v602 = vld [vmem:[#allocation2 + $0x1188] sm:$0xff]
    %v603 = vld [vmem:[#allocation2 + $0x1190] sm:$0xff]
    %v604 = vld [vmem:[#allocation2 + $0x1198] sm:$0xff]
    %v605 = vld [vmem:[#allocation2 + $0x11a0] sm:$0xff]
    %v606 = vld [vmem:[#allocation2 + $0x11a8] sm:$0xff]
    %v607 = vld [vmem:[#allocation2 + $0x11b0] sm:$0xff]
    %v608 = vld [vmem:[#allocation2 + $0x11b8] sm:$0xff]
    %v609 = vld [vmem:[#allocation2 + $0x11c0] sm:$0xff]
    %v610 = vld [vmem:[#allocation2 + $0x11c8] sm:$0xff]
    %v611 = vld [vmem:[#allocation2 + $0x11d0] sm:$0xff]
    %v612 = vld [vmem:[#allocation2 + $0x11d8] sm:$0xff]
    %v613 = vld [vmem:[#allocation2 + $0x11e0] sm:$0xff]
    %v614 = vld [vmem:[#allocation2 + $0x11e8] sm:$0xff]
    %v615 = vld [vmem:[#allocation2 + $0x11f0] sm:$0xff]
    %v616 = vld [vmem:[#allocation2 + $0x11f8] sm:$0xff]
    %v617 = vld [vmem:[#allocation2 + $0x1200] sm:$0xff]
    %v618 = vld [vmem:[#allocation2 + $0x1208] sm:$0xff]
    %v619 = vld [vmem:[#allocation2 + $0x1210] sm:$0xff]
    %v620 = vld [vmem:[#allocation2 + $0x1218] sm:$0xff]
    %v621 = vld [vmem:[#allocation2 + $0x1220] sm:$0xff]
    %v622 = vld [vmem:[#allocation2 + $0x1228] sm:$0xff]
    %v623 = vld [vmem:[#allocation2 + $0x1230] sm:$0xff]
    %v624 = vld [vmem:[#allocation2 + $0x1238] sm:$0xff]
    %v625 = vld [vmem:[#allocation2 + $0x1240] sm:$0xff]
    %v626 = vld [vmem:[#allocation2 + $0x1248] sm:$0xff]
    %v627 = vld [vmem:[#allocation2 + $0x1250] sm:$0xff]
    %v628 = vld [vmem:[#allocation2 + $0x1258] sm:$0xff]
    %v629 = vmax.f32 %v41, 0.0
    %v630 = vmax.f32 %v42, 0.0
    %v631 = vmax.f32 %v43, 0.0
    %v632 = vmax.f32 %v44, 0.0
    %v633 = vmax.f32 %v45, 0.0
    %v634 = vmax.f32 %v46, 0.0
    %v635 = vmax.f32 %v47, 0.0
    %v636 = vmax.f32 %v48, 0.0
    %v637 = vmax.f32 %v49, 0.0
    %v638 = vmax.f32 %v50, 0.0
    %v639 = vmax.f32 %v51, 0.0
    %v640 = vmax.f32 %v52, 0.0
    %v641 = vmax.f32 %v53, 0.0
    %v642 = vmax.f32 %v54, 0.0
    %v643 = vmax.f32 %v55, 0.0
    %v644 = vmax.f32 %v56, 0.0
    %v645 = vmax.f32 %v57, 0.0
    %v646 = vmax.f32 %v58, 0.0
    %v647 = vmax.f32 %v59, 0.0
    %v648 = vmax.f32 %v60, 0.0
    %v649 = vmax.f32 %v61, 0.0
    %v650 = vmax.f32 %v62, 0.0
    %v651 = vmax.f32 %v63, 0.0
    %v652 = vmax.f32 %v64, 0.0
    %v653 = vmax.f32 %v65, 0.0
    %v654 = vmax.f32 %v66, 0.0
    %v655 = vmax.f32 %v67, 0.0
    %v656 = vmax.f32 %v68, 0.0
    %v657 = vmax.f32 %v69, 0.0
    %v658 = vmax.f32 %v70, 0.0
    %v659 = vmax.f32 %v71, 0.0
    %v660 = vmax.f32 %v72, 0.0
    %v661 = vmax.f32 %v73, 0.0
    %v662 = vmax.f32 %v74, 0.0
    %v663 = vmax.f32 %v75, 0.0
    %v664 = vmax.f32 %v76, 0.0
    %v665 = vmax.f32 %v77, 0.0
    %v666 = vmax.f32 %v78, 0.0
    %v667 = vmax.f32 %v79, 0.0
    %v668 = vmax.f32 %v80, 0.0
    %v669 = vmax.f32 %v81, 0.0
    %v670 = vmax.f32 %v82, 0.0
    %v671 = vmax.f32 %v83, 0.0
    %v672 = vmax.f32 %v84, 0.0
    %v673 = vmax.f32 %v85, 0.0
    %v674 = vmax.f32 %v86, 0.0
    %v675 = vmax.f32 %v87, 0.0
    %v676 = vmax.f32 %v88, 0.0
    %v677 = vmax.f32 %v89, 0.0
    %v678 = vmax.f32 %v90, 0.0
    %v679 = vmax.f32 %v91, 0.0
    %v680 = vmax.f32 %v92, 0.0
    %v681 = vmax.f32 %v93, 0.0
    %v682 = vmax.f32 %v94, 0.0
    %v683 = vmax.f32 %v95, 0.0
    %v684 = vmax.f32 %v96, 0.0
    %v685 = vmax.f32 %v97, 0.0
    %v686 = vmax.f32 %v98, 0.0
    %v687 = vmax.f32 %v99, 0.0
    %v688 = vmax.f32 %v100, 0.0
    %v689 = vmax.f32 %v101, 0.0
    %v690 = vmax.f32 %v102, 0.0
    %v691 = vmax.f32 %v103, 0.0
    %v692 = vmax.f32 %v104, 0.0
    %v693 = vmax.f32 %v105, 0.0
    %v694 = vmax.f32 %v106, 0.0
    %v695 = vmax.f32 %v107, 0.0
    %v696 = vmax.f32 %v108, 0.0
    %v697 = vmax.f32 %v109, 0.0
    %v698 = vmax.f32 %v110, 0.0
    %v699 = vmax.f32 %v111, 0.0
    %v700 = vmax.f32 %v112, 0.0
    %v701 = vmax.f32 %v113, 0.0
    %v702 = vmax.f32 %v114, 0.0
    %v703 = vmax.f32 %v115, 0.0
    %v704 = vmax.f32 %v116, 0.0
    %v705 = vmax.f32 %v117, 0.0
    %v706 = vmax.f32 %v118, 0.0
    %v707 = vmax.f32 %v119, 0.0
    %v708 = vmax.f32 %v120, 0.0
    %v709 = vmax.f32 %v121, 0.0
    %v710 = vmax.f32 %v122, 0.0
    %v711 = vmax.f32 %v123, 0.0
    %v712 = vmax.f32 %v124, 0.0
    %v713 = vmax.f32 %v125, 0.0
    %v714 = vmax.f32 %v126, 0.0
    %v715 = vmax.f32 %v127, 0.0
    %v716 = vmax.f32 %v128, 0.0
    %v717 = vmax.f32 %v129, 0.0
    %v718 = vmax.f32 %v130, 0.0
    %v719 = vmax.f32 %v131, 0.0
    %v720 = vmax.f32 %v132, 0.0
    %v721 = vmax.f32 %v133, 0.0
    %v722 = vmax.f32 %v134, 0.0
    %v723 = vmax.f32 %v135, 0.0
    %v724 = vmax.f32 %v136, 0.0
    %v725 = vmax.f32 %v137, 0.0
    %v726 = vmax.f32 %v138, 0.0
    %v727 = vmax.f32 %v139, 0.0
    %v728 = vmax.f32 %v140, 0.0
    %v729 = vmax.f32 %v141, 0.0
    %v730 = vmax.f32 %v142, 0.0
    %v731 = vmax.f32 %v143, 0.0
    %v732 = vmax.f32 %v144, 0.0
    %v733 = vmax.f32 %v145, 0.0
    %v734 = vmax.f32 %v146, 0.0
    %v735 = vmax.f32 %v147, 0.0
    %v736 = vmax.f32 %v148, 0.0
    %v737 = vmax.f32 %v149, 0.0
    %v738 = vmax.f32 %v150, 0.0
    %v739 = vmax.f32 %v151, 0.0
    %v740 = vmax.f32 %v152, 0.0
    %v741 = vmax.f32 %v153, 0.0
    %v742 = vmax.f32 %v154, 0.0
    %v743 = vmax.f32 %v155, 0.0
    %v744 = vmax.f32 %v156, 0.0
    %v745 = vmax.f32 %v157, 0.0
    %v746 = vmax.f32 %v158, 0.0
    %v747 = vmax.f32 %v159, 0.0
    %v748 = vmax.f32 %v160, 0.0
    %v749 = vmax.f32 %v161, 0.0
    %v750 = vmax.f32 %v162, 0.0
    %v751 = vmax.f32 %v163, 0.0
    %v752 = vmax.f32 %v164, 0.0
    %v753 = vmax.f32 %v165, 0.0
    %v754 = vmax.f32 %v166, 0.0
    %v755 = vmax.f32 %v167, 0.0
    %v756 = vmax.f32 %v168, 0.0
    %v757 = vmax.f32 %v169, 0.0
    %v758 = vmax.f32 %v170, 0.0
    %v759 = vmax.f32 %v171, 0.0
    %v760 = vmax.f32 %v172, 0.0
    %v761 = vmax.f32 %v173, 0.0
    %v762 = vmax.f32 %v174, 0.0
    %v763 = vmax.f32 %v175, 0.0
    %v764 = vmax.f32 %v176, 0.0
    %v765 = vmax.f32 %v177, 0.0
    %v766 = vmax.f32 %v178, 0.0
    %v767 = vmax.f32 %v179, 0.0
    %v768 = vmax.f32 %v180, 0.0
    %v769 = vmax.f32 %v181, 0.0
    %v770 = vmax.f32 %v182, 0.0
    %v771 = vmax.f32 %v183, 0.0
    %v772 = vmax.f32 %v184, 0.0
    %v773 = vmax.f32 %v185, 0.0
    %v774 = vmax.f32 %v186, 0.0
    %v775 = vmax.f32 %v187, 0.0
    %v776 = vmax.f32 %v188, 0.0
    %v777 = vmax.f32 %v189, 0.0
    %v778 = vmax.f32 %v190, 0.0
    %v779 = vmax.f32 %v191, 0.0
    %v780 = vmax.f32 %v192, 0.0
    %v781 = vmax.f32 %v193, 0.0
    %v782 = vmax.f32 %v194, 0.0
    %v783 = vmax.f32 %v195, 0.0
    %v784 = vmax.f32 %v196, 0.0
    %v785 = vmax.f32 %v197, 0.0
    %v786 = vmax.f32 %v198, 0.0
    %v787 = vmax.f32 %v199, 0.0
    %v788 = vmax.f32 %v200, 0.0
    %v789 = vmax.f32 %v201, 0.0
    %v790 = vmax.f32 %v202, 0.0
    %v791 = vmax.f32 %v203, 0.0
    %v792 = vmax.f32 %v204, 0.0
    %v793 = vmax.f32 %v205, 0.0
    %v794 = vmax.f32 %v206, 0.0
    %v795 = vmax.f32 %v207, 0.0
    %v796 = vmax.f32 %v208, 0.0
    %v797 = vmax.f32 %v209, 0.0
    %v798 = vmax.f32 %v210, 0.0
    %v799 = vmax.f32 %v211, 0.0
    %v800 = vmax.f32 %v212, 0.0
    %v801 = vmax.f32 %v213, 0.0
    %v802 = vmax.f32 %v214, 0.0
    %v803 = vmax.f32 %v215, 0.0
    %v804 = vmax.f32 %v216, 0.0
    %v805 = vmax.f32 %v217, 0.0
    %v806 = vmax.f32 %v218, 0.0
    %v807 = vmax.f32 %v219, 0.0
    %v808 = vmax.f32 %v220, 0.0
    %v809 = vmax.f32 %v221, 0.0
    %v810 = vmax.f32 %v222, 0.0
    %v811 = vmax.f32 %v223, 0.0
    %v812 = vmax.f32 %v224, 0.0
    %v813 = vmax.f32 %v225, 0.0
    %v814 = vmax.f32 %v226, 0.0
    %v815 = vmax.f32 %v227, 0.0
    %v816 = vmax.f32 %v228, 0.0
    %v817 = vmax.f32 %v229, 0.0
    %v818 = vmax.f32 %v230, 0.0
    %v819 = vmax.f32 %v231, 0.0
    %v820 = vmax.f32 %v232, 0.0
    %v821 = vmax.f32 %v233, 0.0
    %v822 = vmax.f32 %v234, 0.0
    %v823 = vmax.f32 %v235, 0.0
    %v824 = vmax.f32 %v236, 0.0
    %v825 = vmax.f32 %v237, 0.0
    %v826 = vmax.f32 %v238, 0.0
    %v827 = vmax.f32 %v239, 0.0
    %v828 = vmax.f32 %v240, 0.0
    %v829 = vmax.f32 %v241, 0.0
    %v830 = vmax.f32 %v242, 0.0
    %v831 = vmax.f32 %v243, 0.0
    %v832 = vmax.f32 %v244, 0.0
    %v833 = vmax.f32 %v245, 0.0
    %v834 = vmax.f32 %v246, 0.0
    %v835 = vmax.f32 %v247, 0.0
    %v836 = vmax.f32 %v248, 0.0
    %v837 = vmax.f32 %v249, 0.0
    %v838 = vmax.f32 %v250, 0.0
    %v839 = vmax.f32 %v251, 0.0
    %v840 = vmax.f32 %v252, 0.0
    %v841 = vmax.f32 %v253, 0.0
    %v842 = vmax.f32 %v254, 0.0
    %v843 = vmax.f32 %v255, 0.0
    %v844 = vmax.f32 %v256, 0.0
    %v845 = vmax.f32 %v257, 0.0
    %v846 = vmax.f32 %v258, 0.0
    %v847 = vmax.f32 %v259, 0.0
    %v848 = vmax.f32 %v260, 0.0
    %v849 = vmax.f32 %v261, 0.0
    %v850 = vmax.f32 %v262, 0.0
    %v851 = vmax.f32 %v263, 0.0
    %v852 = vmax.f32 %v264, 0.0
    %v853 = vmax.f32 %v265, 0.0
    %v854 = vmax.f32 %v266, 0.0
    %v855 = vmax.f32 %v267, 0.0
    %v856 = vmax.f32 %v268, 0.0
    %v857 = vmax.f32 %v269, 0.0
    %v858 = vmax.f32 %v270, 0.0
    %v859 = vmax.f32 %v271, 0.0
    %v860 = vmax.f32 %v272, 0.0
    %v861 = vmax.f32 %v273, 0.0
    %v862 = vmax.f32 %v274, 0.0
    %v863 = vmax.f32 %v275, 0.0
    %v864 = vmax.f32 %v276, 0.0
    %v865 = vmax.f32 %v277, 0.0
    %v866 = vmax.f32 %v278, 0.0
    %v867 = vmax.f32 %v279, 0.0
    %v868 = vmax.f32 %v280, 0.0
    %v869 = vmax.f32 %v281, 0.0
    %v870 = vmax.f32 %v282, 0.0
    %v871 = vmax.f32 %v283, 0.0
    %v872 = vmax.f32 %v284, 0.0
    %v873 = vmax.f32 %v285, 0.0
    %v874 = vmax.f32 %v286, 0.0
    %v875 = vmax.f32 %v287, 0.0
    %v876 = vmax.f32 %v288, 0.0
    %v877 = vmax.f32 %v289, 0.0
    %v878 = vmax.f32 %v290, 0.0
    %v879 = vmax.f32 %v291, 0.0
    %v880 = vmax.f32 %v292, 0.0
    %v881 = vmax.f32 %v293, 0.0
    %v882 = vmax.f32 %v294, 0.0
    %v883 = vmax.f32 %v295, 0.0
    %v884 = vmax.f32 %v296, 0.0
    %v885 = vmax.f32 %v297, 0.0
    %v886 = vmax.f32 %v298, 0.0
    %v887 = vmax.f32 %v299, 0.0
    %v888 = vmax.f32 %v300, 0.0
    %v889 = vmax.f32 %v301, 0.0
    %v890 = vmax.f32 %v302, 0.0
    %v891 = vmax.f32 %v303, 0.0
    %v892 = vmax.f32 %v304, 0.0
    %v893 = vmax.f32 %v305, 0.0
    %v894 = vmax.f32 %v306, 0.0
    %v895 = vmax.f32 %v307, 0.0
    %v896 = vmax.f32 %v308, 0.0
    %v897 = vmax.f32 %v309, 0.0
    %v898 = vmax.f32 %v310, 0.0
    %v899 = vmax.f32 %v311, 0.0
    %v900 = vmax.f32 %v312, 0.0
    %v901 = vmax.f32 %v313, 0.0
    %v902 = vmax.f32 %v314, 0.0
    %v903 = vmax.f32 %v315, 0.0
    %v904 = vmax.f32 %v316, 0.0
    %v905 = vmax.f32 %v317, 0.0
    %v906 = vmax.f32 %v318, 0.0
    %v907 = vmax.f32 %v319, 0.0
    %v908 = vmax.f32 %v320, 0.0
    %v909 = vmax.f32 %v321, 0.0
    %v910 = vmax.f32 %v322, 0.0
    %v911 = vmax.f32 %v323, 0.0
    %v912 = vmax.f32 %v324, 0.0
    %v913 = vmax.f32 %v325, 0.0
    %v914 = vmax.f32 %v326, 0.0
    %v915 = vmax.f32 %v327, 0.0
    %v916 = vmax.f32 %v328, 0.0
    %v917 = vmax.f32 %v329, 0.0
    %v918 = vmax.f32 %v330, 0.0
    %v919 = vmax.f32 %v331, 0.0
    %v920 = vmax.f32 %v332, 0.0
    %v921 = vmax.f32 %v333, 0.0
    %v922 = vmax.f32 %v334, 0.0
    %v923 = vmax.f32 %v335, 0.0
    %v924 = vmax.f32 %v336, 0.0
    %v925 = vmax.f32 %v337, 0.0
    %v926 = vmax.f32 %v338, 0.0
    %v927 = vmax.f32 %v339, 0.0
    %v928 = vmax.f32 %v340, 0.0
    %v929 = vmax.f32 %v341, 0.0
    %v930 = vmax.f32 %v342, 0.0
    %v931 = vmax.f32 %v343, 0.0
    %v932 = vmax.f32 %v344, 0.0
    %v933 = vmax.f32 %v345, 0.0
    %v934 = vmax.f32 %v346, 0.0
    %v935 = vmax.f32 %v347, 0.0
    %v936 = vmax.f32 %v348, 0.0
    %v937 = vmax.f32 %v349, 0.0
    %v938 = vmax.f32 %v350, 0.0
    %v939 = vmax.f32 %v351, 0.0
    %v940 = vmax.f32 %v352, 0.0
    %v941 = vmax.f32 %v353, 0.0
    %v942 = vmax.f32 %v354, 0.0
    %v943 = vmax.f32 %v355, 0.0
    %v944 = vmax.f32 %v356, 0.0
    %v945 = vmax.f32 %v357, 0.0
    %v946 = vmax.f32 %v358, 0.0
    %v947 = vmax.f32 %v359, 0.0
    %v948 = vmax.f32 %v360, 0.0
    %v949 = vmax.f32 %v361, 0.0
    %v950 = vmax.f32 %v362, 0.0
    %v951 = vmax.f32 %v363, 0.0
    %v952 = vmax.f32 %v364, 0.0
    %v953 = vmax.f32 %v365, 0.0
    %v954 = vmax.f32 %v366, 0.0
    %v955 = vmax.f32 %v367, 0.0
    %v956 = vmax.f32 %v368, 0.0
    %v957 = vmax.f32 %v369, 0.0
    %v958 = vmax.f32 %v370, 0.0
    %v959 = vmax.f32 %v371, 0.0
    %v960 = vmax.f32 %v372, 0.0
    %v961 = vmax.f32 %v373, 0.0
    %v962 = vmax.f32 %v374, 0.0
    %v963 = vmax.f32 %v375, 0.0
    %v964 = vmax.f32 %v376, 0.0
    %v965 = vmax.f32 %v377, 0.0
    %v966 = vmax.f32 %v378, 0.0
    %v967 = vmax.f32 %v379, 0.0
    %v968 = vmax.f32 %v380, 0.0
    %v969 = vmax.f32 %v381, 0.0
    %v970 = vmax.f32 %v382, 0.0
    %v971 = vmax.f32 %v383, 0.0
    %v972 = vmax.f32 %v384, 0.0
    %v973 = vmax.f32 %v385, 0.0
    %v974 = vmax.f32 %v386, 0.0
    %v975 = vmax.f32 %v387, 0.0
    %v976 = vmax.f32 %v388, 0.0
    %v977 = vmax.f32 %v389, 0.0
    %v978 = vmax.f32 %v390, 0.0
    %v979 = vmax.f32 %v391, 0.0
    %v980 = vmax.f32 %v392, 0.0
    %v981 = vmax.f32 %v393, 0.0
    %v982 = vmax.f32 %v394, 0.0
    %v983 = vmax.f32 %v395, 0.0
    %v984 = vmax.f32 %v396, 0.0
    %v985 = vmax.f32 %v397, 0.0
    %v986 = vmax.f32 %v398, 0.0
    %v987 = vmax.f32 %v399, 0.0
    %v988 = vmax.f32 %v400, 0.0
    %v989 = vmax.f32 %v401, 0.0
    %v990 = vmax.f32 %v402, 0.0
    %v991 = vmax.f32 %v403, 0.0
    %v992 = vmax.f32 %v404, 0.0
    %v993 = vmax.f32 %v405, 0.0
    %v994 = vmax.f32 %v406, 0.0
    %v995 = vmax.f32 %v407, 0.0
    %v996 = vmax.f32 %v408, 0.0
    %v997 = vmax.f32 %v409, 0.0
    %v998 = vmax.f32 %v410, 0.0
    %v999 = vmax.f32 %v411, 0.0
    %v1000 = vmax.f32 %v412, 0.0
    %v1001 = vmax.f32 %v413, 0.0
    %v1002 = vmax.f32 %v414, 0.0
    %v1003 = vmax.f32 %v415, 0.0
    %v1004 = vmax.f32 %v416, 0.0
    %v1005 = vmax.f32 %v417, 0.0
    %v1006 = vmax.f32 %v418, 0.0
    %v1007 = vmax.f32 %v419, 0.0
    %v1008 = vmax.f32 %v420, 0.0
    %v1009 = vmax.f32 %v421, 0.0
    %v1010 = vmax.f32 %v422, 0.0
    %v1011 = vmax.f32 %v423, 0.0
    %v1012 = vmax.f32 %v424, 0.0
    %v1013 = vmax.f32 %v425, 0.0
    %v1014 = vmax.f32 %v426, 0.0
    %v1015 = vmax.f32 %v427, 0.0
    %v1016 = vmax.f32 %v428, 0.0
    %v1017 = vmax.f32 %v429, 0.0
    %v1018 = vmax.f32 %v430, 0.0
    %v1019 = vmax.f32 %v431, 0.0
    %v1020 = vmax.f32 %v432, 0.0
    %v1021 = vmax.f32 %v433, 0.0
    %v1022 = vmax.f32 %v434, 0.0
    %v1023 = vmax.f32 %v435, 0.0
    %v1024 = vmax.f32 %v436, 0.0
    %v1025 = vmax.f32 %v437, 0.0
    %v1026 = vmax.f32 %v438, 0.0
    %v1027 = vmax.f32 %v439, 0.0
    %v1028 = vmax.f32 %v440, 0.0
    %v1029 = vmax.f32 %v441, 0.0
    %v1030 = vmax.f32 %v442, 0.0
    %v1031 = vmax.f32 %v443, 0.0
    %v1032 = vmax.f32 %v444, 0.0
    %v1033 = vmax.f32 %v445, 0.0
    %v1034 = vmax.f32 %v446, 0.0
    %v1035 = vmax.f32 %v447, 0.0
    %v1036 = vmax.f32 %v448, 0.0
    %v1037 = vmax.f32 %v449, 0.0
    %v1038 = vmax.f32 %v450, 0.0
    %v1039 = vmax.f32 %v451, 0.0
    %v1040 = vmax.f32 %v452, 0.0
    %v1041 = vmax.f32 %v453, 0.0
    %v1042 = vmax.f32 %v454, 0.0
    %v1043 = vmax.f32 %v455, 0.0
    %v1044 = vmax.f32 %v456, 0.0
    %v1045 = vmax.f32 %v457, 0.0
    %v1046 = vmax.f32 %v458, 0.0
    %v1047 = vmax.f32 %v459, 0.0
    %v1048 = vmax.f32 %v460, 0.0
    %v1049 = vmax.f32 %v461, 0.0
    %v1050 = vmax.f32 %v462, 0.0
    %v1051 = vmax.f32 %v463, 0.0
    %v1052 = vmax.f32 %v464, 0.0
    %v1053 = vmax.f32 %v465, 0.0
    %v1054 = vmax.f32 %v466, 0.0
    %v1055 = vmax.f32 %v467, 0.0
    %v1056 = vmax.f32 %v468, 0.0
    %v1057 = vmax.f32 %v469, 0.0
    %v1058 = vmax.f32 %v470, 0.0
    %v1059 = vmax.f32 %v471, 0.0
    %v1060 = vmax.f32 %v472, 0.0
    %v1061 = vmax.f32 %v473, 0.0
    %v1062 = vmax.f32 %v474, 0.0
    %v1063 = vmax.f32 %v475, 0.0
    %v1064 = vmax.f32 %v476, 0.0
    %v1065 = vmax.f32 %v477, 0.0
    %v1066 = vmax.f32 %v478, 0.0
    %v1067 = vmax.f32 %v479, 0.0
    %v1068 = vmax.f32 %v480, 0.0
    %v1069 = vmax.f32 %v481, 0.0
    %v1070 = vmax.f32 %v482, 0.0
    %v1071 = vmax.f32 %v483, 0.0
    %v1072 = vmax.f32 %v484, 0.0
    %v1073 = vmax.f32 %v485, 0.0
    %v1074 = vmax.f32 %v486, 0.0
    %v1075 = vmax.f32 %v487, 0.0
    %v1076 = vmax.f32 %v488, 0.0
    %v1077 = vmax.f32 %v489, 0.0
    %v1078 = vmax.f32 %v490, 0.0
    %v1079 = vmax.f32 %v491, 0.0
    %v1080 = vmax.f32 %v492, 0.0
    %v1081 = vmax.f32 %v493, 0.0
    %v1082 = vmax.f32 %v494, 0.0
    %v1083 = vmax.f32 %v495, 0.0
    %v1084 = vmax.f32 %v496, 0.0
    %v1085 = vmax.f32 %v497, 0.0
    %v1086 = vmax.f32 %v498, 0.0
    %v1087 = vmax.f32 %v499, 0.0
    %v1088 = vmax.f32 %v500, 0.0
    %v1089 = vmax.f32 %v501, 0.0
    %v1090 = vmax.f32 %v502, 0.0
    %v1091 = vmax.f32 %v503, 0.0
    %v1092 = vmax.f32 %v504, 0.0
    %v1093 = vmax.f32 %v505, 0.0
    %v1094 = vmax.f32 %v506, 0.0
    %v1095 = vmax.f32 %v507, 0.0
    %v1096 = vmax.f32 %v508, 0.0
    %v1097 = vmax.f32 %v509, 0.0
    %v1098 = vmax.f32 %v510, 0.0
    %v1099 = vmax.f32 %v511, 0.0
    %v1100 = vmax.f32 %v512, 0.0
    %v1101 = vmax.f32 %v513, 0.0
    %v1102 = vmax.f32 %v514, 0.0
    %v1103 = vmax.f32 %v515, 0.0
    %v1104 = vmax.f32 %v516, 0.0
    %v1105 = vmax.f32 %v517, 0.0
    %v1106 = vmax.f32 %v518, 0.0
    %v1107 = vmax.f32 %v519, 0.0
    %v1108 = vmax.f32 %v520, 0.0
    %v1109 = vmax.f32 %v521, 0.0
    %v1110 = vmax.f32 %v522, 0.0
    %v1111 = vmax.f32 %v523, 0.0
    %v1112 = vmax.f32 %v524, 0.0
    %v1113 = vmax.f32 %v525, 0.0
    %v1114 = vmax.f32 %v526, 0.0
    %v1115 = vmax.f32 %v527, 0.0
    %v1116 = vmax.f32 %v528, 0.0
    %v1117 = vmax.f32 %v529, 0.0
    %v1118 = vmax.f32 %v530, 0.0
    %v1119 = vmax.f32 %v531, 0.0
    %v1120 = vmax.f32 %v532, 0.0
    %v1121 = vmax.f32 %v533, 0.0
    %v1122 = vmax.f32 %v534, 0.0
    %v1123 = vmax.f32 %v535, 0.0
    %v1124 = vmax.f32 %v536, 0.0
    %v1125 = vmax.f32 %v537, 0.0
    %v1126 = vmax.f32 %v538, 0.0
    %v1127 = vmax.f32 %v539, 0.0
    %v1128 = vmax.f32 %v540, 0.0
    %v1129 = vmax.f32 %v541, 0.0
    %v1130 = vmax.f32 %v542, 0.0
    %v1131 = vmax.f32 %v543, 0.0
    %v1132 = vmax.f32 %v544, 0.0
    %v1133 = vmax.f32 %v545, 0.0
    %v1134 = vmax.f32 %v546, 0.0
    %v1135 = vmax.f32 %v547, 0.0
    %v1136 = vmax.f32 %v548, 0.0
    %v1137 = vmax.f32 %v549, 0.0
    %v1138 = vmax.f32 %v550, 0.0
    %v1139 = vmax.f32 %v551, 0.0
    %v1140 = vmax.f32 %v552, 0.0
    %v1141 = vmax.f32 %v553, 0.0
    %v1142 = vmax.f32 %v554, 0.0
    %v1143 = vmax.f32 %v555, 0.0
    %v1144 = vmax.f32 %v556, 0.0
    %v1145 = vmax.f32 %v557, 0.0
    %v1146 = vmax.f32 %v558, 0.0
    %v1147 = vmax.f32 %v559, 0.0
    %v1148 = vmax.f32 %v560, 0.0
    %v1149 = vmax.f32 %v561, 0.0
    %v1150 = vmax.f32 %v562, 0.0
    %v1151 = vmax.f32 %v563, 0.0
    %v1152 = vmax.f32 %v564, 0.0
    %v1153 = vmax.f32 %v565, 0.0
    %v1154 = vmax.f32 %v566, 0.0
    %v1155 = vmax.f32 %v567, 0.0
    %v1156 = vmax.f32 %v568, 0.0
    %v1157 = vmax.f32 %v569, 0.0
    %v1158 = vmax.f32 %v570, 0.0
    %v1159 = vmax.f32 %v571, 0.0
    %v1160 = vmax.f32 %v572, 0.0
    %v1161 = vmax.f32 %v573, 0.0
    %v1162 = vmax.f32 %v574, 0.0
    %v1163 = vmax.f32 %v575, 0.0
    %v1164 = vmax.f32 %v576, 0.0
    %v1165 = vmax.f32 %v577, 0.0
    %v1166 = vmax.f32 %v578, 0.0
    %v1167 = vmax.f32 %v579, 0.0
    %v1168 = vmax.f32 %v580, 0.0
    %v1169 = vmax.f32 %v581, 0.0
    %v1170 = vmax.f32 %v582, 0.0
    %v1171 = vmax.f32 %v583, 0.0
    %v1172 = vmax.f32 %v584, 0.0
    %v1173 = vmax.f32 %v585, 0.0
    %v1174 = vmax.f32 %v586, 0.0
    %v1175 = vmax.f32 %v587, 0.0
    %v1176 = vmax.f32 %v588, 0.0
    %v1177 = vmax.f32 %v589, 0.0
    %v1178 = vmax.f32 %v590, 0.0
    %v1179 = vmax.f32 %v591, 0.0
    %v1180 = vmax.f32 %v592, 0.0
    %v1181 = vmax.f32 %v593, 0.0
    %v1182 = vmax.f32 %v594, 0.0
    %v1183 = vmax.f32 %v595, 0.0
    %v1184 = vmax.f32 %v596, 0.0
    %v1185 = vmax.f32 %v597, 0.0
    %v1186 = vmax.f32 %v598, 0.0
    %v1187 = vmax.f32 %v599, 0.0
    %v1188 = vmax.f32 %v600, 0.0
    %v1189 = vmax.f32 %v601, 0.0
    %v1190 = vmax.f32 %v602, 0.0
    %v1191 = vmax.f32 %v603, 0.0
    %v1192 = vmax.f32 %v604, 0.0
    %v1193 = vmax.f32 %v605, 0.0
    %v1194 = vmax.f32 %v606, 0.0
    %v1195 = vmax.f32 %v607, 0.0
    %v1196 = vmax.f32 %v608, 0.0
    %v1197 = vmax.f32 %v609, 0.0
    %v1198 = vmax.f32 %v610, 0.0
    %v1199 = vmax.f32 %v611, 0.0
    %v1200 = vmax.f32 %v612, 0.0
    %v1201 = vmax.f32 %v613, 0.0
    %v1202 = vmax.f32 %v614, 0.0
    %v1203 = vmax.f32 %v615, 0.0
    %v1204 = vmax.f32 %v616, 0.0
    %v1205 = vmax.f32 %v617, 0.0
    %v1206 = vmax.f32 %v618, 0.0
    %v1207 = vmax.f32 %v619, 0.0
    %v1208 = vmax.f32 %v620, 0.0
    %v1209 = vmax.f32 %v621, 0.0
    %v1210 = vmax.f32 %v622, 0.0
    %v1211 = vmax.f32 %v623, 0.0
    %v1212 = vmax.f32 %v624, 0.0
    %v1213 = vmax.f32 %v625, 0.0
    %v1214 = vmax.f32 %v626, 0.0
    %v1215 = vmax.f32 %v627, 0.0
    %v1216 = vmax.f32 %v628, 0.0
    %v1217 = vpack.c.bf16 %v636, %v629
    %v1218 = vpack.c.bf16 %v637, %v630
    %v1219 = vpack.c.bf16 %v638, %v631
    %v1220 = vpack.c.bf16 %v639, %v632
    %v1221 = vpack.c.bf16 %v640, %v633
    %v1222 = vpack.c.bf16 %v641, %v634
    %v1223 = vpack.c.bf16 %v642, %v635
    %v1224 = vpack.c.bf16 %v650, %v643
    %v1225 = vpack.c.bf16 %v651, %v644
    %v1226 = vpack.c.bf16 %v652, %v645
    %v1227 = vpack.c.bf16 %v653, %v646
    %v1228 = vpack.c.bf16 %v654, %v647
    %v1229 = vpack.c.bf16 %v655, %v648
    %v1230 = vpack.c.bf16 %v656, %v649
    %v1231 = vpack.c.bf16 %v664, %v657
    %v1232 = vpack.c.bf16 %v665, %v658
    %v1233 = vpack.c.bf16 %v666, %v659
    %v1234 = vpack.c.bf16 %v667, %v660
    %v1235 = vpack.c.bf16 %v668, %v661
    %v1236 = vpack.c.bf16 %v669, %v662
    %v1237 = vpack.c.bf16 %v670, %v663
    %v1238 = vpack.c.bf16 %v678, %v671
    %v1239 = vpack.c.bf16 %v679, %v672
    %v1240 = vpack.c.bf16 %v680, %v673
    %v1241 = vpack.c.bf16 %v681, %v674
    %v1242 = vpack.c.bf16 %v682, %v675
    %v1243 = vpack.c.bf16 %v683, %v676
    %v1244 = vpack.c.bf16 %v684, %v677
    %v1245 = vpack.c.bf16 %v692, %v685
    %v1246 = vpack.c.bf16 %v693, %v686
    %v1247 = vpack.c.bf16 %v694, %v687
    %v1248 = vpack.c.bf16 %v695, %v688
    %v1249 = vpack.c.bf16 %v696, %v689
    %v1250 = vpack.c.bf16 %v697, %v690
    %v1251 = vpack.c.bf16 %v698, %v691
    %v1252 = vpack.c.bf16 %v706, %v699
    %v1253 = vpack.c.bf16 %v707, %v700
    %v1254 = vpack.c.bf16 %v708, %v701
    %v1255 = vpack.c.bf16 %v709, %v702
    %v1256 = vpack.c.bf16 %v710, %v703
    %v1257 = vpack.c.bf16 %v711, %v704
    %v1258 = vpack.c.bf16 %v712, %v705
    %v1259 = vpack.c.bf16 %v720, %v713
    %v1260 = vpack.c.bf16 %v721, %v714
    %v1261 = vpack.c.bf16 %v722, %v715
    %v1262 = vpack.c.bf16 %v723, %v716
    %v1263 = vpack.c.bf16 %v724, %v717
    %v1264 = vpack.c.bf16 %v725, %v718
    %v1265 = vpack.c.bf16 %v726, %v719
    %v1266 = vpack.c.bf16 %v734, %v727
    %v1267 = vpack.c.bf16 %v735, %v728
    %v1268 = vpack.c.bf16 %v736, %v729
    %v1269 = vpack.c.bf16 %v737, %v730
    %v1270 = vpack.c.bf16 %v738, %v731
    %v1271 = vpack.c.bf16 %v739, %v732
    %v1272 = vpack.c.bf16 %v740, %v733
    %v1273 = vpack.c.bf16 %v748, %v741
    %v1274 = vpack.c.bf16 %v749, %v742
    %v1275 = vpack.c.bf16 %v750, %v743
    %v1276 = vpack.c.bf16 %v751, %v744
    %v1277 = vpack.c.bf16 %v752, %v745
    %v1278 = vpack.c.bf16 %v753, %v746
    %v1279 = vpack.c.bf16 %v754, %v747
    %v1280 = vpack.c.bf16 %v762, %v755
    %v1281 = vpack.c.bf16 %v763, %v756
    %v1282 = vpack.c.bf16 %v764, %v757
    %v1283 = vpack.c.bf16 %v765, %v758
    %v1284 = vpack.c.bf16 %v766, %v759
    %v1285 = vpack.c.bf16 %v767, %v760
    %v1286 = vpack.c.bf16 %v768, %v761
    %v1287 = vpack.c.bf16 %v776, %v769
    %v1288 = vpack.c.bf16 %v777, %v770
    %v1289 = vpack.c.bf16 %v778, %v771
    %v1290 = vpack.c.bf16 %v779, %v772
    %v1291 = vpack.c.bf16 %v780, %v773
    %v1292 = vpack.c.bf16 %v781, %v774
    %v1293 = vpack.c.bf16 %v782, %v775
    %v1294 = vpack.c.bf16 %v790, %v783
    %v1295 = vpack.c.bf16 %v791, %v784
    %v1296 = vpack.c.bf16 %v792, %v785
    %v1297 = vpack.c.bf16 %v793, %v786
    %v1298 = vpack.c.bf16 %v794, %v787
    %v1299 = vpack.c.bf16 %v795, %v788
    %v1300 = vpack.c.bf16 %v796, %v789
    %v1301 = vpack.c.bf16 %v804, %v797
    %v1302 = vpack.c.bf16 %v805, %v798
    %v1303 = vpack.c.bf16 %v806, %v799
    %v1304 = vpack.c.bf16 %v807, %v800
    %v1305 = vpack.c.bf16 %v808, %v801
    %v1306 = vpack.c.bf16 %v809, %v802
    %v1307 = vpack.c.bf16 %v810, %v803
    %v1308 = vpack.c.bf16 %v818, %v811
    %v1309 = vpack.c.bf16 %v819, %v812
    %v1310 = vpack.c.bf16 %v820, %v813
    %v1311 = vpack.c.bf16 %v821, %v814
    %v1312 = vpack.c.bf16 %v822, %v815
    %v1313 = vpack.c.bf16 %v823, %v816
    %v1314 = vpack.c.bf16 %v824, %v817
    %v1315 = vpack.c.bf16 %v832, %v825
    %v1316 = vpack.c.bf16 %v833, %v826
    %v1317 = vpack.c.bf16 %v834, %v827
    %v1318 = vpack.c.bf16 %v835, %v828
    %v1319 = vpack.c.bf16 %v836, %v829
    %v1320 = vpack.c.bf16 %v837, %v830
    %v1321 = vpack.c.bf16 %v838, %v831
    %v1322 = vpack.c.bf16 %v846, %v839
    %v1323 = vpack.c.bf16 %v847, %v840
    %v1324 = vpack.c.bf16 %v848, %v841
    %v1325 = vpack.c.bf16 %v849, %v842
    %v1326 = vpack.c.bf16 %v850, %v843
    %v1327 = vpack.c.bf16 %v851, %v844
    %v1328 = vpack.c.bf16 %v852, %v845
    %v1329 = vpack.c.bf16 %v860, %v853
    %v1330 = vpack.c.bf16 %v861, %v854
    %v1331 = vpack.c.bf16 %v862, %v855
    %v1332 = vpack.c.bf16 %v863, %v856
    %v1333 = vpack.c.bf16 %v864, %v857
    %v1334 = vpack.c.bf16 %v865, %v858
    %v1335 = vpack.c.bf16 %v866, %v859
    %v1336 = vpack.c.bf16 %v874, %v867
    %v1337 = vpack.c.bf16 %v875, %v868
    %v1338 = vpack.c.bf16 %v876, %v869
    %v1339 = vpack.c.bf16 %v877, %v870
    %v1340 = vpack.c.bf16 %v878, %v871
    %v1341 = vpack.c.bf16 %v879, %v872
    %v1342 = vpack.c.bf16 %v880, %v873
    %v1343 = vpack.c.bf16 %v888, %v881
    %v1344 = vpack.c.bf16 %v889, %v882
    %v1345 = vpack.c.bf16 %v890, %v883
    %v1346 = vpack.c.bf16 %v891, %v884
    %v1347 = vpack.c.bf16 %v892, %v885
    %v1348 = vpack.c.bf16 %v893, %v886
    %v1349 = vpack.c.bf16 %v894, %v887
    %v1350 = vpack.c.bf16 %v902, %v895
    %v1351 = vpack.c.bf16 %v903, %v896
    %v1352 = vpack.c.bf16 %v904, %v897
    %v1353 = vpack.c.bf16 %v905, %v898
    %v1354 = vpack.c.bf16 %v906, %v899
    %v1355 = vpack.c.bf16 %v907, %v900
    %v1356 = vpack.c.bf16 %v908, %v901
    %v1357 = vpack.c.bf16 %v916, %v909
    %v1358 = vpack.c.bf16 %v917, %v910
    %v1359 = vpack.c.bf16 %v918, %v911
    %v1360 = vpack.c.bf16 %v919, %v912
    %v1361 = vpack.c.bf16 %v920, %v913
    %v1362 = vpack.c.bf16 %v921, %v914
    %v1363 = vpack.c.bf16 %v922, %v915
    %v1364 = vpack.c.bf16 %v930, %v923
    %v1365 = vpack.c.bf16 %v931, %v924
    %v1366 = vpack.c.bf16 %v932, %v925
    %v1367 = vpack.c.bf16 %v933, %v926
    %v1368 = vpack.c.bf16 %v934, %v927
    %v1369 = vpack.c.bf16 %v935, %v928
    %v1370 = vpack.c.bf16 %v936, %v929
    %v1371 = vpack.c.bf16 %v944, %v937
    %v1372 = vpack.c.bf16 %v945, %v938
    %v1373 = vpack.c.bf16 %v946, %v939
    %v1374 = vpack.c.bf16 %v947, %v940
    %v1375 = vpack.c.bf16 %v948, %v941
    %v1376 = vpack.c.bf16 %v949, %v942
    %v1377 = vpack.c.bf16 %v950, %v943
    %v1378 = vpack.c.bf16 %v958, %v951
    %v1379 = vpack.c.bf16 %v959, %v952
    %v1380 = vpack.c.bf16 %v960, %v953
    %v1381 = vpack.c.bf16 %v961, %v954
    %v1382 = vpack.c.bf16 %v962, %v955
    %v1383 = vpack.c.bf16 %v963, %v956
    %v1384 = vpack.c.bf16 %v964, %v957
    %v1385 = vpack.c.bf16 %v972, %v965
    %v1386 = vpack.c.bf16 %v973, %v966
    %v1387 = vpack.c.bf16 %v974, %v967
    %v1388 = vpack.c.bf16 %v975, %v968
    %v1389 = vpack.c.bf16 %v976, %v969
    %v1390 = vpack.c.bf16 %v977, %v970
    %v1391 = vpack.c.bf16 %v978, %v971
    %v1392 = vpack.c.bf16 %v986, %v979
    %v1393 = vpack.c.bf16 %v987, %v980
    %v1394 = vpack.c.bf16 %v988, %v981
    %v1395 = vpack.c.bf16 %v989, %v982
    %v1396 = vpack.c.bf16 %v990, %v983
    %v1397 = vpack.c.bf16 %v991, %v984
    %v1398 = vpack.c.bf16 %v992, %v985
    %v1399 = vpack.c.bf16 %v1000, %v993
    %v1400 = vpack.c.bf16 %v1001, %v994
    %v1401 = vpack.c.bf16 %v1002, %v995
    %v1402 = vpack.c.bf16 %v1003, %v996
    %v1403 = vpack.c.bf16 %v1004, %v997
    %v1404 = vpack.c.bf16 %v1005, %v998
    %v1405 = vpack.c.bf16 %v1006, %v999
    %v1406 = vpack.c.bf16 %v1014, %v1007
    %v1407 = vpack.c.bf16 %v1015, %v1008
    %v1408 = vpack.c.bf16 %v1016, %v1009
    %v1409 = vpack.c.bf16 %v1017, %v1010
    %v1410 = vpack.c.bf16 %v1018, %v1011
    %v1411 = vpack.c.bf16 %v1019, %v1012
    %v1412 = vpack.c.bf16 %v1020, %v1013
    %v1413 = vpack.c.bf16 %v1028, %v1021
    %v1414 = vpack.c.bf16 %v1029, %v1022
    %v1415 = vpack.c.bf16 %v1030, %v1023
    %v1416 = vpack.c.bf16 %v1031, %v1024
    %v1417 = vpack.c.bf16 %v1032, %v1025
    %v1418 = vpack.c.bf16 %v1033, %v1026
    %v1419 = vpack.c.bf16 %v1034, %v1027
    %v1420 = vpack.c.bf16 %v1042, %v1035
    %v1421 = vpack.c.bf16 %v1043, %v1036
    %v1422 = vpack.c.bf16 %v1044, %v1037
    %v1423 = vpack.c.bf16 %v1045, %v1038
    %v1424 = vpack.c.bf16 %v1046, %v1039
    %v1425 = vpack.c.bf16 %v1047, %v1040
    %v1426 = vpack.c.bf16 %v1048, %v1041
    %v1427 = vpack.c.bf16 %v1056, %v1049
    %v1428 = vpack.c.bf16 %v1057, %v1050
    %v1429 = vpack.c.bf16 %v1058, %v1051
    %v1430 = vpack.c.bf16 %v1059, %v1052
    %v1431 = vpack.c.bf16 %v1060, %v1053
    %v1432 = vpack.c.bf16 %v1061, %v1054
    %v1433 = vpack.c.bf16 %v1062, %v1055
    %v1434 = vpack.c.bf16 %v1070, %v1063
    %v1435 = vpack.c.bf16 %v1071, %v1064
    %v1436 = vpack.c.bf16 %v1072, %v1065
    %v1437 = vpack.c.bf16 %v1073, %v1066
    %v1438 = vpack.c.bf16 %v1074, %v1067
    %v1439 = vpack.c.bf16 %v1075, %v1068
    %v1440 = vpack.c.bf16 %v1076, %v1069
    %v1441 = vpack.c.bf16 %v1084, %v1077
    %v1442 = vpack.c.bf16 %v1085, %v1078
    %v1443 = vpack.c.bf16 %v1086, %v1079
    %v1444 = vpack.c.bf16 %v1087, %v1080
    %v1445 = vpack.c.bf16 %v1088, %v1081
    %v1446 = vpack.c.bf16 %v1089, %v1082
    %v1447 = vpack.c.bf16 %v1090, %v1083
    %v1448 = vpack.c.bf16 %v1098, %v1091
    %v1449 = vpack.c.bf16 %v1099, %v1092
    %v1450 = vpack.c.bf16 %v1100, %v1093
    %v1451 = vpack.c.bf16 %v1101, %v1094
    %v1452 = vpack.c.bf16 %v1102, %v1095
    %v1453 = vpack.c.bf16 %v1103, %v1096
    %v1454 = vpack.c.bf16 %v1104, %v1097
    %v1455 = vpack.c.bf16 %v1112, %v1105
    %v1456 = vpack.c.bf16 %v1113, %v1106
    %v1457 = vpack.c.bf16 %v1114, %v1107
    %v1458 = vpack.c.bf16 %v1115, %v1108
    %v1459 = vpack.c.bf16 %v1116, %v1109
    %v1460 = vpack.c.bf16 %v1117, %v1110
    %v1461 = vpack.c.bf16 %v1118, %v1111
    %v1462 = vpack.c.bf16 %v1126, %v1119
    %v1463 = vpack.c.bf16 %v1127, %v1120
    %v1464 = vpack.c.bf16 %v1128, %v1121
    %v1465 = vpack.c.bf16 %v1129, %v1122
    %v1466 = vpack.c.bf16 %v1130, %v1123
    %v1467 = vpack.c.bf16 %v1131, %v1124
    %v1468 = vpack.c.bf16 %v1132, %v1125
    %v1469 = vpack.c.bf16 %v1140, %v1133
    %v1470 = vpack.c.bf16 %v1141, %v1134
    %v1471 = vpack.c.bf16 %v1142, %v1135
    %v1472 = vpack.c.bf16 %v1143, %v1136
    %v1473 = vpack.c.bf16 %v1144, %v1137
    %v1474 = vpack.c.bf16 %v1145, %v1138
    %v1475 = vpack.c.bf16 %v1146, %v1139
    %v1476 = vpack.c.bf16 %v1154, %v1147
    %v1477 = vpack.c.bf16 %v1155, %v1148
    %v1478 = vpack.c.bf16 %v1156, %v1149
    %v1479 = vpack.c.bf16 %v1157, %v1150
    %v1480 = vpack.c.bf16 %v1158, %v1151
    %v1481 = vpack.c.bf16 %v1159, %v1152
    %v1482 = vpack.c.bf16 %v1160, %v1153
    %v1483 = vpack.c.bf16 %v1168, %v1161
    %v1484 = vpack.c.bf16 %v1169, %v1162
    %v1485 = vpack.c.bf16 %v1170, %v1163
    %v1486 = vpack.c.bf16 %v1171, %v1164
    %v1487 = vpack.c.bf16 %v1172, %v1165
    %v1488 = vpack.c.bf16 %v1173, %v1166
    %v1489 = vpack.c.bf16 %v1174, %v1167
    %v1490 = vpack.c.bf16 %v1182, %v1175
    %v1491 = vpack.c.bf16 %v1183, %v1176
    %v1492 = vpack.c.bf16 %v1184, %v1177
    %v1493 = vpack.c.bf16 %v1185, %v1178
    %v1494 = vpack.c.bf16 %v1186, %v1179
    %v1495 = vpack.c.bf16 %v1187, %v1180
    %v1496 = vpack.c.bf16 %v1188, %v1181
    %v1497 = vpack.c.bf16 %v1196, %v1189
    %v1498 = vpack.c.bf16 %v1197, %v1190
    %v1499 = vpack.c.bf16 %v1198, %v1191
    %v1500 = vpack.c.bf16 %v1199, %v1192
    %v1501 = vpack.c.bf16 %v1200, %v1193
    %v1502 = vpack.c.bf16 %v1201, %v1194
    %v1503 = vpack.c.bf16 %v1202, %v1195
    %v1504 = vpack.c.bf16 %v1210, %v1203
    %v1505 = vpack.c.bf16 %v1211, %v1204
    %v1506 = vpack.c.bf16 %v1212, %v1205
    %v1507 = vpack.c.bf16 %v1213, %v1206
    %v1508 = vpack.c.bf16 %v1214, %v1207
    %v1509 = vpack.c.bf16 %v1215, %v1208
    %v1510 = vpack.c.bf16 %v1216, %v1209
    %v1511 = vld [vmem:[#allocation5] sm:$0xff]
    %v1512 = vld [vmem:[#allocation5 + $0x8] sm:$0xff]
    %v1513 = vld [vmem:[#allocation5 + $0x10] sm:$0xff]
    %v1514 = vld [vmem:[#allocation5 + $0x18] sm:$0xff]
    %v1515 = vld [vmem:[#allocation5 + $0x20] sm:$0xff]
    %v1516 = vld [vmem:[#allocation5 + $0x28] sm:$0xff]
    %v1517 = vld [vmem:[#allocation5 + $0x30] sm:$0xff]
    %v1518 = vld [vmem:[#allocation5 + $0x38] sm:$0xff]
    %v1519 = vld [vmem:[#allocation5 + $0x40] sm:$0xff]
    %v1520 = vld [vmem:[#allocation5 + $0x48] sm:$0xff]
    %v1521 = vld [vmem:[#allocation5 + $0x50] sm:$0xff]
    %v1522 = vld [vmem:[#allocation5 + $0x58] sm:$0xff]
    %v1523 = vld [vmem:[#allocation5 + $0x60] sm:$0xff]
    %v1524 = vld [vmem:[#allocation5 + $0x68] sm:$0xff]
    %v1525 = vld [vmem:[#allocation5 + $0x70] sm:$0xff]
    %v1526 = vld [vmem:[#allocation5 + $0x78] sm:$0xff]
    %v1527 = vld [vmem:[#allocation5 + $0x80] sm:$0xff]
    %v1528 = vld [vmem:[#allocation5 + $0x88] sm:$0xff]
    %v1529 = vld [vmem:[#allocation5 + $0x90] sm:$0xff]
    %v1530 = vld [vmem:[#allocation5 + $0x98] sm:$0xff]
    %v1531 = vld [vmem:[#allocation5 + $0xa0] sm:$0xff]
    %v1532 = vld [vmem:[#allocation5 + $0xa8] sm:$0xff]
    %v1533 = vld [vmem:[#allocation5 + $0xb0] sm:$0xff]
    %v1534 = vld [vmem:[#allocation5 + $0xb8] sm:$0xff]
    %v1535 = vld [vmem:[#allocation5 + $0xc0] sm:$0xff]
    %v1536 = vld [vmem:[#allocation5 + $0xc8] sm:$0xff]
    %v1537 = vld [vmem:[#allocation5 + $0xd0] sm:$0xff]
    %v1538 = vld [vmem:[#allocation5 + $0xd8] sm:$0xff]
    %v1539 = vld [vmem:[#allocation5 + $0xe0] sm:$0xff]
    %v1540 = vld [vmem:[#allocation5 + $0xe8] sm:$0xff]
    %v1541 = vld [vmem:[#allocation5 + $0xf0] sm:$0xff]
    %v1542 = vld [vmem:[#allocation5 + $0xf8] sm:$0xff]
    %v1543 = vld [vmem:[#allocation5 + $0x100] sm:$0xff]
    %v1544 = vld [vmem:[#allocation5 + $0x108] sm:$0xff]
    %v1545 = vld [vmem:[#allocation5 + $0x110] sm:$0xff]
    %v1546 = vld [vmem:[#allocation5 + $0x118] sm:$0xff]
    %v1547 = vld [vmem:[#allocation5 + $0x120] sm:$0xff]
    %v1548 = vld [vmem:[#allocation5 + $0x128] sm:$0xff]
    %v1549 = vld [vmem:[#allocation5 + $0x130] sm:$0xff]
    %v1550 = vld [vmem:[#allocation5 + $0x138] sm:$0xff]
    %v1551 = vld [vmem:[#allocation5 + $0x140] sm:$0xff]
    %v1552 = vld [vmem:[#allocation5 + $0x148] sm:$0xff]
    %v1553 = vld [vmem:[#allocation5 + $0x150] sm:$0xff]
    %v1554 = vld [vmem:[#allocation5 + $0x158] sm:$0xff]
    %v1555 = vld [vmem:[#allocation5 + $0x160] sm:$0xff]
    %v1556 = vld [vmem:[#allocation5 + $0x168] sm:$0xff]
    %v1557 = vld [vmem:[#allocation5 + $0x170] sm:$0xff]
    %v1558 = vld [vmem:[#allocation5 + $0x178] sm:$0xff]
    %v1559 = vld [vmem:[#allocation5 + $0x180] sm:$0xff]
    %v1560 = vld [vmem:[#allocation5 + $0x188] sm:$0xff]
    %v1561 = vld [vmem:[#allocation5 + $0x190] sm:$0xff]
    %v1562 = vld [vmem:[#allocation5 + $0x198] sm:$0xff]
    %v1563 = vld [vmem:[#allocation5 + $0x1a0] sm:$0xff]
    %v1564 = vld [vmem:[#allocation5 + $0x1a8] sm:$0xff]
    %v1565 = vld [vmem:[#allocation5 + $0x1b0] sm:$0xff]
    %v1566 = vld [vmem:[#allocation5 + $0x1b8] sm:$0xff]
    %v1567 = vld [vmem:[#allocation5 + $0x1c0] sm:$0xff]
    %v1568 = vld [vmem:[#allocation5 + $0x1c8] sm:$0xff]
    %v1569 = vld [vmem:[#allocation5 + $0x1d0] sm:$0xff]
    %v1570 = vld [vmem:[#allocation5 + $0x1d8] sm:$0xff]
    %v1571 = vld [vmem:[#allocation5 + $0x1e0] sm:$0xff]
    %v1572 = vld [vmem:[#allocation5 + $0x1e8] sm:$0xff]
    %v1573 = vld [vmem:[#allocation5 + $0x1f0] sm:$0xff]
    %v1574 = vld [vmem:[#allocation5 + $0x1f8] sm:$0xff]
    %v1575 = vld [vmem:[#allocation5 + $0x200] sm:$0xff]
    %v1576 = vld [vmem:[#allocation5 + $0x208] sm:$0xff]
    %v1577 = vld [vmem:[#allocation5 + $0x210] sm:$0xff]
    %v1578 = vld [vmem:[#allocation5 + $0x218] sm:$0xff]
    %v1579 = vld [vmem:[#allocation5 + $0x220] sm:$0xff]
    %v1580 = vld [vmem:[#allocation5 + $0x228] sm:$0xff]
    %v1581 = vld [vmem:[#allocation5 + $0x230] sm:$0xff]
    %v1582 = vld [vmem:[#allocation5 + $0x238] sm:$0xff]
    %v1583 = vld [vmem:[#allocation5 + $0x240] sm:$0xff]
    %v1584 = vld [vmem:[#allocation5 + $0x248] sm:$0xff]
    %v1585 = vld [vmem:[#allocation5 + $0x250] sm:$0xff]
    %v1586 = vld [vmem:[#allocation5 + $0x258] sm:$0xff]
    %v1587 = vld [vmem:[#allocation5 + $0x260] sm:$0xff]
    %v1588 = vld [vmem:[#allocation5 + $0x268] sm:$0xff]
    %v1589 = vld [vmem:[#allocation5 + $0x270] sm:$0xff]
    %v1590 = vld [vmem:[#allocation5 + $0x278] sm:$0xff]
    %v1591 = vld [vmem:[#allocation5 + $0x280] sm:$0xff]
    %v1592 = vld [vmem:[#allocation5 + $0x288] sm:$0xff]
    %v1593 = vld [vmem:[#allocation5 + $0x290] sm:$0xff]
    %v1594 = vld [vmem:[#allocation5 + $0x298] sm:$0xff]
    %v1595 = vld [vmem:[#allocation5 + $0x2a0] sm:$0xff]
    %v1596 = vld [vmem:[#allocation5 + $0x2a8] sm:$0xff]
    %v1597 = vld [vmem:[#allocation5 + $0x2b0] sm:$0xff]
    %v1598 = vld [vmem:[#allocation5 + $0x2b8] sm:$0xff]
    %v1599 = vld [vmem:[#allocation5 + $0x2c0] sm:$0xff]
    %v1600 = vld [vmem:[#allocation5 + $0x2c8] sm:$0xff]
    %v1601 = vld [vmem:[#allocation5 + $0x2d0] sm:$0xff]
    %v1602 = vld [vmem:[#allocation5 + $0x2d8] sm:$0xff]
    %v1603 = vld [vmem:[#allocation5 + $0x2e0] sm:$0xff]
    %v1604 = vld [vmem:[#allocation5 + $0x2e8] sm:$0xff]
    %v1605 = vld [vmem:[#allocation5 + $0x2f0] sm:$0xff]
    %v1606 = vld [vmem:[#allocation5 + $0x2f8] sm:$0xff]
    %v1607 = vld [vmem:[#allocation5 + $0x300] sm:$0xff]
    %v1608 = vld [vmem:[#allocation5 + $0x308] sm:$0xff]
    %v1609 = vld [vmem:[#allocation5 + $0x310] sm:$0xff]
    %v1610 = vld [vmem:[#allocation5 + $0x318] sm:$0xff]
    %v1611 = vld [vmem:[#allocation5 + $0x320] sm:$0xff]
    %v1612 = vld [vmem:[#allocation5 + $0x328] sm:$0xff]
    %v1613 = vld [vmem:[#allocation5 + $0x330] sm:$0xff]
    %v1614 = vld [vmem:[#allocation5 + $0x338] sm:$0xff]
    %v1615 = vld [vmem:[#allocation5 + $0x340] sm:$0xff]
    %v1616 = vld [vmem:[#allocation5 + $0x348] sm:$0xff]
    %v1617 = vld [vmem:[#allocation5 + $0x350] sm:$0xff]
    %v1618 = vld [vmem:[#allocation5 + $0x358] sm:$0xff]
    %v1619 = vld [vmem:[#allocation5 + $0x360] sm:$0xff]
    %v1620 = vld [vmem:[#allocation5 + $0x368] sm:$0xff]
    %v1621 = vld [vmem:[#allocation5 + $0x370] sm:$0xff]
    %v1622 = vld [vmem:[#allocation5 + $0x378] sm:$0xff]
    %v1623 = vld [vmem:[#allocation5 + $0x380] sm:$0xff]
    %v1624 = vld [vmem:[#allocation5 + $0x388] sm:$0xff]
    %v1625 = vld [vmem:[#allocation5 + $0x390] sm:$0xff]
    %v1626 = vld [vmem:[#allocation5 + $0x398] sm:$0xff]
    %v1627 = vld [vmem:[#allocation5 + $0x3a0] sm:$0xff]
    %v1628 = vld [vmem:[#allocation5 + $0x3a8] sm:$0xff]
    %v1629 = vld [vmem:[#allocation5 + $0x3b0] sm:$0xff]
    %v1630 = vld [vmem:[#allocation5 + $0x3b8] sm:$0xff]
    %v1631 = vld [vmem:[#allocation5 + $0x3c0] sm:$0xff]
    %v1632 = vld [vmem:[#allocation5 + $0x3c8] sm:$0xff]
    %v1633 = vld [vmem:[#allocation5 + $0x3d0] sm:$0xff]
    %v1634 = vld [vmem:[#allocation5 + $0x3d8] sm:$0xff]
    %v1635 = vld [vmem:[#allocation5 + $0x3e0] sm:$0xff]
    %v1636 = vld [vmem:[#allocation5 + $0x3e8] sm:$0xff]
    %v1637 = vld [vmem:[#allocation5 + $0x3f0] sm:$0xff]
    %v1638 = vld [vmem:[#allocation5 + $0x3f8] sm:$0xff]
    %v1639 = vld [vmem:[#allocation5 + $0x400] sm:$0xff]
    %v1640 = vld [vmem:[#allocation5 + $0x408] sm:$0xff]
    %v1641 = vld [vmem:[#allocation5 + $0x410] sm:$0xff]
    %v1642 = vld [vmem:[#allocation5 + $0x418] sm:$0xff]
    %v1643 = vld [vmem:[#allocation5 + $0x420] sm:$0xff]
    %v1644 = vld [vmem:[#allocation5 + $0x428] sm:$0xff]
    %v1645 = vld [vmem:[#allocation5 + $0x430] sm:$0xff]
    %v1646 = vld [vmem:[#allocation5 + $0x438] sm:$0xff]
    %v1647 = vld [vmem:[#allocation5 + $0x440] sm:$0xff]
    %v1648 = vld [vmem:[#allocation5 + $0x448] sm:$0xff]
    %v1649 = vld [vmem:[#allocation5 + $0x450] sm:$0xff]
    %v1650 = vld [vmem:[#allocation5 + $0x458] sm:$0xff]
    %v1651 = vld [vmem:[#allocation5 + $0x460] sm:$0xff]
    %v1652 = vld [vmem:[#allocation5 + $0x468] sm:$0xff]
    %v1653 = vld [vmem:[#allocation5 + $0x470] sm:$0xff]
    %v1654 = vld [vmem:[#allocation5 + $0x478] sm:$0xff]
    %v1655 = vld [vmem:[#allocation5 + $0x480] sm:$0xff]
    %v1656 = vld [vmem:[#allocation5 + $0x488] sm:$0xff]
    %v1657 = vld [vmem:[#allocation5 + $0x490] sm:$0xff]
    %v1658 = vld [vmem:[#allocation5 + $0x498] sm:$0xff]
    %v1659 = vld [vmem:[#allocation5 + $0x4a0] sm:$0xff]
    %v1660 = vld [vmem:[#allocation5 + $0x4a8] sm:$0xff]
    %v1661 = vld [vmem:[#allocation5 + $0x4b0] sm:$0xff]
    %v1662 = vld [vmem:[#allocation5 + $0x4b8] sm:$0xff]
    %v1663 = vld [vmem:[#allocation5 + $0x4c0] sm:$0xff]
    %v1664 = vld [vmem:[#allocation5 + $0x4c8] sm:$0xff]
    %v1665 = vld [vmem:[#allocation5 + $0x4d0] sm:$0xff]
    %v1666 = vld [vmem:[#allocation5 + $0x4d8] sm:$0xff]
    %v1667 = vld [vmem:[#allocation5 + $0x4e0] sm:$0xff]
    %v1668 = vld [vmem:[#allocation5 + $0x4e8] sm:$0xff]
    %v1669 = vld [vmem:[#allocation5 + $0x4f0] sm:$0xff]
    %v1670 = vld [vmem:[#allocation5 + $0x4f8] sm:$0xff]
    %v1671 = vld [vmem:[#allocation5 + $0x500] sm:$0xff]
    %v1672 = vld [vmem:[#allocation5 + $0x508] sm:$0xff]
    %v1673 = vld [vmem:[#allocation5 + $0x510] sm:$0xff]
    %v1674 = vld [vmem:[#allocation5 + $0x518] sm:$0xff]
    %v1675 = vld [vmem:[#allocation5 + $0x520] sm:$0xff]
    %v1676 = vld [vmem:[#allocation5 + $0x528] sm:$0xff]
    %v1677 = vld [vmem:[#allocation5 + $0x530] sm:$0xff]
    %v1678 = vld [vmem:[#allocation5 + $0x538] sm:$0xff]
    %v1679 = vld [vmem:[#allocation5 + $0x540] sm:$0xff]
    %v1680 = vld [vmem:[#allocation5 + $0x548] sm:$0xff]
    %v1681 = vld [vmem:[#allocation5 + $0x550] sm:$0xff]
    %v1682 = vld [vmem:[#allocation5 + $0x558] sm:$0xff]
    %v1683 = vld [vmem:[#allocation5 + $0x560] sm:$0xff]
    %v1684 = vld [vmem:[#allocation5 + $0x568] sm:$0xff]
    %v1685 = vld [vmem:[#allocation5 + $0x570] sm:$0xff]
    %v1686 = vld [vmem:[#allocation5 + $0x578] sm:$0xff]
    %v1687 = vld [vmem:[#allocation5 + $0x580] sm:$0xff]
    %v1688 = vld [vmem:[#allocation5 + $0x588] sm:$0xff]
    %v1689 = vld [vmem:[#allocation5 + $0x590] sm:$0xff]
    %v1690 = vld [vmem:[#allocation5 + $0x598] sm:$0xff]
    %v1691 = vld [vmem:[#allocation5 + $0x5a0] sm:$0xff]
    %v1692 = vld [vmem:[#allocation5 + $0x5a8] sm:$0xff]
    %v1693 = vld [vmem:[#allocation5 + $0x5b0] sm:$0xff]
    %v1694 = vld [vmem:[#allocation5 + $0x5b8] sm:$0xff]
    %v1695 = vld [vmem:[#allocation5 + $0x5c0] sm:$0xff]
    %v1696 = vld [vmem:[#allocation5 + $0x5c8] sm:$0xff]
    %v1697 = vld [vmem:[#allocation5 + $0x5d0] sm:$0xff]
    %v1698 = vld [vmem:[#allocation5 + $0x5d8] sm:$0xff]
    %v1699 = vld [vmem:[#allocation5 + $0x5e0] sm:$0xff]
    %v1700 = vld [vmem:[#allocation5 + $0x5e8] sm:$0xff]
    %v1701 = vld [vmem:[#allocation5 + $0x5f0] sm:$0xff]
    %v1702 = vld [vmem:[#allocation5 + $0x5f8] sm:$0xff]
    %v1703 = vld [vmem:[#allocation5 + $0x600] sm:$0xff]
    %v1704 = vld [vmem:[#allocation5 + $0x608] sm:$0xff]
    %v1705 = vld [vmem:[#allocation5 + $0x610] sm:$0xff]
    %v1706 = vld [vmem:[#allocation5 + $0x618] sm:$0xff]
    %v1707 = vld [vmem:[#allocation5 + $0x620] sm:$0xff]
    %v1708 = vld [vmem:[#allocation5 + $0x628] sm:$0xff]
    %v1709 = vld [vmem:[#allocation5 + $0x630] sm:$0xff]
    %v1710 = vld [vmem:[#allocation5 + $0x638] sm:$0xff]
    %v1711 = vld [vmem:[#allocation5 + $0x640] sm:$0xff]
    %v1712 = vld [vmem:[#allocation5 + $0x648] sm:$0xff]
    %v1713 = vld [vmem:[#allocation5 + $0x650] sm:$0xff]
    %v1714 = vld [vmem:[#allocation5 + $0x658] sm:$0xff]
    %v1715 = vld [vmem:[#allocation5 + $0x660] sm:$0xff]
    %v1716 = vld [vmem:[#allocation5 + $0x668] sm:$0xff]
    %v1717 = vld [vmem:[#allocation5 + $0x670] sm:$0xff]
    %v1718 = vld [vmem:[#allocation5 + $0x678] sm:$0xff]
    %v1719 = vld [vmem:[#allocation5 + $0x680] sm:$0xff]
    %v1720 = vld [vmem:[#allocation5 + $0x688] sm:$0xff]
    %v1721 = vld [vmem:[#allocation5 + $0x690] sm:$0xff]
    %v1722 = vld [vmem:[#allocation5 + $0x698] sm:$0xff]
    %v1723 = vld [vmem:[#allocation5 + $0x6a0] sm:$0xff]
    %v1724 = vld [vmem:[#allocation5 + $0x6a8] sm:$0xff]
    %v1725 = vld [vmem:[#allocation5 + $0x6b0] sm:$0xff]
    %v1726 = vld [vmem:[#allocation5 + $0x6b8] sm:$0xff]
    %v1727 = vld [vmem:[#allocation5 + $0x6c0] sm:$0xff]
    %v1728 = vld [vmem:[#allocation5 + $0x6c8] sm:$0xff]
    %v1729 = vld [vmem:[#allocation5 + $0x6d0] sm:$0xff]
    %v1730 = vld [vmem:[#allocation5 + $0x6d8] sm:$0xff]
    %v1731 = vld [vmem:[#allocation5 + $0x6e0] sm:$0xff]
    %v1732 = vld [vmem:[#allocation5 + $0x6e8] sm:$0xff]
    %v1733 = vld [vmem:[#allocation5 + $0x6f0] sm:$0xff]
    %v1734 = vld [vmem:[#allocation5 + $0x6f8] sm:$0xff]
    %v1735 = vld [vmem:[#allocation5 + $0x700] sm:$0xff]
    %v1736 = vld [vmem:[#allocation5 + $0x708] sm:$0xff]
    %v1737 = vld [vmem:[#allocation5 + $0x710] sm:$0xff]
    %v1738 = vld [vmem:[#allocation5 + $0x718] sm:$0xff]
    %v1739 = vld [vmem:[#allocation5 + $0x720] sm:$0xff]
    %v1740 = vld [vmem:[#allocation5 + $0x728] sm:$0xff]
    %v1741 = vld [vmem:[#allocation5 + $0x730] sm:$0xff]
    %v1742 = vld [vmem:[#allocation5 + $0x738] sm:$0xff]
    %v1743 = vld [vmem:[#allocation5 + $0x740] sm:$0xff]
    %v1744 = vld [vmem:[#allocation5 + $0x748] sm:$0xff]
    %v1745 = vld [vmem:[#allocation5 + $0x750] sm:$0xff]
    %v1746 = vld [vmem:[#allocation5 + $0x758] sm:$0xff]
    %v1747 = vld [vmem:[#allocation5 + $0x760] sm:$0xff]
    %v1748 = vld [vmem:[#allocation5 + $0x768] sm:$0xff]
    %v1749 = vld [vmem:[#allocation5 + $0x770] sm:$0xff]
    %v1750 = vld [vmem:[#allocation5 + $0x778] sm:$0xff]
    %v1751 = vld [vmem:[#allocation5 + $0x780] sm:$0xff]
    %v1752 = vld [vmem:[#allocation5 + $0x788] sm:$0xff]
    %v1753 = vld [vmem:[#allocation5 + $0x790] sm:$0xff]
    %v1754 = vld [vmem:[#allocation5 + $0x798] sm:$0xff]
    %v1755 = vld [vmem:[#allocation5 + $0x7a0] sm:$0xff]
    %v1756 = vld [vmem:[#allocation5 + $0x7a8] sm:$0xff]
    %v1757 = vld [vmem:[#allocation5 + $0x7b0] sm:$0xff]
    %v1758 = vld [vmem:[#allocation5 + $0x7b8] sm:$0xff]
    %v1759 = vld [vmem:[#allocation5 + $0x7c0] sm:$0xff]
    %v1760 = vld [vmem:[#allocation5 + $0x7c8] sm:$0xff]
    %v1761 = vld [vmem:[#allocation5 + $0x7d0] sm:$0xff]
    %v1762 = vld [vmem:[#allocation5 + $0x7d8] sm:$0xff]
    %v1763 = vld [vmem:[#allocation5 + $0x7e0] sm:$0xff]
    %v1764 = vld [vmem:[#allocation5 + $0x7e8] sm:$0xff]
    %v1765 = vld [vmem:[#allocation5 + $0x7f0] sm:$0xff]
    %v1766 = vld [vmem:[#allocation5 + $0x7f8] sm:$0xff]
    %v1767 = vld [vmem:[#allocation5 + $0x800] sm:$0xff]
    %v1768 = vld [vmem:[#allocation5 + $0x808] sm:$0xff]
    %v1769 = vld [vmem:[#allocation5 + $0x810] sm:$0xff]
    %v1770 = vld [vmem:[#allocation5 + $0x818] sm:$0xff]
    %v1771 = vld [vmem:[#allocation5 + $0x820] sm:$0xff]
    %v1772 = vld [vmem:[#allocation5 + $0x828] sm:$0xff]
    %v1773 = vld [vmem:[#allocation5 + $0x830] sm:$0xff]
    %v1774 = vld [vmem:[#allocation5 + $0x838] sm:$0xff]
    %v1775 = vld [vmem:[#allocation5 + $0x840] sm:$0xff]
    %v1776 = vld [vmem:[#allocation5 + $0x848] sm:$0xff]
    %v1777 = vld [vmem:[#allocation5 + $0x850] sm:$0xff]
    %v1778 = vld [vmem:[#allocation5 + $0x858] sm:$0xff]
    %v1779 = vld [vmem:[#allocation5 + $0x860] sm:$0xff]
    %v1780 = vld [vmem:[#allocation5 + $0x868] sm:$0xff]
    %v1781 = vld [vmem:[#allocation5 + $0x870] sm:$0xff]
    %v1782 = vld [vmem:[#allocation5 + $0x878] sm:$0xff]
    %v1783 = vld [vmem:[#allocation5 + $0x880] sm:$0xff]
    %v1784 = vld [vmem:[#allocation5 + $0x888] sm:$0xff]
    %v1785 = vld [vmem:[#allocation5 + $0x890] sm:$0xff]
    %v1786 = vld [vmem:[#allocation5 + $0x898] sm:$0xff]
    %v1787 = vld [vmem:[#allocation5 + $0x8a0] sm:$0xff]
    %v1788 = vld [vmem:[#allocation5 + $0x8a8] sm:$0xff]
    %v1789 = vld [vmem:[#allocation5 + $0x8b0] sm:$0xff]
    %v1790 = vld [vmem:[#allocation5 + $0x8b8] sm:$0xff]
    %v1791 = vld [vmem:[#allocation5 + $0x8c0] sm:$0xff]
    %v1792 = vld [vmem:[#allocation5 + $0x8c8] sm:$0xff]
    %v1793 = vld [vmem:[#allocation5 + $0x8d0] sm:$0xff]
    %v1794 = vld [vmem:[#allocation5 + $0x8d8] sm:$0xff]
    %v1795 = vld [vmem:[#allocation5 + $0x8e0] sm:$0xff]
    %v1796 = vld [vmem:[#allocation5 + $0x8e8] sm:$0xff]
    %v1797 = vld [vmem:[#allocation5 + $0x8f0] sm:$0xff]
    %v1798 = vld [vmem:[#allocation5 + $0x8f8] sm:$0xff]
    %v1799 = vld [vmem:[#allocation5 + $0x900] sm:$0xff]
    %v1800 = vld [vmem:[#allocation5 + $0x908] sm:$0xff]
    %v1801 = vld [vmem:[#allocation5 + $0x910] sm:$0xff]
    %v1802 = vld [vmem:[#allocation5 + $0x918] sm:$0xff]
    %v1803 = vld [vmem:[#allocation5 + $0x920] sm:$0xff]
    %v1804 = vld [vmem:[#allocation5 + $0x928] sm:$0xff]
    %v1805 = vld [vmem:[#allocation5 + $0x930] sm:$0xff]
    %v1806 = vld [vmem:[#allocation5 + $0x938] sm:$0xff]
    %v1807 = vld [vmem:[#allocation5 + $0x940] sm:$0xff]
    %v1808 = vld [vmem:[#allocation5 + $0x948] sm:$0xff]
    %v1809 = vld [vmem:[#allocation5 + $0x950] sm:$0xff]
    %v1810 = vld [vmem:[#allocation5 + $0x958] sm:$0xff]
    %v1811 = vld [vmem:[#allocation5 + $0x960] sm:$0xff]
    %v1812 = vld [vmem:[#allocation5 + $0x968] sm:$0xff]
    %v1813 = vld [vmem:[#allocation5 + $0x970] sm:$0xff]
    %v1814 = vld [vmem:[#allocation5 + $0x978] sm:$0xff]
    %v1815 = vld [vmem:[#allocation5 + $0x980] sm:$0xff]
    %v1816 = vld [vmem:[#allocation5 + $0x988] sm:$0xff]
    %v1817 = vld [vmem:[#allocation5 + $0x990] sm:$0xff]
    %v1818 = vld [vmem:[#allocation5 + $0x998] sm:$0xff]
    %v1819 = vld [vmem:[#allocation5 + $0x9a0] sm:$0xff]
    %v1820 = vld [vmem:[#allocation5 + $0x9a8] sm:$0xff]
    %v1821 = vld [vmem:[#allocation5 + $0x9b0] sm:$0xff]
    %v1822 = vld [vmem:[#allocation5 + $0x9b8] sm:$0xff]
    %v1823 = vld [vmem:[#allocation5 + $0x9c0] sm:$0xff]
    %v1824 = vld [vmem:[#allocation5 + $0x9c8] sm:$0xff]
    %v1825 = vld [vmem:[#allocation5 + $0x9d0] sm:$0xff]
    %v1826 = vld [vmem:[#allocation5 + $0x9d8] sm:$0xff]
    %v1827 = vld [vmem:[#allocation5 + $0x9e0] sm:$0xff]
    %v1828 = vld [vmem:[#allocation5 + $0x9e8] sm:$0xff]
    %v1829 = vld [vmem:[#allocation5 + $0x9f0] sm:$0xff]
    %v1830 = vld [vmem:[#allocation5 + $0x9f8] sm:$0xff]
    %v1831 = vld [vmem:[#allocation5 + $0xa00] sm:$0xff]
    %v1832 = vld [vmem:[#allocation5 + $0xa08] sm:$0xff]
    %v1833 = vld [vmem:[#allocation5 + $0xa10] sm:$0xff]
    %v1834 = vld [vmem:[#allocation5 + $0xa18] sm:$0xff]
    %v1835 = vld [vmem:[#allocation5 + $0xa20] sm:$0xff]
    %v1836 = vld [vmem:[#allocation5 + $0xa28] sm:$0xff]
    %v1837 = vld [vmem:[#allocation5 + $0xa30] sm:$0xff]
    %v1838 = vld [vmem:[#allocation5 + $0xa38] sm:$0xff]
    %v1839 = vld [vmem:[#allocation5 + $0xa40] sm:$0xff]
    %v1840 = vld [vmem:[#allocation5 + $0xa48] sm:$0xff]
    %v1841 = vld [vmem:[#allocation5 + $0xa50] sm:$0xff]
    %v1842 = vld [vmem:[#allocation5 + $0xa58] sm:$0xff]
    %v1843 = vld [vmem:[#allocation5 + $0xa60] sm:$0xff]
    %v1844 = vld [vmem:[#allocation5 + $0xa68] sm:$0xff]
    %v1845 = vld [vmem:[#allocation5 + $0xa70] sm:$0xff]
    %v1846 = vld [vmem:[#allocation5 + $0xa78] sm:$0xff]
    %v1847 = vld [vmem:[#allocation5 + $0xa80] sm:$0xff]
    %v1848 = vld [vmem:[#allocation5 + $0xa88] sm:$0xff]
    %v1849 = vld [vmem:[#allocation5 + $0xa90] sm:$0xff]
    %v1850 = vld [vmem:[#allocation5 + $0xa98] sm:$0xff]
    %v1851 = vld [vmem:[#allocation5 + $0xaa0] sm:$0xff]
    %v1852 = vld [vmem:[#allocation5 + $0xaa8] sm:$0xff]
    %v1853 = vld [vmem:[#allocation5 + $0xab0] sm:$0xff]
    %v1854 = vld [vmem:[#allocation5 + $0xab8] sm:$0xff]
    %v1855 = vld [vmem:[#allocation5 + $0xac0] sm:$0xff]
    %v1856 = vld [vmem:[#allocation5 + $0xac8] sm:$0xff]
    %v1857 = vld [vmem:[#allocation5 + $0xad0] sm:$0xff]
    %v1858 = vld [vmem:[#allocation5 + $0xad8] sm:$0xff]
    %v1859 = vld [vmem:[#allocation5 + $0xae0] sm:$0xff]
    %v1860 = vld [vmem:[#allocation5 + $0xae8] sm:$0xff]
    %v1861 = vld [vmem:[#allocation5 + $0xaf0] sm:$0xff]
    %v1862 = vld [vmem:[#allocation5 + $0xaf8] sm:$0xff]
    %v1863 = vld [vmem:[#allocation5 + $0xb00] sm:$0xff]
    %v1864 = vld [vmem:[#allocation5 + $0xb08] sm:$0xff]
    %v1865 = vld [vmem:[#allocation5 + $0xb10] sm:$0xff]
    %v1866 = vld [vmem:[#allocation5 + $0xb18] sm:$0xff]
    %v1867 = vld [vmem:[#allocation5 + $0xb20] sm:$0xff]
    %v1868 = vld [vmem:[#allocation5 + $0xb28] sm:$0xff]
    %v1869 = vld [vmem:[#allocation5 + $0xb30] sm:$0xff]
    %v1870 = vld [vmem:[#allocation5 + $0xb38] sm:$0xff]
    %v1871 = vld [vmem:[#allocation5 + $0xb40] sm:$0xff]
    %v1872 = vld [vmem:[#allocation5 + $0xb48] sm:$0xff]
    %v1873 = vld [vmem:[#allocation5 + $0xb50] sm:$0xff]
    %v1874 = vld [vmem:[#allocation5 + $0xb58] sm:$0xff]
    %v1875 = vld [vmem:[#allocation5 + $0xb60] sm:$0xff]
    %v1876 = vld [vmem:[#allocation5 + $0xb68] sm:$0xff]
    %v1877 = vld [vmem:[#allocation5 + $0xb70] sm:$0xff]
    %v1878 = vld [vmem:[#allocation5 + $0xb78] sm:$0xff]
    %v1879 = vld [vmem:[#allocation5 + $0xb80] sm:$0xff]
    %v1880 = vld [vmem:[#allocation5 + $0xb88] sm:$0xff]
    %v1881 = vld [vmem:[#allocation5 + $0xb90] sm:$0xff]
    %v1882 = vld [vmem:[#allocation5 + $0xb98] sm:$0xff]
    %v1883 = vld [vmem:[#allocation5 + $0xba0] sm:$0xff]
    %v1884 = vld [vmem:[#allocation5 + $0xba8] sm:$0xff]
    %v1885 = vld [vmem:[#allocation5 + $0xbb0] sm:$0xff]
    %v1886 = vld [vmem:[#allocation5 + $0xbb8] sm:$0xff]
    %v1887 = vld [vmem:[#allocation5 + $0xbc0] sm:$0xff]
    %v1888 = vld [vmem:[#allocation5 + $0xbc8] sm:$0xff]
    %v1889 = vld [vmem:[#allocation5 + $0xbd0] sm:$0xff]
    %v1890 = vld [vmem:[#allocation5 + $0xbd8] sm:$0xff]
    %v1891 = vld [vmem:[#allocation5 + $0xbe0] sm:$0xff]
    %v1892 = vld [vmem:[#allocation5 + $0xbe8] sm:$0xff]
    %v1893 = vld [vmem:[#allocation5 + $0xbf0] sm:$0xff]
    %v1894 = vld [vmem:[#allocation5 + $0xbf8] sm:$0xff]
    %v1895 = vld [vmem:[#allocation5 + $0xc00] sm:$0xff]
    %v1896 = vld [vmem:[#allocation5 + $0xc08] sm:$0xff]
    %v1897 = vld [vmem:[#allocation5 + $0xc10] sm:$0xff]
    %v1898 = vld [vmem:[#allocation5 + $0xc18] sm:$0xff]
    %v1899 = vld [vmem:[#allocation5 + $0xc20] sm:$0xff]
    %v1900 = vld [vmem:[#allocation5 + $0xc28] sm:$0xff]
    %v1901 = vld [vmem:[#allocation5 + $0xc30] sm:$0xff]
    %v1902 = vld [vmem:[#allocation5 + $0xc38] sm:$0xff]
    %v1903 = vld [vmem:[#allocation5 + $0xc40] sm:$0xff]
    %v1904 = vld [vmem:[#allocation5 + $0xc48] sm:$0xff]
    %v1905 = vld [vmem:[#allocation5 + $0xc50] sm:$0xff]
    %v1906 = vld [vmem:[#allocation5 + $0xc58] sm:$0xff]
    %v1907 = vld [vmem:[#allocation5 + $0xc60] sm:$0xff]
    %v1908 = vld [vmem:[#allocation5 + $0xc68] sm:$0xff]
    %v1909 = vld [vmem:[#allocation5 + $0xc70] sm:$0xff]
    %v1910 = vld [vmem:[#allocation5 + $0xc78] sm:$0xff]
    %v1911 = vld [vmem:[#allocation5 + $0xc80] sm:$0xff]
    %v1912 = vld [vmem:[#allocation5 + $0xc88] sm:$0xff]
    %v1913 = vld [vmem:[#allocation5 + $0xc90] sm:$0xff]
    %v1914 = vld [vmem:[#allocation5 + $0xc98] sm:$0xff]
    %v1915 = vld [vmem:[#allocation5 + $0xca0] sm:$0xff]
    %v1916 = vld [vmem:[#allocation5 + $0xca8] sm:$0xff]
    %v1917 = vld [vmem:[#allocation5 + $0xcb0] sm:$0xff]
    %v1918 = vld [vmem:[#allocation5 + $0xcb8] sm:$0xff]
    %v1919 = vld [vmem:[#allocation5 + $0xcc0] sm:$0xff]
    %v1920 = vld [vmem:[#allocation5 + $0xcc8] sm:$0xff]
    %v1921 = vld [vmem:[#allocation5 + $0xcd0] sm:$0xff]
    %v1922 = vld [vmem:[#allocation5 + $0xcd8] sm:$0xff]
    %v1923 = vld [vmem:[#allocation5 + $0xce0] sm:$0xff]
    %v1924 = vld [vmem:[#allocation5 + $0xce8] sm:$0xff]
    %v1925 = vld [vmem:[#allocation5 + $0xcf0] sm:$0xff]
    %v1926 = vld [vmem:[#allocation5 + $0xcf8] sm:$0xff]
    %v1927 = vld [vmem:[#allocation5 + $0xd00] sm:$0xff]
    %v1928 = vld [vmem:[#allocation5 + $0xd08] sm:$0xff]
    %v1929 = vld [vmem:[#allocation5 + $0xd10] sm:$0xff]
    %v1930 = vld [vmem:[#allocation5 + $0xd18] sm:$0xff]
    %v1931 = vld [vmem:[#allocation5 + $0xd20] sm:$0xff]
    %v1932 = vld [vmem:[#allocation5 + $0xd28] sm:$0xff]
    %v1933 = vld [vmem:[#allocation5 + $0xd30] sm:$0xff]
    %v1934 = vld [vmem:[#allocation5 + $0xd38] sm:$0xff]
    %v1935 = vld [vmem:[#allocation5 + $0xd40] sm:$0xff]
    %v1936 = vld [vmem:[#allocation5 + $0xd48] sm:$0xff]
    %v1937 = vld [vmem:[#allocation5 + $0xd50] sm:$0xff]
    %v1938 = vld [vmem:[#allocation5 + $0xd58] sm:$0xff]
    %v1939 = vld [vmem:[#allocation5 + $0xd60] sm:$0xff]
    %v1940 = vld [vmem:[#allocation5 + $0xd68] sm:$0xff]
    %v1941 = vld [vmem:[#allocation5 + $0xd70] sm:$0xff]
    %v1942 = vld [vmem:[#allocation5 + $0xd78] sm:$0xff]
    %v1943 = vld [vmem:[#allocation5 + $0xd80] sm:$0xff]
    %v1944 = vld [vmem:[#allocation5 + $0xd88] sm:$0xff]
    %v1945 = vld [vmem:[#allocation5 + $0xd90] sm:$0xff]
    %v1946 = vld [vmem:[#allocation5 + $0xd98] sm:$0xff]
    %v1947 = vld [vmem:[#allocation5 + $0xda0] sm:$0xff]
    %v1948 = vld [vmem:[#allocation5 + $0xda8] sm:$0xff]
    %v1949 = vld [vmem:[#allocation5 + $0xdb0] sm:$0xff]
    %v1950 = vld [vmem:[#allocation5 + $0xdb8] sm:$0xff]
    %v1951 = vld [vmem:[#allocation5 + $0xdc0] sm:$0xff]
    %v1952 = vld [vmem:[#allocation5 + $0xdc8] sm:$0xff]
    %v1953 = vld [vmem:[#allocation5 + $0xdd0] sm:$0xff]
    %v1954 = vld [vmem:[#allocation5 + $0xdd8] sm:$0xff]
    %v1955 = vld [vmem:[#allocation5 + $0xde0] sm:$0xff]
    %v1956 = vld [vmem:[#allocation5 + $0xde8] sm:$0xff]
    %v1957 = vld [vmem:[#allocation5 + $0xdf0] sm:$0xff]
    %v1958 = vld [vmem:[#allocation5 + $0xdf8] sm:$0xff]
    %v1959 = vld [vmem:[#allocation5 + $0xe00] sm:$0xff]
    %v1960 = vld [vmem:[#allocation5 + $0xe08] sm:$0xff]
    %v1961 = vld [vmem:[#allocation5 + $0xe10] sm:$0xff]
    %v1962 = vld [vmem:[#allocation5 + $0xe18] sm:$0xff]
    %v1963 = vld [vmem:[#allocation5 + $0xe20] sm:$0xff]
    %v1964 = vld [vmem:[#allocation5 + $0xe28] sm:$0xff]
    %v1965 = vld [vmem:[#allocation5 + $0xe30] sm:$0xff]
    %v1966 = vld [vmem:[#allocation5 + $0xe38] sm:$0xff]
    %v1967 = vld [vmem:[#allocation5 + $0xe40] sm:$0xff]
    %v1968 = vld [vmem:[#allocation5 + $0xe48] sm:$0xff]
    %v1969 = vld [vmem:[#allocation5 + $0xe50] sm:$0xff]
    %v1970 = vld [vmem:[#allocation5 + $0xe58] sm:$0xff]
    %v1971 = vld [vmem:[#allocation5 + $0xe60] sm:$0xff]
    %v1972 = vld [vmem:[#allocation5 + $0xe68] sm:$0xff]
    %v1973 = vld [vmem:[#allocation5 + $0xe70] sm:$0xff]
    %v1974 = vld [vmem:[#allocation5 + $0xe78] sm:$0xff]
    %v1975 = vld [vmem:[#allocation5 + $0xe80] sm:$0xff]
    %v1976 = vld [vmem:[#allocation5 + $0xe88] sm:$0xff]
    %v1977 = vld [vmem:[#allocation5 + $0xe90] sm:$0xff]
    %v1978 = vld [vmem:[#allocation5 + $0xe98] sm:$0xff]
    %v1979 = vld [vmem:[#allocation5 + $0xea0] sm:$0xff]
    %v1980 = vld [vmem:[#allocation5 + $0xea8] sm:$0xff]
    %v1981 = vld [vmem:[#allocation5 + $0xeb0] sm:$0xff]
    %v1982 = vld [vmem:[#allocation5 + $0xeb8] sm:$0xff]
    %v1983 = vld [vmem:[#allocation5 + $0xec0] sm:$0xff]
    %v1984 = vld [vmem:[#allocation5 + $0xec8] sm:$0xff]
    %v1985 = vld [vmem:[#allocation5 + $0xed0] sm:$0xff]
    %v1986 = vld [vmem:[#allocation5 + $0xed8] sm:$0xff]
    %v1987 = vld [vmem:[#allocation5 + $0xee0] sm:$0xff]
    %v1988 = vld [vmem:[#allocation5 + $0xee8] sm:$0xff]
    %v1989 = vld [vmem:[#allocation5 + $0xef0] sm:$0xff]
    %v1990 = vld [vmem:[#allocation5 + $0xef8] sm:$0xff]
    %v1991 = vld [vmem:[#allocation5 + $0xf00] sm:$0xff]
    %v1992 = vld [vmem:[#allocation5 + $0xf08] sm:$0xff]
    %v1993 = vld [vmem:[#allocation5 + $0xf10] sm:$0xff]
    %v1994 = vld [vmem:[#allocation5 + $0xf18] sm:$0xff]
    %v1995 = vld [vmem:[#allocation5 + $0xf20] sm:$0xff]
    %v1996 = vld [vmem:[#allocation5 + $0xf28] sm:$0xff]
    %v1997 = vld [vmem:[#allocation5 + $0xf30] sm:$0xff]
    %v1998 = vld [vmem:[#allocation5 + $0xf38] sm:$0xff]
    %v1999 = vld [vmem:[#allocation5 + $0xf40] sm:$0xff]
    %v2000 = vld [vmem:[#allocation5 + $0xf48] sm:$0xff]
    %v2001 = vld [vmem:[#allocation5 + $0xf50] sm:$0xff]
    %v2002 = vld [vmem:[#allocation5 + $0xf58] sm:$0xff]
    %v2003 = vld [vmem:[#allocation5 + $0xf60] sm:$0xff]
    %v2004 = vld [vmem:[#allocation5 + $0xf68] sm:$0xff]
    %v2005 = vld [vmem:[#allocation5 + $0xf70] sm:$0xff]
    %v2006 = vld [vmem:[#allocation5 + $0xf78] sm:$0xff]
    %v2007 = vld [vmem:[#allocation5 + $0xf80] sm:$0xff]
    %v2008 = vld [vmem:[#allocation5 + $0xf88] sm:$0xff]
    %v2009 = vld [vmem:[#allocation5 + $0xf90] sm:$0xff]
    %v2010 = vld [vmem:[#allocation5 + $0xf98] sm:$0xff]
    %v2011 = vld [vmem:[#allocation5 + $0xfa0] sm:$0xff]
    %v2012 = vld [vmem:[#allocation5 + $0xfa8] sm:$0xff]
    %v2013 = vld [vmem:[#allocation5 + $0xfb0] sm:$0xff]
    %v2014 = vld [vmem:[#allocation5 + $0xfb8] sm:$0xff]
    %v2015 = vpack.c.bf16 %v1517, %v1511
    %v2016 = vpack.c.bf16 %v1518, %v1512
    %v2017 = vpack.c.bf16 %v1519, %v1513
    %v2018 = vpack.c.bf16 %v1520, %v1514
    %v2019 = vpack.c.bf16 %v1521, %v1515
    %v2020 = vpack.c.bf16 %v1522, %v1516
    %v2021 = vpack.c.bf16 %v1529, %v1523
    %v2022 = vpack.c.bf16 %v1530, %v1524
    %v2023 = vpack.c.bf16 %v1531, %v1525
    %v2024 = vpack.c.bf16 %v1532, %v1526
    %v2025 = vpack.c.bf16 %v1533, %v1527
    %v2026 = vpack.c.bf16 %v1534, %v1528
    %v2027 = vpack.c.bf16 %v1541, %v1535
    %v2028 = vpack.c.bf16 %v1542, %v1536
    %v2029 = vpack.c.bf16 %v1543, %v1537
    %v2030 = vpack.c.bf16 %v1544, %v1538
    %v2031 = vpack.c.bf16 %v1545, %v1539
    %v2032 = vpack.c.bf16 %v1546, %v1540
    %v2033 = vpack.c.bf16 %v1553, %v1547
    %v2034 = vpack.c.bf16 %v1554, %v1548
    %v2035 = vpack.c.bf16 %v1555, %v1549
    %v2036 = vpack.c.bf16 %v1556, %v1550
    %v2037 = vpack.c.bf16 %v1557, %v1551
    %v2038 = vpack.c.bf16 %v1558, %v1552
    %v2039 = vpack.c.bf16 %v1565, %v1559
    %v2040 = vpack.c.bf16 %v1566, %v1560
    %v2041 = vpack.c.bf16 %v1567, %v1561
    %v2042 = vpack.c.bf16 %v1568, %v1562
    %v2043 = vpack.c.bf16 %v1569, %v1563
    %v2044 = vpack.c.bf16 %v1570, %v1564
    %v2045 = vpack.c.bf16 %v1577, %v1571
    %v2046 = vpack.c.bf16 %v1578, %v1572
    %v2047 = vpack.c.bf16 %v1579, %v1573
    %v2048 = vpack.c.bf16 %v1580, %v1574
    %v2049 = vpack.c.bf16 %v1581, %v1575
    %v2050 = vpack.c.bf16 %v1582, %v1576
    %v2051 = vpack.c.bf16 %v1589, %v1583
    %v2052 = vpack.c.bf16 %v1590, %v1584
    %v2053 = vpack.c.bf16 %v1591, %v1585
    %v2054 = vpack.c.bf16 %v1592, %v1586
    %v2055 = vpack.c.bf16 %v1593, %v1587
    %v2056 = vpack.c.bf16 %v1594, %v1588
    %v2057 = vpack.c.bf16 %v1601, %v1595
    %v2058 = vpack.c.bf16 %v1602, %v1596
    %v2059 = vpack.c.bf16 %v1603, %v1597
    %v2060 = vpack.c.bf16 %v1604, %v1598
    %v2061 = vpack.c.bf16 %v1605, %v1599
    %v2062 = vpack.c.bf16 %v1606, %v1600
    %v2063 = vpack.c.bf16 %v1613, %v1607
    %v2064 = vpack.c.bf16 %v1614, %v1608
    %v2065 = vpack.c.bf16 %v1615, %v1609
    %v2066 = vpack.c.bf16 %v1616, %v1610
    %v2067 = vpack.c.bf16 %v1617, %v1611
    %v2068 = vpack.c.bf16 %v1618, %v1612
    %v2069 = vpack.c.bf16 %v1625, %v1619
    %v2070 = vpack.c.bf16 %v1626, %v1620
    %v2071 = vpack.c.bf16 %v1627, %v1621
    %v2072 = vpack.c.bf16 %v1628, %v1622
    %v2073 = vpack.c.bf16 %v1629, %v1623
    %v2074 = vpack.c.bf16 %v1630, %v1624
    %v2075 = vpack.c.bf16 %v1637, %v1631
    %v2076 = vpack.c.bf16 %v1638, %v1632
    %v2077 = vpack.c.bf16 %v1639, %v1633
    %v2078 = vpack.c.bf16 %v1640, %v1634
    %v2079 = vpack.c.bf16 %v1641, %v1635
    %v2080 = vpack.c.bf16 %v1642, %v1636
    %v2081 = vpack.c.bf16 %v1649, %v1643
    %v2082 = vpack.c.bf16 %v1650, %v1644
    %v2083 = vpack.c.bf16 %v1651, %v1645
    %v2084 = vpack.c.bf16 %v1652, %v1646
    %v2085 = vpack.c.bf16 %v1653, %v1647
    %v2086 = vpack.c.bf16 %v1654, %v1648
    %v2087 = vpack.c.bf16 %v1661, %v1655
    %v2088 = vpack.c.bf16 %v1662, %v1656
    %v2089 = vpack.c.bf16 %v1663, %v1657
    %v2090 = vpack.c.bf16 %v1664, %v1658
    %v2091 = vpack.c.bf16 %v1665, %v1659
    %v2092 = vpack.c.bf16 %v1666, %v1660
    %v2093 = vpack.c.bf16 %v1673, %v1667
    %v2094 = vpack.c.bf16 %v1674, %v1668
    %v2095 = vpack.c.bf16 %v1675, %v1669
    %v2096 = vpack.c.bf16 %v1676, %v1670
    %v2097 = vpack.c.bf16 %v1677, %v1671
    %v2098 = vpack.c.bf16 %v1678, %v1672
    %v2099 = vpack.c.bf16 %v1685, %v1679
    %v2100 = vpack.c.bf16 %v1686, %v1680
    %v2101 = vpack.c.bf16 %v1687, %v1681
    %v2102 = vpack.c.bf16 %v1688, %v1682
    %v2103 = vpack.c.bf16 %v1689, %v1683
    %v2104 = vpack.c.bf16 %v1690, %v1684
    %v2105 = vpack.c.bf16 %v1697, %v1691
    %v2106 = vpack.c.bf16 %v1698, %v1692
    %v2107 = vpack.c.bf16 %v1699, %v1693
    %v2108 = vpack.c.bf16 %v1700, %v1694
    %v2109 = vpack.c.bf16 %v1701, %v1695
    %v2110 = vpack.c.bf16 %v1702, %v1696
    %v2111 = vpack.c.bf16 %v1709, %v1703
    %v2112 = vpack.c.bf16 %v1710, %v1704
    %v2113 = vpack.c.bf16 %v1711, %v1705
    %v2114 = vpack.c.bf16 %v1712, %v1706
    %v2115 = vpack.c.bf16 %v1713, %v1707
    %v2116 = vpack.c.bf16 %v1714, %v1708
    %v2117 = vpack.c.bf16 %v1721, %v1715
    %v2118 = vpack.c.bf16 %v1722, %v1716
    %v2119 = vpack.c.bf16 %v1723, %v1717
    %v2120 = vpack.c.bf16 %v1724, %v1718
    %v2121 = vpack.c.bf16 %v1725, %v1719
    %v2122 = vpack.c.bf16 %v1726, %v1720
    %v2123 = vpack.c.bf16 %v1733, %v1727
    %v2124 = vpack.c.bf16 %v1734, %v1728
    %v2125 = vpack.c.bf16 %v1735, %v1729
    %v2126 = vpack.c.bf16 %v1736, %v1730
    %v2127 = vpack.c.bf16 %v1737, %v1731
    %v2128 = vpack.c.bf16 %v1738, %v1732
    %v2129 = vpack.c.bf16 %v1745, %v1739
    %v2130 = vpack.c.bf16 %v1746, %v1740
    %v2131 = vpack.c.bf16 %v1747, %v1741
    %v2132 = vpack.c.bf16 %v1748, %v1742
    %v2133 = vpack.c.bf16 %v1749, %v1743
    %v2134 = vpack.c.bf16 %v1750, %v1744
    %v2135 = vpack.c.bf16 %v1757, %v1751
    %v2136 = vpack.c.bf16 %v1758, %v1752
    %v2137 = vpack.c.bf16 %v1759, %v1753
    %v2138 = vpack.c.bf16 %v1760, %v1754
    %v2139 = vpack.c.bf16 %v1761, %v1755
    %v2140 = vpack.c.bf16 %v1762, %v1756
    %v2141 = vpack.c.bf16 %v1769, %v1763
    %v2142 = vpack.c.bf16 %v1770, %v1764
    %v2143 = vpack.c.bf16 %v1771, %v1765
    %v2144 = vpack.c.bf16 %v1772, %v1766
    %v2145 = vpack.c.bf16 %v1773, %v1767
    %v2146 = vpack.c.bf16 %v1774, %v1768
    %v2147 = vpack.c.bf16 %v1781, %v1775
    %v2148 = vpack.c.bf16 %v1782, %v1776
    %v2149 = vpack.c.bf16 %v1783, %v1777
    %v2150 = vpack.c.bf16 %v1784, %v1778
    %v2151 = vpack.c.bf16 %v1785, %v1779
    %v2152 = vpack.c.bf16 %v1786, %v1780
    %v2153 = vpack.c.bf16 %v1793, %v1787
    %v2154 = vpack.c.bf16 %v1794, %v1788
    %v2155 = vpack.c.bf16 %v1795, %v1789
    %v2156 = vpack.c.bf16 %v1796, %v1790
    %v2157 = vpack.c.bf16 %v1797, %v1791
    %v2158 = vpack.c.bf16 %v1798, %v1792
    %v2159 = vpack.c.bf16 %v1805, %v1799
    %v2160 = vpack.c.bf16 %v1806, %v1800
    %v2161 = vpack.c.bf16 %v1807, %v1801
    %v2162 = vpack.c.bf16 %v1808, %v1802
    %v2163 = vpack.c.bf16 %v1809, %v1803
    %v2164 = vpack.c.bf16 %v1810, %v1804
    %v2165 = vpack.c.bf16 %v1817, %v1811
    %v2166 = vpack.c.bf16 %v1818, %v1812
    %v2167 = vpack.c.bf16 %v1819, %v1813
    %v2168 = vpack.c.bf16 %v1820, %v1814
    %v2169 = vpack.c.bf16 %v1821, %v1815
    %v2170 = vpack.c.bf16 %v1822, %v1816
    %v2171 = vpack.c.bf16 %v1829, %v1823
    %v2172 = vpack.c.bf16 %v1830, %v1824
    %v2173 = vpack.c.bf16 %v1831, %v1825
    %v2174 = vpack.c.bf16 %v1832, %v1826
    %v2175 = vpack.c.bf16 %v1833, %v1827
    %v2176 = vpack.c.bf16 %v1834, %v1828
    %v2177 = vpack.c.bf16 %v1841, %v1835
    %v2178 = vpack.c.bf16 %v1842, %v1836
    %v2179 = vpack.c.bf16 %v1843, %v1837
    %v2180 = vpack.c.bf16 %v1844, %v1838
    %v2181 = vpack.c.bf16 %v1845, %v1839
    %v2182 = vpack.c.bf16 %v1846, %v1840
    %v2183 = vpack.c.bf16 %v1853, %v1847
    %v2184 = vpack.c.bf16 %v1854, %v1848
    %v2185 = vpack.c.bf16 %v1855, %v1849
    %v2186 = vpack.c.bf16 %v1856, %v1850
    %v2187 = vpack.c.bf16 %v1857, %v1851
    %v2188 = vpack.c.bf16 %v1858, %v1852
    %v2189 = vpack.c.bf16 %v1865, %v1859
    %v2190 = vpack.c.bf16 %v1866, %v1860
    %v2191 = vpack.c.bf16 %v1867, %v1861
    %v2192 = vpack.c.bf16 %v1868, %v1862
    %v2193 = vpack.c.bf16 %v1869, %v1863
    %v2194 = vpack.c.bf16 %v1870, %v1864
    %v2195 = vpack.c.bf16 %v1877, %v1871
    %v2196 = vpack.c.bf16 %v1878, %v1872
    %v2197 = vpack.c.bf16 %v1879, %v1873
    %v2198 = vpack.c.bf16 %v1880, %v1874
    %v2199 = vpack.c.bf16 %v1881, %v1875
    %v2200 = vpack.c.bf16 %v1882, %v1876
    %v2201 = vpack.c.bf16 %v1889, %v1883
    %v2202 = vpack.c.bf16 %v1890, %v1884
    %v2203 = vpack.c.bf16 %v1891, %v1885
    %v2204 = vpack.c.bf16 %v1892, %v1886
    %v2205 = vpack.c.bf16 %v1893, %v1887
    %v2206 = vpack.c.bf16 %v1894, %v1888
    %v2207 = vpack.c.bf16 %v1901, %v1895
    %v2208 = vpack.c.bf16 %v1902, %v1896
    %v2209 = vpack.c.bf16 %v1903, %v1897
    %v2210 = vpack.c.bf16 %v1904, %v1898
    %v2211 = vpack.c.bf16 %v1905, %v1899
    %v2212 = vpack.c.bf16 %v1906, %v1900
    %v2213 = vpack.c.bf16 %v1913, %v1907
    %v2214 = vpack.c.bf16 %v1914, %v1908
    %v2215 = vpack.c.bf16 %v1915, %v1909
    %v2216 = vpack.c.bf16 %v1916, %v1910
    %v2217 = vpack.c.bf16 %v1917, %v1911
    %v2218 = vpack.c.bf16 %v1918, %v1912
    %v2219 = vpack.c.bf16 %v1925, %v1919
    %v2220 = vpack.c.bf16 %v1926, %v1920
    %v2221 = vpack.c.bf16 %v1927, %v1921
    %v2222 = vpack.c.bf16 %v1928, %v1922
    %v2223 = vpack.c.bf16 %v1929, %v1923
    %v2224 = vpack.c.bf16 %v1930, %v1924
    %v2225 = vpack.c.bf16 %v1937, %v1931
    %v2226 = vpack.c.bf16 %v1938, %v1932
    %v2227 = vpack.c.bf16 %v1939, %v1933
    %v2228 = vpack.c.bf16 %v1940, %v1934
    %v2229 = vpack.c.bf16 %v1941, %v1935
    %v2230 = vpack.c.bf16 %v1942, %v1936
    %v2231 = vpack.c.bf16 %v1949, %v1943
    %v2232 = vpack.c.bf16 %v1950, %v1944
    %v2233 = vpack.c.bf16 %v1951, %v1945
    %v2234 = vpack.c.bf16 %v1952, %v1946
    %v2235 = vpack.c.bf16 %v1953, %v1947
    %v2236 = vpack.c.bf16 %v1954, %v1948
    %v2237 = vpack.c.bf16 %v1961, %v1955
    %v2238 = vpack.c.bf16 %v1962, %v1956
    %v2239 = vpack.c.bf16 %v1963, %v1957
    %v2240 = vpack.c.bf16 %v1964, %v1958
    %v2241 = vpack.c.bf16 %v1965, %v1959
    %v2242 = vpack.c.bf16 %v1966, %v1960
    %v2243 = vpack.c.bf16 %v1973, %v1967
    %v2244 = vpack.c.bf16 %v1974, %v1968
    %v2245 = vpack.c.bf16 %v1975, %v1969
    %v2246 = vpack.c.bf16 %v1976, %v1970
    %v2247 = vpack.c.bf16 %v1977, %v1971
    %v2248 = vpack.c.bf16 %v1978, %v1972
    %v2249 = vpack.c.bf16 %v1985, %v1979
    %v2250 = vpack.c.bf16 %v1986, %v1980
    %v2251 = vpack.c.bf16 %v1987, %v1981
    %v2252 = vpack.c.bf16 %v1988, %v1982
    %v2253 = vpack.c.bf16 %v1989, %v1983
    %v2254 = vpack.c.bf16 %v1990, %v1984
    %v2255 = vpack.c.bf16 %v1997, %v1991
    %v2256 = vpack.c.bf16 %v1998, %v1992
    %v2257 = vpack.c.bf16 %v1999, %v1993
    %v2258 = vpack.c.bf16 %v2000, %v1994
    %v2259 = vpack.c.bf16 %v2001, %v1995
    %v2260 = vpack.c.bf16 %v2002, %v1996
    %v2261 = vpack.c.bf16 %v2009, %v2003
    %v2262 = vpack.c.bf16 %v2010, %v2004
    %v2263 = vpack.c.bf16 %v2011, %v2005
    %v2264 = vpack.c.bf16 %v2012, %v2006
    %v2265 = vpack.c.bf16 %v2013, %v2007
    %v2266 = vpack.c.bf16 %v2014, %v2008
    %vm2267 = vcmask 261120
    %v2269 = vsel %vm2267, %v2020, 0
    %v2272 = vsel %vm2267, %v2026, 0
    %v2275 = vsel %vm2267, %v2032, 0
    %v2278 = vsel %vm2267, %v2038, 0
    %v2281 = vsel %vm2267, %v2044, 0
    %v2284 = vsel %vm2267, %v2050, 0
    %v2287 = vsel %vm2267, %v2056, 0
    %v2290 = vsel %vm2267, %v2062, 0
    %v2293 = vsel %vm2267, %v2068, 0
    %v2296 = vsel %vm2267, %v2074, 0
    %v2299 = vsel %vm2267, %v2080, 0
    %v2302 = vsel %vm2267, %v2086, 0
    %v2305 = vsel %vm2267, %v2092, 0
    %v2308 = vsel %vm2267, %v2098, 0
    %v2311 = vsel %vm2267, %v2104, 0
    %v2314 = vsel %vm2267, %v2110, 0
    %v2317 = vsel %vm2267, %v2116, 0
    %v2320 = vsel %vm2267, %v2122, 0
    %v2323 = vsel %vm2267, %v2128, 0
    %v2326 = vsel %vm2267, %v2134, 0
    %v2329 = vsel %vm2267, %v2140, 0
    %v2332 = vsel %vm2267, %v2146, 0
    %v2335 = vsel %vm2267, %v2152, 0
    %v2338 = vsel %vm2267, %v2158, 0
    %v2341 = vsel %vm2267, %v2164, 0
    %v2344 = vsel %vm2267, %v2170, 0
    %v2347 = vsel %vm2267, %v2176, 0
    %v2350 = vsel %vm2267, %v2182, 0
    %v2353 = vsel %vm2267, %v2188, 0
    %v2356 = vsel %vm2267, %v2194, 0
    %v2359 = vsel %vm2267, %v2200, 0
    %v2362 = vsel %vm2267, %v2206, 0
    %v2365 = vsel %vm2267, %v2212, 0
    %v2368 = vsel %vm2267, %v2218, 0
    %v2371 = vsel %vm2267, %v2224, 0
    %v2374 = vsel %vm2267, %v2230, 0
    %v2377 = vsel %vm2267, %v2236, 0
    %v2380 = vsel %vm2267, %v2242, 0
    %v2383 = vsel %vm2267, %v2248, 0
    %v2386 = vsel %vm2267, %v2254, 0
    %v2389 = vsel %vm2267, %v2260, 0
    %v2392 = vsel %vm2267, %v2266, 0
    %2394 = vmatprep.subr.bf16.mxu0 %v1218
    %2395 = vmatpush1.bf16.msra.mxu0 %v1217
    %2396 = vmatprep.subr.bf16.mxu0 %v1225
    %2397 = vmatpush1.bf16.msra.mxu0 %v1224
    %2398 = vmatprep.subr.bf16.mxu0 %v1232
    %2399 = vmatpush1.bf16.msra.mxu0 %v1231
    %2400 = vmatprep.subr.bf16.mxu0 %v1239
    %2401 = vmatpush1.bf16.msra.mxu0 %v1238
    %2402 = vmatprep.subr.bf16.mxu0 %v1246
    %2403 = vmatpush1.bf16.msra.mxu0 %v1245
    %2404 = vmatprep.subr.bf16.mxu0 %v1253
    %2405 = vmatpush1.bf16.msra.mxu0 %v1252
    %2406 = vmatprep.subr.bf16.mxu0 %v1260
    %2407 = vmatpush1.bf16.msra.mxu0 %v1259
    %2408 = vmatprep.subr.bf16.mxu0 %v1267
    %2409 = vmatpush1.bf16.msra.mxu0 %v1266
    %2410 = vmatprep.subr.bf16.mxu0 %v1274
    %2411 = vmatpush1.bf16.msra.mxu0 %v1273
    %2412 = vmatprep.subr.bf16.mxu0 %v1281
    %2413 = vmatpush1.bf16.msra.mxu0 %v1280
    %2414 = vmatprep.subr.bf16.mxu0 %v1288
    %2415 = vmatpush1.bf16.msra.mxu0 %v1287
    %2416 = vmatprep.subr.bf16.mxu0 %v1295
    %2417 = vmatpush1.bf16.msra.mxu0 %v1294
    %2418 = vmatprep.subr.bf16.mxu0 %v1302
    %2419 = vmatpush1.bf16.msra.mxu0 %v1301
    %2420 = vmatprep.subr.bf16.mxu0 %v1309
    %2421 = vmatpush1.bf16.msra.mxu0 %v1308
    %2422 = vmatprep.subr.bf16.mxu0 %v1316
    %2423 = vmatpush1.bf16.msra.mxu0 %v1315
    %2424 = vmatprep.subr.bf16.mxu0 %v1323
    %2425 = vmatpush1.bf16.msra.mxu0 %v1322
    %2426 = vmatprep.mubr.bf16.mxu0 %v2016
    %2427 = vmatmul.mubr.bf16.gmra.mrb[0].mxu0 %v2015
    %v2428 = vpop.f32.mrb[0].mxu0
    %v2429 = vadd.f32 0.0, %v2428
    %v2430 = vpop.f32.mrb[0].mxu0
    %v2431 = vadd.f32 0.0, %v2430
    %v2432 = vpop.f32.mrb[0].mxu0
    %v2433 = vadd.f32 0.0, %v2432
    %v2434 = vpop.f32.mrb[0].mxu0
    %v2435 = vadd.f32 0.0, %v2434
    %2436 = vmatprep.mubr.bf16.mxu0 %v2022
    %2437 = vmatmul.mubr.bf16.gmra.mrb[0].mxu0 %v2021
    %v2438 = vpop.f32.mrb[0].mxu0
    %v2439 = vadd.f32 0.0, %v2438
    %v2440 = vpop.f32.mrb[0].mxu0
    %v2441 = vadd.f32 0.0, %v2440
    %v2442 = vpop.f32.mrb[0].mxu0
    %v2443 = vadd.f32 0.0, %v2442
    %v2444 = vpop.f32.mrb[0].mxu0
    %v2445 = vadd.f32 0.0, %v2444
    %2446 = vmatprep.mubr.bf16.mxu0 %v2028
    %2447 = vmatmul.mubr.bf16.gmra.mrb[0].mxu0 %v2027
    %v2448 = vpop.f32.mrb[0].mxu0
    %v2449 = vadd.f32 0.0, %v2448
    %v2450 = vpop.f32.mrb[0].mxu0
    %v2451 = vadd.f32 0.0, %v2450
    %v2452 = vpop.f32.mrb[0].mxu0
    %v2453 = vadd.f32 0.0, %v2452
    %v2454 = vpop.f32.mrb[0].mxu0
    %v2455 = vadd.f32 0.0, %v2454
    %2456 = vmatprep.mubr.bf16.mxu0 %v2034
    %2457 = vmatmul.mubr.bf16.gmra.mrb[0].mxu0 %v2033
    %v2458 = vpop.f32.mrb[0].mxu0
    %v2459 = vadd.f32 0.0, %v2458
    %v2460 = vpop.f32.mrb[0].mxu0
    %v2461 = vadd.f32 0.0, %v2460
    %v2462 = vpop.f32.mrb[0].mxu0
    %v2463 = vadd.f32 0.0, %v2462
    %v2464 = vpop.f32.mrb[0].mxu0
    %v2465 = vadd.f32 0.0, %v2464
    %2466 = vmatprep.mubr.bf16.mxu0 %v2040
    %2467 = vmatmul.mubr.bf16.gmra.mrb[0].mxu0 %v2039
    %v2468 = vpop.f32.mrb[0].mxu0
    %v2469 = vadd.f32 0.0, %v2468
    %v2470 = vpop.f32.mrb[0].mxu0
    %v2471 = vadd.f32 0.0, %v2470
    %v2472 = vpop.f32.mrb[0].mxu0
    %v2473 = vadd.f32 0.0, %v2472
    %v2474 = vpop.f32.mrb[0].mxu0
    %v2475 = vadd.f32 0.0, %v2474
    %2476 = vmatprep.mubr.bf16.mxu0 %v2046
    %2477 = vmatmul.mubr.bf16.gmra.mrb[0].mxu0 %v2045
    %v2478 = vpop.f32.mrb[0].mxu0
    %v2479 = vadd.f32 0.0, %v2478
    %v2480 = vpop.f32.mrb[0].mxu0
    %v2481 = vadd.f32 0.0, %v2480
    %v2482 = vpop.f32.mrb[0].mxu0
    %v2483 = vadd.f32 0.0, %v2482
    %v2484 = vpop.f32.mrb[0].mxu0
    %v2485 = vadd.f32 0.0, %v2484
    %2486 = vmatprep.mubr.bf16.mxu0 %v2052
    %2487 = vmatmul.mubr.bf16.gmra.mrb[0].mxu0 %v2051
    %v2488 = vpop.f32.mrb[0].mxu0
    %v2489 = vadd.f32 0.0, %v2488
    %v2490 = vpop.f32.mrb[0].mxu0
    %v2491 = vadd.f32 0.0, %v2490
    %v2492 = vpop.f32.mrb[0].mxu0
    %v2493 = vadd.f32 0.0, %v2492
    %v2494 = vpop.f32.mrb[0].mxu0
    %v2495 = vadd.f32 0.0, %v2494
    %2496 = vmatprep.mubr.bf16.mxu0 %v2058
    %2497 = vmatmul.mubr.bf16.gmra.mrb[0].mxu0 %v2057
    %v2498 = vpop.f32.mrb[0].mxu0
    %v2499 = vadd.f32 0.0, %v2498
    %v2500 = vpop.f32.mrb[0].mxu0
    %v2501 = vadd.f32 0.0, %v2500
    %v2502 = vpop.f32.mrb[0].mxu0
    %v2503 = vadd.f32 0.0, %v2502
    %v2504 = vpop.f32.mrb[0].mxu0
    %v2505 = vadd.f32 0.0, %v2504
    %2506 = vmatprep.mubr.bf16.mxu0 %v2064
    %2507 = vmatmul.mubr.bf16.gmra.mrb[0].mxu0 %v2063
    %v2508 = vpop.f32.mrb[0].mxu0
    %v2509 = vadd.f32 0.0, %v2508
    %v2510 = vpop.f32.mrb[0].mxu0
    %v2511 = vadd.f32 0.0, %v2510
    %v2512 = vpop.f32.mrb[0].mxu0
    %v2513 = vadd.f32 0.0, %v2512
    %v2514 = vpop.f32.mrb[0].mxu0
    %v2515 = vadd.f32 0.0, %v2514
    %2516 = vmatprep.mubr.bf16.mxu0 %v2070
    %2517 = vmatmul.mubr.bf16.gmra.mrb[0].mxu0 %v2069
    %v2518 = vpop.f32.mrb[0].mxu0
    %v2519 = vadd.f32 0.0, %v2518
    %v2520 = vpop.f32.mrb[0].mxu0
    %v2521 = vadd.f32 0.0, %v2520
    %v2522 = vpop.f32.mrb[0].mxu0
    %v2523 = vadd.f32 0.0, %v2522
    %v2524 = vpop.f32.mrb[0].mxu0
    %v2525 = vadd.f32 0.0, %v2524
    %2526 = vmatprep.mubr.bf16.mxu0 %v2076
    %2527 = vmatmul.mubr.bf16.gmra.mrb[0].mxu0 %v2075
    %v2528 = vpop.f32.mrb[0].mxu0
    %v2529 = vadd.f32 0.0, %v2528
    %v2530 = vpop.f32.mrb[0].mxu0
    %v2531 = vadd.f32 0.0, %v2530
    %v2532 = vpop.f32.mrb[0].mxu0
    %v2533 = vadd.f32 0.0, %v2532
    %v2534 = vpop.f32.mrb[0].mxu0
    %v2535 = vadd.f32 0.0, %v2534
    %2536 = vmatprep.mubr.bf16.mxu0 %v2082
    %2537 = vmatmul.mubr.bf16.gmra.mrb[0].mxu0 %v2081
    %v2538 = vpop.f32.mrb[0].mxu0
    %v2539 = vadd.f32 0.0, %v2538
    %v2540 = vpop.f32.mrb[0].mxu0
    %v2541 = vadd.f32 0.0, %v2540
    %v2542 = vpop.f32.mrb[0].mxu0
    %v2543 = vadd.f32 0.0, %v2542
    %v2544 = vpop.f32.mrb[0].mxu0
    %v2545 = vadd.f32 0.0, %v2544
    %2546 = vmatprep.mubr.bf16.mxu0 %v2088
    %2547 = vmatmul.mubr.bf16.gmra.mrb[0].mxu0 %v2087
    %v2548 = vpop.f32.mrb[0].mxu0
    %v2549 = vadd.f32 0.0, %v2548
    %v2550 = vpop.f32.mrb[0].mxu0
    %v2551 = vadd.f32 0.0, %v2550
    %v2552 = vpop.f32.mrb[0].mxu0
    %v2553 = vadd.f32 0.0, %v2552
    %v2554 = vpop.f32.mrb[0].mxu0
    %v2555 = vadd.f32 0.0, %v2554
    %2556 = vmatprep.mubr.bf16.mxu0 %v2094
    %2557 = vmatmul.mubr.bf16.gmra.mrb[0].mxu0 %v2093
    %v2558 = vpop.f32.mrb[0].mxu0
    %v2559 = vadd.f32 0.0, %v2558
    %v2560 = vpop.f32.mrb[0].mxu0
    %v2561 = vadd.f32 0.0, %v2560
    %v2562 = vpop.f32.mrb[0].mxu0
    %v2563 = vadd.f32 0.0, %v2562
    %v2564 = vpop.f32.mrb[0].mxu0
    %v2565 = vadd.f32 0.0, %v2564
    %2566 = vmatprep.mubr.bf16.mxu0 %v2100
    %2567 = vmatmul.mubr.bf16.gmra.mrb[0].mxu0 %v2099
    %v2568 = vpop.f32.mrb[0].mxu0
    %v2569 = vadd.f32 0.0, %v2568
    %v2570 = vpop.f32.mrb[0].mxu0
    %v2571 = vadd.f32 0.0, %v2570
    %v2572 = vpop.f32.mrb[0].mxu0
    %v2573 = vadd.f32 0.0, %v2572
    %v2574 = vpop.f32.mrb[0].mxu0
    %v2575 = vadd.f32 0.0, %v2574
    %2576 = vmatprep.mubr.bf16.mxu0 %v2106
    %2577 = vmatmul.mubr.bf16.gmra.mrb[0].mxu0 %v2105
    %v2578 = vpop.f32.mrb[0].mxu0
    %v2579 = vadd.f32 0.0, %v2578
    %v2580 = vpop.f32.mrb[0].mxu0
    %v2581 = vadd.f32 0.0, %v2580
    %v2582 = vpop.f32.mrb[0].mxu0
    %v2583 = vadd.f32 0.0, %v2582
    %v2584 = vpop.f32.mrb[0].mxu0
    %v2585 = vadd.f32 0.0, %v2584
    %2586 = vmatprep.mubr.bf16.mxu0 %v2112
    %2587 = vmatmul.mubr.bf16.gmra.mrb[0].mxu0 %v2111
    %v2588 = vpop.f32.mrb[0].mxu0
    %v2589 = vadd.f32 0.0, %v2588
    %v2590 = vpop.f32.mrb[0].mxu0
    %v2591 = vadd.f32 0.0, %v2590
    %v2592 = vpop.f32.mrb[0].mxu0
    %v2593 = vadd.f32 0.0, %v2592
    %v2594 = vpop.f32.mrb[0].mxu0
    %v2595 = vadd.f32 0.0, %v2594
    %2596 = vmatprep.mubr.bf16.mxu0 %v2118
    %2597 = vmatmul.mubr.bf16.gmra.mrb[0].mxu0 %v2117
    %v2598 = vpop.f32.mrb[0].mxu0
    %v2599 = vadd.f32 0.0, %v2598
    %v2600 = vpop.f32.mrb[0].mxu0
    %v2601 = vadd.f32 0.0, %v2600
    %v2602 = vpop.f32.mrb[0].mxu0
    %v2603 = vadd.f32 0.0, %v2602
    %v2604 = vpop.f32.mrb[0].mxu0
    %v2605 = vadd.f32 0.0, %v2604
    %2606 = vmatprep.mubr.bf16.mxu0 %v2124
    %2607 = vmatmul.mubr.bf16.gmra.mrb[0].mxu0 %v2123
    %v2608 = vpop.f32.mrb[0].mxu0
    %v2609 = vadd.f32 0.0, %v2608
    %v2610 = vpop.f32.mrb[0].mxu0
    %v2611 = vadd.f32 0.0, %v2610
    %v2612 = vpop.f32.mrb[0].mxu0
    %v2613 = vadd.f32 0.0, %v2612
    %v2614 = vpop.f32.mrb[0].mxu0
    %v2615 = vadd.f32 0.0, %v2614
    %2616 = vmatprep.mubr.bf16.mxu0 %v2130
    %2617 = vmatmul.mubr.bf16.gmra.mrb[0].mxu0 %v2129
    %v2618 = vpop.f32.mrb[0].mxu0
    %v2619 = vadd.f32 0.0, %v2618
    %v2620 = vpop.f32.mrb[0].mxu0
    %v2621 = vadd.f32 0.0, %v2620
    %v2622 = vpop.f32.mrb[0].mxu0
    %v2623 = vadd.f32 0.0, %v2622
    %v2624 = vpop.f32.mrb[0].mxu0
    %v2625 = vadd.f32 0.0, %v2624
    %2626 = vmatprep.mubr.bf16.mxu0 %v2136
    %2627 = vmatmul.mubr.bf16.gmra.mrb[0].mxu0 %v2135
    %v2628 = vpop.f32.mrb[0].mxu0
    %v2629 = vadd.f32 0.0, %v2628
    %v2630 = vpop.f32.mrb[0].mxu0
    %v2631 = vadd.f32 0.0, %v2630
    %v2632 = vpop.f32.mrb[0].mxu0
    %v2633 = vadd.f32 0.0, %v2632
    %v2634 = vpop.f32.mrb[0].mxu0
    %v2635 = vadd.f32 0.0, %v2634
    %2636 = vmatprep.mubr.bf16.mxu0 %v2142
    %2637 = vmatmul.mubr.bf16.gmra.mrb[0].mxu0 %v2141
    %v2638 = vpop.f32.mrb[0].mxu0
    %v2639 = vadd.f32 0.0, %v2638
    %v2640 = vpop.f32.mrb[0].mxu0
    %v2641 = vadd.f32 0.0, %v2640
    %v2642 = vpop.f32.mrb[0].mxu0
    %v2643 = vadd.f32 0.0, %v2642
    %v2644 = vpop.f32.mrb[0].mxu0
    %v2645 = vadd.f32 0.0, %v2644
    %2646 = vmatprep.mubr.bf16.mxu0 %v2148
    %2647 = vmatmul.mubr.bf16.gmra.mrb[0].mxu0 %v2147
    %v2648 = vpop.f32.mrb[0].mxu0
    %v2649 = vadd.f32 0.0, %v2648
    %v2650 = vpop.f32.mrb[0].mxu0
    %v2651 = vadd.f32 0.0, %v2650
    %v2652 = vpop.f32.mrb[0].mxu0
    %v2653 = vadd.f32 0.0, %v2652
    %v2654 = vpop.f32.mrb[0].mxu0
    %v2655 = vadd.f32 0.0, %v2654
    %2656 = vmatprep.mubr.bf16.mxu0 %v2154
    %2657 = vmatmul.mubr.bf16.gmra.mrb[0].mxu0 %v2153
    %v2658 = vpop.f32.mrb[0].mxu0
    %v2659 = vadd.f32 0.0, %v2658
    %v2660 = vpop.f32.mrb[0].mxu0
    %v2661 = vadd.f32 0.0, %v2660
    %v2662 = vpop.f32.mrb[0].mxu0
    %v2663 = vadd.f32 0.0, %v2662
    %v2664 = vpop.f32.mrb[0].mxu0
    %v2665 = vadd.f32 0.0, %v2664
    %2666 = vmatprep.mubr.bf16.mxu0 %v2160
    %2667 = vmatmul.mubr.bf16.gmra.mrb[0].mxu0 %v2159
    %v2668 = vpop.f32.mrb[0].mxu0
    %v2669 = vadd.f32 0.0, %v2668
    %v2670 = vpop.f32.mrb[0].mxu0
    %v2671 = vadd.f32 0.0, %v2670
    %v2672 = vpop.f32.mrb[0].mxu0
    %v2673 = vadd.f32 0.0, %v2672
    %v2674 = vpop.f32.mrb[0].mxu0
    %v2675 = vadd.f32 0.0, %v2674
    %2676 = vmatprep.mubr.bf16.mxu0 %v2166
    %2677 = vmatmul.mubr.bf16.gmra.mrb[0].mxu0 %v2165
    %v2678 = vpop.f32.mrb[0].mxu0
    %v2679 = vadd.f32 0.0, %v2678
    %v2680 = vpop.f32.mrb[0].mxu0
    %v2681 = vadd.f32 0.0, %v2680
    %v2682 = vpop.f32.mrb[0].mxu0
    %v2683 = vadd.f32 0.0, %v2682
    %v2684 = vpop.f32.mrb[0].mxu0
    %v2685 = vadd.f32 0.0, %v2684
    %2686 = vmatprep.mubr.bf16.mxu0 %v2172
    %2687 = vmatmul.mubr.bf16.gmra.mrb[0].mxu0 %v2171
    %v2688 = vpop.f32.mrb[0].mxu0
    %v2689 = vadd.f32 0.0, %v2688
    %v2690 = vpop.f32.mrb[0].mxu0
    %v2691 = vadd.f32 0.0, %v2690
    %v2692 = vpop.f32.mrb[0].mxu0
    %v2693 = vadd.f32 0.0, %v2692
    %v2694 = vpop.f32.mrb[0].mxu0
    %v2695 = vadd.f32 0.0, %v2694
    %2696 = vmatprep.mubr.bf16.mxu0 %v2178
    %2697 = vmatmul.mubr.bf16.gmra.mrb[0].mxu0 %v2177
    %v2698 = vpop.f32.mrb[0].mxu0
    %v2699 = vadd.f32 0.0, %v2698
    %v2700 = vpop.f32.mrb[0].mxu0
    %v2701 = vadd.f32 0.0, %v2700
    %v2702 = vpop.f32.mrb[0].mxu0
    %v2703 = vadd.f32 0.0, %v2702
    %v2704 = vpop.f32.mrb[0].mxu0
    %v2705 = vadd.f32 0.0, %v2704
    %2706 = vmatprep.mubr.bf16.mxu0 %v2184
    %2707 = vmatmul.mubr.bf16.gmra.mrb[0].mxu0 %v2183
    %v2708 = vpop.f32.mrb[0].mxu0
    %v2709 = vadd.f32 0.0, %v2708
    %v2710 = vpop.f32.mrb[0].mxu0
    %v2711 = vadd.f32 0.0, %v2710
    %v2712 = vpop.f32.mrb[0].mxu0
    %v2713 = vadd.f32 0.0, %v2712
    %v2714 = vpop.f32.mrb[0].mxu0
    %v2715 = vadd.f32 0.0, %v2714
    %2716 = vmatprep.mubr.bf16.mxu0 %v2190
    %2717 = vmatmul.mubr.bf16.gmra.mrb[0].mxu0 %v2189
    %v2718 = vpop.f32.mrb[0].mxu0
    %v2719 = vadd.f32 0.0, %v2718
    %v2720 = vpop.f32.mrb[0].mxu0
    %v2721 = vadd.f32 0.0, %v2720
    %v2722 = vpop.f32.mrb[0].mxu0
    %v2723 = vadd.f32 0.0, %v2722
    %v2724 = vpop.f32.mrb[0].mxu0
    %v2725 = vadd.f32 0.0, %v2724
    %2726 = vmatprep.mubr.bf16.mxu0 %v2196
    %2727 = vmatmul.mubr.bf16.gmra.mrb[0].mxu0 %v2195
    %v2728 = vpop.f32.mrb[0].mxu0
    %v2729 = vadd.f32 0.0, %v2728
    %v2730 = vpop.f32.mrb[0].mxu0
    %v2731 = vadd.f32 0.0, %v2730
    %v2732 = vpop.f32.mrb[0].mxu0
    %v2733 = vadd.f32 0.0, %v2732
    %v2734 = vpop.f32.mrb[0].mxu0
    %v2735 = vadd.f32 0.0, %v2734
    %2736 = vmatprep.mubr.bf16.mxu0 %v2202
    %2737 = vmatmul.mubr.bf16.gmra.mrb[0].mxu0 %v2201
    %v2738 = vpop.f32.mrb[0].mxu0
    %v2739 = vadd.f32 0.0, %v2738
    %v2740 = vpop.f32.mrb[0].mxu0
    %v2741 = vadd.f32 0.0, %v2740
    %v2742 = vpop.f32.mrb[0].mxu0
    %v2743 = vadd.f32 0.0, %v2742
    %v2744 = vpop.f32.mrb[0].mxu0
    %v2745 = vadd.f32 0.0, %v2744
    %2746 = vmatprep.mubr.bf16.mxu0 %v2208
    %2747 = vmatmul.mubr.bf16.gmra.mrb[0].mxu0 %v2207
    %v2748 = vpop.f32.mrb[0].mxu0
    %v2749 = vadd.f32 0.0, %v2748
    %v2750 = vpop.f32.mrb[0].mxu0
    %v2751 = vadd.f32 0.0, %v2750
    %v2752 = vpop.f32.mrb[0].mxu0
    %v2753 = vadd.f32 0.0, %v2752
    %v2754 = vpop.f32.mrb[0].mxu0
    %v2755 = vadd.f32 0.0, %v2754
    %2756 = vmatprep.mubr.bf16.mxu0 %v2214
    %2757 = vmatmul.mubr.bf16.gmra.mrb[0].mxu0 %v2213
    %v2758 = vpop.f32.mrb[0].mxu0
    %v2759 = vadd.f32 0.0, %v2758
    %v2760 = vpop.f32.mrb[0].mxu0
    %v2761 = vadd.f32 0.0, %v2760
    %v2762 = vpop.f32.mrb[0].mxu0
    %v2763 = vadd.f32 0.0, %v2762
    %v2764 = vpop.f32.mrb[0].mxu0
    %v2765 = vadd.f32 0.0, %v2764
    %2766 = vmatprep.mubr.bf16.mxu0 %v2220
    %2767 = vmatmul.mubr.bf16.gmra.mrb[0].mxu0 %v2219
    %v2768 = vpop.f32.mrb[0].mxu0
    %v2769 = vadd.f32 0.0, %v2768
    %v2770 = vpop.f32.mrb[0].mxu0
    %v2771 = vadd.f32 0.0, %v2770
    %v2772 = vpop.f32.mrb[0].mxu0
    %v2773 = vadd.f32 0.0, %v2772
    %v2774 = vpop.f32.mrb[0].mxu0
    %v2775 = vadd.f32 0.0, %v2774
    %2776 = vmatprep.mubr.bf16.mxu0 %v2226
    %2777 = vmatmul.mubr.bf16.gmra.mrb[0].mxu0 %v2225
    %v2778 = vpop.f32.mrb[0].mxu0
    %v2779 = vadd.f32 0.0, %v2778
    %v2780 = vpop.f32.mrb[0].mxu0
    %v2781 = vadd.f32 0.0, %v2780
    %v2782 = vpop.f32.mrb[0].mxu0
    %v2783 = vadd.f32 0.0, %v2782
    %v2784 = vpop.f32.mrb[0].mxu0
    %v2785 = vadd.f32 0.0, %v2784
    %2786 = vmatprep.mubr.bf16.mxu0 %v2232
    %2787 = vmatmul.mubr.bf16.gmra.mrb[0].mxu0 %v2231
    %v2788 = vpop.f32.mrb[0].mxu0
    %v2789 = vadd.f32 0.0, %v2788
    %v2790 = vpop.f32.mrb[0].mxu0
    %v2791 = vadd.f32 0.0, %v2790
    %v2792 = vpop.f32.mrb[0].mxu0
    %v2793 = vadd.f32 0.0, %v2792
    %v2794 = vpop.f32.mrb[0].mxu0
    %v2795 = vadd.f32 0.0, %v2794
    %2796 = vmatprep.mubr.bf16.mxu0 %v2238
    %2797 = vmatmul.mubr.bf16.gmra.mrb[0].mxu0 %v2237
    %v2798 = vpop.f32.mrb[0].mxu0
    %v2799 = vadd.f32 0.0, %v2798
    %v2800 = vpop.f32.mrb[0].mxu0
    %v2801 = vadd.f32 0.0, %v2800
    %v2802 = vpop.f32.mrb[0].mxu0
    %v2803 = vadd.f32 0.0, %v2802
    %v2804 = vpop.f32.mrb[0].mxu0
    %v2805 = vadd.f32 0.0, %v2804
    %2806 = vmatprep.mubr.bf16.mxu0 %v2244
    %2807 = vmatmul.mubr.bf16.gmra.mrb[0].mxu0 %v2243
    %v2808 = vpop.f32.mrb[0].mxu0
    %v2809 = vadd.f32 0.0, %v2808
    %v2810 = vpop.f32.mrb[0].mxu0
    %v2811 = vadd.f32 0.0, %v2810
    %v2812 = vpop.f32.mrb[0].mxu0
    %v2813 = vadd.f32 0.0, %v2812
    %v2814 = vpop.f32.mrb[0].mxu0
    %v2815 = vadd.f32 0.0, %v2814
    %2816 = vmatprep.mubr.bf16.mxu0 %v2250
    %2817 = vmatmul.mubr.bf16.gmra.mrb[0].mxu0 %v2249
    %v2818 = vpop.f32.mrb[0].mxu0
    %v2819 = vadd.f32 0.0, %v2818
    %v2820 = vpop.f32.mrb[0].mxu0
    %v2821 = vadd.f32 0.0, %v2820
    %v2822 = vpop.f32.mrb[0].mxu0
    %v2823 = vadd.f32 0.0, %v2822
    %v2824 = vpop.f32.mrb[0].mxu0
    %v2825 = vadd.f32 0.0, %v2824
    %2826 = vmatprep.mubr.bf16.mxu0 %v2256
    %2827 = vmatmul.mubr.bf16.gmra.mrb[0].mxu0 %v2255
    %v2828 = vpop.f32.mrb[0].mxu0
    %v2829 = vadd.f32 0.0, %v2828
    %v2830 = vpop.f32.mrb[0].mxu0
    %v2831 = vadd.f32 0.0, %v2830
    %v2832 = vpop.f32.mrb[0].mxu0
    %v2833 = vadd.f32 0.0, %v2832
    %v2834 = vpop.f32.mrb[0].mxu0
    %v2835 = vadd.f32 0.0, %v2834
    %2836 = vmatprep.mubr.bf16.mxu0 %v2262
    %2837 = vmatmul.mubr.bf16.gmra.mrb[0].mxu0 %v2261
    %v2838 = vpop.f32.mrb[0].mxu0
    %v2839 = vadd.f32 0.0, %v2838
    %v2840 = vpop.f32.mrb[0].mxu0
    %v2841 = vadd.f32 0.0, %v2840
    %v2842 = vpop.f32.mrb[0].mxu0
    %v2843 = vadd.f32 0.0, %v2842
    %v2844 = vpop.f32.mrb[0].mxu0
    %v2845 = vadd.f32 0.0, %v2844
    %2846 = vdwg.mxu0
    %2847 = vmatprep.subr.bf16.mxu0 %v1330
    %2848 = vmatpush1.bf16.msra.mxu0 %v1329
    %2849 = vmatprep.subr.bf16.mxu0 %v1337
    %2850 = vmatpush1.bf16.msra.mxu0 %v1336
    %2851 = vmatprep.subr.bf16.mxu0 %v1344
    %2852 = vmatpush1.bf16.msra.mxu0 %v1343
    %2853 = vmatprep.subr.bf16.mxu0 %v1351
    %2854 = vmatpush1.bf16.msra.mxu0 %v1350
    %2855 = vmatprep.subr.bf16.mxu0 %v1358
    %2856 = vmatpush1.bf16.msra.mxu0 %v1357
    %2857 = vmatprep.subr.bf16.mxu0 %v1365
    %2858 = vmatpush1.bf16.msra.mxu0 %v1364
    %2859 = vmatprep.subr.bf16.mxu0 %v1372
    %2860 = vmatpush1.bf16.msra.mxu0 %v1371
    %2861 = vmatprep.subr.bf16.mxu0 %v1379
    %2862 = vmatpush1.bf16.msra.mxu0 %v1378
    %2863 = vmatprep.subr.bf16.mxu0 %v1386
    %2864 = vmatpush1.bf16.msra.mxu0 %v1385
    %2865 = vmatprep.subr.bf16.mxu0 %v1393
    %2866 = vmatpush1.bf16.msra.mxu0 %v1392
    %2867 = vmatprep.subr.bf16.mxu0 %v1400
    %2868 = vmatpush1.bf16.msra.mxu0 %v1399
    %2869 = vmatprep.subr.bf16.mxu0 %v1407
    %2870 = vmatpush1.bf16.msra.mxu0 %v1406
    %2871 = vmatprep.subr.bf16.mxu0 %v1414
    %2872 = vmatpush1.bf16.msra.mxu0 %v1413
    %2873 = vmatprep.subr.bf16.mxu0 %v1421
    %2874 = vmatpush1.bf16.msra.mxu0 %v1420
    %2875 = vmatprep.subr.bf16.mxu0 %v1428
    %2876 = vmatpush1.bf16.msra.mxu0 %v1427
    %2877 = vmatprep.subr.bf16.mxu0 %v1435
    %2878 = vmatpush1.bf16.msra.mxu0 %v1434
    %2879 = vmatprep.mubr.bf16.mxu0 %v2018
    %2880 = vmatmul.mubr.bf16.gmra.mrb[0].mxu0 %v2017
    %v2881 = vpop.f32.mrb[0].mxu0
    %v2882 = vadd.f32 %v2429, %v2881
    %v2883 = vpop.f32.mrb[0].mxu0
    %v2884 = vadd.f32 %v2431, %v2883
    %v2885 = vpop.f32.mrb[0].mxu0
    %v2886 = vadd.f32 %v2433, %v2885
    %v2887 = vpop.f32.mrb[0].mxu0
    %v2888 = vadd.f32 %v2435, %v2887
    %2889 = vmatprep.mubr.bf16.mxu0 %v2024
    %2890 = vmatmul.mubr.bf16.gmra.mrb[0].mxu0 %v2023
    %v2891 = vpop.f32.mrb[0].mxu0
    %v2892 = vadd.f32 %v2439, %v2891
    %v2893 = vpop.f32.mrb[0].mxu0
    %v2894 = vadd.f32 %v2441, %v2893
    %v2895 = vpop.f32.mrb[0].mxu0
    %v2896 = vadd.f32 %v2443, %v2895
    %v2897 = vpop.f32.mrb[0].mxu0
    %v2898 = vadd.f32 %v2445, %v2897
    %2899 = vmatprep.mubr.bf16.mxu0 %v2030
    %2900 = vmatmul.mubr.bf16.gmra.mrb[0].mxu0 %v2029
    %v2901 = vpop.f32.mrb[0].mxu0
    %v2902 = vadd.f32 %v2449, %v2901
    %v2903 = vpop.f32.mrb[0].mxu0
    %v2904 = vadd.f32 %v2451, %v2903
    %v2905 = vpop.f32.mrb[0].mxu0
    %v2906 = vadd.f32 %v2453, %v2905
    %v2907 = vpop.f32.mrb[0].mxu0
    %v2908 = vadd.f32 %v2455, %v2907
    %2909 = vmatprep.mubr.bf16.mxu0 %v2036
    %2910 = vmatmul.mubr.bf16.gmra.mrb[0].mxu0 %v2035
    %v2911 = vpop.f32.mrb[0].mxu0
    %v2912 = vadd.f32 %v2459, %v2911
    %v2913 = vpop.f32.mrb[0].mxu0
    %v2914 = vadd.f32 %v2461, %v2913
    %v2915 = vpop.f32.mrb[0].mxu0
    %v2916 = vadd.f32 %v2463, %v2915
    %v2917 = vpop.f32.mrb[0].mxu0
    %v2918 = vadd.f32 %v2465, %v2917
    %2919 = vmatprep.mubr.bf16.mxu0 %v2042
    %2920 = vmatmul.mubr.bf16.gmra.mrb[0].mxu0 %v2041
    %v2921 = vpop.f32.mrb[0].mxu0
    %v2922 = vadd.f32 %v2469, %v2921
    %v2923 = vpop.f32.mrb[0].mxu0
    %v2924 = vadd.f32 %v2471, %v2923
    %v2925 = vpop.f32.mrb[0].mxu0
    %v2926 = vadd.f32 %v2473, %v2925
    %v2927 = vpop.f32.mrb[0].mxu0
    %v2928 = vadd.f32 %v2475, %v2927
    %2929 = vmatprep.mubr.bf16.mxu0 %v2048
    %2930 = vmatmul.mubr.bf16.gmra.mrb[0].mxu0 %v2047
    %v2931 = vpop.f32.mrb[0].mxu0
    %v2932 = vadd.f32 %v2479, %v2931
    %v2933 = vpop.f32.mrb[0].mxu0
    %v2934 = vadd.f32 %v2481, %v2933
    %v2935 = vpop.f32.mrb[0].mxu0
    %v2936 = vadd.f32 %v2483, %v2935
    %v2937 = vpop.f32.mrb[0].mxu0
    %v2938 = vadd.f32 %v2485, %v2937
    %2939 = vmatprep.mubr.bf16.mxu0 %v2054
    %2940 = vmatmul.mubr.bf16.gmra.mrb[0].mxu0 %v2053
    %v2941 = vpop.f32.mrb[0].mxu0
    %v2942 = vadd.f32 %v2489, %v2941
    %v2943 = vpop.f32.mrb[0].mxu0
    %v2944 = vadd.f32 %v2491, %v2943
    %v2945 = vpop.f32.mrb[0].mxu0
    %v2946 = vadd.f32 %v2493, %v2945
    %v2947 = vpop.f32.mrb[0].mxu0
    %v2948 = vadd.f32 %v2495, %v2947
    %2949 = vmatprep.mubr.bf16.mxu0 %v2060
    %2950 = vmatmul.mubr.bf16.gmra.mrb[0].mxu0 %v2059
    %v2951 = vpop.f32.mrb[0].mxu0
    %v2952 = vadd.f32 %v2499, %v2951
    %v2953 = vpop.f32.mrb[0].mxu0
    %v2954 = vadd.f32 %v2501, %v2953
    %v2955 = vpop.f32.mrb[0].mxu0
    %v2956 = vadd.f32 %v2503, %v2955
    %v2957 = vpop.f32.mrb[0].mxu0
    %v2958 = vadd.f32 %v2505, %v2957
    %2959 = vmatprep.mubr.bf16.mxu0 %v2066
    %2960 = vmatmul.mubr.bf16.gmra.mrb[0].mxu0 %v2065
    %v2961 = vpop.f32.mrb[0].mxu0
    %v2962 = vadd.f32 %v2509, %v2961
    %v2963 = vpop.f32.mrb[0].mxu0
    %v2964 = vadd.f32 %v2511, %v2963
    %v2965 = vpop.f32.mrb[0].mxu0
    %v2966 = vadd.f32 %v2513, %v2965
    %v2967 = vpop.f32.mrb[0].mxu0
    %v2968 = vadd.f32 %v2515, %v2967
    %2969 = vmatprep.mubr.bf16.mxu0 %v2072
    %2970 = vmatmul.mubr.bf16.gmra.mrb[0].mxu0 %v2071
    %v2971 = vpop.f32.mrb[0].mxu0
    %v2972 = vadd.f32 %v2519, %v2971
    %v2973 = vpop.f32.mrb[0].mxu0
    %v2974 = vadd.f32 %v2521, %v2973
    %v2975 = vpop.f32.mrb[0].mxu0
    %v2976 = vadd.f32 %v2523, %v2975
    %v2977 = vpop.f32.mrb[0].mxu0
    %v2978 = vadd.f32 %v2525, %v2977
    %2979 = vmatprep.mubr.bf16.mxu0 %v2078
    %2980 = vmatmul.mubr.bf16.gmra.mrb[0].mxu0 %v2077
    %v2981 = vpop.f32.mrb[0].mxu0
    %v2982 = vadd.f32 %v2529, %v2981
    %v2983 = vpop.f32.mrb[0].mxu0
    %v2984 = vadd.f32 %v2531, %v2983
    %v2985 = vpop.f32.mrb[0].mxu0
    %v2986 = vadd.f32 %v2533, %v2985
    %v2987 = vpop.f32.mrb[0].mxu0
    %v2988 = vadd.f32 %v2535, %v2987
    %2989 = vmatprep.mubr.bf16.mxu0 %v2084
    %2990 = vmatmul.mubr.bf16.gmra.mrb[0].mxu0 %v2083
    %v2991 = vpop.f32.mrb[0].mxu0
    %v2992 = vadd.f32 %v2539, %v2991
    %v2993 = vpop.f32.mrb[0].mxu0
    %v2994 = vadd.f32 %v2541, %v2993
    %v2995 = vpop.f32.mrb[0].mxu0
    %v2996 = vadd.f32 %v2543, %v2995
    %v2997 = vpop.f32.mrb[0].mxu0
    %v2998 = vadd.f32 %v2545, %v2997
    %2999 = vmatprep.mubr.bf16.mxu0 %v2090
    %3000 = vmatmul.mubr.bf16.gmra.mrb[0].mxu0 %v2089
    %v3001 = vpop.f32.mrb[0].mxu0
    %v3002 = vadd.f32 %v2549, %v3001
    %v3003 = vpop.f32.mrb[0].mxu0
    %v3004 = vadd.f32 %v2551, %v3003
    %v3005 = vpop.f32.mrb[0].mxu0
    %v3006 = vadd.f32 %v2553, %v3005
    %v3007 = vpop.f32.mrb[0].mxu0
    %v3008 = vadd.f32 %v2555, %v3007
    %3009 = vmatprep.mubr.bf16.mxu0 %v2096
    %3010 = vmatmul.mubr.bf16.gmra.mrb[0].mxu0 %v2095
    %v3011 = vpop.f32.mrb[0].mxu0
    %v3012 = vadd.f32 %v2559, %v3011
    %v3013 = vpop.f32.mrb[0].mxu0
    %v3014 = vadd.f32 %v2561, %v3013
    %v3015 = vpop.f32.mrb[0].mxu0
    %v3016 = vadd.f32 %v2563, %v3015
    %v3017 = vpop.f32.mrb[0].mxu0
    %v3018 = vadd.f32 %v2565, %v3017
    %3019 = vmatprep.mubr.bf16.mxu0 %v2102
    %3020 = vmatmul.mubr.bf16.gmra.mrb[0].mxu0 %v2101
    %v3021 = vpop.f32.mrb[0].mxu0
    %v3022 = vadd.f32 %v2569, %v3021
    %v3023 = vpop.f32.mrb[0].mxu0
    %v3024 = vadd.f32 %v2571, %v3023
    %v3025 = vpop.f32.mrb[0].mxu0
    %v3026 = vadd.f32 %v2573, %v3025
    %v3027 = vpop.f32.mrb[0].mxu0
    %v3028 = vadd.f32 %v2575, %v3027
    %3029 = vmatprep.mubr.bf16.mxu0 %v2108
    %3030 = vmatmul.mubr.bf16.gmra.mrb[0].mxu0 %v2107
    %v3031 = vpop.f32.mrb[0].mxu0
    %v3032 = vadd.f32 %v2579, %v3031
    %v3033 = vpop.f32.mrb[0].mxu0
    %v3034 = vadd.f32 %v2581, %v3033
    %v3035 = vpop.f32.mrb[0].mxu0
    %v3036 = vadd.f32 %v2583, %v3035
    %v3037 = vpop.f32.mrb[0].mxu0
    %v3038 = vadd.f32 %v2585, %v3037
    %3039 = vmatprep.mubr.bf16.mxu0 %v2114
    %3040 = vmatmul.mubr.bf16.gmra.mrb[0].mxu0 %v2113
    %v3041 = vpop.f32.mrb[0].mxu0
    %v3042 = vadd.f32 %v2589, %v3041
    %v3043 = vpop.f32.mrb[0].mxu0
    %v3044 = vadd.f32 %v2591, %v3043
    %v3045 = vpop.f32.mrb[0].mxu0
    %v3046 = vadd.f32 %v2593, %v3045
    %v3047 = vpop.f32.mrb[0].mxu0
    %v3048 = vadd.f32 %v2595, %v3047
    %3049 = vmatprep.mubr.bf16.mxu0 %v2120
    %3050 = vmatmul.mubr.bf16.gmra.mrb[0].mxu0 %v2119
    %v3051 = vpop.f32.mrb[0].mxu0
    %v3052 = vadd.f32 %v2599, %v3051
    %v3053 = vpop.f32.mrb[0].mxu0
    %v3054 = vadd.f32 %v2601, %v3053
    %v3055 = vpop.f32.mrb[0].mxu0
    %v3056 = vadd.f32 %v2603, %v3055
    %v3057 = vpop.f32.mrb[0].mxu0
    %v3058 = vadd.f32 %v2605, %v3057
    %3059 = vmatprep.mubr.bf16.mxu0 %v2126
    %3060 = vmatmul.mubr.bf16.gmra.mrb[0].mxu0 %v2125
    %v3061 = vpop.f32.mrb[0].mxu0
    %v3062 = vadd.f32 %v2609, %v3061
    %v3063 = vpop.f32.mrb[0].mxu0
    %v3064 = vadd.f32 %v2611, %v3063
    %v3065 = vpop.f32.mrb[0].mxu0
    %v3066 = vadd.f32 %v2613, %v3065
    %v3067 = vpop.f32.mrb[0].mxu0
    %v3068 = vadd.f32 %v2615, %v3067
    %3069 = vmatprep.mubr.bf16.mxu0 %v2132
    %3070 = vmatmul.mubr.bf16.gmra.mrb[0].mxu0 %v2131
    %v3071 = vpop.f32.mrb[0].mxu0
    %v3072 = vadd.f32 %v2619, %v3071
    %v3073 = vpop.f32.mrb[0].mxu0
    %v3074 = vadd.f32 %v2621, %v3073
    %v3075 = vpop.f32.mrb[0].mxu0
    %v3076 = vadd.f32 %v2623, %v3075
    %v3077 = vpop.f32.mrb[0].mxu0
    %v3078 = vadd.f32 %v2625, %v3077
    %3079 = vmatprep.mubr.bf16.mxu0 %v2138
    %3080 = vmatmul.mubr.bf16.gmra.mrb[0].mxu0 %v2137
    %v3081 = vpop.f32.mrb[0].mxu0
    %v3082 = vadd.f32 %v2629, %v3081
    %v3083 = vpop.f32.mrb[0].mxu0
    %v3084 = vadd.f32 %v2631, %v3083
    %v3085 = vpop.f32.mrb[0].mxu0
    %v3086 = vadd.f32 %v2633, %v3085
    %v3087 = vpop.f32.mrb[0].mxu0
    %v3088 = vadd.f32 %v2635, %v3087
    %3089 = vmatprep.mubr.bf16.mxu0 %v2144
    %3090 = vmatmul.mubr.bf16.gmra.mrb[0].mxu0 %v2143
    %v3091 = vpop.f32.mrb[0].mxu0
    %v3092 = vadd.f32 %v2639, %v3091
    %v3093 = vpop.f32.mrb[0].mxu0
    %v3094 = vadd.f32 %v2641, %v3093
    %v3095 = vpop.f32.mrb[0].mxu0
    %v3096 = vadd.f32 %v2643, %v3095
    %v3097 = vpop.f32.mrb[0].mxu0
    %v3098 = vadd.f32 %v2645, %v3097
    %3099 = vmatprep.mubr.bf16.mxu0 %v2150
    %3100 = vmatmul.mubr.bf16.gmra.mrb[0].mxu0 %v2149
    %v3101 = vpop.f32.mrb[0].mxu0
    %v3102 = vadd.f32 %v2649, %v3101
    %v3103 = vpop.f32.mrb[0].mxu0
    %v3104 = vadd.f32 %v2651, %v3103
    %v3105 = vpop.f32.mrb[0].mxu0
    %v3106 = vadd.f32 %v2653, %v3105
    %v3107 = vpop.f32.mrb[0].mxu0
    %v3108 = vadd.f32 %v2655, %v3107
    %3109 = vmatprep.mubr.bf16.mxu0 %v2156
    %3110 = vmatmul.mubr.bf16.gmra.mrb[0].mxu0 %v2155
    %v3111 = vpop.f32.mrb[0].mxu0
    %v3112 = vadd.f32 %v2659, %v3111
    %v3113 = vpop.f32.mrb[0].mxu0
    %v3114 = vadd.f32 %v2661, %v3113
    %v3115 = vpop.f32.mrb[0].mxu0
    %v3116 = vadd.f32 %v2663, %v3115
    %v3117 = vpop.f32.mrb[0].mxu0
    %v3118 = vadd.f32 %v2665, %v3117
    %3119 = vmatprep.mubr.bf16.mxu0 %v2162
    %3120 = vmatmul.mubr.bf16.gmra.mrb[0].mxu0 %v2161
    %v3121 = vpop.f32.mrb[0].mxu0
    %v3122 = vadd.f32 %v2669, %v3121
    %v3123 = vpop.f32.mrb[0].mxu0
    %v3124 = vadd.f32 %v2671, %v3123
    %v3125 = vpop.f32.mrb[0].mxu0
    %v3126 = vadd.f32 %v2673, %v3125
    %v3127 = vpop.f32.mrb[0].mxu0
    %v3128 = vadd.f32 %v2675, %v3127
    %3129 = vmatprep.mubr.bf16.mxu0 %v2168
    %3130 = vmatmul.mubr.bf16.gmra.mrb[0].mxu0 %v2167
    %v3131 = vpop.f32.mrb[0].mxu0
    %v3132 = vadd.f32 %v2679, %v3131
    %v3133 = vpop.f32.mrb[0].mxu0
    %v3134 = vadd.f32 %v2681, %v3133
    %v3135 = vpop.f32.mrb[0].mxu0
    %v3136 = vadd.f32 %v2683, %v3135
    %v3137 = vpop.f32.mrb[0].mxu0
    %v3138 = vadd.f32 %v2685, %v3137
    %3139 = vmatprep.mubr.bf16.mxu0 %v2174
    %3140 = vmatmul.mubr.bf16.gmra.mrb[0].mxu0 %v2173
    %v3141 = vpop.f32.mrb[0].mxu0
    %v3142 = vadd.f32 %v2689, %v3141
    %v3143 = vpop.f32.mrb[0].mxu0
    %v3144 = vadd.f32 %v2691, %v3143
    %v3145 = vpop.f32.mrb[0].mxu0
    %v3146 = vadd.f32 %v2693, %v3145
    %v3147 = vpop.f32.mrb[0].mxu0
    %v3148 = vadd.f32 %v2695, %v3147
    %3149 = vmatprep.mubr.bf16.mxu0 %v2180
    %3150 = vmatmul.mubr.bf16.gmra.mrb[0].mxu0 %v2179
    %v3151 = vpop.f32.mrb[0].mxu0
    %v3152 = vadd.f32 %v2699, %v3151
    %v3153 = vpop.f32.mrb[0].mxu0
    %v3154 = vadd.f32 %v2701, %v3153
    %v3155 = vpop.f32.mrb[0].mxu0
    %v3156 = vadd.f32 %v2703, %v3155
    %v3157 = vpop.f32.mrb[0].mxu0
    %v3158 = vadd.f32 %v2705, %v3157
    %3159 = vmatprep.mubr.bf16.mxu0 %v2186
    %3160 = vmatmul.mubr.bf16.gmra.mrb[0].mxu0 %v2185
    %v3161 = vpop.f32.mrb[0].mxu0
    %v3162 = vadd.f32 %v2709, %v3161
    %v3163 = vpop.f32.mrb[0].mxu0
    %v3164 = vadd.f32 %v2711, %v3163
    %v3165 = vpop.f32.mrb[0].mxu0
    %v3166 = vadd.f32 %v2713, %v3165
    %v3167 = vpop.f32.mrb[0].mxu0
    %v3168 = vadd.f32 %v2715, %v3167
    %3169 = vmatprep.mubr.bf16.mxu0 %v2192
    %3170 = vmatmul.mubr.bf16.gmra.mrb[0].mxu0 %v2191
    %v3171 = vpop.f32.mrb[0].mxu0
    %v3172 = vadd.f32 %v2719, %v3171
    %v3173 = vpop.f32.mrb[0].mxu0
    %v3174 = vadd.f32 %v2721, %v3173
    %v3175 = vpop.f32.mrb[0].mxu0
    %v3176 = vadd.f32 %v2723, %v3175
    %v3177 = vpop.f32.mrb[0].mxu0
    %v3178 = vadd.f32 %v2725, %v3177
    %3179 = vmatprep.mubr.bf16.mxu0 %v2198
    %3180 = vmatmul.mubr.bf16.gmra.mrb[0].mxu0 %v2197
    %v3181 = vpop.f32.mrb[0].mxu0
    %v3182 = vadd.f32 %v2729, %v3181
    %v3183 = vpop.f32.mrb[0].mxu0
    %v3184 = vadd.f32 %v2731, %v3183
    %v3185 = vpop.f32.mrb[0].mxu0
    %v3186 = vadd.f32 %v2733, %v3185
    %v3187 = vpop.f32.mrb[0].mxu0
    %v3188 = vadd.f32 %v2735, %v3187
    %3189 = vmatprep.mubr.bf16.mxu0 %v2204
    %3190 = vmatmul.mubr.bf16.gmra.mrb[0].mxu0 %v2203
    %v3191 = vpop.f32.mrb[0].mxu0
    %v3192 = vadd.f32 %v2739, %v3191
    %v3193 = vpop.f32.mrb[0].mxu0
    %v3194 = vadd.f32 %v2741, %v3193
    %v3195 = vpop.f32.mrb[0].mxu0
    %v3196 = vadd.f32 %v2743, %v3195
    %v3197 = vpop.f32.mrb[0].mxu0
    %v3198 = vadd.f32 %v2745, %v3197
    %3199 = vmatprep.mubr.bf16.mxu0 %v2210
    %3200 = vmatmul.mubr.bf16.gmra.mrb[0].mxu0 %v2209
    %v3201 = vpop.f32.mrb[0].mxu0
    %v3202 = vadd.f32 %v2749, %v3201
    %v3203 = vpop.f32.mrb[0].mxu0
    %v3204 = vadd.f32 %v2751, %v3203
    %v3205 = vpop.f32.mrb[0].mxu0
    %v3206 = vadd.f32 %v2753, %v3205
    %v3207 = vpop.f32.mrb[0].mxu0
    %v3208 = vadd.f32 %v2755, %v3207
    %3209 = vmatprep.mubr.bf16.mxu0 %v2216
    %3210 = vmatmul.mubr.bf16.gmra.mrb[0].mxu0 %v2215
    %v3211 = vpop.f32.mrb[0].mxu0
    %v3212 = vadd.f32 %v2759, %v3211
    %v3213 = vpop.f32.mrb[0].mxu0
    %v3214 = vadd.f32 %v2761, %v3213
    %v3215 = vpop.f32.mrb[0].mxu0
    %v3216 = vadd.f32 %v2763, %v3215
    %v3217 = vpop.f32.mrb[0].mxu0
    %v3218 = vadd.f32 %v2765, %v3217
    %3219 = vmatprep.mubr.bf16.mxu0 %v2222
    %3220 = vmatmul.mubr.bf16.gmra.mrb[0].mxu0 %v2221
    %v3221 = vpop.f32.mrb[0].mxu0
    %v3222 = vadd.f32 %v2769, %v3221
    %v3223 = vpop.f32.mrb[0].mxu0
    %v3224 = vadd.f32 %v2771, %v3223
    %v3225 = vpop.f32.mrb[0].mxu0
    %v3226 = vadd.f32 %v2773, %v3225
    %v3227 = vpop.f32.mrb[0].mxu0
    %v3228 = vadd.f32 %v2775, %v3227
    %3229 = vmatprep.mubr.bf16.mxu0 %v2228
    %3230 = vmatmul.mubr.bf16.gmra.mrb[0].mxu0 %v2227
    %v3231 = vpop.f32.mrb[0].mxu0
    %v3232 = vadd.f32 %v2779, %v3231
    %v3233 = vpop.f32.mrb[0].mxu0
    %v3234 = vadd.f32 %v2781, %v3233
    %v3235 = vpop.f32.mrb[0].mxu0
    %v3236 = vadd.f32 %v2783, %v3235
    %v3237 = vpop.f32.mrb[0].mxu0
    %v3238 = vadd.f32 %v2785, %v3237
    %3239 = vmatprep.mubr.bf16.mxu0 %v2234
    %3240 = vmatmul.mubr.bf16.gmra.mrb[0].mxu0 %v2233
    %v3241 = vpop.f32.mrb[0].mxu0
    %v3242 = vadd.f32 %v2789, %v3241
    %v3243 = vpop.f32.mrb[0].mxu0
    %v3244 = vadd.f32 %v2791, %v3243
    %v3245 = vpop.f32.mrb[0].mxu0
    %v3246 = vadd.f32 %v2793, %v3245
    %v3247 = vpop.f32.mrb[0].mxu0
    %v3248 = vadd.f32 %v2795, %v3247
    %3249 = vmatprep.mubr.bf16.mxu0 %v2240
    %3250 = vmatmul.mubr.bf16.gmra.mrb[0].mxu0 %v2239
    %v3251 = vpop.f32.mrb[0].mxu0
    %v3252 = vadd.f32 %v2799, %v3251
    %v3253 = vpop.f32.mrb[0].mxu0
    %v3254 = vadd.f32 %v2801, %v3253
    %v3255 = vpop.f32.mrb[0].mxu0
    %v3256 = vadd.f32 %v2803, %v3255
    %v3257 = vpop.f32.mrb[0].mxu0
    %v3258 = vadd.f32 %v2805, %v3257
    %3259 = vmatprep.mubr.bf16.mxu0 %v2246
    %3260 = vmatmul.mubr.bf16.gmra.mrb[0].mxu0 %v2245
    %v3261 = vpop.f32.mrb[0].mxu0
    %v3262 = vadd.f32 %v2809, %v3261
    %v3263 = vpop.f32.mrb[0].mxu0
    %v3264 = vadd.f32 %v2811, %v3263
    %v3265 = vpop.f32.mrb[0].mxu0
    %v3266 = vadd.f32 %v2813, %v3265
    %v3267 = vpop.f32.mrb[0].mxu0
    %v3268 = vadd.f32 %v2815, %v3267
    %3269 = vmatprep.mubr.bf16.mxu0 %v2252
    %3270 = vmatmul.mubr.bf16.gmra.mrb[0].mxu0 %v2251
    %v3271 = vpop.f32.mrb[0].mxu0
    %v3272 = vadd.f32 %v2819, %v3271
    %v3273 = vpop.f32.mrb[0].mxu0
    %v3274 = vadd.f32 %v2821, %v3273
    %v3275 = vpop.f32.mrb[0].mxu0
    %v3276 = vadd.f32 %v2823, %v3275
    %v3277 = vpop.f32.mrb[0].mxu0
    %v3278 = vadd.f32 %v2825, %v3277
    %3279 = vmatprep.mubr.bf16.mxu0 %v2258
    %3280 = vmatmul.mubr.bf16.gmra.mrb[0].mxu0 %v2257
    %v3281 = vpop.f32.mrb[0].mxu0
    %v3282 = vadd.f32 %v2829, %v3281
    %v3283 = vpop.f32.mrb[0].mxu0
    %v3284 = vadd.f32 %v2831, %v3283
    %v3285 = vpop.f32.mrb[0].mxu0
    %v3286 = vadd.f32 %v2833, %v3285
    %v3287 = vpop.f32.mrb[0].mxu0
    %v3288 = vadd.f32 %v2835, %v3287
    %3289 = vmatprep.mubr.bf16.mxu0 %v2264
    %3290 = vmatmul.mubr.bf16.gmra.mrb[0].mxu0 %v2263
    %v3291 = vpop.f32.mrb[0].mxu0
    %v3292 = vadd.f32 %v2839, %v3291
    %v3293 = vpop.f32.mrb[0].mxu0
    %v3294 = vadd.f32 %v2841, %v3293
    %v3295 = vpop.f32.mrb[0].mxu0
    %v3296 = vadd.f32 %v2843, %v3295
    %v3297 = vpop.f32.mrb[0].mxu0
    %v3298 = vadd.f32 %v2845, %v3297
    %3299 = vdwg.mxu0
    %3300 = vmatprep.subr.bf16.mxu0 %v1442
    %3301 = vmatpush1.bf16.msra.mxu0 %v1441
    %3302 = vmatprep.subr.bf16.mxu0 %v1449
    %3303 = vmatpush1.bf16.msra.mxu0 %v1448
    %3304 = vmatprep.subr.bf16.mxu0 %v1456
    %3305 = vmatpush1.bf16.msra.mxu0 %v1455
    %3306 = vmatprep.subr.bf16.mxu0 %v1463
    %3307 = vmatpush1.bf16.msra.mxu0 %v1462
    %3308 = vmatprep.subr.bf16.mxu0 %v1470
    %3309 = vmatpush1.bf16.msra.mxu0 %v1469
    %3310 = vmatprep.subr.bf16.mxu0 %v1477
    %3311 = vmatpush1.bf16.msra.mxu0 %v1476
    %3312 = vmatprep.subr.bf16.mxu0 %v1484
    %3313 = vmatpush1.bf16.msra.mxu0 %v1483
    %3314 = vmatprep.subr.bf16.mxu0 %v1491
    %3315 = vmatpush1.bf16.msra.mxu0 %v1490
    %3316 = vmatprep.subr.bf16.mxu0 %v1498
    %3317 = vmatpush1.bf16.msra.mxu0 %v1497
    %3318 = vmatprep.subr.bf16.mxu0 %v1505
    %3319 = vmatpush1.bf16.msra.mxu0 %v1504
    %3320 = vmatprep.subr.bf16.mxu0 0
    %3321 = vmatpush1.bf16.msra.mxu0 0
    %3322 = vmatprep.subr.bf16.mxu0 0
    %3323 = vmatpush1.bf16.msra.mxu0 0
    %3324 = vmatprep.subr.bf16.mxu0 0
    %3325 = vmatpush1.bf16.msra.mxu0 0
    %3326 = vmatprep.subr.bf16.mxu0 0
    %3327 = vmatpush1.bf16.msra.mxu0 0
    %3328 = vmatprep.subr.bf16.mxu0 0
    %3329 = vmatpush1.bf16.msra.mxu0 0
    %3330 = vmatprep.subr.bf16.mxu0 0
    %3331 = vmatpush1.bf16.msra.mxu0 0
    %3332 = vmatprep.mubr.bf16.mxu0 %v2269
    %3333 = vmatmul.mubr.bf16.gmra.mrb[0].mxu0 %v2019
    %v3334 = vpop.f32.mrb[0].mxu0
    %v3335 = vadd.f32 %v2882, %v3334
    %v3336 = vpop.f32.mrb[0].mxu0
    %v3337 = vadd.f32 %v2884, %v3336
    %v3338 = vpop.f32.mrb[0].mxu0
    %v3339 = vadd.f32 %v2886, %v3338
    %v3340 = vpop.f32.mrb[0].mxu0
    %v3341 = vadd.f32 %v2888, %v3340
    %3342 = vmatprep.mubr.bf16.mxu0 %v2272
    %3343 = vmatmul.mubr.bf16.gmra.mrb[0].mxu0 %v2025
    %v3344 = vpop.f32.mrb[0].mxu0
    %v3345 = vadd.f32 %v2892, %v3344
    %v3346 = vpop.f32.mrb[0].mxu0
    %v3347 = vadd.f32 %v2894, %v3346
    %v3348 = vpop.f32.mrb[0].mxu0
    %v3349 = vadd.f32 %v2896, %v3348
    %v3350 = vpop.f32.mrb[0].mxu0
    %v3351 = vadd.f32 %v2898, %v3350
    %3352 = vmatprep.mubr.bf16.mxu0 %v2275
    %3353 = vmatmul.mubr.bf16.gmra.mrb[0].mxu0 %v2031
    %v3354 = vpop.f32.mrb[0].mxu0
    %v3355 = vadd.f32 %v2902, %v3354
    %v3356 = vpop.f32.mrb[0].mxu0
    %v3357 = vadd.f32 %v2904, %v3356
    %v3358 = vpop.f32.mrb[0].mxu0
    %v3359 = vadd.f32 %v2906, %v3358
    %v3360 = vpop.f32.mrb[0].mxu0
    %v3361 = vadd.f32 %v2908, %v3360
    %3362 = vmatprep.mubr.bf16.mxu0 %v2278
    %3363 = vmatmul.mubr.bf16.gmra.mrb[0].mxu0 %v2037
    %v3364 = vpop.f32.mrb[0].mxu0
    %v3365 = vadd.f32 %v2912, %v3364
    %v3366 = vpop.f32.mrb[0].mxu0
    %v3367 = vadd.f32 %v2914, %v3366
    %v3368 = vpop.f32.mrb[0].mxu0
    %v3369 = vadd.f32 %v2916, %v3368
    %v3370 = vpop.f32.mrb[0].mxu0
    %v3371 = vadd.f32 %v2918, %v3370
    %3372 = vmatprep.mubr.bf16.mxu0 %v2281
    %3373 = vmatmul.mubr.bf16.gmra.mrb[0].mxu0 %v2043
    %v3374 = vpop.f32.mrb[0].mxu0
    %v3375 = vadd.f32 %v2922, %v3374
    %v3376 = vpop.f32.mrb[0].mxu0
    %v3377 = vadd.f32 %v2924, %v3376
    %v3378 = vpop.f32.mrb[0].mxu0
    %v3379 = vadd.f32 %v2926, %v3378
    %v3380 = vpop.f32.mrb[0].mxu0
    %v3381 = vadd.f32 %v2928, %v3380
    %3382 = vmatprep.mubr.bf16.mxu0 %v2284
    %3383 = vmatmul.mubr.bf16.gmra.mrb[0].mxu0 %v2049
    %v3384 = vpop.f32.mrb[0].mxu0
    %v3385 = vadd.f32 %v2932, %v3384
    %v3386 = vpop.f32.mrb[0].mxu0
    %v3387 = vadd.f32 %v2934, %v3386
    %v3388 = vpop.f32.mrb[0].mxu0
    %v3389 = vadd.f32 %v2936, %v3388
    %v3390 = vpop.f32.mrb[0].mxu0
    %v3391 = vadd.f32 %v2938, %v3390
    %3392 = vmatprep.mubr.bf16.mxu0 %v2287
    %3393 = vmatmul.mubr.bf16.gmra.mrb[0].mxu0 %v2055
    %v3394 = vpop.f32.mrb[0].mxu0
    %v3395 = vadd.f32 %v2942, %v3394
    %v3396 = vpop.f32.mrb[0].mxu0
    %v3397 = vadd.f32 %v2944, %v3396
    %v3398 = vpop.f32.mrb[0].mxu0
    %v3399 = vadd.f32 %v2946, %v3398
    %v3400 = vpop.f32.mrb[0].mxu0
    %v3401 = vadd.f32 %v2948, %v3400
    %3402 = vmatprep.mubr.bf16.mxu0 %v2290
    %3403 = vmatmul.mubr.bf16.gmra.mrb[0].mxu0 %v2061
    %v3404 = vpop.f32.mrb[0].mxu0
    %v3405 = vadd.f32 %v2952, %v3404
    %v3406 = vpop.f32.mrb[0].mxu0
    %v3407 = vadd.f32 %v2954, %v3406
    %v3408 = vpop.f32.mrb[0].mxu0
    %v3409 = vadd.f32 %v2956, %v3408
    %v3410 = vpop.f32.mrb[0].mxu0
    %v3411 = vadd.f32 %v2958, %v3410
    %3412 = vmatprep.mubr.bf16.mxu0 %v2293
    %3413 = vmatmul.mubr.bf16.gmra.mrb[0].mxu0 %v2067
    %v3414 = vpop.f32.mrb[0].mxu0
    %v3415 = vadd.f32 %v2962, %v3414
    %v3416 = vpop.f32.mrb[0].mxu0
    %v3417 = vadd.f32 %v2964, %v3416
    %v3418 = vpop.f32.mrb[0].mxu0
    %v3419 = vadd.f32 %v2966, %v3418
    %v3420 = vpop.f32.mrb[0].mxu0
    %v3421 = vadd.f32 %v2968, %v3420
    %3422 = vmatprep.mubr.bf16.mxu0 %v2296
    %3423 = vmatmul.mubr.bf16.gmra.mrb[0].mxu0 %v2073
    %v3424 = vpop.f32.mrb[0].mxu0
    %v3425 = vadd.f32 %v2972, %v3424
    %v3426 = vpop.f32.mrb[0].mxu0
    %v3427 = vadd.f32 %v2974, %v3426
    %v3428 = vpop.f32.mrb[0].mxu0
    %v3429 = vadd.f32 %v2976, %v3428
    %v3430 = vpop.f32.mrb[0].mxu0
    %v3431 = vadd.f32 %v2978, %v3430
    %3432 = vmatprep.mubr.bf16.mxu0 %v2299
    %3433 = vmatmul.mubr.bf16.gmra.mrb[0].mxu0 %v2079
    %v3434 = vpop.f32.mrb[0].mxu0
    %v3435 = vadd.f32 %v2982, %v3434
    %v3436 = vpop.f32.mrb[0].mxu0
    %v3437 = vadd.f32 %v2984, %v3436
    %v3438 = vpop.f32.mrb[0].mxu0
    %v3439 = vadd.f32 %v2986, %v3438
    %v3440 = vpop.f32.mrb[0].mxu0
    %v3441 = vadd.f32 %v2988, %v3440
    %3442 = vmatprep.mubr.bf16.mxu0 %v2302
    %3443 = vmatmul.mubr.bf16.gmra.mrb[0].mxu0 %v2085
    %v3444 = vpop.f32.mrb[0].mxu0
    %v3445 = vadd.f32 %v2992, %v3444
    %v3446 = vpop.f32.mrb[0].mxu0
    %v3447 = vadd.f32 %v2994, %v3446
    %v3448 = vpop.f32.mrb[0].mxu0
    %v3449 = vadd.f32 %v2996, %v3448
    %v3450 = vpop.f32.mrb[0].mxu0
    %v3451 = vadd.f32 %v2998, %v3450
    %3452 = vmatprep.mubr.bf16.mxu0 %v2305
    %3453 = vmatmul.mubr.bf16.gmra.mrb[0].mxu0 %v2091
    %v3454 = vpop.f32.mrb[0].mxu0
    %v3455 = vadd.f32 %v3002, %v3454
    %v3456 = vpop.f32.mrb[0].mxu0
    %v3457 = vadd.f32 %v3004, %v3456
    %v3458 = vpop.f32.mrb[0].mxu0
    %v3459 = vadd.f32 %v3006, %v3458
    %v3460 = vpop.f32.mrb[0].mxu0
    %v3461 = vadd.f32 %v3008, %v3460
    %3462 = vmatprep.mubr.bf16.mxu0 %v2308
    %3463 = vmatmul.mubr.bf16.gmra.mrb[0].mxu0 %v2097
    %v3464 = vpop.f32.mrb[0].mxu0
    %v3465 = vadd.f32 %v3012, %v3464
    %v3466 = vpop.f32.mrb[0].mxu0
    %v3467 = vadd.f32 %v3014, %v3466
    %v3468 = vpop.f32.mrb[0].mxu0
    %v3469 = vadd.f32 %v3016, %v3468
    %v3470 = vpop.f32.mrb[0].mxu0
    %v3471 = vadd.f32 %v3018, %v3470
    %3472 = vmatprep.mubr.bf16.mxu0 %v2311
    %3473 = vmatmul.mubr.bf16.gmra.mrb[0].mxu0 %v2103
    %v3474 = vpop.f32.mrb[0].mxu0
    %v3475 = vadd.f32 %v3022, %v3474
    %v3476 = vpop.f32.mrb[0].mxu0
    %v3477 = vadd.f32 %v3024, %v3476
    %v3478 = vpop.f32.mrb[0].mxu0
    %v3479 = vadd.f32 %v3026, %v3478
    %v3480 = vpop.f32.mrb[0].mxu0
    %v3481 = vadd.f32 %v3028, %v3480
    %3482 = vmatprep.mubr.bf16.mxu0 %v2314
    %3483 = vmatmul.mubr.bf16.gmra.mrb[0].mxu0 %v2109
    %v3484 = vpop.f32.mrb[0].mxu0
    %v3485 = vadd.f32 %v3032, %v3484
    %v3486 = vpop.f32.mrb[0].mxu0
    %v3487 = vadd.f32 %v3034, %v3486
    %v3488 = vpop.f32.mrb[0].mxu0
    %v3489 = vadd.f32 %v3036, %v3488
    %v3490 = vpop.f32.mrb[0].mxu0
    %v3491 = vadd.f32 %v3038, %v3490
    %3492 = vmatprep.mubr.bf16.mxu0 %v2317
    %3493 = vmatmul.mubr.bf16.gmra.mrb[0].mxu0 %v2115
    %v3494 = vpop.f32.mrb[0].mxu0
    %v3495 = vadd.f32 %v3042, %v3494
    %v3496 = vpop.f32.mrb[0].mxu0
    %v3497 = vadd.f32 %v3044, %v3496
    %v3498 = vpop.f32.mrb[0].mxu0
    %v3499 = vadd.f32 %v3046, %v3498
    %v3500 = vpop.f32.mrb[0].mxu0
    %v3501 = vadd.f32 %v3048, %v3500
    %3502 = vmatprep.mubr.bf16.mxu0 %v2320
    %3503 = vmatmul.mubr.bf16.gmra.mrb[0].mxu0 %v2121
    %v3504 = vpop.f32.mrb[0].mxu0
    %v3505 = vadd.f32 %v3052, %v3504
    %v3506 = vpop.f32.mrb[0].mxu0
    %v3507 = vadd.f32 %v3054, %v3506
    %v3508 = vpop.f32.mrb[0].mxu0
    %v3509 = vadd.f32 %v3056, %v3508
    %v3510 = vpop.f32.mrb[0].mxu0
    %v3511 = vadd.f32 %v3058, %v3510
    %3512 = vmatprep.mubr.bf16.mxu0 %v2323
    %3513 = vmatmul.mubr.bf16.gmra.mrb[0].mxu0 %v2127
    %v3514 = vpop.f32.mrb[0].mxu0
    %v3515 = vadd.f32 %v3062, %v3514
    %v3516 = vpop.f32.mrb[0].mxu0
    %v3517 = vadd.f32 %v3064, %v3516
    %v3518 = vpop.f32.mrb[0].mxu0
    %v3519 = vadd.f32 %v3066, %v3518
    %v3520 = vpop.f32.mrb[0].mxu0
    %v3521 = vadd.f32 %v3068, %v3520
    %3522 = vmatprep.mubr.bf16.mxu0 %v2326
    %3523 = vmatmul.mubr.bf16.gmra.mrb[0].mxu0 %v2133
    %v3524 = vpop.f32.mrb[0].mxu0
    %v3525 = vadd.f32 %v3072, %v3524
    %v3526 = vpop.f32.mrb[0].mxu0
    %v3527 = vadd.f32 %v3074, %v3526
    %v3528 = vpop.f32.mrb[0].mxu0
    %v3529 = vadd.f32 %v3076, %v3528
    %v3530 = vpop.f32.mrb[0].mxu0
    %v3531 = vadd.f32 %v3078, %v3530
    %3532 = vmatprep.mubr.bf16.mxu0 %v2329
    %3533 = vmatmul.mubr.bf16.gmra.mrb[0].mxu0 %v2139
    %v3534 = vpop.f32.mrb[0].mxu0
    %v3535 = vadd.f32 %v3082, %v3534
    %v3536 = vpop.f32.mrb[0].mxu0
    %v3537 = vadd.f32 %v3084, %v3536
    %v3538 = vpop.f32.mrb[0].mxu0
    %v3539 = vadd.f32 %v3086, %v3538
    %v3540 = vpop.f32.mrb[0].mxu0
    %v3541 = vadd.f32 %v3088, %v3540
    %3542 = vmatprep.mubr.bf16.mxu0 %v2332
    %3543 = vmatmul.mubr.bf16.gmra.mrb[0].mxu0 %v2145
    %v3544 = vpop.f32.mrb[0].mxu0
    %v3545 = vadd.f32 %v3092, %v3544
    %v3546 = vpop.f32.mrb[0].mxu0
    %v3547 = vadd.f32 %v3094, %v3546
    %v3548 = vpop.f32.mrb[0].mxu0
    %v3549 = vadd.f32 %v3096, %v3548
    %v3550 = vpop.f32.mrb[0].mxu0
    %v3551 = vadd.f32 %v3098, %v3550
    %3552 = vmatprep.mubr.bf16.mxu0 %v2335
    %3553 = vmatmul.mubr.bf16.gmra.mrb[0].mxu0 %v2151
    %v3554 = vpop.f32.mrb[0].mxu0
    %v3555 = vadd.f32 %v3102, %v3554
    %v3556 = vpop.f32.mrb[0].mxu0
    %v3557 = vadd.f32 %v3104, %v3556
    %v3558 = vpop.f32.mrb[0].mxu0
    %v3559 = vadd.f32 %v3106, %v3558
    %v3560 = vpop.f32.mrb[0].mxu0
    %v3561 = vadd.f32 %v3108, %v3560
    %3562 = vmatprep.mubr.bf16.mxu0 %v2338
    %3563 = vmatmul.mubr.bf16.gmra.mrb[0].mxu0 %v2157
    %v3564 = vpop.f32.mrb[0].mxu0
    %v3565 = vadd.f32 %v3112, %v3564
    %v3566 = vpop.f32.mrb[0].mxu0
    %v3567 = vadd.f32 %v3114, %v3566
    %v3568 = vpop.f32.mrb[0].mxu0
    %v3569 = vadd.f32 %v3116, %v3568
    %v3570 = vpop.f32.mrb[0].mxu0
    %v3571 = vadd.f32 %v3118, %v3570
    %3572 = vmatprep.mubr.bf16.mxu0 %v2341
    %3573 = vmatmul.mubr.bf16.gmra.mrb[0].mxu0 %v2163
    %v3574 = vpop.f32.mrb[0].mxu0
    %v3575 = vadd.f32 %v3122, %v3574
    %v3576 = vpop.f32.mrb[0].mxu0
    %v3577 = vadd.f32 %v3124, %v3576
    %v3578 = vpop.f32.mrb[0].mxu0
    %v3579 = vadd.f32 %v3126, %v3578
    %v3580 = vpop.f32.mrb[0].mxu0
    %v3581 = vadd.f32 %v3128, %v3580
    %3582 = vmatprep.mubr.bf16.mxu0 %v2344
    %3583 = vmatmul.mubr.bf16.gmra.mrb[0].mxu0 %v2169
    %v3584 = vpop.f32.mrb[0].mxu0
    %v3585 = vadd.f32 %v3132, %v3584
    %v3586 = vpop.f32.mrb[0].mxu0
    %v3587 = vadd.f32 %v3134, %v3586
    %v3588 = vpop.f32.mrb[0].mxu0
    %v3589 = vadd.f32 %v3136, %v3588
    %v3590 = vpop.f32.mrb[0].mxu0
    %v3591 = vadd.f32 %v3138, %v3590
    %3592 = vmatprep.mubr.bf16.mxu0 %v2347
    %3593 = vmatmul.mubr.bf16.gmra.mrb[0].mxu0 %v2175
    %v3594 = vpop.f32.mrb[0].mxu0
    %v3595 = vadd.f32 %v3142, %v3594
    %v3596 = vpop.f32.mrb[0].mxu0
    %v3597 = vadd.f32 %v3144, %v3596
    %v3598 = vpop.f32.mrb[0].mxu0
    %v3599 = vadd.f32 %v3146, %v3598
    %v3600 = vpop.f32.mrb[0].mxu0
    %v3601 = vadd.f32 %v3148, %v3600
    %3602 = vmatprep.mubr.bf16.mxu0 %v2350
    %3603 = vmatmul.mubr.bf16.gmra.mrb[0].mxu0 %v2181
    %v3604 = vpop.f32.mrb[0].mxu0
    %v3605 = vadd.f32 %v3152, %v3604
    %v3606 = vpop.f32.mrb[0].mxu0
    %v3607 = vadd.f32 %v3154, %v3606
    %v3608 = vpop.f32.mrb[0].mxu0
    %v3609 = vadd.f32 %v3156, %v3608
    %v3610 = vpop.f32.mrb[0].mxu0
    %v3611 = vadd.f32 %v3158, %v3610
    %3612 = vmatprep.mubr.bf16.mxu0 %v2353
    %3613 = vmatmul.mubr.bf16.gmra.mrb[0].mxu0 %v2187
    %v3614 = vpop.f32.mrb[0].mxu0
    %v3615 = vadd.f32 %v3162, %v3614
    %v3616 = vpop.f32.mrb[0].mxu0
    %v3617 = vadd.f32 %v3164, %v3616
    %v3618 = vpop.f32.mrb[0].mxu0
    %v3619 = vadd.f32 %v3166, %v3618
    %v3620 = vpop.f32.mrb[0].mxu0
    %v3621 = vadd.f32 %v3168, %v3620
    %3622 = vmatprep.mubr.bf16.mxu0 %v2356
    %3623 = vmatmul.mubr.bf16.gmra.mrb[0].mxu0 %v2193
    %v3624 = vpop.f32.mrb[0].mxu0
    %v3625 = vadd.f32 %v3172, %v3624
    %v3626 = vpop.f32.mrb[0].mxu0
    %v3627 = vadd.f32 %v3174, %v3626
    %v3628 = vpop.f32.mrb[0].mxu0
    %v3629 = vadd.f32 %v3176, %v3628
    %v3630 = vpop.f32.mrb[0].mxu0
    %v3631 = vadd.f32 %v3178, %v3630
    %3632 = vmatprep.mubr.bf16.mxu0 %v2359
    %3633 = vmatmul.mubr.bf16.gmra.mrb[0].mxu0 %v2199
    %v3634 = vpop.f32.mrb[0].mxu0
    %v3635 = vadd.f32 %v3182, %v3634
    %v3636 = vpop.f32.mrb[0].mxu0
    %v3637 = vadd.f32 %v3184, %v3636
    %v3638 = vpop.f32.mrb[0].mxu0
    %v3639 = vadd.f32 %v3186, %v3638
    %v3640 = vpop.f32.mrb[0].mxu0
    %v3641 = vadd.f32 %v3188, %v3640
    %3642 = vmatprep.mubr.bf16.mxu0 %v2362
    %3643 = vmatmul.mubr.bf16.gmra.mrb[0].mxu0 %v2205
    %v3644 = vpop.f32.mrb[0].mxu0
    %v3645 = vadd.f32 %v3192, %v3644
    %v3646 = vpop.f32.mrb[0].mxu0
    %v3647 = vadd.f32 %v3194, %v3646
    %v3648 = vpop.f32.mrb[0].mxu0
    %v3649 = vadd.f32 %v3196, %v3648
    %v3650 = vpop.f32.mrb[0].mxu0
    %v3651 = vadd.f32 %v3198, %v3650
    %3652 = vmatprep.mubr.bf16.mxu0 %v2365
    %3653 = vmatmul.mubr.bf16.gmra.mrb[0].mxu0 %v2211
    %v3654 = vpop.f32.mrb[0].mxu0
    %v3655 = vadd.f32 %v3202, %v3654
    %v3656 = vpop.f32.mrb[0].mxu0
    %v3657 = vadd.f32 %v3204, %v3656
    %v3658 = vpop.f32.mrb[0].mxu0
    %v3659 = vadd.f32 %v3206, %v3658
    %v3660 = vpop.f32.mrb[0].mxu0
    %v3661 = vadd.f32 %v3208, %v3660
    %3662 = vmatprep.mubr.bf16.mxu0 %v2368
    %3663 = vmatmul.mubr.bf16.gmra.mrb[0].mxu0 %v2217
    %v3664 = vpop.f32.mrb[0].mxu0
    %v3665 = vadd.f32 %v3212, %v3664
    %v3666 = vpop.f32.mrb[0].mxu0
    %v3667 = vadd.f32 %v3214, %v3666
    %v3668 = vpop.f32.mrb[0].mxu0
    %v3669 = vadd.f32 %v3216, %v3668
    %v3670 = vpop.f32.mrb[0].mxu0
    %v3671 = vadd.f32 %v3218, %v3670
    %3672 = vmatprep.mubr.bf16.mxu0 %v2371
    %3673 = vmatmul.mubr.bf16.gmra.mrb[0].mxu0 %v2223
    %v3674 = vpop.f32.mrb[0].mxu0
    %v3675 = vadd.f32 %v3222, %v3674
    %v3676 = vpop.f32.mrb[0].mxu0
    %v3677 = vadd.f32 %v3224, %v3676
    %v3678 = vpop.f32.mrb[0].mxu0
    %v3679 = vadd.f32 %v3226, %v3678
    %v3680 = vpop.f32.mrb[0].mxu0
    %v3681 = vadd.f32 %v3228, %v3680
    %3682 = vmatprep.mubr.bf16.mxu0 %v2374
    %3683 = vmatmul.mubr.bf16.gmra.mrb[0].mxu0 %v2229
    %v3684 = vpop.f32.mrb[0].mxu0
    %v3685 = vadd.f32 %v3232, %v3684
    %v3686 = vpop.f32.mrb[0].mxu0
    %v3687 = vadd.f32 %v3234, %v3686
    %v3688 = vpop.f32.mrb[0].mxu0
    %v3689 = vadd.f32 %v3236, %v3688
    %v3690 = vpop.f32.mrb[0].mxu0
    %v3691 = vadd.f32 %v3238, %v3690
    %3692 = vmatprep.mubr.bf16.mxu0 %v2377
    %3693 = vmatmul.mubr.bf16.gmra.mrb[0].mxu0 %v2235
    %v3694 = vpop.f32.mrb[0].mxu0
    %v3695 = vadd.f32 %v3242, %v3694
    %v3696 = vpop.f32.mrb[0].mxu0
    %v3697 = vadd.f32 %v3244, %v3696
    %v3698 = vpop.f32.mrb[0].mxu0
    %v3699 = vadd.f32 %v3246, %v3698
    %v3700 = vpop.f32.mrb[0].mxu0
    %v3701 = vadd.f32 %v3248, %v3700
    %3702 = vmatprep.mubr.bf16.mxu0 %v2380
    %3703 = vmatmul.mubr.bf16.gmra.mrb[0].mxu0 %v2241
    %v3704 = vpop.f32.mrb[0].mxu0
    %v3705 = vadd.f32 %v3252, %v3704
    %v3706 = vpop.f32.mrb[0].mxu0
    %v3707 = vadd.f32 %v3254, %v3706
    %v3708 = vpop.f32.mrb[0].mxu0
    %v3709 = vadd.f32 %v3256, %v3708
    %v3710 = vpop.f32.mrb[0].mxu0
    %v3711 = vadd.f32 %v3258, %v3710
    %3712 = vmatprep.mubr.bf16.mxu0 %v2383
    %3713 = vmatmul.mubr.bf16.gmra.mrb[0].mxu0 %v2247
    %v3714 = vpop.f32.mrb[0].mxu0
    %v3715 = vadd.f32 %v3262, %v3714
    %v3716 = vpop.f32.mrb[0].mxu0
    %v3717 = vadd.f32 %v3264, %v3716
    %v3718 = vpop.f32.mrb[0].mxu0
    %v3719 = vadd.f32 %v3266, %v3718
    %v3720 = vpop.f32.mrb[0].mxu0
    %v3721 = vadd.f32 %v3268, %v3720
    %3722 = vmatprep.mubr.bf16.mxu0 %v2386
    %3723 = vmatmul.mubr.bf16.gmra.mrb[0].mxu0 %v2253
    %v3724 = vpop.f32.mrb[0].mxu0
    %v3725 = vadd.f32 %v3272, %v3724
    %v3726 = vpop.f32.mrb[0].mxu0
    %v3727 = vadd.f32 %v3274, %v3726
    %v3728 = vpop.f32.mrb[0].mxu0
    %v3729 = vadd.f32 %v3276, %v3728
    %v3730 = vpop.f32.mrb[0].mxu0
    %v3731 = vadd.f32 %v3278, %v3730
    %3732 = vmatprep.mubr.bf16.mxu0 %v2389
    %3733 = vmatmul.mubr.bf16.gmra.mrb[0].mxu0 %v2259
    %v3734 = vpop.f32.mrb[0].mxu0
    %v3735 = vadd.f32 %v3282, %v3734
    %v3736 = vpop.f32.mrb[0].mxu0
    %v3737 = vadd.f32 %v3284, %v3736
    %v3738 = vpop.f32.mrb[0].mxu0
    %v3739 = vadd.f32 %v3286, %v3738
    %v3740 = vpop.f32.mrb[0].mxu0
    %v3741 = vadd.f32 %v3288, %v3740
    %3742 = vmatprep.mubr.bf16.mxu0 %v2392
    %3743 = vmatmul.mubr.bf16.gmra.mrb[0].mxu0 %v2265
    %v3744 = vpop.f32.mrb[0].mxu0
    %v3745 = vadd.f32 %v3292, %v3744
    %v3746 = vpop.f32.mrb[0].mxu0
    %v3747 = vadd.f32 %v3294, %v3746
    %v3748 = vpop.f32.mrb[0].mxu0
    %v3749 = vadd.f32 %v3296, %v3748
    %v3750 = vpop.f32.mrb[0].mxu0
    %v3751 = vadd.f32 %v3298, %v3750
    %3752 = vdwg.mxu0
    %3753 = vmatprep.subr.bf16.mxu0 %v1220
    %3754 = vmatpush1.bf16.msra.mxu0 %v1219
    %3755 = vmatprep.subr.bf16.mxu0 %v1227
    %3756 = vmatpush1.bf16.msra.mxu0 %v1226
    %3757 = vmatprep.subr.bf16.mxu0 %v1234
    %3758 = vmatpush1.bf16.msra.mxu0 %v1233
    %3759 = vmatprep.subr.bf16.mxu0 %v1241
    %3760 = vmatpush1.bf16.msra.mxu0 %v1240
    %3761 = vmatprep.subr.bf16.mxu0 %v1248
    %3762 = vmatpush1.bf16.msra.mxu0 %v1247
    %3763 = vmatprep.subr.bf16.mxu0 %v1255
    %3764 = vmatpush1.bf16.msra.mxu0 %v1254
    %3765 = vmatprep.subr.bf16.mxu0 %v1262
    %3766 = vmatpush1.bf16.msra.mxu0 %v1261
    %3767 = vmatprep.subr.bf16.mxu0 %v1269
    %3768 = vmatpush1.bf16.msra.mxu0 %v1268
    %3769 = vmatprep.subr.bf16.mxu0 %v1276
    %3770 = vmatpush1.bf16.msra.mxu0 %v1275
    %3771 = vmatprep.subr.bf16.mxu0 %v1283
    %3772 = vmatpush1.bf16.msra.mxu0 %v1282
    %3773 = vmatprep.subr.bf16.mxu0 %v1290
    %3774 = vmatpush1.bf16.msra.mxu0 %v1289
    %3775 = vmatprep.subr.bf16.mxu0 %v1297
    %3776 = vmatpush1.bf16.msra.mxu0 %v1296
    %3777 = vmatprep.subr.bf16.mxu0 %v1304
    %3778 = vmatpush1.bf16.msra.mxu0 %v1303
    %3779 = vmatprep.subr.bf16.mxu0 %v1311
    %3780 = vmatpush1.bf16.msra.mxu0 %v1310
    %3781 = vmatprep.subr.bf16.mxu0 %v1318
    %3782 = vmatpush1.bf16.msra.mxu0 %v1317
    %3783 = vmatprep.subr.bf16.mxu0 %v1325
    %3784 = vmatpush1.bf16.msra.mxu0 %v1324
    %3785 = vmatprep.mubr.bf16.mxu0 %v2016
    %3786 = vmatmul.mubr.bf16.gmra.mrb[0].mxu0 %v2015
    %v3787 = vpop.f32.mrb[0].mxu0
    %v3788 = vadd.f32 0.0, %v3787
    %v3789 = vpop.f32.mrb[0].mxu0
    %v3790 = vadd.f32 0.0, %v3789
    %v3791 = vpop.f32.mrb[0].mxu0
    %v3792 = vadd.f32 0.0, %v3791
    %v3793 = vpop.f32.mrb[0].mxu0
    %v3794 = vadd.f32 0.0, %v3793
    %3795 = vmatprep.mubr.bf16.mxu0 %v2022
    %3796 = vmatmul.mubr.bf16.gmra.mrb[0].mxu0 %v2021
    %v3797 = vpop.f32.mrb[0].mxu0
    %v3798 = vadd.f32 0.0, %v3797
    %v3799 = vpop.f32.mrb[0].mxu0
    %v3800 = vadd.f32 0.0, %v3799
    %v3801 = vpop.f32.mrb[0].mxu0
    %v3802 = vadd.f32 0.0, %v3801
    %v3803 = vpop.f32.mrb[0].mxu0
    %v3804 = vadd.f32 0.0, %v3803
    %3805 = vmatprep.mubr.bf16.mxu0 %v2028
    %3806 = vmatmul.mubr.bf16.gmra.mrb[0].mxu0 %v2027
    %v3807 = vpop.f32.mrb[0].mxu0
    %v3808 = vadd.f32 0.0, %v3807
    %v3809 = vpop.f32.mrb[0].mxu0
    %v3810 = vadd.f32 0.0, %v3809
    %v3811 = vpop.f32.mrb[0].mxu0
    %v3812 = vadd.f32 0.0, %v3811
    %v3813 = vpop.f32.mrb[0].mxu0
    %v3814 = vadd.f32 0.0, %v3813
    %3815 = vmatprep.mubr.bf16.mxu0 %v2034
    %3816 = vmatmul.mubr.bf16.gmra.mrb[0].mxu0 %v2033
    %v3817 = vpop.f32.mrb[0].mxu0
    %v3818 = vadd.f32 0.0, %v3817
    %v3819 = vpop.f32.mrb[0].mxu0
    %v3820 = vadd.f32 0.0, %v3819
    %v3821 = vpop.f32.mrb[0].mxu0
    %v3822 = vadd.f32 0.0, %v3821
    %v3823 = vpop.f32.mrb[0].mxu0
    %v3824 = vadd.f32 0.0, %v3823
    %3825 = vmatprep.mubr.bf16.mxu0 %v2040
    %3826 = vmatmul.mubr.bf16.gmra.mrb[0].mxu0 %v2039
    %v3827 = vpop.f32.mrb[0].mxu0
    %v3828 = vadd.f32 0.0, %v3827
    %v3829 = vpop.f32.mrb[0].mxu0
    %v3830 = vadd.f32 0.0, %v3829
    %v3831 = vpop.f32.mrb[0].mxu0
    %v3832 = vadd.f32 0.0, %v3831
    %v3833 = vpop.f32.mrb[0].mxu0
    %v3834 = vadd.f32 0.0, %v3833
    %3835 = vmatprep.mubr.bf16.mxu0 %v2046
    %3836 = vmatmul.mubr.bf16.gmra.mrb[0].mxu0 %v2045
    %v3837 = vpop.f32.mrb[0].mxu0
    %v3838 = vadd.f32 0.0, %v3837
    %v3839 = vpop.f32.mrb[0].mxu0
    %v3840 = vadd.f32 0.0, %v3839
    %v3841 = vpop.f32.mrb[0].mxu0
    %v3842 = vadd.f32 0.0, %v3841
    %v3843 = vpop.f32.mrb[0].mxu0
    %v3844 = vadd.f32 0.0, %v3843
    %3845 = vmatprep.mubr.bf16.mxu0 %v2052
    %3846 = vmatmul.mubr.bf16.gmra.mrb[0].mxu0 %v2051
    %v3847 = vpop.f32.mrb[0].mxu0
    %v3848 = vadd.f32 0.0, %v3847
    %v3849 = vpop.f32.mrb[0].mxu0
    %v3850 = vadd.f32 0.0, %v3849
    %v3851 = vpop.f32.mrb[0].mxu0
    %v3852 = vadd.f32 0.0, %v3851
    %v3853 = vpop.f32.mrb[0].mxu0
    %v3854 = vadd.f32 0.0, %v3853
    %3855 = vmatprep.mubr.bf16.mxu0 %v2058
    %3856 = vmatmul.mubr.bf16.gmra.mrb[0].mxu0 %v2057
    %v3857 = vpop.f32.mrb[0].mxu0
    %v3858 = vadd.f32 0.0, %v3857
    %v3859 = vpop.f32.mrb[0].mxu0
    %v3860 = vadd.f32 0.0, %v3859
    %v3861 = vpop.f32.mrb[0].mxu0
    %v3862 = vadd.f32 0.0, %v3861
    %v3863 = vpop.f32.mrb[0].mxu0
    %v3864 = vadd.f32 0.0, %v3863
    %3865 = vmatprep.mubr.bf16.mxu0 %v2064
    %3866 = vmatmul.mubr.bf16.gmra.mrb[0].mxu0 %v2063
    %v3867 = vpop.f32.mrb[0].mxu0
    %v3868 = vadd.f32 0.0, %v3867
    %v3869 = vpop.f32.mrb[0].mxu0
    %v3870 = vadd.f32 0.0, %v3869
    %v3871 = vpop.f32.mrb[0].mxu0
    %v3872 = vadd.f32 0.0, %v3871
    %v3873 = vpop.f32.mrb[0].mxu0
    %v3874 = vadd.f32 0.0, %v3873
    %3875 = vmatprep.mubr.bf16.mxu0 %v2070
    %3876 = vmatmul.mubr.bf16.gmra.mrb[0].mxu0 %v2069
    %v3877 = vpop.f32.mrb[0].mxu0
    %v3878 = vadd.f32 0.0, %v3877
    %v3879 = vpop.f32.mrb[0].mxu0
    %v3880 = vadd.f32 0.0, %v3879
    %v3881 = vpop.f32.mrb[0].mxu0
    %v3882 = vadd.f32 0.0, %v3881
    %v3883 = vpop.f32.mrb[0].mxu0
    %v3884 = vadd.f32 0.0, %v3883
    %3885 = vmatprep.mubr.bf16.mxu0 %v2076
    %3886 = vmatmul.mubr.bf16.gmra.mrb[0].mxu0 %v2075
    %v3887 = vpop.f32.mrb[0].mxu0
    %v3888 = vadd.f32 0.0, %v3887
    %v3889 = vpop.f32.mrb[0].mxu0
    %v3890 = vadd.f32 0.0, %v3889
    %v3891 = vpop.f32.mrb[0].mxu0
    %v3892 = vadd.f32 0.0, %v3891
    %v3893 = vpop.f32.mrb[0].mxu0
    %v3894 = vadd.f32 0.0, %v3893
    %3895 = vmatprep.mubr.bf16.mxu0 %v2082
    %3896 = vmatmul.mubr.bf16.gmra.mrb[0].mxu0 %v2081
    %v3897 = vpop.f32.mrb[0].mxu0
    %v3898 = vadd.f32 0.0, %v3897
    %v3899 = vpop.f32.mrb[0].mxu0
    %v3900 = vadd.f32 0.0, %v3899
    %v3901 = vpop.f32.mrb[0].mxu0
    %v3902 = vadd.f32 0.0, %v3901
    %v3903 = vpop.f32.mrb[0].mxu0
    %v3904 = vadd.f32 0.0, %v3903
    %3905 = vmatprep.mubr.bf16.mxu0 %v2088
    %3906 = vmatmul.mubr.bf16.gmra.mrb[0].mxu0 %v2087
    %v3907 = vpop.f32.mrb[0].mxu0
    %v3908 = vadd.f32 0.0, %v3907
    %v3909 = vpop.f32.mrb[0].mxu0
    %v3910 = vadd.f32 0.0, %v3909
    %v3911 = vpop.f32.mrb[0].mxu0
    %v3912 = vadd.f32 0.0, %v3911
    %v3913 = vpop.f32.mrb[0].mxu0
    %v3914 = vadd.f32 0.0, %v3913
    %3915 = vmatprep.mubr.bf16.mxu0 %v2094
    %3916 = vmatmul.mubr.bf16.gmra.mrb[0].mxu0 %v2093
    %v3917 = vpop.f32.mrb[0].mxu0
    %v3918 = vadd.f32 0.0, %v3917
    %v3919 = vpop.f32.mrb[0].mxu0
    %v3920 = vadd.f32 0.0, %v3919
    %v3921 = vpop.f32.mrb[0].mxu0
    %v3922 = vadd.f32 0.0, %v3921
    %v3923 = vpop.f32.mrb[0].mxu0
    %v3924 = vadd.f32 0.0, %v3923
    %3925 = vmatprep.mubr.bf16.mxu0 %v2100
    %3926 = vmatmul.mubr.bf16.gmra.mrb[0].mxu0 %v2099
    %v3927 = vpop.f32.mrb[0].mxu0
    %v3928 = vadd.f32 0.0, %v3927
    %v3929 = vpop.f32.mrb[0].mxu0
    %v3930 = vadd.f32 0.0, %v3929
    %v3931 = vpop.f32.mrb[0].mxu0
    %v3932 = vadd.f32 0.0, %v3931
    %v3933 = vpop.f32.mrb[0].mxu0
    %v3934 = vadd.f32 0.0, %v3933
    %3935 = vmatprep.mubr.bf16.mxu0 %v2106
    %3936 = vmatmul.mubr.bf16.gmra.mrb[0].mxu0 %v2105
    %v3937 = vpop.f32.mrb[0].mxu0
    %v3938 = vadd.f32 0.0, %v3937
    %v3939 = vpop.f32.mrb[0].mxu0
    %v3940 = vadd.f32 0.0, %v3939
    %v3941 = vpop.f32.mrb[0].mxu0
    %v3942 = vadd.f32 0.0, %v3941
    %v3943 = vpop.f32.mrb[0].mxu0
    %v3944 = vadd.f32 0.0, %v3943
    %3945 = vmatprep.mubr.bf16.mxu0 %v2112
    %3946 = vmatmul.mubr.bf16.gmra.mrb[0].mxu0 %v2111
    %v3947 = vpop.f32.mrb[0].mxu0
    %v3948 = vadd.f32 0.0, %v3947
    %v3949 = vpop.f32.mrb[0].mxu0
    %v3950 = vadd.f32 0.0, %v3949
    %v3951 = vpop.f32.mrb[0].mxu0
    %v3952 = vadd.f32 0.0, %v3951
    %v3953 = vpop.f32.mrb[0].mxu0
    %v3954 = vadd.f32 0.0, %v3953
    %3955 = vmatprep.mubr.bf16.mxu0 %v2118
    %3956 = vmatmul.mubr.bf16.gmra.mrb[0].mxu0 %v2117
    %v3957 = vpop.f32.mrb[0].mxu0
    %v3958 = vadd.f32 0.0, %v3957
    %v3959 = vpop.f32.mrb[0].mxu0
    %v3960 = vadd.f32 0.0, %v3959
    %v3961 = vpop.f32.mrb[0].mxu0
    %v3962 = vadd.f32 0.0, %v3961
    %v3963 = vpop.f32.mrb[0].mxu0
    %v3964 = vadd.f32 0.0, %v3963
    %3965 = vmatprep.mubr.bf16.mxu0 %v2124
    %3966 = vmatmul.mubr.bf16.gmra.mrb[0].mxu0 %v2123
    %v3967 = vpop.f32.mrb[0].mxu0
    %v3968 = vadd.f32 0.0, %v3967
    %v3969 = vpop.f32.mrb[0].mxu0
    %v3970 = vadd.f32 0.0, %v3969
    %v3971 = vpop.f32.mrb[0].mxu0
    %v3972 = vadd.f32 0.0, %v3971
    %v3973 = vpop.f32.mrb[0].mxu0
    %v3974 = vadd.f32 0.0, %v3973
    %3975 = vmatprep.mubr.bf16.mxu0 %v2130
    %3976 = vmatmul.mubr.bf16.gmra.mrb[0].mxu0 %v2129
    %v3977 = vpop.f32.mrb[0].mxu0
    %v3978 = vadd.f32 0.0, %v3977
    %v3979 = vpop.f32.mrb[0].mxu0
    %v3980 = vadd.f32 0.0, %v3979
    %v3981 = vpop.f32.mrb[0].mxu0
    %v3982 = vadd.f32 0.0, %v3981
    %v3983 = vpop.f32.mrb[0].mxu0
    %v3984 = vadd.f32 0.0, %v3983
    %3985 = vmatprep.mubr.bf16.mxu0 %v2136
    %3986 = vmatmul.mubr.bf16.gmra.mrb[0].mxu0 %v2135
    %v3987 = vpop.f32.mrb[0].mxu0
    %v3988 = vadd.f32 0.0, %v3987
    %v3989 = vpop.f32.mrb[0].mxu0
    %v3990 = vadd.f32 0.0, %v3989
    %v3991 = vpop.f32.mrb[0].mxu0
    %v3992 = vadd.f32 0.0, %v3991
    %v3993 = vpop.f32.mrb[0].mxu0
    %v3994 = vadd.f32 0.0, %v3993
    %3995 = vmatprep.mubr.bf16.mxu0 %v2142
    %3996 = vmatmul.mubr.bf16.gmra.mrb[0].mxu0 %v2141
    %v3997 = vpop.f32.mrb[0].mxu0
    %v3998 = vadd.f32 0.0, %v3997
    %v3999 = vpop.f32.mrb[0].mxu0
    %v4000 = vadd.f32 0.0, %v3999
    %v4001 = vpop.f32.mrb[0].mxu0
    %v4002 = vadd.f32 0.0, %v4001
    %v4003 = vpop.f32.mrb[0].mxu0
    %v4004 = vadd.f32 0.0, %v4003
    %4005 = vmatprep.mubr.bf16.mxu0 %v2148
    %4006 = vmatmul.mubr.bf16.gmra.mrb[0].mxu0 %v2147
    %v4007 = vpop.f32.mrb[0].mxu0
    %v4008 = vadd.f32 0.0, %v4007
    %v4009 = vpop.f32.mrb[0].mxu0
    %v4010 = vadd.f32 0.0, %v4009
    %v4011 = vpop.f32.mrb[0].mxu0
    %v4012 = vadd.f32 0.0, %v4011
    %v4013 = vpop.f32.mrb[0].mxu0
    %v4014 = vadd.f32 0.0, %v4013
    %4015 = vmatprep.mubr.bf16.mxu0 %v2154
    %4016 = vmatmul.mubr.bf16.gmra.mrb[0].mxu0 %v2153
    %v4017 = vpop.f32.mrb[0].mxu0
    %v4018 = vadd.f32 0.0, %v4017
    %v4019 = vpop.f32.mrb[0].mxu0
    %v4020 = vadd.f32 0.0, %v4019
    %v4021 = vpop.f32.mrb[0].mxu0
    %v4022 = vadd.f32 0.0, %v4021
    %v4023 = vpop.f32.mrb[0].mxu0
    %v4024 = vadd.f32 0.0, %v4023
    %4025 = vmatprep.mubr.bf16.mxu0 %v2160
    %4026 = vmatmul.mubr.bf16.gmra.mrb[0].mxu0 %v2159
    %v4027 = vpop.f32.mrb[0].mxu0
    %v4028 = vadd.f32 0.0, %v4027
    %v4029 = vpop.f32.mrb[0].mxu0
    %v4030 = vadd.f32 0.0, %v4029
    %v4031 = vpop.f32.mrb[0].mxu0
    %v4032 = vadd.f32 0.0, %v4031
    %v4033 = vpop.f32.mrb[0].mxu0
    %v4034 = vadd.f32 0.0, %v4033
    %4035 = vmatprep.mubr.bf16.mxu0 %v2166
    %4036 = vmatmul.mubr.bf16.gmra.mrb[0].mxu0 %v2165
    %v4037 = vpop.f32.mrb[0].mxu0
    %v4038 = vadd.f32 0.0, %v4037
    %v4039 = vpop.f32.mrb[0].mxu0
    %v4040 = vadd.f32 0.0, %v4039
    %v4041 = vpop.f32.mrb[0].mxu0
    %v4042 = vadd.f32 0.0, %v4041
    %v4043 = vpop.f32.mrb[0].mxu0
    %v4044 = vadd.f32 0.0, %v4043
    %4045 = vmatprep.mubr.bf16.mxu0 %v2172
    %4046 = vmatmul.mubr.bf16.gmra.mrb[0].mxu0 %v2171
    %v4047 = vpop.f32.mrb[0].mxu0
    %v4048 = vadd.f32 0.0, %v4047
    %v4049 = vpop.f32.mrb[0].mxu0
    %v4050 = vadd.f32 0.0, %v4049
    %v4051 = vpop.f32.mrb[0].mxu0
    %v4052 = vadd.f32 0.0, %v4051
    %v4053 = vpop.f32.mrb[0].mxu0
    %v4054 = vadd.f32 0.0, %v4053
    %4055 = vmatprep.mubr.bf16.mxu0 %v2178
    %4056 = vmatmul.mubr.bf16.gmra.mrb[0].mxu0 %v2177
    %v4057 = vpop.f32.mrb[0].mxu0
    %v4058 = vadd.f32 0.0, %v4057
    %v4059 = vpop.f32.mrb[0].mxu0
    %v4060 = vadd.f32 0.0, %v4059
    %v4061 = vpop.f32.mrb[0].mxu0
    %v4062 = vadd.f32 0.0, %v4061
    %v4063 = vpop.f32.mrb[0].mxu0
    %v4064 = vadd.f32 0.0, %v4063
    %4065 = vmatprep.mubr.bf16.mxu0 %v2184
    %4066 = vmatmul.mubr.bf16.gmra.mrb[0].mxu0 %v2183
    %v4067 = vpop.f32.mrb[0].mxu0
    %v4068 = vadd.f32 0.0, %v4067
    %v4069 = vpop.f32.mrb[0].mxu0
    %v4070 = vadd.f32 0.0, %v4069
    %v4071 = vpop.f32.mrb[0].mxu0
    %v4072 = vadd.f32 0.0, %v4071
    %v4073 = vpop.f32.mrb[0].mxu0
    %v4074 = vadd.f32 0.0, %v4073
    %4075 = vmatprep.mubr.bf16.mxu0 %v2190
    %4076 = vmatmul.mubr.bf16.gmra.mrb[0].mxu0 %v2189
    %v4077 = vpop.f32.mrb[0].mxu0
    %v4078 = vadd.f32 0.0, %v4077
    %v4079 = vpop.f32.mrb[0].mxu0
    %v4080 = vadd.f32 0.0, %v4079
    %v4081 = vpop.f32.mrb[0].mxu0
    %v4082 = vadd.f32 0.0, %v4081
    %v4083 = vpop.f32.mrb[0].mxu0
    %v4084 = vadd.f32 0.0, %v4083
    %4085 = vmatprep.mubr.bf16.mxu0 %v2196
    %4086 = vmatmul.mubr.bf16.gmra.mrb[0].mxu0 %v2195
    %v4087 = vpop.f32.mrb[0].mxu0
    %v4088 = vadd.f32 0.0, %v4087
    %v4089 = vpop.f32.mrb[0].mxu0
    %v4090 = vadd.f32 0.0, %v4089
    %v4091 = vpop.f32.mrb[0].mxu0
    %v4092 = vadd.f32 0.0, %v4091
    %v4093 = vpop.f32.mrb[0].mxu0
    %v4094 = vadd.f32 0.0, %v4093
    %4095 = vmatprep.mubr.bf16.mxu0 %v2202
    %4096 = vmatmul.mubr.bf16.gmra.mrb[0].mxu0 %v2201
    %v4097 = vpop.f32.mrb[0].mxu0
    %v4098 = vadd.f32 0.0, %v4097
    %v4099 = vpop.f32.mrb[0].mxu0
    %v4100 = vadd.f32 0.0, %v4099
    %v4101 = vpop.f32.mrb[0].mxu0
    %v4102 = vadd.f32 0.0, %v4101
    %v4103 = vpop.f32.mrb[0].mxu0
    %v4104 = vadd.f32 0.0, %v4103
    %4105 = vmatprep.mubr.bf16.mxu0 %v2208
    %4106 = vmatmul.mubr.bf16.gmra.mrb[0].mxu0 %v2207
    %v4107 = vpop.f32.mrb[0].mxu0
    %v4108 = vadd.f32 0.0, %v4107
    %v4109 = vpop.f32.mrb[0].mxu0
    %v4110 = vadd.f32 0.0, %v4109
    %v4111 = vpop.f32.mrb[0].mxu0
    %v4112 = vadd.f32 0.0, %v4111
    %v4113 = vpop.f32.mrb[0].mxu0
    %v4114 = vadd.f32 0.0, %v4113
    %4115 = vmatprep.mubr.bf16.mxu0 %v2214
    %4116 = vmatmul.mubr.bf16.gmra.mrb[0].mxu0 %v2213
    %v4117 = vpop.f32.mrb[0].mxu0
    %v4118 = vadd.f32 0.0, %v4117
    %v4119 = vpop.f32.mrb[0].mxu0
    %v4120 = vadd.f32 0.0, %v4119
    %v4121 = vpop.f32.mrb[0].mxu0
    %v4122 = vadd.f32 0.0, %v4121
    %v4123 = vpop.f32.mrb[0].mxu0
    %v4124 = vadd.f32 0.0, %v4123
    %4125 = vmatprep.mubr.bf16.mxu0 %v2220
    %4126 = vmatmul.mubr.bf16.gmra.mrb[0].mxu0 %v2219
    %v4127 = vpop.f32.mrb[0].mxu0
    %v4128 = vadd.f32 0.0, %v4127
    %v4129 = vpop.f32.mrb[0].mxu0
    %v4130 = vadd.f32 0.0, %v4129
    %v4131 = vpop.f32.mrb[0].mxu0
    %v4132 = vadd.f32 0.0, %v4131
    %v4133 = vpop.f32.mrb[0].mxu0
    %v4134 = vadd.f32 0.0, %v4133
    %4135 = vmatprep.mubr.bf16.mxu0 %v2226
    %4136 = vmatmul.mubr.bf16.gmra.mrb[0].mxu0 %v2225
    %v4137 = vpop.f32.mrb[0].mxu0
    %v4138 = vadd.f32 0.0, %v4137
    %v4139 = vpop.f32.mrb[0].mxu0
    %v4140 = vadd.f32 0.0, %v4139
    %v4141 = vpop.f32.mrb[0].mxu0
    %v4142 = vadd.f32 0.0, %v4141
    %v4143 = vpop.f32.mrb[0].mxu0
    %v4144 = vadd.f32 0.0, %v4143
    %4145 = vmatprep.mubr.bf16.mxu0 %v2232
    %4146 = vmatmul.mubr.bf16.gmra.mrb[0].mxu0 %v2231
    %v4147 = vpop.f32.mrb[0].mxu0
    %v4148 = vadd.f32 0.0, %v4147
    %v4149 = vpop.f32.mrb[0].mxu0
    %v4150 = vadd.f32 0.0, %v4149
    %v4151 = vpop.f32.mrb[0].mxu0
    %v4152 = vadd.f32 0.0, %v4151
    %v4153 = vpop.f32.mrb[0].mxu0
    %v4154 = vadd.f32 0.0, %v4153
    %4155 = vmatprep.mubr.bf16.mxu0 %v2238
    %4156 = vmatmul.mubr.bf16.gmra.mrb[0].mxu0 %v2237
    %v4157 = vpop.f32.mrb[0].mxu0
    %v4158 = vadd.f32 0.0, %v4157
    %v4159 = vpop.f32.mrb[0].mxu0
    %v4160 = vadd.f32 0.0, %v4159
    %v4161 = vpop.f32.mrb[0].mxu0
    %v4162 = vadd.f32 0.0, %v4161
    %v4163 = vpop.f32.mrb[0].mxu0
    %v4164 = vadd.f32 0.0, %v4163
    %4165 = vmatprep.mubr.bf16.mxu0 %v2244
    %4166 = vmatmul.mubr.bf16.gmra.mrb[0].mxu0 %v2243
    %v4167 = vpop.f32.mrb[0].mxu0
    %v4168 = vadd.f32 0.0, %v4167
    %v4169 = vpop.f32.mrb[0].mxu0
    %v4170 = vadd.f32 0.0, %v4169
    %v4171 = vpop.f32.mrb[0].mxu0
    %v4172 = vadd.f32 0.0, %v4171
    %v4173 = vpop.f32.mrb[0].mxu0
    %v4174 = vadd.f32 0.0, %v4173
    %4175 = vmatprep.mubr.bf16.mxu0 %v2250
    %4176 = vmatmul.mubr.bf16.gmra.mrb[0].mxu0 %v2249
    %v4177 = vpop.f32.mrb[0].mxu0
    %v4178 = vadd.f32 0.0, %v4177
    %v4179 = vpop.f32.mrb[0].mxu0
    %v4180 = vadd.f32 0.0, %v4179
    %v4181 = vpop.f32.mrb[0].mxu0
    %v4182 = vadd.f32 0.0, %v4181
    %v4183 = vpop.f32.mrb[0].mxu0
    %v4184 = vadd.f32 0.0, %v4183
    %4185 = vmatprep.mubr.bf16.mxu0 %v2256
    %4186 = vmatmul.mubr.bf16.gmra.mrb[0].mxu0 %v2255
    %v4187 = vpop.f32.mrb[0].mxu0
    %v4188 = vadd.f32 0.0, %v4187
    %v4189 = vpop.f32.mrb[0].mxu0
    %v4190 = vadd.f32 0.0, %v4189
    %v4191 = vpop.f32.mrb[0].mxu0
    %v4192 = vadd.f32 0.0, %v4191
    %v4193 = vpop.f32.mrb[0].mxu0
    %v4194 = vadd.f32 0.0, %v4193
    %4195 = vmatprep.mubr.bf16.mxu0 %v2262
    %4196 = vmatmul.mubr.bf16.gmra.mrb[0].mxu0 %v2261
    %v4197 = vpop.f32.mrb[0].mxu0
    %v4198 = vadd.f32 0.0, %v4197
    %v4199 = vpop.f32.mrb[0].mxu0
    %v4200 = vadd.f32 0.0, %v4199
    %v4201 = vpop.f32.mrb[0].mxu0
    %v4202 = vadd.f32 0.0, %v4201
    %v4203 = vpop.f32.mrb[0].mxu0
    %v4204 = vadd.f32 0.0, %v4203
    %4205 = vdwg.mxu0
    %4206 = vmatprep.subr.bf16.mxu0 %v1332
    %4207 = vmatpush1.bf16.msra.mxu0 %v1331
    %4208 = vmatprep.subr.bf16.mxu0 %v1339
    %4209 = vmatpush1.bf16.msra.mxu0 %v1338
    %4210 = vmatprep.subr.bf16.mxu0 %v1346
    %4211 = vmatpush1.bf16.msra.mxu0 %v1345
    %4212 = vmatprep.subr.bf16.mxu0 %v1353
    %4213 = vmatpush1.bf16.msra.mxu0 %v1352
    %4214 = vmatprep.subr.bf16.mxu0 %v1360
    %4215 = vmatpush1.bf16.msra.mxu0 %v1359
    %4216 = vmatprep.subr.bf16.mxu0 %v1367
    %4217 = vmatpush1.bf16.msra.mxu0 %v1366
    %4218 = vmatprep.subr.bf16.mxu0 %v1374
    %4219 = vmatpush1.bf16.msra.mxu0 %v1373
    %4220 = vmatprep.subr.bf16.mxu0 %v1381
    %4221 = vmatpush1.bf16.msra.mxu0 %v1380
    %4222 = vmatprep.subr.bf16.mxu0 %v1388
    %4223 = vmatpush1.bf16.msra.mxu0 %v1387
    %4224 = vmatprep.subr.bf16.mxu0 %v1395
    %4225 = vmatpush1.bf16.msra.mxu0 %v1394
    %4226 = vmatprep.subr.bf16.mxu0 %v1402
    %4227 = vmatpush1.bf16.msra.mxu0 %v1401
    %4228 = vmatprep.subr.bf16.mxu0 %v1409
    %4229 = vmatpush1.bf16.msra.mxu0 %v1408
    %4230 = vmatprep.subr.bf16.mxu0 %v1416
    %4231 = vmatpush1.bf16.msra.mxu0 %v1415
    %4232 = vmatprep.subr.bf16.mxu0 %v1423
    %4233 = vmatpush1.bf16.msra.mxu0 %v1422
    %4234 = vmatprep.subr.bf16.mxu0 %v1430
    %4235 = vmatpush1.bf16.msra.mxu0 %v1429
    %4236 = vmatprep.subr.bf16.mxu0 %v1437
    %4237 = vmatpush1.bf16.msra.mxu0 %v1436
    %4238 = vmatprep.mubr.bf16.mxu0 %v2018
    %4239 = vmatmul.mubr.bf16.gmra.mrb[0].mxu0 %v2017
    %v4240 = vpop.f32.mrb[0].mxu0
    %v4241 = vadd.f32 %v3788, %v4240
    %v4242 = vpop.f32.mrb[0].mxu0
    %v4243 = vadd.f32 %v3790, %v4242
    %v4244 = vpop.f32.mrb[0].mxu0
    %v4245 = vadd.f32 %v3792, %v4244
    %v4246 = vpop.f32.mrb[0].mxu0
    %v4247 = vadd.f32 %v3794, %v4246
    %4248 = vmatprep.mubr.bf16.mxu0 %v2024
    %4249 = vmatmul.mubr.bf16.gmra.mrb[0].mxu0 %v2023
    %v4250 = vpop.f32.mrb[0].mxu0
    %v4251 = vadd.f32 %v3798, %v4250
    %v4252 = vpop.f32.mrb[0].mxu0
    %v4253 = vadd.f32 %v3800, %v4252
    %v4254 = vpop.f32.mrb[0].mxu0
    %v4255 = vadd.f32 %v3802, %v4254
    %v4256 = vpop.f32.mrb[0].mxu0
    %v4257 = vadd.f32 %v3804, %v4256
    %4258 = vmatprep.mubr.bf16.mxu0 %v2030
    %4259 = vmatmul.mubr.bf16.gmra.mrb[0].mxu0 %v2029
    %v4260 = vpop.f32.mrb[0].mxu0
    %v4261 = vadd.f32 %v3808, %v4260
    %v4262 = vpop.f32.mrb[0].mxu0
    %v4263 = vadd.f32 %v3810, %v4262
    %v4264 = vpop.f32.mrb[0].mxu0
    %v4265 = vadd.f32 %v3812, %v4264
    %v4266 = vpop.f32.mrb[0].mxu0
    %v4267 = vadd.f32 %v3814, %v4266
    %4268 = vmatprep.mubr.bf16.mxu0 %v2036
    %4269 = vmatmul.mubr.bf16.gmra.mrb[0].mxu0 %v2035
    %v4270 = vpop.f32.mrb[0].mxu0
    %v4271 = vadd.f32 %v3818, %v4270
    %v4272 = vpop.f32.mrb[0].mxu0
    %v4273 = vadd.f32 %v3820, %v4272
    %v4274 = vpop.f32.mrb[0].mxu0
    %v4275 = vadd.f32 %v3822, %v4274
    %v4276 = vpop.f32.mrb[0].mxu0
    %v4277 = vadd.f32 %v3824, %v4276
    %4278 = vmatprep.mubr.bf16.mxu0 %v2042
    %4279 = vmatmul.mubr.bf16.gmra.mrb[0].mxu0 %v2041
    %v4280 = vpop.f32.mrb[0].mxu0
    %v4281 = vadd.f32 %v3828, %v4280
    %v4282 = vpop.f32.mrb[0].mxu0
    %v4283 = vadd.f32 %v3830, %v4282
    %v4284 = vpop.f32.mrb[0].mxu0
    %v4285 = vadd.f32 %v3832, %v4284
    %v4286 = vpop.f32.mrb[0].mxu0
    %v4287 = vadd.f32 %v3834, %v4286
    %4288 = vmatprep.mubr.bf16.mxu0 %v2048
    %4289 = vmatmul.mubr.bf16.gmra.mrb[0].mxu0 %v2047
    %v4290 = vpop.f32.mrb[0].mxu0
    %v4291 = vadd.f32 %v3838, %v4290
    %v4292 = vpop.f32.mrb[0].mxu0
    %v4293 = vadd.f32 %v3840, %v4292
    %v4294 = vpop.f32.mrb[0].mxu0
    %v4295 = vadd.f32 %v3842, %v4294
    %v4296 = vpop.f32.mrb[0].mxu0
    %v4297 = vadd.f32 %v3844, %v4296
    %4298 = vmatprep.mubr.bf16.mxu0 %v2054
    %4299 = vmatmul.mubr.bf16.gmra.mrb[0].mxu0 %v2053
    %v4300 = vpop.f32.mrb[0].mxu0
    %v4301 = vadd.f32 %v3848, %v4300
    %v4302 = vpop.f32.mrb[0].mxu0
    %v4303 = vadd.f32 %v3850, %v4302
    %v4304 = vpop.f32.mrb[0].mxu0
    %v4305 = vadd.f32 %v3852, %v4304
    %v4306 = vpop.f32.mrb[0].mxu0
    %v4307 = vadd.f32 %v3854, %v4306
    %4308 = vmatprep.mubr.bf16.mxu0 %v2060
    %4309 = vmatmul.mubr.bf16.gmra.mrb[0].mxu0 %v2059
    %v4310 = vpop.f32.mrb[0].mxu0
    %v4311 = vadd.f32 %v3858, %v4310
    %v4312 = vpop.f32.mrb[0].mxu0
    %v4313 = vadd.f32 %v3860, %v4312
    %v4314 = vpop.f32.mrb[0].mxu0
    %v4315 = vadd.f32 %v3862, %v4314
    %v4316 = vpop.f32.mrb[0].mxu0
    %v4317 = vadd.f32 %v3864, %v4316
    %4318 = vmatprep.mubr.bf16.mxu0 %v2066
    %4319 = vmatmul.mubr.bf16.gmra.mrb[0].mxu0 %v2065
    %v4320 = vpop.f32.mrb[0].mxu0
    %v4321 = vadd.f32 %v3868, %v4320
    %v4322 = vpop.f32.mrb[0].mxu0
    %v4323 = vadd.f32 %v3870, %v4322
    %v4324 = vpop.f32.mrb[0].mxu0
    %v4325 = vadd.f32 %v3872, %v4324
    %v4326 = vpop.f32.mrb[0].mxu0
    %v4327 = vadd.f32 %v3874, %v4326
    %4328 = vmatprep.mubr.bf16.mxu0 %v2072
    %4329 = vmatmul.mubr.bf16.gmra.mrb[0].mxu0 %v2071
    %v4330 = vpop.f32.mrb[0].mxu0
    %v4331 = vadd.f32 %v3878, %v4330
    %v4332 = vpop.f32.mrb[0].mxu0
    %v4333 = vadd.f32 %v3880, %v4332
    %v4334 = vpop.f32.mrb[0].mxu0
    %v4335 = vadd.f32 %v3882, %v4334
    %v4336 = vpop.f32.mrb[0].mxu0
    %v4337 = vadd.f32 %v3884, %v4336
    %4338 = vmatprep.mubr.bf16.mxu0 %v2078
    %4339 = vmatmul.mubr.bf16.gmra.mrb[0].mxu0 %v2077
    %v4340 = vpop.f32.mrb[0].mxu0
    %v4341 = vadd.f32 %v3888, %v4340
    %v4342 = vpop.f32.mrb[0].mxu0
    %v4343 = vadd.f32 %v3890, %v4342
    %v4344 = vpop.f32.mrb[0].mxu0
    %v4345 = vadd.f32 %v3892, %v4344
    %v4346 = vpop.f32.mrb[0].mxu0
    %v4347 = vadd.f32 %v3894, %v4346
    %4348 = vmatprep.mubr.bf16.mxu0 %v2084
    %4349 = vmatmul.mubr.bf16.gmra.mrb[0].mxu0 %v2083
    %v4350 = vpop.f32.mrb[0].mxu0
    %v4351 = vadd.f32 %v3898, %v4350
    %v4352 = vpop.f32.mrb[0].mxu0
    %v4353 = vadd.f32 %v3900, %v4352
    %v4354 = vpop.f32.mrb[0].mxu0
    %v4355 = vadd.f32 %v3902, %v4354
    %v4356 = vpop.f32.mrb[0].mxu0
    %v4357 = vadd.f32 %v3904, %v4356
    %4358 = vmatprep.mubr.bf16.mxu0 %v2090
    %4359 = vmatmul.mubr.bf16.gmra.mrb[0].mxu0 %v2089
    %v4360 = vpop.f32.mrb[0].mxu0
    %v4361 = vadd.f32 %v3908, %v4360
    %v4362 = vpop.f32.mrb[0].mxu0
    %v4363 = vadd.f32 %v3910, %v4362
    %v4364 = vpop.f32.mrb[0].mxu0
    %v4365 = vadd.f32 %v3912, %v4364
    %v4366 = vpop.f32.mrb[0].mxu0
    %v4367 = vadd.f32 %v3914, %v4366
    %4368 = vmatprep.mubr.bf16.mxu0 %v2096
    %4369 = vmatmul.mubr.bf16.gmra.mrb[0].mxu0 %v2095
    %v4370 = vpop.f32.mrb[0].mxu0
    %v4371 = vadd.f32 %v3918, %v4370
    %v4372 = vpop.f32.mrb[0].mxu0
    %v4373 = vadd.f32 %v3920, %v4372
    %v4374 = vpop.f32.mrb[0].mxu0
    %v4375 = vadd.f32 %v3922, %v4374
    %v4376 = vpop.f32.mrb[0].mxu0
    %v4377 = vadd.f32 %v3924, %v4376
    %4378 = vmatprep.mubr.bf16.mxu0 %v2102
    %4379 = vmatmul.mubr.bf16.gmra.mrb[0].mxu0 %v2101
    %v4380 = vpop.f32.mrb[0].mxu0
    %v4381 = vadd.f32 %v3928, %v4380
    %v4382 = vpop.f32.mrb[0].mxu0
    %v4383 = vadd.f32 %v3930, %v4382
    %v4384 = vpop.f32.mrb[0].mxu0
    %v4385 = vadd.f32 %v3932, %v4384
    %v4386 = vpop.f32.mrb[0].mxu0
    %v4387 = vadd.f32 %v3934, %v4386
    %4388 = vmatprep.mubr.bf16.mxu0 %v2108
    %4389 = vmatmul.mubr.bf16.gmra.mrb[0].mxu0 %v2107
    %v4390 = vpop.f32.mrb[0].mxu0
    %v4391 = vadd.f32 %v3938, %v4390
    %v4392 = vpop.f32.mrb[0].mxu0
    %v4393 = vadd.f32 %v3940, %v4392
    %v4394 = vpop.f32.mrb[0].mxu0
    %v4395 = vadd.f32 %v3942, %v4394
    %v4396 = vpop.f32.mrb[0].mxu0
    %v4397 = vadd.f32 %v3944, %v4396
    %4398 = vmatprep.mubr.bf16.mxu0 %v2114
    %4399 = vmatmul.mubr.bf16.gmra.mrb[0].mxu0 %v2113
    %v4400 = vpop.f32.mrb[0].mxu0
    %v4401 = vadd.f32 %v3948, %v4400
    %v4402 = vpop.f32.mrb[0].mxu0
    %v4403 = vadd.f32 %v3950, %v4402
    %v4404 = vpop.f32.mrb[0].mxu0
    %v4405 = vadd.f32 %v3952, %v4404
    %v4406 = vpop.f32.mrb[0].mxu0
    %v4407 = vadd.f32 %v3954, %v4406
    %4408 = vmatprep.mubr.bf16.mxu0 %v2120
    %4409 = vmatmul.mubr.bf16.gmra.mrb[0].mxu0 %v2119
    %v4410 = vpop.f32.mrb[0].mxu0
    %v4411 = vadd.f32 %v3958, %v4410
    %v4412 = vpop.f32.mrb[0].mxu0
    %v4413 = vadd.f32 %v3960, %v4412
    %v4414 = vpop.f32.mrb[0].mxu0
    %v4415 = vadd.f32 %v3962, %v4414
    %v4416 = vpop.f32.mrb[0].mxu0
    %v4417 = vadd.f32 %v3964, %v4416
    %4418 = vmatprep.mubr.bf16.mxu0 %v2126
    %4419 = vmatmul.mubr.bf16.gmra.mrb[0].mxu0 %v2125
    %v4420 = vpop.f32.mrb[0].mxu0
    %v4421 = vadd.f32 %v3968, %v4420
    %v4422 = vpop.f32.mrb[0].mxu0
    %v4423 = vadd.f32 %v3970, %v4422
    %v4424 = vpop.f32.mrb[0].mxu0
    %v4425 = vadd.f32 %v3972, %v4424
    %v4426 = vpop.f32.mrb[0].mxu0
    %v4427 = vadd.f32 %v3974, %v4426
    %4428 = vmatprep.mubr.bf16.mxu0 %v2132
    %4429 = vmatmul.mubr.bf16.gmra.mrb[0].mxu0 %v2131
    %v4430 = vpop.f32.mrb[0].mxu0
    %v4431 = vadd.f32 %v3978, %v4430
    %v4432 = vpop.f32.mrb[0].mxu0
    %v4433 = vadd.f32 %v3980, %v4432
    %v4434 = vpop.f32.mrb[0].mxu0
    %v4435 = vadd.f32 %v3982, %v4434
    %v4436 = vpop.f32.mrb[0].mxu0
    %v4437 = vadd.f32 %v3984, %v4436
    %4438 = vmatprep.mubr.bf16.mxu0 %v2138
    %4439 = vmatmul.mubr.bf16.gmra.mrb[0].mxu0 %v2137
    %v4440 = vpop.f32.mrb[0].mxu0
    %v4441 = vadd.f32 %v3988, %v4440
    %v4442 = vpop.f32.mrb[0].mxu0
    %v4443 = vadd.f32 %v3990, %v4442
    %v4444 = vpop.f32.mrb[0].mxu0
    %v4445 = vadd.f32 %v3992, %v4444
    %v4446 = vpop.f32.mrb[0].mxu0
    %v4447 = vadd.f32 %v3994, %v4446
    %4448 = vmatprep.mubr.bf16.mxu0 %v2144
    %4449 = vmatmul.mubr.bf16.gmra.mrb[0].mxu0 %v2143
    %v4450 = vpop.f32.mrb[0].mxu0
    %v4451 = vadd.f32 %v3998, %v4450
    %v4452 = vpop.f32.mrb[0].mxu0
    %v4453 = vadd.f32 %v4000, %v4452
    %v4454 = vpop.f32.mrb[0].mxu0
    %v4455 = vadd.f32 %v4002, %v4454
    %v4456 = vpop.f32.mrb[0].mxu0
    %v4457 = vadd.f32 %v4004, %v4456
    %4458 = vmatprep.mubr.bf16.mxu0 %v2150
    %4459 = vmatmul.mubr.bf16.gmra.mrb[0].mxu0 %v2149
    %v4460 = vpop.f32.mrb[0].mxu0
    %v4461 = vadd.f32 %v4008, %v4460
    %v4462 = vpop.f32.mrb[0].mxu0
    %v4463 = vadd.f32 %v4010, %v4462
    %v4464 = vpop.f32.mrb[0].mxu0
    %v4465 = vadd.f32 %v4012, %v4464
    %v4466 = vpop.f32.mrb[0].mxu0
    %v4467 = vadd.f32 %v4014, %v4466
    %4468 = vmatprep.mubr.bf16.mxu0 %v2156
    %4469 = vmatmul.mubr.bf16.gmra.mrb[0].mxu0 %v2155
    %v4470 = vpop.f32.mrb[0].mxu0
    %v4471 = vadd.f32 %v4018, %v4470
    %v4472 = vpop.f32.mrb[0].mxu0
    %v4473 = vadd.f32 %v4020, %v4472
    %v4474 = vpop.f32.mrb[0].mxu0
    %v4475 = vadd.f32 %v4022, %v4474
    %v4476 = vpop.f32.mrb[0].mxu0
    %v4477 = vadd.f32 %v4024, %v4476
    %4478 = vmatprep.mubr.bf16.mxu0 %v2162
    %4479 = vmatmul.mubr.bf16.gmra.mrb[0].mxu0 %v2161
    %v4480 = vpop.f32.mrb[0].mxu0
    %v4481 = vadd.f32 %v4028, %v4480
    %v4482 = vpop.f32.mrb[0].mxu0
    %v4483 = vadd.f32 %v4030, %v4482
    %v4484 = vpop.f32.mrb[0].mxu0
    %v4485 = vadd.f32 %v4032, %v4484
    %v4486 = vpop.f32.mrb[0].mxu0
    %v4487 = vadd.f32 %v4034, %v4486
    %4488 = vmatprep.mubr.bf16.mxu0 %v2168
    %4489 = vmatmul.mubr.bf16.gmra.mrb[0].mxu0 %v2167
    %v4490 = vpop.f32.mrb[0].mxu0
    %v4491 = vadd.f32 %v4038, %v4490
    %v4492 = vpop.f32.mrb[0].mxu0
    %v4493 = vadd.f32 %v4040, %v4492
    %v4494 = vpop.f32.mrb[0].mxu0
    %v4495 = vadd.f32 %v4042, %v4494
    %v4496 = vpop.f32.mrb[0].mxu0
    %v4497 = vadd.f32 %v4044, %v4496
    %4498 = vmatprep.mubr.bf16.mxu0 %v2174
    %4499 = vmatmul.mubr.bf16.gmra.mrb[0].mxu0 %v2173
    %v4500 = vpop.f32.mrb[0].mxu0
    %v4501 = vadd.f32 %v4048, %v4500
    %v4502 = vpop.f32.mrb[0].mxu0
    %v4503 = vadd.f32 %v4050, %v4502
    %v4504 = vpop.f32.mrb[0].mxu0
    %v4505 = vadd.f32 %v4052, %v4504
    %v4506 = vpop.f32.mrb[0].mxu0
    %v4507 = vadd.f32 %v4054, %v4506
    %4508 = vmatprep.mubr.bf16.mxu0 %v2180
    %4509 = vmatmul.mubr.bf16.gmra.mrb[0].mxu0 %v2179
    %v4510 = vpop.f32.mrb[0].mxu0
    %v4511 = vadd.f32 %v4058, %v4510
    %v4512 = vpop.f32.mrb[0].mxu0
    %v4513 = vadd.f32 %v4060, %v4512
    %v4514 = vpop.f32.mrb[0].mxu0
    %v4515 = vadd.f32 %v4062, %v4514
    %v4516 = vpop.f32.mrb[0].mxu0
    %v4517 = vadd.f32 %v4064, %v4516
    %4518 = vmatprep.mubr.bf16.mxu0 %v2186
    %4519 = vmatmul.mubr.bf16.gmra.mrb[0].mxu0 %v2185
    %v4520 = vpop.f32.mrb[0].mxu0
    %v4521 = vadd.f32 %v4068, %v4520
    %v4522 = vpop.f32.mrb[0].mxu0
    %v4523 = vadd.f32 %v4070, %v4522
    %v4524 = vpop.f32.mrb[0].mxu0
    %v4525 = vadd.f32 %v4072, %v4524
    %v4526 = vpop.f32.mrb[0].mxu0
    %v4527 = vadd.f32 %v4074, %v4526
    %4528 = vmatprep.mubr.bf16.mxu0 %v2192
    %4529 = vmatmul.mubr.bf16.gmra.mrb[0].mxu0 %v2191
    %v4530 = vpop.f32.mrb[0].mxu0
    %v4531 = vadd.f32 %v4078, %v4530
    %v4532 = vpop.f32.mrb[0].mxu0
    %v4533 = vadd.f32 %v4080, %v4532
    %v4534 = vpop.f32.mrb[0].mxu0
    %v4535 = vadd.f32 %v4082, %v4534
    %v4536 = vpop.f32.mrb[0].mxu0
    %v4537 = vadd.f32 %v4084, %v4536
    %4538 = vmatprep.mubr.bf16.mxu0 %v2198
    %4539 = vmatmul.mubr.bf16.gmra.mrb[0].mxu0 %v2197
    %v4540 = vpop.f32.mrb[0].mxu0
    %v4541 = vadd.f32 %v4088, %v4540
    %v4542 = vpop.f32.mrb[0].mxu0
    %v4543 = vadd.f32 %v4090, %v4542
    %v4544 = vpop.f32.mrb[0].mxu0
    %v4545 = vadd.f32 %v4092, %v4544
    %v4546 = vpop.f32.mrb[0].mxu0
    %v4547 = vadd.f32 %v4094, %v4546
    %4548 = vmatprep.mubr.bf16.mxu0 %v2204
    %4549 = vmatmul.mubr.bf16.gmra.mrb[0].mxu0 %v2203
    %v4550 = vpop.f32.mrb[0].mxu0
    %v4551 = vadd.f32 %v4098, %v4550
    %v4552 = vpop.f32.mrb[0].mxu0
    %v4553 = vadd.f32 %v4100, %v4552
    %v4554 = vpop.f32.mrb[0].mxu0
    %v4555 = vadd.f32 %v4102, %v4554
    %v4556 = vpop.f32.mrb[0].mxu0
    %v4557 = vadd.f32 %v4104, %v4556
    %4558 = vmatprep.mubr.bf16.mxu0 %v2210
    %4559 = vmatmul.mubr.bf16.gmra.mrb[0].mxu0 %v2209
    %v4560 = vpop.f32.mrb[0].mxu0
    %v4561 = vadd.f32 %v4108, %v4560
    %v4562 = vpop.f32.mrb[0].mxu0
    %v4563 = vadd.f32 %v4110, %v4562
    %v4564 = vpop.f32.mrb[0].mxu0
    %v4565 = vadd.f32 %v4112, %v4564
    %v4566 = vpop.f32.mrb[0].mxu0
    %v4567 = vadd.f32 %v4114, %v4566
    %4568 = vmatprep.mubr.bf16.mxu0 %v2216
    %4569 = vmatmul.mubr.bf16.gmra.mrb[0].mxu0 %v2215
    %v4570 = vpop.f32.mrb[0].mxu0
    %v4571 = vadd.f32 %v4118, %v4570
    %v4572 = vpop.f32.mrb[0].mxu0
    %v4573 = vadd.f32 %v4120, %v4572
    %v4574 = vpop.f32.mrb[0].mxu0
    %v4575 = vadd.f32 %v4122, %v4574
    %v4576 = vpop.f32.mrb[0].mxu0
    %v4577 = vadd.f32 %v4124, %v4576
    %4578 = vmatprep.mubr.bf16.mxu0 %v2222
    %4579 = vmatmul.mubr.bf16.gmra.mrb[0].mxu0 %v2221
    %v4580 = vpop.f32.mrb[0].mxu0
    %v4581 = vadd.f32 %v4128, %v4580
    %v4582 = vpop.f32.mrb[0].mxu0
    %v4583 = vadd.f32 %v4130, %v4582
    %v4584 = vpop.f32.mrb[0].mxu0
    %v4585 = vadd.f32 %v4132, %v4584
    %v4586 = vpop.f32.mrb[0].mxu0
    %v4587 = vadd.f32 %v4134, %v4586
    %4588 = vmatprep.mubr.bf16.mxu0 %v2228
    %4589 = vmatmul.mubr.bf16.gmra.mrb[0].mxu0 %v2227
    %v4590 = vpop.f32.mrb[0].mxu0
    %v4591 = vadd.f32 %v4138, %v4590
    %v4592 = vpop.f32.mrb[0].mxu0
    %v4593 = vadd.f32 %v4140, %v4592
    %v4594 = vpop.f32.mrb[0].mxu0
    %v4595 = vadd.f32 %v4142, %v4594
    %v4596 = vpop.f32.mrb[0].mxu0
    %v4597 = vadd.f32 %v4144, %v4596
    %4598 = vmatprep.mubr.bf16.mxu0 %v2234
    %4599 = vmatmul.mubr.bf16.gmra.mrb[0].mxu0 %v2233
    %v4600 = vpop.f32.mrb[0].mxu0
    %v4601 = vadd.f32 %v4148, %v4600
    %v4602 = vpop.f32.mrb[0].mxu0
    %v4603 = vadd.f32 %v4150, %v4602
    %v4604 = vpop.f32.mrb[0].mxu0
    %v4605 = vadd.f32 %v4152, %v4604
    %v4606 = vpop.f32.mrb[0].mxu0
    %v4607 = vadd.f32 %v4154, %v4606
    %4608 = vmatprep.mubr.bf16.mxu0 %v2240
    %4609 = vmatmul.mubr.bf16.gmra.mrb[0].mxu0 %v2239
    %v4610 = vpop.f32.mrb[0].mxu0
    %v4611 = vadd.f32 %v4158, %v4610
    %v4612 = vpop.f32.mrb[0].mxu0
    %v4613 = vadd.f32 %v4160, %v4612
    %v4614 = vpop.f32.mrb[0].mxu0
    %v4615 = vadd.f32 %v4162, %v4614
    %v4616 = vpop.f32.mrb[0].mxu0
    %v4617 = vadd.f32 %v4164, %v4616
    %4618 = vmatprep.mubr.bf16.mxu0 %v2246
    %4619 = vmatmul.mubr.bf16.gmra.mrb[0].mxu0 %v2245
    %v4620 = vpop.f32.mrb[0].mxu0
    %v4621 = vadd.f32 %v4168, %v4620
    %v4622 = vpop.f32.mrb[0].mxu0
    %v4623 = vadd.f32 %v4170, %v4622
    %v4624 = vpop.f32.mrb[0].mxu0
    %v4625 = vadd.f32 %v4172, %v4624
    %v4626 = vpop.f32.mrb[0].mxu0
    %v4627 = vadd.f32 %v4174, %v4626
    %4628 = vmatprep.mubr.bf16.mxu0 %v2252
    %4629 = vmatmul.mubr.bf16.gmra.mrb[0].mxu0 %v2251
    %v4630 = vpop.f32.mrb[0].mxu0
    %v4631 = vadd.f32 %v4178, %v4630
    %v4632 = vpop.f32.mrb[0].mxu0
    %v4633 = vadd.f32 %v4180, %v4632
    %v4634 = vpop.f32.mrb[0].mxu0
    %v4635 = vadd.f32 %v4182, %v4634
    %v4636 = vpop.f32.mrb[0].mxu0
    %v4637 = vadd.f32 %v4184, %v4636
    %4638 = vmatprep.mubr.bf16.mxu0 %v2258
    %4639 = vmatmul.mubr.bf16.gmra.mrb[0].mxu0 %v2257
    %v4640 = vpop.f32.mrb[0].mxu0
    %v4641 = vadd.f32 %v4188, %v4640
    %v4642 = vpop.f32.mrb[0].mxu0
    %v4643 = vadd.f32 %v4190, %v4642
    %v4644 = vpop.f32.mrb[0].mxu0
    %v4645 = vadd.f32 %v4192, %v4644
    %v4646 = vpop.f32.mrb[0].mxu0
    %v4647 = vadd.f32 %v4194, %v4646
    %4648 = vmatprep.mubr.bf16.mxu0 %v2264
    %4649 = vmatmul.mubr.bf16.gmra.mrb[0].mxu0 %v2263
    %v4650 = vpop.f32.mrb[0].mxu0
    %v4651 = vadd.f32 %v4198, %v4650
    %v4652 = vpop.f32.mrb[0].mxu0
    %v4653 = vadd.f32 %v4200, %v4652
    %v4654 = vpop.f32.mrb[0].mxu0
    %v4655 = vadd.f32 %v4202, %v4654
    %v4656 = vpop.f32.mrb[0].mxu0
    %v4657 = vadd.f32 %v4204, %v4656
    %4658 = vdwg.mxu0
    %4659 = vmatprep.subr.bf16.mxu0 %v1444
    %4660 = vmatpush1.bf16.msra.mxu0 %v1443
    %4661 = vmatprep.subr.bf16.mxu0 %v1451
    %4662 = vmatpush1.bf16.msra.mxu0 %v1450
    %4663 = vmatprep.subr.bf16.mxu0 %v1458
    %4664 = vmatpush1.bf16.msra.mxu0 %v1457
    %4665 = vmatprep.subr.bf16.mxu0 %v1465
    %4666 = vmatpush1.bf16.msra.mxu0 %v1464
    %4667 = vmatprep.subr.bf16.mxu0 %v1472
    %4668 = vmatpush1.bf16.msra.mxu0 %v1471
    %4669 = vmatprep.subr.bf16.mxu0 %v1479
    %4670 = vmatpush1.bf16.msra.mxu0 %v1478
    %4671 = vmatprep.subr.bf16.mxu0 %v1486
    %4672 = vmatpush1.bf16.msra.mxu0 %v1485
    %4673 = vmatprep.subr.bf16.mxu0 %v1493
    %4674 = vmatpush1.bf16.msra.mxu0 %v1492
    %4675 = vmatprep.subr.bf16.mxu0 %v1500
    %4676 = vmatpush1.bf16.msra.mxu0 %v1499
    %4677 = vmatprep.subr.bf16.mxu0 %v1507
    %4678 = vmatpush1.bf16.msra.mxu0 %v1506
    %4679 = vmatprep.subr.bf16.mxu0 0
    %4680 = vmatpush1.bf16.msra.mxu0 0
    %4681 = vmatprep.subr.bf16.mxu0 0
    %4682 = vmatpush1.bf16.msra.mxu0 0
    %4683 = vmatprep.subr.bf16.mxu0 0
    %4684 = vmatpush1.bf16.msra.mxu0 0
    %4685 = vmatprep.subr.bf16.mxu0 0
    %4686 = vmatpush1.bf16.msra.mxu0 0
    %4687 = vmatprep.subr.bf16.mxu0 0
    %4688 = vmatpush1.bf16.msra.mxu0 0
    %4689 = vmatprep.subr.bf16.mxu0 0
    %4690 = vmatpush1.bf16.msra.mxu0 0
    %4691 = vmatprep.mubr.bf16.mxu0 %v2269
    %4692 = vmatmul.mubr.bf16.gmra.mrb[0].mxu0 %v2019
    %v4693 = vpop.f32.mrb[0].mxu0
    %v4694 = vadd.f32 %v4241, %v4693
    %v4695 = vpop.f32.mrb[0].mxu0
    %v4696 = vadd.f32 %v4243, %v4695
    %v4697 = vpop.f32.mrb[0].mxu0
    %v4698 = vadd.f32 %v4245, %v4697
    %v4699 = vpop.f32.mrb[0].mxu0
    %v4700 = vadd.f32 %v4247, %v4699
    %4701 = vmatprep.mubr.bf16.mxu0 %v2272
    %4702 = vmatmul.mubr.bf16.gmra.mrb[0].mxu0 %v2025
    %v4703 = vpop.f32.mrb[0].mxu0
    %v4704 = vadd.f32 %v4251, %v4703
    %v4705 = vpop.f32.mrb[0].mxu0
    %v4706 = vadd.f32 %v4253, %v4705
    %v4707 = vpop.f32.mrb[0].mxu0
    %v4708 = vadd.f32 %v4255, %v4707
    %v4709 = vpop.f32.mrb[0].mxu0
    %v4710 = vadd.f32 %v4257, %v4709
    %4711 = vmatprep.mubr.bf16.mxu0 %v2275
    %4712 = vmatmul.mubr.bf16.gmra.mrb[0].mxu0 %v2031
    %v4713 = vpop.f32.mrb[0].mxu0
    %v4714 = vadd.f32 %v4261, %v4713
    %v4715 = vpop.f32.mrb[0].mxu0
    %v4716 = vadd.f32 %v4263, %v4715
    %v4717 = vpop.f32.mrb[0].mxu0
    %v4718 = vadd.f32 %v4265, %v4717
    %v4719 = vpop.f32.mrb[0].mxu0
    %v4720 = vadd.f32 %v4267, %v4719
    %4721 = vmatprep.mubr.bf16.mxu0 %v2278
    %4722 = vmatmul.mubr.bf16.gmra.mrb[0].mxu0 %v2037
    %v4723 = vpop.f32.mrb[0].mxu0
    %v4724 = vadd.f32 %v4271, %v4723
    %v4725 = vpop.f32.mrb[0].mxu0
    %v4726 = vadd.f32 %v4273, %v4725
    %v4727 = vpop.f32.mrb[0].mxu0
    %v4728 = vadd.f32 %v4275, %v4727
    %v4729 = vpop.f32.mrb[0].mxu0
    %v4730 = vadd.f32 %v4277, %v4729
    %4731 = vmatprep.mubr.bf16.mxu0 %v2281
    %4732 = vmatmul.mubr.bf16.gmra.mrb[0].mxu0 %v2043
    %v4733 = vpop.f32.mrb[0].mxu0
    %v4734 = vadd.f32 %v4281, %v4733
    %v4735 = vpop.f32.mrb[0].mxu0
    %v4736 = vadd.f32 %v4283, %v4735
    %v4737 = vpop.f32.mrb[0].mxu0
    %v4738 = vadd.f32 %v4285, %v4737
    %v4739 = vpop.f32.mrb[0].mxu0
    %v4740 = vadd.f32 %v4287, %v4739
    %4741 = vmatprep.mubr.bf16.mxu0 %v2284
    %4742 = vmatmul.mubr.bf16.gmra.mrb[0].mxu0 %v2049
    %v4743 = vpop.f32.mrb[0].mxu0
    %v4744 = vadd.f32 %v4291, %v4743
    %v4745 = vpop.f32.mrb[0].mxu0
    %v4746 = vadd.f32 %v4293, %v4745
    %v4747 = vpop.f32.mrb[0].mxu0
    %v4748 = vadd.f32 %v4295, %v4747
    %v4749 = vpop.f32.mrb[0].mxu0
    %v4750 = vadd.f32 %v4297, %v4749
    %4751 = vmatprep.mubr.bf16.mxu0 %v2287
    %4752 = vmatmul.mubr.bf16.gmra.mrb[0].mxu0 %v2055
    %v4753 = vpop.f32.mrb[0].mxu0
    %v4754 = vadd.f32 %v4301, %v4753
    %v4755 = vpop.f32.mrb[0].mxu0
    %v4756 = vadd.f32 %v4303, %v4755
    %v4757 = vpop.f32.mrb[0].mxu0
    %v4758 = vadd.f32 %v4305, %v4757
    %v4759 = vpop.f32.mrb[0].mxu0
    %v4760 = vadd.f32 %v4307, %v4759
    %4761 = vmatprep.mubr.bf16.mxu0 %v2290
    %4762 = vmatmul.mubr.bf16.gmra.mrb[0].mxu0 %v2061
    %v4763 = vpop.f32.mrb[0].mxu0
    %v4764 = vadd.f32 %v4311, %v4763
    %v4765 = vpop.f32.mrb[0].mxu0
    %v4766 = vadd.f32 %v4313, %v4765
    %v4767 = vpop.f32.mrb[0].mxu0
    %v4768 = vadd.f32 %v4315, %v4767
    %v4769 = vpop.f32.mrb[0].mxu0
    %v4770 = vadd.f32 %v4317, %v4769
    %4771 = vmatprep.mubr.bf16.mxu0 %v2293
    %4772 = vmatmul.mubr.bf16.gmra.mrb[0].mxu0 %v2067
    %v4773 = vpop.f32.mrb[0].mxu0
    %v4774 = vadd.f32 %v4321, %v4773
    %v4775 = vpop.f32.mrb[0].mxu0
    %v4776 = vadd.f32 %v4323, %v4775
    %v4777 = vpop.f32.mrb[0].mxu0
    %v4778 = vadd.f32 %v4325, %v4777
    %v4779 = vpop.f32.mrb[0].mxu0
    %v4780 = vadd.f32 %v4327, %v4779
    %4781 = vmatprep.mubr.bf16.mxu0 %v2296
    %4782 = vmatmul.mubr.bf16.gmra.mrb[0].mxu0 %v2073
    %v4783 = vpop.f32.mrb[0].mxu0
    %v4784 = vadd.f32 %v4331, %v4783
    %v4785 = vpop.f32.mrb[0].mxu0
    %v4786 = vadd.f32 %v4333, %v4785
    %v4787 = vpop.f32.mrb[0].mxu0
    %v4788 = vadd.f32 %v4335, %v4787
    %v4789 = vpop.f32.mrb[0].mxu0
    %v4790 = vadd.f32 %v4337, %v4789
    %4791 = vmatprep.mubr.bf16.mxu0 %v2299
    %4792 = vmatmul.mubr.bf16.gmra.mrb[0].mxu0 %v2079
    %v4793 = vpop.f32.mrb[0].mxu0
    %v4794 = vadd.f32 %v4341, %v4793
    %v4795 = vpop.f32.mrb[0].mxu0
    %v4796 = vadd.f32 %v4343, %v4795
    %v4797 = vpop.f32.mrb[0].mxu0
    %v4798 = vadd.f32 %v4345, %v4797
    %v4799 = vpop.f32.mrb[0].mxu0
    %v4800 = vadd.f32 %v4347, %v4799
    %4801 = vmatprep.mubr.bf16.mxu0 %v2302
    %4802 = vmatmul.mubr.bf16.gmra.mrb[0].mxu0 %v2085
    %v4803 = vpop.f32.mrb[0].mxu0
    %v4804 = vadd.f32 %v4351, %v4803
    %v4805 = vpop.f32.mrb[0].mxu0
    %v4806 = vadd.f32 %v4353, %v4805
    %v4807 = vpop.f32.mrb[0].mxu0
    %v4808 = vadd.f32 %v4355, %v4807
    %v4809 = vpop.f32.mrb[0].mxu0
    %v4810 = vadd.f32 %v4357, %v4809
    %4811 = vmatprep.mubr.bf16.mxu0 %v2305
    %4812 = vmatmul.mubr.bf16.gmra.mrb[0].mxu0 %v2091
    %v4813 = vpop.f32.mrb[0].mxu0
    %v4814 = vadd.f32 %v4361, %v4813
    %v4815 = vpop.f32.mrb[0].mxu0
    %v4816 = vadd.f32 %v4363, %v4815
    %v4817 = vpop.f32.mrb[0].mxu0
    %v4818 = vadd.f32 %v4365, %v4817
    %v4819 = vpop.f32.mrb[0].mxu0
    %v4820 = vadd.f32 %v4367, %v4819
    %4821 = vmatprep.mubr.bf16.mxu0 %v2308
    %4822 = vmatmul.mubr.bf16.gmra.mrb[0].mxu0 %v2097
    %v4823 = vpop.f32.mrb[0].mxu0
    %v4824 = vadd.f32 %v4371, %v4823
    %v4825 = vpop.f32.mrb[0].mxu0
    %v4826 = vadd.f32 %v4373, %v4825
    %v4827 = vpop.f32.mrb[0].mxu0
    %v4828 = vadd.f32 %v4375, %v4827
    %v4829 = vpop.f32.mrb[0].mxu0
    %v4830 = vadd.f32 %v4377, %v4829
    %4831 = vmatprep.mubr.bf16.mxu0 %v2311
    %4832 = vmatmul.mubr.bf16.gmra.mrb[0].mxu0 %v2103
    %v4833 = vpop.f32.mrb[0].mxu0
    %v4834 = vadd.f32 %v4381, %v4833
    %v4835 = vpop.f32.mrb[0].mxu0
    %v4836 = vadd.f32 %v4383, %v4835
    %v4837 = vpop.f32.mrb[0].mxu0
    %v4838 = vadd.f32 %v4385, %v4837
    %v4839 = vpop.f32.mrb[0].mxu0
    %v4840 = vadd.f32 %v4387, %v4839
    %4841 = vmatprep.mubr.bf16.mxu0 %v2314
    %4842 = vmatmul.mubr.bf16.gmra.mrb[0].mxu0 %v2109
    %v4843 = vpop.f32.mrb[0].mxu0
    %v4844 = vadd.f32 %v4391, %v4843
    %v4845 = vpop.f32.mrb[0].mxu0
    %v4846 = vadd.f32 %v4393, %v4845
    %v4847 = vpop.f32.mrb[0].mxu0
    %v4848 = vadd.f32 %v4395, %v4847
    %v4849 = vpop.f32.mrb[0].mxu0
    %v4850 = vadd.f32 %v4397, %v4849
    %4851 = vmatprep.mubr.bf16.mxu0 %v2317
    %4852 = vmatmul.mubr.bf16.gmra.mrb[0].mxu0 %v2115
    %v4853 = vpop.f32.mrb[0].mxu0
    %v4854 = vadd.f32 %v4401, %v4853
    %v4855 = vpop.f32.mrb[0].mxu0
    %v4856 = vadd.f32 %v4403, %v4855
    %v4857 = vpop.f32.mrb[0].mxu0
    %v4858 = vadd.f32 %v4405, %v4857
    %v4859 = vpop.f32.mrb[0].mxu0
    %v4860 = vadd.f32 %v4407, %v4859
    %4861 = vmatprep.mubr.bf16.mxu0 %v2320
    %4862 = vmatmul.mubr.bf16.gmra.mrb[0].mxu0 %v2121
    %v4863 = vpop.f32.mrb[0].mxu0
    %v4864 = vadd.f32 %v4411, %v4863
    %v4865 = vpop.f32.mrb[0].mxu0
    %v4866 = vadd.f32 %v4413, %v4865
    %v4867 = vpop.f32.mrb[0].mxu0
    %v4868 = vadd.f32 %v4415, %v4867
    %v4869 = vpop.f32.mrb[0].mxu0
    %v4870 = vadd.f32 %v4417, %v4869
    %4871 = vmatprep.mubr.bf16.mxu0 %v2323
    %4872 = vmatmul.mubr.bf16.gmra.mrb[0].mxu0 %v2127
    %v4873 = vpop.f32.mrb[0].mxu0
    %v4874 = vadd.f32 %v4421, %v4873
    %v4875 = vpop.f32.mrb[0].mxu0
    %v4876 = vadd.f32 %v4423, %v4875
    %v4877 = vpop.f32.mrb[0].mxu0
    %v4878 = vadd.f32 %v4425, %v4877
    %v4879 = vpop.f32.mrb[0].mxu0
    %v4880 = vadd.f32 %v4427, %v4879
    %4881 = vmatprep.mubr.bf16.mxu0 %v2326
    %4882 = vmatmul.mubr.bf16.gmra.mrb[0].mxu0 %v2133
    %v4883 = vpop.f32.mrb[0].mxu0
    %v4884 = vadd.f32 %v4431, %v4883
    %v4885 = vpop.f32.mrb[0].mxu0
    %v4886 = vadd.f32 %v4433, %v4885
    %v4887 = vpop.f32.mrb[0].mxu0
    %v4888 = vadd.f32 %v4435, %v4887
    %v4889 = vpop.f32.mrb[0].mxu0
    %v4890 = vadd.f32 %v4437, %v4889
    %4891 = vmatprep.mubr.bf16.mxu0 %v2329
    %4892 = vmatmul.mubr.bf16.gmra.mrb[0].mxu0 %v2139
    %v4893 = vpop.f32.mrb[0].mxu0
    %v4894 = vadd.f32 %v4441, %v4893
    %v4895 = vpop.f32.mrb[0].mxu0
    %v4896 = vadd.f32 %v4443, %v4895
    %v4897 = vpop.f32.mrb[0].mxu0
    %v4898 = vadd.f32 %v4445, %v4897
    %v4899 = vpop.f32.mrb[0].mxu0
    %v4900 = vadd.f32 %v4447, %v4899
    %4901 = vmatprep.mubr.bf16.mxu0 %v2332
    %4902 = vmatmul.mubr.bf16.gmra.mrb[0].mxu0 %v2145
    %v4903 = vpop.f32.mrb[0].mxu0
    %v4904 = vadd.f32 %v4451, %v4903
    %v4905 = vpop.f32.mrb[0].mxu0
    %v4906 = vadd.f32 %v4453, %v4905
    %v4907 = vpop.f32.mrb[0].mxu0
    %v4908 = vadd.f32 %v4455, %v4907
    %v4909 = vpop.f32.mrb[0].mxu0
    %v4910 = vadd.f32 %v4457, %v4909
    %4911 = vmatprep.mubr.bf16.mxu0 %v2335
    %4912 = vmatmul.mubr.bf16.gmra.mrb[0].mxu0 %v2151
    %v4913 = vpop.f32.mrb[0].mxu0
    %v4914 = vadd.f32 %v4461, %v4913
    %v4915 = vpop.f32.mrb[0].mxu0
    %v4916 = vadd.f32 %v4463, %v4915
    %v4917 = vpop.f32.mrb[0].mxu0
    %v4918 = vadd.f32 %v4465, %v4917
    %v4919 = vpop.f32.mrb[0].mxu0
    %v4920 = vadd.f32 %v4467, %v4919
    %4921 = vmatprep.mubr.bf16.mxu0 %v2338
    %4922 = vmatmul.mubr.bf16.gmra.mrb[0].mxu0 %v2157
    %v4923 = vpop.f32.mrb[0].mxu0
    %v4924 = vadd.f32 %v4471, %v4923
    %v4925 = vpop.f32.mrb[0].mxu0
    %v4926 = vadd.f32 %v4473, %v4925
    %v4927 = vpop.f32.mrb[0].mxu0
    %v4928 = vadd.f32 %v4475, %v4927
    %v4929 = vpop.f32.mrb[0].mxu0
    %v4930 = vadd.f32 %v4477, %v4929
    %4931 = vmatprep.mubr.bf16.mxu0 %v2341
    %4932 = vmatmul.mubr.bf16.gmra.mrb[0].mxu0 %v2163
    %v4933 = vpop.f32.mrb[0].mxu0
    %v4934 = vadd.f32 %v4481, %v4933
    %v4935 = vpop.f32.mrb[0].mxu0
    %v4936 = vadd.f32 %v4483, %v4935
    %v4937 = vpop.f32.mrb[0].mxu0
    %v4938 = vadd.f32 %v4485, %v4937
    %v4939 = vpop.f32.mrb[0].mxu0
    %v4940 = vadd.f32 %v4487, %v4939
    %4941 = vmatprep.mubr.bf16.mxu0 %v2344
    %4942 = vmatmul.mubr.bf16.gmra.mrb[0].mxu0 %v2169
    %v4943 = vpop.f32.mrb[0].mxu0
    %v4944 = vadd.f32 %v4491, %v4943
    %v4945 = vpop.f32.mrb[0].mxu0
    %v4946 = vadd.f32 %v4493, %v4945
    %v4947 = vpop.f32.mrb[0].mxu0
    %v4948 = vadd.f32 %v4495, %v4947
    %v4949 = vpop.f32.mrb[0].mxu0
    %v4950 = vadd.f32 %v4497, %v4949
    %4951 = vmatprep.mubr.bf16.mxu0 %v2347
    %4952 = vmatmul.mubr.bf16.gmra.mrb[0].mxu0 %v2175
    %v4953 = vpop.f32.mrb[0].mxu0
    %v4954 = vadd.f32 %v4501, %v4953
    %v4955 = vpop.f32.mrb[0].mxu0
    %v4956 = vadd.f32 %v4503, %v4955
    %v4957 = vpop.f32.mrb[0].mxu0
    %v4958 = vadd.f32 %v4505, %v4957
    %v4959 = vpop.f32.mrb[0].mxu0
    %v4960 = vadd.f32 %v4507, %v4959
    %4961 = vmatprep.mubr.bf16.mxu0 %v2350
    %4962 = vmatmul.mubr.bf16.gmra.mrb[0].mxu0 %v2181
    %v4963 = vpop.f32.mrb[0].mxu0
    %v4964 = vadd.f32 %v4511, %v4963
    %v4965 = vpop.f32.mrb[0].mxu0
    %v4966 = vadd.f32 %v4513, %v4965
    %v4967 = vpop.f32.mrb[0].mxu0
    %v4968 = vadd.f32 %v4515, %v4967
    %v4969 = vpop.f32.mrb[0].mxu0
    %v4970 = vadd.f32 %v4517, %v4969
    %4971 = vmatprep.mubr.bf16.mxu0 %v2353
    %4972 = vmatmul.mubr.bf16.gmra.mrb[0].mxu0 %v2187
    %v4973 = vpop.f32.mrb[0].mxu0
    %v4974 = vadd.f32 %v4521, %v4973
    %v4975 = vpop.f32.mrb[0].mxu0
    %v4976 = vadd.f32 %v4523, %v4975
    %v4977 = vpop.f32.mrb[0].mxu0
    %v4978 = vadd.f32 %v4525, %v4977
    %v4979 = vpop.f32.mrb[0].mxu0
    %v4980 = vadd.f32 %v4527, %v4979
    %4981 = vmatprep.mubr.bf16.mxu0 %v2356
    %4982 = vmatmul.mubr.bf16.gmra.mrb[0].mxu0 %v2193
    %v4983 = vpop.f32.mrb[0].mxu0
    %v4984 = vadd.f32 %v4531, %v4983
    %v4985 = vpop.f32.mrb[0].mxu0
    %v4986 = vadd.f32 %v4533, %v4985
    %v4987 = vpop.f32.mrb[0].mxu0
    %v4988 = vadd.f32 %v4535, %v4987
    %v4989 = vpop.f32.mrb[0].mxu0
    %v4990 = vadd.f32 %v4537, %v4989
    %4991 = vmatprep.mubr.bf16.mxu0 %v2359
    %4992 = vmatmul.mubr.bf16.gmra.mrb[0].mxu0 %v2199
    %v4993 = vpop.f32.mrb[0].mxu0
    %v4994 = vadd.f32 %v4541, %v4993
    %v4995 = vpop.f32.mrb[0].mxu0
    %v4996 = vadd.f32 %v4543, %v4995
    %v4997 = vpop.f32.mrb[0].mxu0
    %v4998 = vadd.f32 %v4545, %v4997
    %v4999 = vpop.f32.mrb[0].mxu0
    %v5000 = vadd.f32 %v4547, %v4999
    %5001 = vmatprep.mubr.bf16.mxu0 %v2362
    %5002 = vmatmul.mubr.bf16.gmra.mrb[0].mxu0 %v2205
    %v5003 = vpop.f32.mrb[0].mxu0
    %v5004 = vadd.f32 %v4551, %v5003
    %v5005 = vpop.f32.mrb[0].mxu0
    %v5006 = vadd.f32 %v4553, %v5005
    %v5007 = vpop.f32.mrb[0].mxu0
    %v5008 = vadd.f32 %v4555, %v5007
    %v5009 = vpop.f32.mrb[0].mxu0
    %v5010 = vadd.f32 %v4557, %v5009
    %5011 = vmatprep.mubr.bf16.mxu0 %v2365
    %5012 = vmatmul.mubr.bf16.gmra.mrb[0].mxu0 %v2211
    %v5013 = vpop.f32.mrb[0].mxu0
    %v5014 = vadd.f32 %v4561, %v5013
    %v5015 = vpop.f32.mrb[0].mxu0
    %v5016 = vadd.f32 %v4563, %v5015
    %v5017 = vpop.f32.mrb[0].mxu0
    %v5018 = vadd.f32 %v4565, %v5017
    %v5019 = vpop.f32.mrb[0].mxu0
    %v5020 = vadd.f32 %v4567, %v5019
    %5021 = vmatprep.mubr.bf16.mxu0 %v2368
    %5022 = vmatmul.mubr.bf16.gmra.mrb[0].mxu0 %v2217
    %v5023 = vpop.f32.mrb[0].mxu0
    %v5024 = vadd.f32 %v4571, %v5023
    %v5025 = vpop.f32.mrb[0].mxu0
    %v5026 = vadd.f32 %v4573, %v5025
    %v5027 = vpop.f32.mrb[0].mxu0
    %v5028 = vadd.f32 %v4575, %v5027
    %v5029 = vpop.f32.mrb[0].mxu0
    %v5030 = vadd.f32 %v4577, %v5029
    %5031 = vmatprep.mubr.bf16.mxu0 %v2371
    %5032 = vmatmul.mubr.bf16.gmra.mrb[0].mxu0 %v2223
    %v5033 = vpop.f32.mrb[0].mxu0
    %v5034 = vadd.f32 %v4581, %v5033
    %v5035 = vpop.f32.mrb[0].mxu0
    %v5036 = vadd.f32 %v4583, %v5035
    %v5037 = vpop.f32.mrb[0].mxu0
    %v5038 = vadd.f32 %v4585, %v5037
    %v5039 = vpop.f32.mrb[0].mxu0
    %v5040 = vadd.f32 %v4587, %v5039
    %5041 = vmatprep.mubr.bf16.mxu0 %v2374
    %5042 = vmatmul.mubr.bf16.gmra.mrb[0].mxu0 %v2229
    %v5043 = vpop.f32.mrb[0].mxu0
    %v5044 = vadd.f32 %v4591, %v5043
    %v5045 = vpop.f32.mrb[0].mxu0
    %v5046 = vadd.f32 %v4593, %v5045
    %v5047 = vpop.f32.mrb[0].mxu0
    %v5048 = vadd.f32 %v4595, %v5047
    %v5049 = vpop.f32.mrb[0].mxu0
    %v5050 = vadd.f32 %v4597, %v5049
    %5051 = vmatprep.mubr.bf16.mxu0 %v2377
    %5052 = vmatmul.mubr.bf16.gmra.mrb[0].mxu0 %v2235
    %v5053 = vpop.f32.mrb[0].mxu0
    %v5054 = vadd.f32 %v4601, %v5053
    %v5055 = vpop.f32.mrb[0].mxu0
    %v5056 = vadd.f32 %v4603, %v5055
    %v5057 = vpop.f32.mrb[0].mxu0
    %v5058 = vadd.f32 %v4605, %v5057
    %v5059 = vpop.f32.mrb[0].mxu0
    %v5060 = vadd.f32 %v4607, %v5059
    %5061 = vmatprep.mubr.bf16.mxu0 %v2380
    %5062 = vmatmul.mubr.bf16.gmra.mrb[0].mxu0 %v2241
    %v5063 = vpop.f32.mrb[0].mxu0
    %v5064 = vadd.f32 %v4611, %v5063
    %v5065 = vpop.f32.mrb[0].mxu0
    %v5066 = vadd.f32 %v4613, %v5065
    %v5067 = vpop.f32.mrb[0].mxu0
    %v5068 = vadd.f32 %v4615, %v5067
    %v5069 = vpop.f32.mrb[0].mxu0
    %v5070 = vadd.f32 %v4617, %v5069
    %5071 = vmatprep.mubr.bf16.mxu0 %v2383
    %5072 = vmatmul.mubr.bf16.gmra.mrb[0].mxu0 %v2247
    %v5073 = vpop.f32.mrb[0].mxu0
    %v5074 = vadd.f32 %v4621, %v5073
    %v5075 = vpop.f32.mrb[0].mxu0
    %v5076 = vadd.f32 %v4623, %v5075
    %v5077 = vpop.f32.mrb[0].mxu0
    %v5078 = vadd.f32 %v4625, %v5077
    %v5079 = vpop.f32.mrb[0].mxu0
    %v5080 = vadd.f32 %v4627, %v5079
    %5081 = vmatprep.mubr.bf16.mxu0 %v2386
    %5082 = vmatmul.mubr.bf16.gmra.mrb[0].mxu0 %v2253
    %v5083 = vpop.f32.mrb[0].mxu0
    %v5084 = vadd.f32 %v4631, %v5083
    %v5085 = vpop.f32.mrb[0].mxu0
    %v5086 = vadd.f32 %v4633, %v5085
    %v5087 = vpop.f32.mrb[0].mxu0
    %v5088 = vadd.f32 %v4635, %v5087
    %v5089 = vpop.f32.mrb[0].mxu0
    %v5090 = vadd.f32 %v4637, %v5089
    %5091 = vmatprep.mubr.bf16.mxu0 %v2389
    %5092 = vmatmul.mubr.bf16.gmra.mrb[0].mxu0 %v2259
    %v5093 = vpop.f32.mrb[0].mxu0
    %v5094 = vadd.f32 %v4641, %v5093
    %v5095 = vpop.f32.mrb[0].mxu0
    %v5096 = vadd.f32 %v4643, %v5095
    %v5097 = vpop.f32.mrb[0].mxu0
    %v5098 = vadd.f32 %v4645, %v5097
    %v5099 = vpop.f32.mrb[0].mxu0
    %v5100 = vadd.f32 %v4647, %v5099
    %5101 = vmatprep.mubr.bf16.mxu0 %v2392
    %5102 = vmatmul.mubr.bf16.gmra.mrb[0].mxu0 %v2265
    %v5103 = vpop.f32.mrb[0].mxu0
    %v5104 = vadd.f32 %v4651, %v5103
    %v5105 = vpop.f32.mrb[0].mxu0
    %v5106 = vadd.f32 %v4653, %v5105
    %v5107 = vpop.f32.mrb[0].mxu0
    %v5108 = vadd.f32 %v4655, %v5107
    %v5109 = vpop.f32.mrb[0].mxu0
    %v5110 = vadd.f32 %v4657, %v5109
    %5111 = vdwg.mxu0
    %5112 = vmatprep.subr.bf16.mxu0 %v1222
    %5113 = vmatpush1.bf16.msra.mxu0 %v1221
    %5114 = vmatprep.subr.bf16.mxu0 %v1229
    %5115 = vmatpush1.bf16.msra.mxu0 %v1228
    %5116 = vmatprep.subr.bf16.mxu0 %v1236
    %5117 = vmatpush1.bf16.msra.mxu0 %v1235
    %5118 = vmatprep.subr.bf16.mxu0 %v1243
    %5119 = vmatpush1.bf16.msra.mxu0 %v1242
    %5120 = vmatprep.subr.bf16.mxu0 %v1250
    %5121 = vmatpush1.bf16.msra.mxu0 %v1249
    %5122 = vmatprep.subr.bf16.mxu0 %v1257
    %5123 = vmatpush1.bf16.msra.mxu0 %v1256
    %5124 = vmatprep.subr.bf16.mxu0 %v1264
    %5125 = vmatpush1.bf16.msra.mxu0 %v1263
    %5126 = vmatprep.subr.bf16.mxu0 %v1271
    %5127 = vmatpush1.bf16.msra.mxu0 %v1270
    %5128 = vmatprep.subr.bf16.mxu0 %v1278
    %5129 = vmatpush1.bf16.msra.mxu0 %v1277
    %5130 = vmatprep.subr.bf16.mxu0 %v1285
    %5131 = vmatpush1.bf16.msra.mxu0 %v1284
    %5132 = vmatprep.subr.bf16.mxu0 %v1292
    %5133 = vmatpush1.bf16.msra.mxu0 %v1291
    %5134 = vmatprep.subr.bf16.mxu0 %v1299
    %5135 = vmatpush1.bf16.msra.mxu0 %v1298
    %5136 = vmatprep.subr.bf16.mxu0 %v1306
    %5137 = vmatpush1.bf16.msra.mxu0 %v1305
    %5138 = vmatprep.subr.bf16.mxu0 %v1313
    %5139 = vmatpush1.bf16.msra.mxu0 %v1312
    %5140 = vmatprep.subr.bf16.mxu0 %v1320
    %5141 = vmatpush1.bf16.msra.mxu0 %v1319
    %5142 = vmatprep.subr.bf16.mxu0 %v1327
    %5143 = vmatpush1.bf16.msra.mxu0 %v1326
    %5144 = vmatprep.mubr.bf16.mxu0 %v2016
    %5145 = vmatmul.mubr.bf16.gmra.mrb[0].mxu0 %v2015
    %v5146 = vpop.f32.mrb[0].mxu0
    %v5147 = vadd.f32 0.0, %v5146
    %v5148 = vpop.f32.mrb[0].mxu0
    %v5149 = vadd.f32 0.0, %v5148
    %v5150 = vpop.f32.mrb[0].mxu0
    %v5151 = vadd.f32 0.0, %v5150
    %v5152 = vpop.f32.mrb[0].mxu0
    %v5153 = vadd.f32 0.0, %v5152
    %5154 = vmatprep.mubr.bf16.mxu0 %v2022
    %5155 = vmatmul.mubr.bf16.gmra.mrb[0].mxu0 %v2021
    %v5156 = vpop.f32.mrb[0].mxu0
    %v5157 = vadd.f32 0.0, %v5156
    %v5158 = vpop.f32.mrb[0].mxu0
    %v5159 = vadd.f32 0.0, %v5158
    %v5160 = vpop.f32.mrb[0].mxu0
    %v5161 = vadd.f32 0.0, %v5160
    %v5162 = vpop.f32.mrb[0].mxu0
    %v5163 = vadd.f32 0.0, %v5162
    %5164 = vmatprep.mubr.bf16.mxu0 %v2028
    %5165 = vmatmul.mubr.bf16.gmra.mrb[0].mxu0 %v2027
    %v5166 = vpop.f32.mrb[0].mxu0
    %v5167 = vadd.f32 0.0, %v5166
    %v5168 = vpop.f32.mrb[0].mxu0
    %v5169 = vadd.f32 0.0, %v5168
    %v5170 = vpop.f32.mrb[0].mxu0
    %v5171 = vadd.f32 0.0, %v5170
    %v5172 = vpop.f32.mrb[0].mxu0
    %v5173 = vadd.f32 0.0, %v5172
    %5174 = vmatprep.mubr.bf16.mxu0 %v2034
    %5175 = vmatmul.mubr.bf16.gmra.mrb[0].mxu0 %v2033
    %v5176 = vpop.f32.mrb[0].mxu0
    %v5177 = vadd.f32 0.0, %v5176
    %v5178 = vpop.f32.mrb[0].mxu0
    %v5179 = vadd.f32 0.0, %v5178
    %v5180 = vpop.f32.mrb[0].mxu0
    %v5181 = vadd.f32 0.0, %v5180
    %v5182 = vpop.f32.mrb[0].mxu0
    %v5183 = vadd.f32 0.0, %v5182
    %5184 = vmatprep.mubr.bf16.mxu0 %v2040
    %5185 = vmatmul.mubr.bf16.gmra.mrb[0].mxu0 %v2039
    %v5186 = vpop.f32.mrb[0].mxu0
    %v5187 = vadd.f32 0.0, %v5186
    %v5188 = vpop.f32.mrb[0].mxu0
    %v5189 = vadd.f32 0.0, %v5188
    %v5190 = vpop.f32.mrb[0].mxu0
    %v5191 = vadd.f32 0.0, %v5190
    %v5192 = vpop.f32.mrb[0].mxu0
    %v5193 = vadd.f32 0.0, %v5192
    %5194 = vmatprep.mubr.bf16.mxu0 %v2046
    %5195 = vmatmul.mubr.bf16.gmra.mrb[0].mxu0 %v2045
    %v5196 = vpop.f32.mrb[0].mxu0
    %v5197 = vadd.f32 0.0, %v5196
    %v5198 = vpop.f32.mrb[0].mxu0
    %v5199 = vadd.f32 0.0, %v5198
    %v5200 = vpop.f32.mrb[0].mxu0
    %v5201 = vadd.f32 0.0, %v5200
    %v5202 = vpop.f32.mrb[0].mxu0
    %v5203 = vadd.f32 0.0, %v5202
    %5204 = vmatprep.mubr.bf16.mxu0 %v2052
    %5205 = vmatmul.mubr.bf16.gmra.mrb[0].mxu0 %v2051
    %v5206 = vpop.f32.mrb[0].mxu0
    %v5207 = vadd.f32 0.0, %v5206
    %v5208 = vpop.f32.mrb[0].mxu0
    %v5209 = vadd.f32 0.0, %v5208
    %v5210 = vpop.f32.mrb[0].mxu0
    %v5211 = vadd.f32 0.0, %v5210
    %v5212 = vpop.f32.mrb[0].mxu0
    %v5213 = vadd.f32 0.0, %v5212
    %5214 = vmatprep.mubr.bf16.mxu0 %v2058
    %5215 = vmatmul.mubr.bf16.gmra.mrb[0].mxu0 %v2057
    %v5216 = vpop.f32.mrb[0].mxu0
    %v5217 = vadd.f32 0.0, %v5216
    %v5218 = vpop.f32.mrb[0].mxu0
    %v5219 = vadd.f32 0.0, %v5218
    %v5220 = vpop.f32.mrb[0].mxu0
    %v5221 = vadd.f32 0.0, %v5220
    %v5222 = vpop.f32.mrb[0].mxu0
    %v5223 = vadd.f32 0.0, %v5222
    %5224 = vmatprep.mubr.bf16.mxu0 %v2064
    %5225 = vmatmul.mubr.bf16.gmra.mrb[0].mxu0 %v2063
    %v5226 = vpop.f32.mrb[0].mxu0
    %v5227 = vadd.f32 0.0, %v5226
    %v5228 = vpop.f32.mrb[0].mxu0
    %v5229 = vadd.f32 0.0, %v5228
    %v5230 = vpop.f32.mrb[0].mxu0
    %v5231 = vadd.f32 0.0, %v5230
    %v5232 = vpop.f32.mrb[0].mxu0
    %v5233 = vadd.f32 0.0, %v5232
    %5234 = vmatprep.mubr.bf16.mxu0 %v2070
    %5235 = vmatmul.mubr.bf16.gmra.mrb[0].mxu0 %v2069
    %v5236 = vpop.f32.mrb[0].mxu0
    %v5237 = vadd.f32 0.0, %v5236
    %v5238 = vpop.f32.mrb[0].mxu0
    %v5239 = vadd.f32 0.0, %v5238
    %v5240 = vpop.f32.mrb[0].mxu0
    %v5241 = vadd.f32 0.0, %v5240
    %v5242 = vpop.f32.mrb[0].mxu0
    %v5243 = vadd.f32 0.0, %v5242
    %5244 = vmatprep.mubr.bf16.mxu0 %v2076
    %5245 = vmatmul.mubr.bf16.gmra.mrb[0].mxu0 %v2075
    %v5246 = vpop.f32.mrb[0].mxu0
    %v5247 = vadd.f32 0.0, %v5246
    %v5248 = vpop.f32.mrb[0].mxu0
    %v5249 = vadd.f32 0.0, %v5248
    %v5250 = vpop.f32.mrb[0].mxu0
    %v5251 = vadd.f32 0.0, %v5250
    %v5252 = vpop.f32.mrb[0].mxu0
    %v5253 = vadd.f32 0.0, %v5252
    %5254 = vmatprep.mubr.bf16.mxu0 %v2082
    %5255 = vmatmul.mubr.bf16.gmra.mrb[0].mxu0 %v2081
    %v5256 = vpop.f32.mrb[0].mxu0
    %v5257 = vadd.f32 0.0, %v5256
    %v5258 = vpop.f32.mrb[0].mxu0
    %v5259 = vadd.f32 0.0, %v5258
    %v5260 = vpop.f32.mrb[0].mxu0
    %v5261 = vadd.f32 0.0, %v5260
    %v5262 = vpop.f32.mrb[0].mxu0
    %v5263 = vadd.f32 0.0, %v5262
    %5264 = vmatprep.mubr.bf16.mxu0 %v2088
    %5265 = vmatmul.mubr.bf16.gmra.mrb[0].mxu0 %v2087
    %v5266 = vpop.f32.mrb[0].mxu0
    %v5267 = vadd.f32 0.0, %v5266
    %v5268 = vpop.f32.mrb[0].mxu0
    %v5269 = vadd.f32 0.0, %v5268
    %v5270 = vpop.f32.mrb[0].mxu0
    %v5271 = vadd.f32 0.0, %v5270
    %v5272 = vpop.f32.mrb[0].mxu0
    %v5273 = vadd.f32 0.0, %v5272
    %5274 = vmatprep.mubr.bf16.mxu0 %v2094
    %5275 = vmatmul.mubr.bf16.gmra.mrb[0].mxu0 %v2093
    %v5276 = vpop.f32.mrb[0].mxu0
    %v5277 = vadd.f32 0.0, %v5276
    %v5278 = vpop.f32.mrb[0].mxu0
    %v5279 = vadd.f32 0.0, %v5278
    %v5280 = vpop.f32.mrb[0].mxu0
    %v5281 = vadd.f32 0.0, %v5280
    %v5282 = vpop.f32.mrb[0].mxu0
    %v5283 = vadd.f32 0.0, %v5282
    %5284 = vmatprep.mubr.bf16.mxu0 %v2100
    %5285 = vmatmul.mubr.bf16.gmra.mrb[0].mxu0 %v2099
    %v5286 = vpop.f32.mrb[0].mxu0
    %v5287 = vadd.f32 0.0, %v5286
    %v5288 = vpop.f32.mrb[0].mxu0
    %v5289 = vadd.f32 0.0, %v5288
    %v5290 = vpop.f32.mrb[0].mxu0
    %v5291 = vadd.f32 0.0, %v5290
    %v5292 = vpop.f32.mrb[0].mxu0
    %v5293 = vadd.f32 0.0, %v5292
    %5294 = vmatprep.mubr.bf16.mxu0 %v2106
    %5295 = vmatmul.mubr.bf16.gmra.mrb[0].mxu0 %v2105
    %v5296 = vpop.f32.mrb[0].mxu0
    %v5297 = vadd.f32 0.0, %v5296
    %v5298 = vpop.f32.mrb[0].mxu0
    %v5299 = vadd.f32 0.0, %v5298
    %v5300 = vpop.f32.mrb[0].mxu0
    %v5301 = vadd.f32 0.0, %v5300
    %v5302 = vpop.f32.mrb[0].mxu0
    %v5303 = vadd.f32 0.0, %v5302
    %5304 = vmatprep.mubr.bf16.mxu0 %v2112
    %5305 = vmatmul.mubr.bf16.gmra.mrb[0].mxu0 %v2111
    %v5306 = vpop.f32.mrb[0].mxu0
    %v5307 = vadd.f32 0.0, %v5306
    %v5308 = vpop.f32.mrb[0].mxu0
    %v5309 = vadd.f32 0.0, %v5308
    %v5310 = vpop.f32.mrb[0].mxu0
    %v5311 = vadd.f32 0.0, %v5310
    %v5312 = vpop.f32.mrb[0].mxu0
    %v5313 = vadd.f32 0.0, %v5312
    %5314 = vmatprep.mubr.bf16.mxu0 %v2118
    %5315 = vmatmul.mubr.bf16.gmra.mrb[0].mxu0 %v2117
    %v5316 = vpop.f32.mrb[0].mxu0
    %v5317 = vadd.f32 0.0, %v5316
    %v5318 = vpop.f32.mrb[0].mxu0
    %v5319 = vadd.f32 0.0, %v5318
    %v5320 = vpop.f32.mrb[0].mxu0
    %v5321 = vadd.f32 0.0, %v5320
    %v5322 = vpop.f32.mrb[0].mxu0
    %v5323 = vadd.f32 0.0, %v5322
    %5324 = vmatprep.mubr.bf16.mxu0 %v2124
    %5325 = vmatmul.mubr.bf16.gmra.mrb[0].mxu0 %v2123
    %v5326 = vpop.f32.mrb[0].mxu0
    %v5327 = vadd.f32 0.0, %v5326
    %v5328 = vpop.f32.mrb[0].mxu0
    %v5329 = vadd.f32 0.0, %v5328
    %v5330 = vpop.f32.mrb[0].mxu0
    %v5331 = vadd.f32 0.0, %v5330
    %v5332 = vpop.f32.mrb[0].mxu0
    %v5333 = vadd.f32 0.0, %v5332
    %5334 = vmatprep.mubr.bf16.mxu0 %v2130
    %5335 = vmatmul.mubr.bf16.gmra.mrb[0].mxu0 %v2129
    %v5336 = vpop.f32.mrb[0].mxu0
    %v5337 = vadd.f32 0.0, %v5336
    %v5338 = vpop.f32.mrb[0].mxu0
    %v5339 = vadd.f32 0.0, %v5338
    %v5340 = vpop.f32.mrb[0].mxu0
    %v5341 = vadd.f32 0.0, %v5340
    %v5342 = vpop.f32.mrb[0].mxu0
    %v5343 = vadd.f32 0.0, %v5342
    %5344 = vmatprep.mubr.bf16.mxu0 %v2136
    %5345 = vmatmul.mubr.bf16.gmra.mrb[0].mxu0 %v2135
    %v5346 = vpop.f32.mrb[0].mxu0
    %v5347 = vadd.f32 0.0, %v5346
    %v5348 = vpop.f32.mrb[0].mxu0
    %v5349 = vadd.f32 0.0, %v5348
    %v5350 = vpop.f32.mrb[0].mxu0
    %v5351 = vadd.f32 0.0, %v5350
    %v5352 = vpop.f32.mrb[0].mxu0
    %v5353 = vadd.f32 0.0, %v5352
    %5354 = vmatprep.mubr.bf16.mxu0 %v2142
    %5355 = vmatmul.mubr.bf16.gmra.mrb[0].mxu0 %v2141
    %v5356 = vpop.f32.mrb[0].mxu0
    %v5357 = vadd.f32 0.0, %v5356
    %v5358 = vpop.f32.mrb[0].mxu0
    %v5359 = vadd.f32 0.0, %v5358
    %v5360 = vpop.f32.mrb[0].mxu0
    %v5361 = vadd.f32 0.0, %v5360
    %v5362 = vpop.f32.mrb[0].mxu0
    %v5363 = vadd.f32 0.0, %v5362
    %5364 = vmatprep.mubr.bf16.mxu0 %v2148
    %5365 = vmatmul.mubr.bf16.gmra.mrb[0].mxu0 %v2147
    %v5366 = vpop.f32.mrb[0].mxu0
    %v5367 = vadd.f32 0.0, %v5366
    %v5368 = vpop.f32.mrb[0].mxu0
    %v5369 = vadd.f32 0.0, %v5368
    %v5370 = vpop.f32.mrb[0].mxu0
    %v5371 = vadd.f32 0.0, %v5370
    %v5372 = vpop.f32.mrb[0].mxu0
    %v5373 = vadd.f32 0.0, %v5372
    %5374 = vmatprep.mubr.bf16.mxu0 %v2154
    %5375 = vmatmul.mubr.bf16.gmra.mrb[0].mxu0 %v2153
    %v5376 = vpop.f32.mrb[0].mxu0
    %v5377 = vadd.f32 0.0, %v5376
    %v5378 = vpop.f32.mrb[0].mxu0
    %v5379 = vadd.f32 0.0, %v5378
    %v5380 = vpop.f32.mrb[0].mxu0
    %v5381 = vadd.f32 0.0, %v5380
    %v5382 = vpop.f32.mrb[0].mxu0
    %v5383 = vadd.f32 0.0, %v5382
    %5384 = vmatprep.mubr.bf16.mxu0 %v2160
    %5385 = vmatmul.mubr.bf16.gmra.mrb[0].mxu0 %v2159
    %v5386 = vpop.f32.mrb[0].mxu0
    %v5387 = vadd.f32 0.0, %v5386
    %v5388 = vpop.f32.mrb[0].mxu0
    %v5389 = vadd.f32 0.0, %v5388
    %v5390 = vpop.f32.mrb[0].mxu0
    %v5391 = vadd.f32 0.0, %v5390
    %v5392 = vpop.f32.mrb[0].mxu0
    %v5393 = vadd.f32 0.0, %v5392
    %5394 = vmatprep.mubr.bf16.mxu0 %v2166
    %5395 = vmatmul.mubr.bf16.gmra.mrb[0].mxu0 %v2165
    %v5396 = vpop.f32.mrb[0].mxu0
    %v5397 = vadd.f32 0.0, %v5396
    %v5398 = vpop.f32.mrb[0].mxu0
    %v5399 = vadd.f32 0.0, %v5398
    %v5400 = vpop.f32.mrb[0].mxu0
    %v5401 = vadd.f32 0.0, %v5400
    %v5402 = vpop.f32.mrb[0].mxu0
    %v5403 = vadd.f32 0.0, %v5402
    %5404 = vmatprep.mubr.bf16.mxu0 %v2172
    %5405 = vmatmul.mubr.bf16.gmra.mrb[0].mxu0 %v2171
    %v5406 = vpop.f32.mrb[0].mxu0
    %v5407 = vadd.f32 0.0, %v5406
    %v5408 = vpop.f32.mrb[0].mxu0
    %v5409 = vadd.f32 0.0, %v5408
    %v5410 = vpop.f32.mrb[0].mxu0
    %v5411 = vadd.f32 0.0, %v5410
    %v5412 = vpop.f32.mrb[0].mxu0
    %v5413 = vadd.f32 0.0, %v5412
    %5414 = vmatprep.mubr.bf16.mxu0 %v2178
    %5415 = vmatmul.mubr.bf16.gmra.mrb[0].mxu0 %v2177
    %v5416 = vpop.f32.mrb[0].mxu0
    %v5417 = vadd.f32 0.0, %v5416
    %v5418 = vpop.f32.mrb[0].mxu0
    %v5419 = vadd.f32 0.0, %v5418
    %v5420 = vpop.f32.mrb[0].mxu0
    %v5421 = vadd.f32 0.0, %v5420
    %v5422 = vpop.f32.mrb[0].mxu0
    %v5423 = vadd.f32 0.0, %v5422
    %5424 = vmatprep.mubr.bf16.mxu0 %v2184
    %5425 = vmatmul.mubr.bf16.gmra.mrb[0].mxu0 %v2183
    %v5426 = vpop.f32.mrb[0].mxu0
    %v5427 = vadd.f32 0.0, %v5426
    %v5428 = vpop.f32.mrb[0].mxu0
    %v5429 = vadd.f32 0.0, %v5428
    %v5430 = vpop.f32.mrb[0].mxu0
    %v5431 = vadd.f32 0.0, %v5430
    %v5432 = vpop.f32.mrb[0].mxu0
    %v5433 = vadd.f32 0.0, %v5432
    %5434 = vmatprep.mubr.bf16.mxu0 %v2190
    %5435 = vmatmul.mubr.bf16.gmra.mrb[0].mxu0 %v2189
    %v5436 = vpop.f32.mrb[0].mxu0
    %v5437 = vadd.f32 0.0, %v5436
    %v5438 = vpop.f32.mrb[0].mxu0
    %v5439 = vadd.f32 0.0, %v5438
    %v5440 = vpop.f32.mrb[0].mxu0
    %v5441 = vadd.f32 0.0, %v5440
    %v5442 = vpop.f32.mrb[0].mxu0
    %v5443 = vadd.f32 0.0, %v5442
    %5444 = vmatprep.mubr.bf16.mxu0 %v2196
    %5445 = vmatmul.mubr.bf16.gmra.mrb[0].mxu0 %v2195
    %v5446 = vpop.f32.mrb[0].mxu0
    %v5447 = vadd.f32 0.0, %v5446
    %v5448 = vpop.f32.mrb[0].mxu0
    %v5449 = vadd.f32 0.0, %v5448
    %v5450 = vpop.f32.mrb[0].mxu0
    %v5451 = vadd.f32 0.0, %v5450
    %v5452 = vpop.f32.mrb[0].mxu0
    %v5453 = vadd.f32 0.0, %v5452
    %5454 = vmatprep.mubr.bf16.mxu0 %v2202
    %5455 = vmatmul.mubr.bf16.gmra.mrb[0].mxu0 %v2201
    %v5456 = vpop.f32.mrb[0].mxu0
    %v5457 = vadd.f32 0.0, %v5456
    %v5458 = vpop.f32.mrb[0].mxu0
    %v5459 = vadd.f32 0.0, %v5458
    %v5460 = vpop.f32.mrb[0].mxu0
    %v5461 = vadd.f32 0.0, %v5460
    %v5462 = vpop.f32.mrb[0].mxu0
    %v5463 = vadd.f32 0.0, %v5462
    %5464 = vmatprep.mubr.bf16.mxu0 %v2208
    %5465 = vmatmul.mubr.bf16.gmra.mrb[0].mxu0 %v2207
    %v5466 = vpop.f32.mrb[0].mxu0
    %v5467 = vadd.f32 0.0, %v5466
    %v5468 = vpop.f32.mrb[0].mxu0
    %v5469 = vadd.f32 0.0, %v5468
    %v5470 = vpop.f32.mrb[0].mxu0
    %v5471 = vadd.f32 0.0, %v5470
    %v5472 = vpop.f32.mrb[0].mxu0
    %v5473 = vadd.f32 0.0, %v5472
    %5474 = vmatprep.mubr.bf16.mxu0 %v2214
    %5475 = vmatmul.mubr.bf16.gmra.mrb[0].mxu0 %v2213
    %v5476 = vpop.f32.mrb[0].mxu0
    %v5477 = vadd.f32 0.0, %v5476
    %v5478 = vpop.f32.mrb[0].mxu0
    %v5479 = vadd.f32 0.0, %v5478
    %v5480 = vpop.f32.mrb[0].mxu0
    %v5481 = vadd.f32 0.0, %v5480
    %v5482 = vpop.f32.mrb[0].mxu0
    %v5483 = vadd.f32 0.0, %v5482
    %5484 = vmatprep.mubr.bf16.mxu0 %v2220
    %5485 = vmatmul.mubr.bf16.gmra.mrb[0].mxu0 %v2219
    %v5486 = vpop.f32.mrb[0].mxu0
    %v5487 = vadd.f32 0.0, %v5486
    %v5488 = vpop.f32.mrb[0].mxu0
    %v5489 = vadd.f32 0.0, %v5488
    %v5490 = vpop.f32.mrb[0].mxu0
    %v5491 = vadd.f32 0.0, %v5490
    %v5492 = vpop.f32.mrb[0].mxu0
    %v5493 = vadd.f32 0.0, %v5492
    %5494 = vmatprep.mubr.bf16.mxu0 %v2226
    %5495 = vmatmul.mubr.bf16.gmra.mrb[0].mxu0 %v2225
    %v5496 = vpop.f32.mrb[0].mxu0
    %v5497 = vadd.f32 0.0, %v5496
    %v5498 = vpop.f32.mrb[0].mxu0
    %v5499 = vadd.f32 0.0, %v5498
    %v5500 = vpop.f32.mrb[0].mxu0
    %v5501 = vadd.f32 0.0, %v5500
    %v5502 = vpop.f32.mrb[0].mxu0
    %v5503 = vadd.f32 0.0, %v5502
    %5504 = vmatprep.mubr.bf16.mxu0 %v2232
    %5505 = vmatmul.mubr.bf16.gmra.mrb[0].mxu0 %v2231
    %v5506 = vpop.f32.mrb[0].mxu0
    %v5507 = vadd.f32 0.0, %v5506
    %v5508 = vpop.f32.mrb[0].mxu0
    %v5509 = vadd.f32 0.0, %v5508
    %v5510 = vpop.f32.mrb[0].mxu0
    %v5511 = vadd.f32 0.0, %v5510
    %v5512 = vpop.f32.mrb[0].mxu0
    %v5513 = vadd.f32 0.0, %v5512
    %5514 = vmatprep.mubr.bf16.mxu0 %v2238
    %5515 = vmatmul.mubr.bf16.gmra.mrb[0].mxu0 %v2237
    %v5516 = vpop.f32.mrb[0].mxu0
    %v5517 = vadd.f32 0.0, %v5516
    %v5518 = vpop.f32.mrb[0].mxu0
    %v5519 = vadd.f32 0.0, %v5518
    %v5520 = vpop.f32.mrb[0].mxu0
    %v5521 = vadd.f32 0.0, %v5520
    %v5522 = vpop.f32.mrb[0].mxu0
    %v5523 = vadd.f32 0.0, %v5522
    %5524 = vmatprep.mubr.bf16.mxu0 %v2244
    %5525 = vmatmul.mubr.bf16.gmra.mrb[0].mxu0 %v2243
    %v5526 = vpop.f32.mrb[0].mxu0
    %v5527 = vadd.f32 0.0, %v5526
    %v5528 = vpop.f32.mrb[0].mxu0
    %v5529 = vadd.f32 0.0, %v5528
    %v5530 = vpop.f32.mrb[0].mxu0
    %v5531 = vadd.f32 0.0, %v5530
    %v5532 = vpop.f32.mrb[0].mxu0
    %v5533 = vadd.f32 0.0, %v5532
    %5534 = vmatprep.mubr.bf16.mxu0 %v2250
    %5535 = vmatmul.mubr.bf16.gmra.mrb[0].mxu0 %v2249
    %v5536 = vpop.f32.mrb[0].mxu0
    %v5537 = vadd.f32 0.0, %v5536
    %v5538 = vpop.f32.mrb[0].mxu0
    %v5539 = vadd.f32 0.0, %v5538
    %v5540 = vpop.f32.mrb[0].mxu0
    %v5541 = vadd.f32 0.0, %v5540
    %v5542 = vpop.f32.mrb[0].mxu0
    %v5543 = vadd.f32 0.0, %v5542
    %5544 = vmatprep.mubr.bf16.mxu0 %v2256
    %5545 = vmatmul.mubr.bf16.gmra.mrb[0].mxu0 %v2255
    %v5546 = vpop.f32.mrb[0].mxu0
    %v5547 = vadd.f32 0.0, %v5546
    %v5548 = vpop.f32.mrb[0].mxu0
    %v5549 = vadd.f32 0.0, %v5548
    %v5550 = vpop.f32.mrb[0].mxu0
    %v5551 = vadd.f32 0.0, %v5550
    %v5552 = vpop.f32.mrb[0].mxu0
    %v5553 = vadd.f32 0.0, %v5552
    %5554 = vmatprep.mubr.bf16.mxu0 %v2262
    %5555 = vmatmul.mubr.bf16.gmra.mrb[0].mxu0 %v2261
    %v5556 = vpop.f32.mrb[0].mxu0
    %v5557 = vadd.f32 0.0, %v5556
    %v5558 = vpop.f32.mrb[0].mxu0
    %v5559 = vadd.f32 0.0, %v5558
    %v5560 = vpop.f32.mrb[0].mxu0
    %v5561 = vadd.f32 0.0, %v5560
    %v5562 = vpop.f32.mrb[0].mxu0
    %v5563 = vadd.f32 0.0, %v5562
    %5564 = vdwg.mxu0
    %5565 = vmatprep.subr.bf16.mxu0 %v1334
    %5566 = vmatpush1.bf16.msra.mxu0 %v1333
    %5567 = vmatprep.subr.bf16.mxu0 %v1341
    %5568 = vmatpush1.bf16.msra.mxu0 %v1340
    %5569 = vmatprep.subr.bf16.mxu0 %v1348
    %5570 = vmatpush1.bf16.msra.mxu0 %v1347
    %5571 = vmatprep.subr.bf16.mxu0 %v1355
    %5572 = vmatpush1.bf16.msra.mxu0 %v1354
    %5573 = vmatprep.subr.bf16.mxu0 %v1362
    %5574 = vmatpush1.bf16.msra.mxu0 %v1361
    %5575 = vmatprep.subr.bf16.mxu0 %v1369
    %5576 = vmatpush1.bf16.msra.mxu0 %v1368
    %5577 = vmatprep.subr.bf16.mxu0 %v1376
    %5578 = vmatpush1.bf16.msra.mxu0 %v1375
    %5579 = vmatprep.subr.bf16.mxu0 %v1383
    %5580 = vmatpush1.bf16.msra.mxu0 %v1382
    %5581 = vmatprep.subr.bf16.mxu0 %v1390
    %5582 = vmatpush1.bf16.msra.mxu0 %v1389
    %5583 = vmatprep.subr.bf16.mxu0 %v1397
    %5584 = vmatpush1.bf16.msra.mxu0 %v1396
    %5585 = vmatprep.subr.bf16.mxu0 %v1404
    %5586 = vmatpush1.bf16.msra.mxu0 %v1403
    %5587 = vmatprep.subr.bf16.mxu0 %v1411
    %5588 = vmatpush1.bf16.msra.mxu0 %v1410
    %5589 = vmatprep.subr.bf16.mxu0 %v1418
    %5590 = vmatpush1.bf16.msra.mxu0 %v1417
    %5591 = vmatprep.subr.bf16.mxu0 %v1425
    %5592 = vmatpush1.bf16.msra.mxu0 %v1424
    %5593 = vmatprep.subr.bf16.mxu0 %v1432
    %5594 = vmatpush1.bf16.msra.mxu0 %v1431
    %5595 = vmatprep.subr.bf16.mxu0 %v1439
    %5596 = vmatpush1.bf16.msra.mxu0 %v1438
    %5597 = vmatprep.mubr.bf16.mxu0 %v2018
    %5598 = vmatmul.mubr.bf16.gmra.mrb[0].mxu0 %v2017
    %v5599 = vpop.f32.mrb[0].mxu0
    %v5600 = vadd.f32 %v5147, %v5599
    %v5601 = vpop.f32.mrb[0].mxu0
    %v5602 = vadd.f32 %v5149, %v5601
    %v5603 = vpop.f32.mrb[0].mxu0
    %v5604 = vadd.f32 %v5151, %v5603
    %v5605 = vpop.f32.mrb[0].mxu0
    %v5606 = vadd.f32 %v5153, %v5605
    %5607 = vmatprep.mubr.bf16.mxu0 %v2024
    %5608 = vmatmul.mubr.bf16.gmra.mrb[0].mxu0 %v2023
    %v5609 = vpop.f32.mrb[0].mxu0
    %v5610 = vadd.f32 %v5157, %v5609
    %v5611 = vpop.f32.mrb[0].mxu0
    %v5612 = vadd.f32 %v5159, %v5611
    %v5613 = vpop.f32.mrb[0].mxu0
    %v5614 = vadd.f32 %v5161, %v5613
    %v5615 = vpop.f32.mrb[0].mxu0
    %v5616 = vadd.f32 %v5163, %v5615
    %5617 = vmatprep.mubr.bf16.mxu0 %v2030
    %5618 = vmatmul.mubr.bf16.gmra.mrb[0].mxu0 %v2029
    %v5619 = vpop.f32.mrb[0].mxu0
    %v5620 = vadd.f32 %v5167, %v5619
    %v5621 = vpop.f32.mrb[0].mxu0
    %v5622 = vadd.f32 %v5169, %v5621
    %v5623 = vpop.f32.mrb[0].mxu0
    %v5624 = vadd.f32 %v5171, %v5623
    %v5625 = vpop.f32.mrb[0].mxu0
    %v5626 = vadd.f32 %v5173, %v5625
    %5627 = vmatprep.mubr.bf16.mxu0 %v2036
    %5628 = vmatmul.mubr.bf16.gmra.mrb[0].mxu0 %v2035
    %v5629 = vpop.f32.mrb[0].mxu0
    %v5630 = vadd.f32 %v5177, %v5629
    %v5631 = vpop.f32.mrb[0].mxu0
    %v5632 = vadd.f32 %v5179, %v5631
    %v5633 = vpop.f32.mrb[0].mxu0
    %v5634 = vadd.f32 %v5181, %v5633
    %v5635 = vpop.f32.mrb[0].mxu0
    %v5636 = vadd.f32 %v5183, %v5635
    %5637 = vmatprep.mubr.bf16.mxu0 %v2042
    %5638 = vmatmul.mubr.bf16.gmra.mrb[0].mxu0 %v2041
    %v5639 = vpop.f32.mrb[0].mxu0
    %v5640 = vadd.f32 %v5187, %v5639
    %v5641 = vpop.f32.mrb[0].mxu0
    %v5642 = vadd.f32 %v5189, %v5641
    %v5643 = vpop.f32.mrb[0].mxu0
    %v5644 = vadd.f32 %v5191, %v5643
    %v5645 = vpop.f32.mrb[0].mxu0
    %v5646 = vadd.f32 %v5193, %v5645
    %5647 = vmatprep.mubr.bf16.mxu0 %v2048
    %5648 = vmatmul.mubr.bf16.gmra.mrb[0].mxu0 %v2047
    %v5649 = vpop.f32.mrb[0].mxu0
    %v5650 = vadd.f32 %v5197, %v5649
    %v5651 = vpop.f32.mrb[0].mxu0
    %v5652 = vadd.f32 %v5199, %v5651
    %v5653 = vpop.f32.mrb[0].mxu0
    %v5654 = vadd.f32 %v5201, %v5653
    %v5655 = vpop.f32.mrb[0].mxu0
    %v5656 = vadd.f32 %v5203, %v5655
    %5657 = vmatprep.mubr.bf16.mxu0 %v2054
    %5658 = vmatmul.mubr.bf16.gmra.mrb[0].mxu0 %v2053
    %v5659 = vpop.f32.mrb[0].mxu0
    %v5660 = vadd.f32 %v5207, %v5659
    %v5661 = vpop.f32.mrb[0].mxu0
    %v5662 = vadd.f32 %v5209, %v5661
    %v5663 = vpop.f32.mrb[0].mxu0
    %v5664 = vadd.f32 %v5211, %v5663
    %v5665 = vpop.f32.mrb[0].mxu0
    %v5666 = vadd.f32 %v5213, %v5665
    %5667 = vmatprep.mubr.bf16.mxu0 %v2060
    %5668 = vmatmul.mubr.bf16.gmra.mrb[0].mxu0 %v2059
    %v5669 = vpop.f32.mrb[0].mxu0
    %v5670 = vadd.f32 %v5217, %v5669
    %v5671 = vpop.f32.mrb[0].mxu0
    %v5672 = vadd.f32 %v5219, %v5671
    %v5673 = vpop.f32.mrb[0].mxu0
    %v5674 = vadd.f32 %v5221, %v5673
    %v5675 = vpop.f32.mrb[0].mxu0
    %v5676 = vadd.f32 %v5223, %v5675
    %5677 = vmatprep.mubr.bf16.mxu0 %v2066
    %5678 = vmatmul.mubr.bf16.gmra.mrb[0].mxu0 %v2065
    %v5679 = vpop.f32.mrb[0].mxu0
    %v5680 = vadd.f32 %v5227, %v5679
    %v5681 = vpop.f32.mrb[0].mxu0
    %v5682 = vadd.f32 %v5229, %v5681
    %v5683 = vpop.f32.mrb[0].mxu0
    %v5684 = vadd.f32 %v5231, %v5683
    %v5685 = vpop.f32.mrb[0].mxu0
    %v5686 = vadd.f32 %v5233, %v5685
    %5687 = vmatprep.mubr.bf16.mxu0 %v2072
    %5688 = vmatmul.mubr.bf16.gmra.mrb[0].mxu0 %v2071
    %v5689 = vpop.f32.mrb[0].mxu0
    %v5690 = vadd.f32 %v5237, %v5689
    %v5691 = vpop.f32.mrb[0].mxu0
    %v5692 = vadd.f32 %v5239, %v5691
    %v5693 = vpop.f32.mrb[0].mxu0
    %v5694 = vadd.f32 %v5241, %v5693
    %v5695 = vpop.f32.mrb[0].mxu0
    %v5696 = vadd.f32 %v5243, %v5695
    %5697 = vmatprep.mubr.bf16.mxu0 %v2078
    %5698 = vmatmul.mubr.bf16.gmra.mrb[0].mxu0 %v2077
    %v5699 = vpop.f32.mrb[0].mxu0
    %v5700 = vadd.f32 %v5247, %v5699
    %v5701 = vpop.f32.mrb[0].mxu0
    %v5702 = vadd.f32 %v5249, %v5701
    %v5703 = vpop.f32.mrb[0].mxu0
    %v5704 = vadd.f32 %v5251, %v5703
    %v5705 = vpop.f32.mrb[0].mxu0
    %v5706 = vadd.f32 %v5253, %v5705
    %5707 = vmatprep.mubr.bf16.mxu0 %v2084
    %5708 = vmatmul.mubr.bf16.gmra.mrb[0].mxu0 %v2083
    %v5709 = vpop.f32.mrb[0].mxu0
    %v5710 = vadd.f32 %v5257, %v5709
    %v5711 = vpop.f32.mrb[0].mxu0
    %v5712 = vadd.f32 %v5259, %v5711
    %v5713 = vpop.f32.mrb[0].mxu0
    %v5714 = vadd.f32 %v5261, %v5713
    %v5715 = vpop.f32.mrb[0].mxu0
    %v5716 = vadd.f32 %v5263, %v5715
    %5717 = vmatprep.mubr.bf16.mxu0 %v2090
    %5718 = vmatmul.mubr.bf16.gmra.mrb[0].mxu0 %v2089
    %v5719 = vpop.f32.mrb[0].mxu0
    %v5720 = vadd.f32 %v5267, %v5719
    %v5721 = vpop.f32.mrb[0].mxu0
    %v5722 = vadd.f32 %v5269, %v5721
    %v5723 = vpop.f32.mrb[0].mxu0
    %v5724 = vadd.f32 %v5271, %v5723
    %v5725 = vpop.f32.mrb[0].mxu0
    %v5726 = vadd.f32 %v5273, %v5725
    %5727 = vmatprep.mubr.bf16.mxu0 %v2096
    %5728 = vmatmul.mubr.bf16.gmra.mrb[0].mxu0 %v2095
    %v5729 = vpop.f32.mrb[0].mxu0
    %v5730 = vadd.f32 %v5277, %v5729
    %v5731 = vpop.f32.mrb[0].mxu0
    %v5732 = vadd.f32 %v5279, %v5731
    %v5733 = vpop.f32.mrb[0].mxu0
    %v5734 = vadd.f32 %v5281, %v5733
    %v5735 = vpop.f32.mrb[0].mxu0
    %v5736 = vadd.f32 %v5283, %v5735
    %5737 = vmatprep.mubr.bf16.mxu0 %v2102
    %5738 = vmatmul.mubr.bf16.gmra.mrb[0].mxu0 %v2101
    %v5739 = vpop.f32.mrb[0].mxu0
    %v5740 = vadd.f32 %v5287, %v5739
    %v5741 = vpop.f32.mrb[0].mxu0
    %v5742 = vadd.f32 %v5289, %v5741
    %v5743 = vpop.f32.mrb[0].mxu0
    %v5744 = vadd.f32 %v5291, %v5743
    %v5745 = vpop.f32.mrb[0].mxu0
    %v5746 = vadd.f32 %v5293, %v5745
    %5747 = vmatprep.mubr.bf16.mxu0 %v2108
    %5748 = vmatmul.mubr.bf16.gmra.mrb[0].mxu0 %v2107
    %v5749 = vpop.f32.mrb[0].mxu0
    %v5750 = vadd.f32 %v5297, %v5749
    %v5751 = vpop.f32.mrb[0].mxu0
    %v5752 = vadd.f32 %v5299, %v5751
    %v5753 = vpop.f32.mrb[0].mxu0
    %v5754 = vadd.f32 %v5301, %v5753
    %v5755 = vpop.f32.mrb[0].mxu0
    %v5756 = vadd.f32 %v5303, %v5755
    %5757 = vmatprep.mubr.bf16.mxu0 %v2114
    %5758 = vmatmul.mubr.bf16.gmra.mrb[0].mxu0 %v2113
    %v5759 = vpop.f32.mrb[0].mxu0
    %v5760 = vadd.f32 %v5307, %v5759
    %v5761 = vpop.f32.mrb[0].mxu0
    %v5762 = vadd.f32 %v5309, %v5761
    %v5763 = vpop.f32.mrb[0].mxu0
    %v5764 = vadd.f32 %v5311, %v5763
    %v5765 = vpop.f32.mrb[0].mxu0
    %v5766 = vadd.f32 %v5313, %v5765
    %5767 = vmatprep.mubr.bf16.mxu0 %v2120
    %5768 = vmatmul.mubr.bf16.gmra.mrb[0].mxu0 %v2119
    %v5769 = vpop.f32.mrb[0].mxu0
    %v5770 = vadd.f32 %v5317, %v5769
    %v5771 = vpop.f32.mrb[0].mxu0
    %v5772 = vadd.f32 %v5319, %v5771
    %v5773 = vpop.f32.mrb[0].mxu0
    %v5774 = vadd.f32 %v5321, %v5773
    %v5775 = vpop.f32.mrb[0].mxu0
    %v5776 = vadd.f32 %v5323, %v5775
    %5777 = vmatprep.mubr.bf16.mxu0 %v2126
    %5778 = vmatmul.mubr.bf16.gmra.mrb[0].mxu0 %v2125
    %v5779 = vpop.f32.mrb[0].mxu0
    %v5780 = vadd.f32 %v5327, %v5779
    %v5781 = vpop.f32.mrb[0].mxu0
    %v5782 = vadd.f32 %v5329, %v5781
    %v5783 = vpop.f32.mrb[0].mxu0
    %v5784 = vadd.f32 %v5331, %v5783
    %v5785 = vpop.f32.mrb[0].mxu0
    %v5786 = vadd.f32 %v5333, %v5785
    %5787 = vmatprep.mubr.bf16.mxu0 %v2132
    %5788 = vmatmul.mubr.bf16.gmra.mrb[0].mxu0 %v2131
    %v5789 = vpop.f32.mrb[0].mxu0
    %v5790 = vadd.f32 %v5337, %v5789
    %v5791 = vpop.f32.mrb[0].mxu0
    %v5792 = vadd.f32 %v5339, %v5791
    %v5793 = vpop.f32.mrb[0].mxu0
    %v5794 = vadd.f32 %v5341, %v5793
    %v5795 = vpop.f32.mrb[0].mxu0
    %v5796 = vadd.f32 %v5343, %v5795
    %5797 = vmatprep.mubr.bf16.mxu0 %v2138
    %5798 = vmatmul.mubr.bf16.gmra.mrb[0].mxu0 %v2137
    %v5799 = vpop.f32.mrb[0].mxu0
    %v5800 = vadd.f32 %v5347, %v5799
    %v5801 = vpop.f32.mrb[0].mxu0
    %v5802 = vadd.f32 %v5349, %v5801
    %v5803 = vpop.f32.mrb[0].mxu0
    %v5804 = vadd.f32 %v5351, %v5803
    %v5805 = vpop.f32.mrb[0].mxu0
    %v5806 = vadd.f32 %v5353, %v5805
    %5807 = vmatprep.mubr.bf16.mxu0 %v2144
    %5808 = vmatmul.mubr.bf16.gmra.mrb[0].mxu0 %v2143
    %v5809 = vpop.f32.mrb[0].mxu0
    %v5810 = vadd.f32 %v5357, %v5809
    %v5811 = vpop.f32.mrb[0].mxu0
    %v5812 = vadd.f32 %v5359, %v5811
    %v5813 = vpop.f32.mrb[0].mxu0
    %v5814 = vadd.f32 %v5361, %v5813
    %v5815 = vpop.f32.mrb[0].mxu0
    %v5816 = vadd.f32 %v5363, %v5815
    %5817 = vmatprep.mubr.bf16.mxu0 %v2150
    %5818 = vmatmul.mubr.bf16.gmra.mrb[0].mxu0 %v2149
    %v5819 = vpop.f32.mrb[0].mxu0
    %v5820 = vadd.f32 %v5367, %v5819
    %v5821 = vpop.f32.mrb[0].mxu0
    %v5822 = vadd.f32 %v5369, %v5821
    %v5823 = vpop.f32.mrb[0].mxu0
    %v5824 = vadd.f32 %v5371, %v5823
    %v5825 = vpop.f32.mrb[0].mxu0
    %v5826 = vadd.f32 %v5373, %v5825
    %5827 = vmatprep.mubr.bf16.mxu0 %v2156
    %5828 = vmatmul.mubr.bf16.gmra.mrb[0].mxu0 %v2155
    %v5829 = vpop.f32.mrb[0].mxu0
    %v5830 = vadd.f32 %v5377, %v5829
    %v5831 = vpop.f32.mrb[0].mxu0
    %v5832 = vadd.f32 %v5379, %v5831
    %v5833 = vpop.f32.mrb[0].mxu0
    %v5834 = vadd.f32 %v5381, %v5833
    %v5835 = vpop.f32.mrb[0].mxu0
    %v5836 = vadd.f32 %v5383, %v5835
    %5837 = vmatprep.mubr.bf16.mxu0 %v2162
    %5838 = vmatmul.mubr.bf16.gmra.mrb[0].mxu0 %v2161
    %v5839 = vpop.f32.mrb[0].mxu0
    %v5840 = vadd.f32 %v5387, %v5839
    %v5841 = vpop.f32.mrb[0].mxu0
    %v5842 = vadd.f32 %v5389, %v5841
    %v5843 = vpop.f32.mrb[0].mxu0
    %v5844 = vadd.f32 %v5391, %v5843
    %v5845 = vpop.f32.mrb[0].mxu0
    %v5846 = vadd.f32 %v5393, %v5845
    %5847 = vmatprep.mubr.bf16.mxu0 %v2168
    %5848 = vmatmul.mubr.bf16.gmra.mrb[0].mxu0 %v2167
    %v5849 = vpop.f32.mrb[0].mxu0
    %v5850 = vadd.f32 %v5397, %v5849
    %v5851 = vpop.f32.mrb[0].mxu0
    %v5852 = vadd.f32 %v5399, %v5851
    %v5853 = vpop.f32.mrb[0].mxu0
    %v5854 = vadd.f32 %v5401, %v5853
    %v5855 = vpop.f32.mrb[0].mxu0
    %v5856 = vadd.f32 %v5403, %v5855
    %5857 = vmatprep.mubr.bf16.mxu0 %v2174
    %5858 = vmatmul.mubr.bf16.gmra.mrb[0].mxu0 %v2173
    %v5859 = vpop.f32.mrb[0].mxu0
    %v5860 = vadd.f32 %v5407, %v5859
    %v5861 = vpop.f32.mrb[0].mxu0
    %v5862 = vadd.f32 %v5409, %v5861
    %v5863 = vpop.f32.mrb[0].mxu0
    %v5864 = vadd.f32 %v5411, %v5863
    %v5865 = vpop.f32.mrb[0].mxu0
    %v5866 = vadd.f32 %v5413, %v5865
    %5867 = vmatprep.mubr.bf16.mxu0 %v2180
    %5868 = vmatmul.mubr.bf16.gmra.mrb[0].mxu0 %v2179
    %v5869 = vpop.f32.mrb[0].mxu0
    %v5870 = vadd.f32 %v5417, %v5869
    %v5871 = vpop.f32.mrb[0].mxu0
    %v5872 = vadd.f32 %v5419, %v5871
    %v5873 = vpop.f32.mrb[0].mxu0
    %v5874 = vadd.f32 %v5421, %v5873
    %v5875 = vpop.f32.mrb[0].mxu0
    %v5876 = vadd.f32 %v5423, %v5875
    %5877 = vmatprep.mubr.bf16.mxu0 %v2186
    %5878 = vmatmul.mubr.bf16.gmra.mrb[0].mxu0 %v2185
    %v5879 = vpop.f32.mrb[0].mxu0
    %v5880 = vadd.f32 %v5427, %v5879
    %v5881 = vpop.f32.mrb[0].mxu0
    %v5882 = vadd.f32 %v5429, %v5881
    %v5883 = vpop.f32.mrb[0].mxu0
    %v5884 = vadd.f32 %v5431, %v5883
    %v5885 = vpop.f32.mrb[0].mxu0
    %v5886 = vadd.f32 %v5433, %v5885
    %5887 = vmatprep.mubr.bf16.mxu0 %v2192
    %5888 = vmatmul.mubr.bf16.gmra.mrb[0].mxu0 %v2191
    %v5889 = vpop.f32.mrb[0].mxu0
    %v5890 = vadd.f32 %v5437, %v5889
    %v5891 = vpop.f32.mrb[0].mxu0
    %v5892 = vadd.f32 %v5439, %v5891
    %v5893 = vpop.f32.mrb[0].mxu0
    %v5894 = vadd.f32 %v5441, %v5893
    %v5895 = vpop.f32.mrb[0].mxu0
    %v5896 = vadd.f32 %v5443, %v5895
    %5897 = vmatprep.mubr.bf16.mxu0 %v2198
    %5898 = vmatmul.mubr.bf16.gmra.mrb[0].mxu0 %v2197
    %v5899 = vpop.f32.mrb[0].mxu0
    %v5900 = vadd.f32 %v5447, %v5899
    %v5901 = vpop.f32.mrb[0].mxu0
    %v5902 = vadd.f32 %v5449, %v5901
    %v5903 = vpop.f32.mrb[0].mxu0
    %v5904 = vadd.f32 %v5451, %v5903
    %v5905 = vpop.f32.mrb[0].mxu0
    %v5906 = vadd.f32 %v5453, %v5905
    %5907 = vmatprep.mubr.bf16.mxu0 %v2204
    %5908 = vmatmul.mubr.bf16.gmra.mrb[0].mxu0 %v2203
    %v5909 = vpop.f32.mrb[0].mxu0
    %v5910 = vadd.f32 %v5457, %v5909
    %v5911 = vpop.f32.mrb[0].mxu0
    %v5912 = vadd.f32 %v5459, %v5911
    %v5913 = vpop.f32.mrb[0].mxu0
    %v5914 = vadd.f32 %v5461, %v5913
    %v5915 = vpop.f32.mrb[0].mxu0
    %v5916 = vadd.f32 %v5463, %v5915
    %5917 = vmatprep.mubr.bf16.mxu0 %v2210
    %5918 = vmatmul.mubr.bf16.gmra.mrb[0].mxu0 %v2209
    %v5919 = vpop.f32.mrb[0].mxu0
    %v5920 = vadd.f32 %v5467, %v5919
    %v5921 = vpop.f32.mrb[0].mxu0
    %v5922 = vadd.f32 %v5469, %v5921
    %v5923 = vpop.f32.mrb[0].mxu0
    %v5924 = vadd.f32 %v5471, %v5923
    %v5925 = vpop.f32.mrb[0].mxu0
    %v5926 = vadd.f32 %v5473, %v5925
    %5927 = vmatprep.mubr.bf16.mxu0 %v2216
    %5928 = vmatmul.mubr.bf16.gmra.mrb[0].mxu0 %v2215
    %v5929 = vpop.f32.mrb[0].mxu0
    %v5930 = vadd.f32 %v5477, %v5929
    %v5931 = vpop.f32.mrb[0].mxu0
    %v5932 = vadd.f32 %v5479, %v5931
    %v5933 = vpop.f32.mrb[0].mxu0
    %v5934 = vadd.f32 %v5481, %v5933
    %v5935 = vpop.f32.mrb[0].mxu0
    %v5936 = vadd.f32 %v5483, %v5935
    %5937 = vmatprep.mubr.bf16.mxu0 %v2222
    %5938 = vmatmul.mubr.bf16.gmra.mrb[0].mxu0 %v2221
    %v5939 = vpop.f32.mrb[0].mxu0
    %v5940 = vadd.f32 %v5487, %v5939
    %v5941 = vpop.f32.mrb[0].mxu0
    %v5942 = vadd.f32 %v5489, %v5941
    %v5943 = vpop.f32.mrb[0].mxu0
    %v5944 = vadd.f32 %v5491, %v5943
    %v5945 = vpop.f32.mrb[0].mxu0
    %v5946 = vadd.f32 %v5493, %v5945
    %5947 = vmatprep.mubr.bf16.mxu0 %v2228
    %5948 = vmatmul.mubr.bf16.gmra.mrb[0].mxu0 %v2227
    %v5949 = vpop.f32.mrb[0].mxu0
    %v5950 = vadd.f32 %v5497, %v5949
    %v5951 = vpop.f32.mrb[0].mxu0
    %v5952 = vadd.f32 %v5499, %v5951
    %v5953 = vpop.f32.mrb[0].mxu0
    %v5954 = vadd.f32 %v5501, %v5953
    %v5955 = vpop.f32.mrb[0].mxu0
    %v5956 = vadd.f32 %v5503, %v5955
    %5957 = vmatprep.mubr.bf16.mxu0 %v2234
    %5958 = vmatmul.mubr.bf16.gmra.mrb[0].mxu0 %v2233
    %v5959 = vpop.f32.mrb[0].mxu0
    %v5960 = vadd.f32 %v5507, %v5959
    %v5961 = vpop.f32.mrb[0].mxu0
    %v5962 = vadd.f32 %v5509, %v5961
    %v5963 = vpop.f32.mrb[0].mxu0
    %v5964 = vadd.f32 %v5511, %v5963
    %v5965 = vpop.f32.mrb[0].mxu0
    %v5966 = vadd.f32 %v5513, %v5965
    %5967 = vmatprep.mubr.bf16.mxu0 %v2240
    %5968 = vmatmul.mubr.bf16.gmra.mrb[0].mxu0 %v2239
    %v5969 = vpop.f32.mrb[0].mxu0
    %v5970 = vadd.f32 %v5517, %v5969
    %v5971 = vpop.f32.mrb[0].mxu0
    %v5972 = vadd.f32 %v5519, %v5971
    %v5973 = vpop.f32.mrb[0].mxu0
    %v5974 = vadd.f32 %v5521, %v5973
    %v5975 = vpop.f32.mrb[0].mxu0
    %v5976 = vadd.f32 %v5523, %v5975
    %5977 = vmatprep.mubr.bf16.mxu0 %v2246
    %5978 = vmatmul.mubr.bf16.gmra.mrb[0].mxu0 %v2245
    %v5979 = vpop.f32.mrb[0].mxu0
    %v5980 = vadd.f32 %v5527, %v5979
    %v5981 = vpop.f32.mrb[0].mxu0
    %v5982 = vadd.f32 %v5529, %v5981
    %v5983 = vpop.f32.mrb[0].mxu0
    %v5984 = vadd.f32 %v5531, %v5983
    %v5985 = vpop.f32.mrb[0].mxu0
    %v5986 = vadd.f32 %v5533, %v5985
    %5987 = vmatprep.mubr.bf16.mxu0 %v2252
    %5988 = vmatmul.mubr.bf16.gmra.mrb[0].mxu0 %v2251
    %v5989 = vpop.f32.mrb[0].mxu0
    %v5990 = vadd.f32 %v5537, %v5989
    %v5991 = vpop.f32.mrb[0].mxu0
    %v5992 = vadd.f32 %v5539, %v5991
    %v5993 = vpop.f32.mrb[0].mxu0
    %v5994 = vadd.f32 %v5541, %v5993
    %v5995 = vpop.f32.mrb[0].mxu0
    %v5996 = vadd.f32 %v5543, %v5995
    %5997 = vmatprep.mubr.bf16.mxu0 %v2258
    %5998 = vmatmul.mubr.bf16.gmra.mrb[0].mxu0 %v2257
    %v5999 = vpop.f32.mrb[0].mxu0
    %v6000 = vadd.f32 %v5547, %v5999
    %v6001 = vpop.f32.mrb[0].mxu0
    %v6002 = vadd.f32 %v5549, %v6001
    %v6003 = vpop.f32.mrb[0].mxu0
    %v6004 = vadd.f32 %v5551, %v6003
    %v6005 = vpop.f32.mrb[0].mxu0
    %v6006 = vadd.f32 %v5553, %v6005
    %6007 = vmatprep.mubr.bf16.mxu0 %v2264
    %6008 = vmatmul.mubr.bf16.gmra.mrb[0].mxu0 %v2263
    %v6009 = vpop.f32.mrb[0].mxu0
    %v6010 = vadd.f32 %v5557, %v6009
    %v6011 = vpop.f32.mrb[0].mxu0
    %v6012 = vadd.f32 %v5559, %v6011
    %v6013 = vpop.f32.mrb[0].mxu0
    %v6014 = vadd.f32 %v5561, %v6013
    %v6015 = vpop.f32.mrb[0].mxu0
    %v6016 = vadd.f32 %v5563, %v6015
    %6017 = vdwg.mxu0
    %6018 = vmatprep.subr.bf16.mxu0 %v1446
    %6019 = vmatpush1.bf16.msra.mxu0 %v1445
    %6020 = vmatprep.subr.bf16.mxu0 %v1453
    %6021 = vmatpush1.bf16.msra.mxu0 %v1452
    %6022 = vmatprep.subr.bf16.mxu0 %v1460
    %6023 = vmatpush1.bf16.msra.mxu0 %v1459
    %6024 = vmatprep.subr.bf16.mxu0 %v1467
    %6025 = vmatpush1.bf16.msra.mxu0 %v1466
    %6026 = vmatprep.subr.bf16.mxu0 %v1474
    %6027 = vmatpush1.bf16.msra.mxu0 %v1473
    %6028 = vmatprep.subr.bf16.mxu0 %v1481
    %6029 = vmatpush1.bf16.msra.mxu0 %v1480
    %6030 = vmatprep.subr.bf16.mxu0 %v1488
    %6031 = vmatpush1.bf16.msra.mxu0 %v1487
    %6032 = vmatprep.subr.bf16.mxu0 %v1495
    %6033 = vmatpush1.bf16.msra.mxu0 %v1494
    %6034 = vmatprep.subr.bf16.mxu0 %v1502
    %6035 = vmatpush1.bf16.msra.mxu0 %v1501
    %6036 = vmatprep.subr.bf16.mxu0 %v1509
    %6037 = vmatpush1.bf16.msra.mxu0 %v1508
    %6038 = vmatprep.subr.bf16.mxu0 0
    %6039 = vmatpush1.bf16.msra.mxu0 0
    %6040 = vmatprep.subr.bf16.mxu0 0
    %6041 = vmatpush1.bf16.msra.mxu0 0
    %6042 = vmatprep.subr.bf16.mxu0 0
    %6043 = vmatpush1.bf16.msra.mxu0 0
    %6044 = vmatprep.subr.bf16.mxu0 0
    %6045 = vmatpush1.bf16.msra.mxu0 0
    %6046 = vmatprep.subr.bf16.mxu0 0
    %6047 = vmatpush1.bf16.msra.mxu0 0
    %6048 = vmatprep.subr.bf16.mxu0 0
    %6049 = vmatpush1.bf16.msra.mxu0 0
    %6050 = vmatprep.mubr.bf16.mxu0 %v2269
    %6051 = vmatmul.mubr.bf16.gmra.mrb[0].mxu0 %v2019
    %v6052 = vpop.f32.mrb[0].mxu0
    %v6053 = vadd.f32 %v5600, %v6052
    %v6054 = vpop.f32.mrb[0].mxu0
    %v6055 = vadd.f32 %v5602, %v6054
    %v6056 = vpop.f32.mrb[0].mxu0
    %v6057 = vadd.f32 %v5604, %v6056
    %v6058 = vpop.f32.mrb[0].mxu0
    %v6059 = vadd.f32 %v5606, %v6058
    %6060 = vmatprep.mubr.bf16.mxu0 %v2272
    %6061 = vmatmul.mubr.bf16.gmra.mrb[0].mxu0 %v2025
    %v6062 = vpop.f32.mrb[0].mxu0
    %v6063 = vadd.f32 %v5610, %v6062
    %v6064 = vpop.f32.mrb[0].mxu0
    %v6065 = vadd.f32 %v5612, %v6064
    %v6066 = vpop.f32.mrb[0].mxu0
    %v6067 = vadd.f32 %v5614, %v6066
    %v6068 = vpop.f32.mrb[0].mxu0
    %v6069 = vadd.f32 %v5616, %v6068
    %6070 = vmatprep.mubr.bf16.mxu0 %v2275
    %6071 = vmatmul.mubr.bf16.gmra.mrb[0].mxu0 %v2031
    %v6072 = vpop.f32.mrb[0].mxu0
    %v6073 = vadd.f32 %v5620, %v6072
    %v6074 = vpop.f32.mrb[0].mxu0
    %v6075 = vadd.f32 %v5622, %v6074
    %v6076 = vpop.f32.mrb[0].mxu0
    %v6077 = vadd.f32 %v5624, %v6076
    %v6078 = vpop.f32.mrb[0].mxu0
    %v6079 = vadd.f32 %v5626, %v6078
    %6080 = vmatprep.mubr.bf16.mxu0 %v2278
    %6081 = vmatmul.mubr.bf16.gmra.mrb[0].mxu0 %v2037
    %v6082 = vpop.f32.mrb[0].mxu0
    %v6083 = vadd.f32 %v5630, %v6082
    %v6084 = vpop.f32.mrb[0].mxu0
    %v6085 = vadd.f32 %v5632, %v6084
    %v6086 = vpop.f32.mrb[0].mxu0
    %v6087 = vadd.f32 %v5634, %v6086
    %v6088 = vpop.f32.mrb[0].mxu0
    %v6089 = vadd.f32 %v5636, %v6088
    %6090 = vmatprep.mubr.bf16.mxu0 %v2281
    %6091 = vmatmul.mubr.bf16.gmra.mrb[0].mxu0 %v2043
    %v6092 = vpop.f32.mrb[0].mxu0
    %v6093 = vadd.f32 %v5640, %v6092
    %v6094 = vpop.f32.mrb[0].mxu0
    %v6095 = vadd.f32 %v5642, %v6094
    %v6096 = vpop.f32.mrb[0].mxu0
    %v6097 = vadd.f32 %v5644, %v6096
    %v6098 = vpop.f32.mrb[0].mxu0
    %v6099 = vadd.f32 %v5646, %v6098
    %6100 = vmatprep.mubr.bf16.mxu0 %v2284
    %6101 = vmatmul.mubr.bf16.gmra.mrb[0].mxu0 %v2049
    %v6102 = vpop.f32.mrb[0].mxu0
    %v6103 = vadd.f32 %v5650, %v6102
    %v6104 = vpop.f32.mrb[0].mxu0
    %v6105 = vadd.f32 %v5652, %v6104
    %v6106 = vpop.f32.mrb[0].mxu0
    %v6107 = vadd.f32 %v5654, %v6106
    %v6108 = vpop.f32.mrb[0].mxu0
    %v6109 = vadd.f32 %v5656, %v6108
    %6110 = vmatprep.mubr.bf16.mxu0 %v2287
    %6111 = vmatmul.mubr.bf16.gmra.mrb[0].mxu0 %v2055
    %v6112 = vpop.f32.mrb[0].mxu0
    %v6113 = vadd.f32 %v5660, %v6112
    %v6114 = vpop.f32.mrb[0].mxu0
    %v6115 = vadd.f32 %v5662, %v6114
    %v6116 = vpop.f32.mrb[0].mxu0
    %v6117 = vadd.f32 %v5664, %v6116
    %v6118 = vpop.f32.mrb[0].mxu0
    %v6119 = vadd.f32 %v5666, %v6118
    %6120 = vmatprep.mubr.bf16.mxu0 %v2290
    %6121 = vmatmul.mubr.bf16.gmra.mrb[0].mxu0 %v2061
    %v6122 = vpop.f32.mrb[0].mxu0
    %v6123 = vadd.f32 %v5670, %v6122
    %v6124 = vpop.f32.mrb[0].mxu0
    %v6125 = vadd.f32 %v5672, %v6124
    %v6126 = vpop.f32.mrb[0].mxu0
    %v6127 = vadd.f32 %v5674, %v6126
    %v6128 = vpop.f32.mrb[0].mxu0
    %v6129 = vadd.f32 %v5676, %v6128
    %6130 = vmatprep.mubr.bf16.mxu0 %v2293
    %6131 = vmatmul.mubr.bf16.gmra.mrb[0].mxu0 %v2067
    %v6132 = vpop.f32.mrb[0].mxu0
    %v6133 = vadd.f32 %v5680, %v6132
    %v6134 = vpop.f32.mrb[0].mxu0
    %v6135 = vadd.f32 %v5682, %v6134
    %v6136 = vpop.f32.mrb[0].mxu0
    %v6137 = vadd.f32 %v5684, %v6136
    %v6138 = vpop.f32.mrb[0].mxu0
    %v6139 = vadd.f32 %v5686, %v6138
    %6140 = vmatprep.mubr.bf16.mxu0 %v2296
    %6141 = vmatmul.mubr.bf16.gmra.mrb[0].mxu0 %v2073
    %v6142 = vpop.f32.mrb[0].mxu0
    %v6143 = vadd.f32 %v5690, %v6142
    %v6144 = vpop.f32.mrb[0].mxu0
    %v6145 = vadd.f32 %v5692, %v6144
    %v6146 = vpop.f32.mrb[0].mxu0
    %v6147 = vadd.f32 %v5694, %v6146
    %v6148 = vpop.f32.mrb[0].mxu0
    %v6149 = vadd.f32 %v5696, %v6148
    %6150 = vmatprep.mubr.bf16.mxu0 %v2299
    %6151 = vmatmul.mubr.bf16.gmra.mrb[0].mxu0 %v2079
    %v6152 = vpop.f32.mrb[0].mxu0
    %v6153 = vadd.f32 %v5700, %v6152
    %v6154 = vpop.f32.mrb[0].mxu0
    %v6155 = vadd.f32 %v5702, %v6154
    %v6156 = vpop.f32.mrb[0].mxu0
    %v6157 = vadd.f32 %v5704, %v6156
    %v6158 = vpop.f32.mrb[0].mxu0
    %v6159 = vadd.f32 %v5706, %v6158
    %6160 = vmatprep.mubr.bf16.mxu0 %v2302
    %6161 = vmatmul.mubr.bf16.gmra.mrb[0].mxu0 %v2085
    %v6162 = vpop.f32.mrb[0].mxu0
    %v6163 = vadd.f32 %v5710, %v6162
    %v6164 = vpop.f32.mrb[0].mxu0
    %v6165 = vadd.f32 %v5712, %v6164
    %v6166 = vpop.f32.mrb[0].mxu0
    %v6167 = vadd.f32 %v5714, %v6166
    %v6168 = vpop.f32.mrb[0].mxu0
    %v6169 = vadd.f32 %v5716, %v6168
    %6170 = vmatprep.mubr.bf16.mxu0 %v2305
    %6171 = vmatmul.mubr.bf16.gmra.mrb[0].mxu0 %v2091
    %v6172 = vpop.f32.mrb[0].mxu0
    %v6173 = vadd.f32 %v5720, %v6172
    %v6174 = vpop.f32.mrb[0].mxu0
    %v6175 = vadd.f32 %v5722, %v6174
    %v6176 = vpop.f32.mrb[0].mxu0
    %v6177 = vadd.f32 %v5724, %v6176
    %v6178 = vpop.f32.mrb[0].mxu0
    %v6179 = vadd.f32 %v5726, %v6178
    %6180 = vmatprep.mubr.bf16.mxu0 %v2308
    %6181 = vmatmul.mubr.bf16.gmra.mrb[0].mxu0 %v2097
    %v6182 = vpop.f32.mrb[0].mxu0
    %v6183 = vadd.f32 %v5730, %v6182
    %v6184 = vpop.f32.mrb[0].mxu0
    %v6185 = vadd.f32 %v5732, %v6184
    %v6186 = vpop.f32.mrb[0].mxu0
    %v6187 = vadd.f32 %v5734, %v6186
    %v6188 = vpop.f32.mrb[0].mxu0
    %v6189 = vadd.f32 %v5736, %v6188
    %6190 = vmatprep.mubr.bf16.mxu0 %v2311
    %6191 = vmatmul.mubr.bf16.gmra.mrb[0].mxu0 %v2103
    %v6192 = vpop.f32.mrb[0].mxu0
    %v6193 = vadd.f32 %v5740, %v6192
    %v6194 = vpop.f32.mrb[0].mxu0
    %v6195 = vadd.f32 %v5742, %v6194
    %v6196 = vpop.f32.mrb[0].mxu0
    %v6197 = vadd.f32 %v5744, %v6196
    %v6198 = vpop.f32.mrb[0].mxu0
    %v6199 = vadd.f32 %v5746, %v6198
    %6200 = vmatprep.mubr.bf16.mxu0 %v2314
    %6201 = vmatmul.mubr.bf16.gmra.mrb[0].mxu0 %v2109
    %v6202 = vpop.f32.mrb[0].mxu0
    %v6203 = vadd.f32 %v5750, %v6202
    %v6204 = vpop.f32.mrb[0].mxu0
    %v6205 = vadd.f32 %v5752, %v6204
    %v6206 = vpop.f32.mrb[0].mxu0
    %v6207 = vadd.f32 %v5754, %v6206
    %v6208 = vpop.f32.mrb[0].mxu0
    %v6209 = vadd.f32 %v5756, %v6208
    %6210 = vmatprep.mubr.bf16.mxu0 %v2317
    %6211 = vmatmul.mubr.bf16.gmra.mrb[0].mxu0 %v2115
    %v6212 = vpop.f32.mrb[0].mxu0
    %v6213 = vadd.f32 %v5760, %v6212
    %v6214 = vpop.f32.mrb[0].mxu0
    %v6215 = vadd.f32 %v5762, %v6214
    %v6216 = vpop.f32.mrb[0].mxu0
    %v6217 = vadd.f32 %v5764, %v6216
    %v6218 = vpop.f32.mrb[0].mxu0
    %v6219 = vadd.f32 %v5766, %v6218
    %6220 = vmatprep.mubr.bf16.mxu0 %v2320
    %6221 = vmatmul.mubr.bf16.gmra.mrb[0].mxu0 %v2121
    %v6222 = vpop.f32.mrb[0].mxu0
    %v6223 = vadd.f32 %v5770, %v6222
    %v6224 = vpop.f32.mrb[0].mxu0
    %v6225 = vadd.f32 %v5772, %v6224
    %v6226 = vpop.f32.mrb[0].mxu0
    %v6227 = vadd.f32 %v5774, %v6226
    %v6228 = vpop.f32.mrb[0].mxu0
    %v6229 = vadd.f32 %v5776, %v6228
    %6230 = vmatprep.mubr.bf16.mxu0 %v2323
    %6231 = vmatmul.mubr.bf16.gmra.mrb[0].mxu0 %v2127
    %v6232 = vpop.f32.mrb[0].mxu0
    %v6233 = vadd.f32 %v5780, %v6232
    %v6234 = vpop.f32.mrb[0].mxu0
    %v6235 = vadd.f32 %v5782, %v6234
    %v6236 = vpop.f32.mrb[0].mxu0
    %v6237 = vadd.f32 %v5784, %v6236
    %v6238 = vpop.f32.mrb[0].mxu0
    %v6239 = vadd.f32 %v5786, %v6238
    %6240 = vmatprep.mubr.bf16.mxu0 %v2326
    %6241 = vmatmul.mubr.bf16.gmra.mrb[0].mxu0 %v2133
    %v6242 = vpop.f32.mrb[0].mxu0
    %v6243 = vadd.f32 %v5790, %v6242
    %v6244 = vpop.f32.mrb[0].mxu0
    %v6245 = vadd.f32 %v5792, %v6244
    %v6246 = vpop.f32.mrb[0].mxu0
    %v6247 = vadd.f32 %v5794, %v6246
    %v6248 = vpop.f32.mrb[0].mxu0
    %v6249 = vadd.f32 %v5796, %v6248
    %6250 = vmatprep.mubr.bf16.mxu0 %v2329
    %6251 = vmatmul.mubr.bf16.gmra.mrb[0].mxu0 %v2139
    %v6252 = vpop.f32.mrb[0].mxu0
    %v6253 = vadd.f32 %v5800, %v6252
    %v6254 = vpop.f32.mrb[0].mxu0
    %v6255 = vadd.f32 %v5802, %v6254
    %v6256 = vpop.f32.mrb[0].mxu0
    %v6257 = vadd.f32 %v5804, %v6256
    %v6258 = vpop.f32.mrb[0].mxu0
    %v6259 = vadd.f32 %v5806, %v6258
    %6260 = vmatprep.mubr.bf16.mxu0 %v2332
    %6261 = vmatmul.mubr.bf16.gmra.mrb[0].mxu0 %v2145
    %v6262 = vpop.f32.mrb[0].mxu0
    %v6263 = vadd.f32 %v5810, %v6262
    %v6264 = vpop.f32.mrb[0].mxu0
    %v6265 = vadd.f32 %v5812, %v6264
    %v6266 = vpop.f32.mrb[0].mxu0
    %v6267 = vadd.f32 %v5814, %v6266
    %v6268 = vpop.f32.mrb[0].mxu0
    %v6269 = vadd.f32 %v5816, %v6268
    %6270 = vmatprep.mubr.bf16.mxu0 %v2335
    %6271 = vmatmul.mubr.bf16.gmra.mrb[0].mxu0 %v2151
    %v6272 = vpop.f32.mrb[0].mxu0
    %v6273 = vadd.f32 %v5820, %v6272
    %v6274 = vpop.f32.mrb[0].mxu0
    %v6275 = vadd.f32 %v5822, %v6274
    %v6276 = vpop.f32.mrb[0].mxu0
    %v6277 = vadd.f32 %v5824, %v6276
    %v6278 = vpop.f32.mrb[0].mxu0
    %v6279 = vadd.f32 %v5826, %v6278
    %6280 = vmatprep.mubr.bf16.mxu0 %v2338
    %6281 = vmatmul.mubr.bf16.gmra.mrb[0].mxu0 %v2157
    %v6282 = vpop.f32.mrb[0].mxu0
    %v6283 = vadd.f32 %v5830, %v6282
    %v6284 = vpop.f32.mrb[0].mxu0
    %v6285 = vadd.f32 %v5832, %v6284
    %v6286 = vpop.f32.mrb[0].mxu0
    %v6287 = vadd.f32 %v5834, %v6286
    %v6288 = vpop.f32.mrb[0].mxu0
    %v6289 = vadd.f32 %v5836, %v6288
    %6290 = vmatprep.mubr.bf16.mxu0 %v2341
    %6291 = vmatmul.mubr.bf16.gmra.mrb[0].mxu0 %v2163
    %v6292 = vpop.f32.mrb[0].mxu0
    %v6293 = vadd.f32 %v5840, %v6292
    %v6294 = vpop.f32.mrb[0].mxu0
    %v6295 = vadd.f32 %v5842, %v6294
    %v6296 = vpop.f32.mrb[0].mxu0
    %v6297 = vadd.f32 %v5844, %v6296
    %v6298 = vpop.f32.mrb[0].mxu0
    %v6299 = vadd.f32 %v5846, %v6298
    %6300 = vmatprep.mubr.bf16.mxu0 %v2344
    %6301 = vmatmul.mubr.bf16.gmra.mrb[0].mxu0 %v2169
    %v6302 = vpop.f32.mrb[0].mxu0
    %v6303 = vadd.f32 %v5850, %v6302
    %v6304 = vpop.f32.mrb[0].mxu0
    %v6305 = vadd.f32 %v5852, %v6304
    %v6306 = vpop.f32.mrb[0].mxu0
    %v6307 = vadd.f32 %v5854, %v6306
    %v6308 = vpop.f32.mrb[0].mxu0
    %v6309 = vadd.f32 %v5856, %v6308
    %6310 = vmatprep.mubr.bf16.mxu0 %v2347
    %6311 = vmatmul.mubr.bf16.gmra.mrb[0].mxu0 %v2175
    %v6312 = vpop.f32.mrb[0].mxu0
    %v6313 = vadd.f32 %v5860, %v6312
    %v6314 = vpop.f32.mrb[0].mxu0
    %v6315 = vadd.f32 %v5862, %v6314
    %v6316 = vpop.f32.mrb[0].mxu0
    %v6317 = vadd.f32 %v5864, %v6316
    %v6318 = vpop.f32.mrb[0].mxu0
    %v6319 = vadd.f32 %v5866, %v6318
    %6320 = vmatprep.mubr.bf16.mxu0 %v2350
    %6321 = vmatmul.mubr.bf16.gmra.mrb[0].mxu0 %v2181
    %v6322 = vpop.f32.mrb[0].mxu0
    %v6323 = vadd.f32 %v5870, %v6322
    %v6324 = vpop.f32.mrb[0].mxu0
    %v6325 = vadd.f32 %v5872, %v6324
    %v6326 = vpop.f32.mrb[0].mxu0
    %v6327 = vadd.f32 %v5874, %v6326
    %v6328 = vpop.f32.mrb[0].mxu0
    %v6329 = vadd.f32 %v5876, %v6328
    %6330 = vmatprep.mubr.bf16.mxu0 %v2353
    %6331 = vmatmul.mubr.bf16.gmra.mrb[0].mxu0 %v2187
    %v6332 = vpop.f32.mrb[0].mxu0
    %v6333 = vadd.f32 %v5880, %v6332
    %v6334 = vpop.f32.mrb[0].mxu0
    %v6335 = vadd.f32 %v5882, %v6334
    %v6336 = vpop.f32.mrb[0].mxu0
    %v6337 = vadd.f32 %v5884, %v6336
    %v6338 = vpop.f32.mrb[0].mxu0
    %v6339 = vadd.f32 %v5886, %v6338
    %6340 = vmatprep.mubr.bf16.mxu0 %v2356
    %6341 = vmatmul.mubr.bf16.gmra.mrb[0].mxu0 %v2193
    %v6342 = vpop.f32.mrb[0].mxu0
    %v6343 = vadd.f32 %v5890, %v6342
    %v6344 = vpop.f32.mrb[0].mxu0
    %v6345 = vadd.f32 %v5892, %v6344
    %v6346 = vpop.f32.mrb[0].mxu0
    %v6347 = vadd.f32 %v5894, %v6346
    %v6348 = vpop.f32.mrb[0].mxu0
    %v6349 = vadd.f32 %v5896, %v6348
    %6350 = vmatprep.mubr.bf16.mxu0 %v2359
    %6351 = vmatmul.mubr.bf16.gmra.mrb[0].mxu0 %v2199
    %v6352 = vpop.f32.mrb[0].mxu0
    %v6353 = vadd.f32 %v5900, %v6352
    %v6354 = vpop.f32.mrb[0].mxu0
    %v6355 = vadd.f32 %v5902, %v6354
    %v6356 = vpop.f32.mrb[0].mxu0
    %v6357 = vadd.f32 %v5904, %v6356
    %v6358 = vpop.f32.mrb[0].mxu0
    %v6359 = vadd.f32 %v5906, %v6358
    %6360 = vmatprep.mubr.bf16.mxu0 %v2362
    %6361 = vmatmul.mubr.bf16.gmra.mrb[0].mxu0 %v2205
    %v6362 = vpop.f32.mrb[0].mxu0
    %v6363 = vadd.f32 %v5910, %v6362
    %v6364 = vpop.f32.mrb[0].mxu0
    %v6365 = vadd.f32 %v5912, %v6364
    %v6366 = vpop.f32.mrb[0].mxu0
    %v6367 = vadd.f32 %v5914, %v6366
    %v6368 = vpop.f32.mrb[0].mxu0
    %v6369 = vadd.f32 %v5916, %v6368
    %6370 = vmatprep.mubr.bf16.mxu0 %v2365
    %6371 = vmatmul.mubr.bf16.gmra.mrb[0].mxu0 %v2211
    %v6372 = vpop.f32.mrb[0].mxu0
    %v6373 = vadd.f32 %v5920, %v6372
    %v6374 = vpop.f32.mrb[0].mxu0
    %v6375 = vadd.f32 %v5922, %v6374
    %v6376 = vpop.f32.mrb[0].mxu0
    %v6377 = vadd.f32 %v5924, %v6376
    %v6378 = vpop.f32.mrb[0].mxu0
    %v6379 = vadd.f32 %v5926, %v6378
    %6380 = vmatprep.mubr.bf16.mxu0 %v2368
    %6381 = vmatmul.mubr.bf16.gmra.mrb[0].mxu0 %v2217
    %v6382 = vpop.f32.mrb[0].mxu0
    %v6383 = vadd.f32 %v5930, %v6382
    %v6384 = vpop.f32.mrb[0].mxu0
    %v6385 = vadd.f32 %v5932, %v6384
    %v6386 = vpop.f32.mrb[0].mxu0
    %v6387 = vadd.f32 %v5934, %v6386
    %v6388 = vpop.f32.mrb[0].mxu0
    %v6389 = vadd.f32 %v5936, %v6388
    %6390 = vmatprep.mubr.bf16.mxu0 %v2371
    %6391 = vmatmul.mubr.bf16.gmra.mrb[0].mxu0 %v2223
    %v6392 = vpop.f32.mrb[0].mxu0
    %v6393 = vadd.f32 %v5940, %v6392
    %v6394 = vpop.f32.mrb[0].mxu0
    %v6395 = vadd.f32 %v5942, %v6394
    %v6396 = vpop.f32.mrb[0].mxu0
    %v6397 = vadd.f32 %v5944, %v6396
    %v6398 = vpop.f32.mrb[0].mxu0
    %v6399 = vadd.f32 %v5946, %v6398
    %6400 = vmatprep.mubr.bf16.mxu0 %v2374
    %6401 = vmatmul.mubr.bf16.gmra.mrb[0].mxu0 %v2229
    %v6402 = vpop.f32.mrb[0].mxu0
    %v6403 = vadd.f32 %v5950, %v6402
    %v6404 = vpop.f32.mrb[0].mxu0
    %v6405 = vadd.f32 %v5952, %v6404
    %v6406 = vpop.f32.mrb[0].mxu0
    %v6407 = vadd.f32 %v5954, %v6406
    %v6408 = vpop.f32.mrb[0].mxu0
    %v6409 = vadd.f32 %v5956, %v6408
    %6410 = vmatprep.mubr.bf16.mxu0 %v2377
    %6411 = vmatmul.mubr.bf16.gmra.mrb[0].mxu0 %v2235
    %v6412 = vpop.f32.mrb[0].mxu0
    %v6413 = vadd.f32 %v5960, %v6412
    %v6414 = vpop.f32.mrb[0].mxu0
    %v6415 = vadd.f32 %v5962, %v6414
    %v6416 = vpop.f32.mrb[0].mxu0
    %v6417 = vadd.f32 %v5964, %v6416
    %v6418 = vpop.f32.mrb[0].mxu0
    %v6419 = vadd.f32 %v5966, %v6418
    %6420 = vmatprep.mubr.bf16.mxu0 %v2380
    %6421 = vmatmul.mubr.bf16.gmra.mrb[0].mxu0 %v2241
    %v6422 = vpop.f32.mrb[0].mxu0
    %v6423 = vadd.f32 %v5970, %v6422
    %v6424 = vpop.f32.mrb[0].mxu0
    %v6425 = vadd.f32 %v5972, %v6424
    %v6426 = vpop.f32.mrb[0].mxu0
    %v6427 = vadd.f32 %v5974, %v6426
    %v6428 = vpop.f32.mrb[0].mxu0
    %v6429 = vadd.f32 %v5976, %v6428
    %6430 = vmatprep.mubr.bf16.mxu0 %v2383
    %6431 = vmatmul.mubr.bf16.gmra.mrb[0].mxu0 %v2247
    %v6432 = vpop.f32.mrb[0].mxu0
    %v6433 = vadd.f32 %v5980, %v6432
    %v6434 = vpop.f32.mrb[0].mxu0
    %v6435 = vadd.f32 %v5982, %v6434
    %v6436 = vpop.f32.mrb[0].mxu0
    %v6437 = vadd.f32 %v5984, %v6436
    %v6438 = vpop.f32.mrb[0].mxu0
    %v6439 = vadd.f32 %v5986, %v6438
    %6440 = vmatprep.mubr.bf16.mxu0 %v2386
    %6441 = vmatmul.mubr.bf16.gmra.mrb[0].mxu0 %v2253
    %v6442 = vpop.f32.mrb[0].mxu0
    %v6443 = vadd.f32 %v5990, %v6442
    %v6444 = vpop.f32.mrb[0].mxu0
    %v6445 = vadd.f32 %v5992, %v6444
    %v6446 = vpop.f32.mrb[0].mxu0
    %v6447 = vadd.f32 %v5994, %v6446
    %v6448 = vpop.f32.mrb[0].mxu0
    %v6449 = vadd.f32 %v5996, %v6448
    %6450 = vmatprep.mubr.bf16.mxu0 %v2389
    %6451 = vmatmul.mubr.bf16.gmra.mrb[0].mxu0 %v2259
    %v6452 = vpop.f32.mrb[0].mxu0
    %v6453 = vadd.f32 %v6000, %v6452
    %v6454 = vpop.f32.mrb[0].mxu0
    %v6455 = vadd.f32 %v6002, %v6454
    %v6456 = vpop.f32.mrb[0].mxu0
    %v6457 = vadd.f32 %v6004, %v6456
    %v6458 = vpop.f32.mrb[0].mxu0
    %v6459 = vadd.f32 %v6006, %v6458
    %6460 = vmatprep.mubr.bf16.mxu0 %v2392
    %6461 = vmatmul.mubr.bf16.gmra.mrb[0].mxu0 %v2265
    %v6462 = vpop.f32.mrb[0].mxu0
    %v6463 = vadd.f32 %v6010, %v6462
    %v6464 = vpop.f32.mrb[0].mxu0
    %v6465 = vadd.f32 %v6012, %v6464
    %v6466 = vpop.f32.mrb[0].mxu0
    %v6467 = vadd.f32 %v6014, %v6466
    %v6468 = vpop.f32.mrb[0].mxu0
    %v6469 = vadd.f32 %v6016, %v6468
    %6470 = vdwg.mxu0
    %6471 = vmatprep.subr.bf16.mxu0 0
    %6472 = vmatpush1.bf16.msra.mxu0 %v1223
    %6473 = vmatprep.subr.bf16.mxu0 0
    %6474 = vmatpush1.bf16.msra.mxu0 %v1230
    %6475 = vmatprep.subr.bf16.mxu0 0
    %6476 = vmatpush1.bf16.msra.mxu0 %v1237
    %6477 = vmatprep.subr.bf16.mxu0 0
    %6478 = vmatpush1.bf16.msra.mxu0 %v1244
    %6479 = vmatprep.subr.bf16.mxu0 0
    %6480 = vmatpush1.bf16.msra.mxu0 %v1251
    %6481 = vmatprep.subr.bf16.mxu0 0
    %6482 = vmatpush1.bf16.msra.mxu0 %v1258
    %6483 = vmatprep.subr.bf16.mxu0 0
    %6484 = vmatpush1.bf16.msra.mxu0 %v1265
    %6485 = vmatprep.subr.bf16.mxu0 0
    %6486 = vmatpush1.bf16.msra.mxu0 %v1272
    %6487 = vmatprep.subr.bf16.mxu0 0
    %6488 = vmatpush1.bf16.msra.mxu0 %v1279
    %6489 = vmatprep.subr.bf16.mxu0 0
    %6490 = vmatpush1.bf16.msra.mxu0 %v1286
    %6491 = vmatprep.subr.bf16.mxu0 0
    %6492 = vmatpush1.bf16.msra.mxu0 %v1293
    %6493 = vmatprep.subr.bf16.mxu0 0
    %6494 = vmatpush1.bf16.msra.mxu0 %v1300
    %6495 = vmatprep.subr.bf16.mxu0 0
    %6496 = vmatpush1.bf16.msra.mxu0 %v1307
    %6497 = vmatprep.subr.bf16.mxu0 0
    %6498 = vmatpush1.bf16.msra.mxu0 %v1314
    %6499 = vmatprep.subr.bf16.mxu0 0
    %6500 = vmatpush1.bf16.msra.mxu0 %v1321
    %6501 = vmatprep.subr.bf16.mxu0 0
    %6502 = vmatpush1.bf16.msra.mxu0 %v1328
    %6503 = vmatprep.mubr.bf16.mxu0 %v2016
    %6504 = vmatmul.mubr.bf16.gmra.mrb[0].mxu0 %v2015
    %v6505 = vpop.f32.mrb[0].mxu0
    %v6506 = vadd.f32 0.0, %v6505
    %v6507 = vpop.f32.mrb[0].mxu0
    %v6508 = vpop.f32.mrb[0].mxu0
    %v6509 = vadd.f32 0.0, %v6508
    %v6510 = vpop.f32.mrb[0].mxu0
    %6511 = vmatprep.mubr.bf16.mxu0 %v2022
    %6512 = vmatmul.mubr.bf16.gmra.mrb[0].mxu0 %v2021
    %v6513 = vpop.f32.mrb[0].mxu0
    %v6514 = vadd.f32 0.0, %v6513
    %v6515 = vpop.f32.mrb[0].mxu0
    %v6516 = vpop.f32.mrb[0].mxu0
    %v6517 = vadd.f32 0.0, %v6516
    %v6518 = vpop.f32.mrb[0].mxu0
    %6519 = vmatprep.mubr.bf16.mxu0 %v2028
    %6520 = vmatmul.mubr.bf16.gmra.mrb[0].mxu0 %v2027
    %v6521 = vpop.f32.mrb[0].mxu0
    %v6522 = vadd.f32 0.0, %v6521
    %v6523 = vpop.f32.mrb[0].mxu0
    %v6524 = vpop.f32.mrb[0].mxu0
    %v6525 = vadd.f32 0.0, %v6524
    %v6526 = vpop.f32.mrb[0].mxu0
    %6527 = vmatprep.mubr.bf16.mxu0 %v2034
    %6528 = vmatmul.mubr.bf16.gmra.mrb[0].mxu0 %v2033
    %v6529 = vpop.f32.mrb[0].mxu0
    %v6530 = vadd.f32 0.0, %v6529
    %v6531 = vpop.f32.mrb[0].mxu0
    %v6532 = vpop.f32.mrb[0].mxu0
    %v6533 = vadd.f32 0.0, %v6532
    %v6534 = vpop.f32.mrb[0].mxu0
    %6535 = vmatprep.mubr.bf16.mxu0 %v2040
    %6536 = vmatmul.mubr.bf16.gmra.mrb[0].mxu0 %v2039
    %v6537 = vpop.f32.mrb[0].mxu0
    %v6538 = vadd.f32 0.0, %v6537
    %v6539 = vpop.f32.mrb[0].mxu0
    %v6540 = vpop.f32.mrb[0].mxu0
    %v6541 = vadd.f32 0.0, %v6540
    %v6542 = vpop.f32.mrb[0].mxu0
    %6543 = vmatprep.mubr.bf16.mxu0 %v2046
    %6544 = vmatmul.mubr.bf16.gmra.mrb[0].mxu0 %v2045
    %v6545 = vpop.f32.mrb[0].mxu0
    %v6546 = vadd.f32 0.0, %v6545
    %v6547 = vpop.f32.mrb[0].mxu0
    %v6548 = vpop.f32.mrb[0].mxu0
    %v6549 = vadd.f32 0.0, %v6548
    %v6550 = vpop.f32.mrb[0].mxu0
    %6551 = vmatprep.mubr.bf16.mxu0 %v2052
    %6552 = vmatmul.mubr.bf16.gmra.mrb[0].mxu0 %v2051
    %v6553 = vpop.f32.mrb[0].mxu0
    %v6554 = vadd.f32 0.0, %v6553
    %v6555 = vpop.f32.mrb[0].mxu0
    %v6556 = vpop.f32.mrb[0].mxu0
    %v6557 = vadd.f32 0.0, %v6556
    %v6558 = vpop.f32.mrb[0].mxu0
    %6559 = vmatprep.mubr.bf16.mxu0 %v2058
    %6560 = vmatmul.mubr.bf16.gmra.mrb[0].mxu0 %v2057
    %v6561 = vpop.f32.mrb[0].mxu0
    %v6562 = vadd.f32 0.0, %v6561
    %v6563 = vpop.f32.mrb[0].mxu0
    %v6564 = vpop.f32.mrb[0].mxu0
    %v6565 = vadd.f32 0.0, %v6564
    %v6566 = vpop.f32.mrb[0].mxu0
    %6567 = vmatprep.mubr.bf16.mxu0 %v2064
    %6568 = vmatmul.mubr.bf16.gmra.mrb[0].mxu0 %v2063
    %v6569 = vpop.f32.mrb[0].mxu0
    %v6570 = vadd.f32 0.0, %v6569
    %v6571 = vpop.f32.mrb[0].mxu0
    %v6572 = vpop.f32.mrb[0].mxu0
    %v6573 = vadd.f32 0.0, %v6572
    %v6574 = vpop.f32.mrb[0].mxu0
    %6575 = vmatprep.mubr.bf16.mxu0 %v2070
    %6576 = vmatmul.mubr.bf16.gmra.mrb[0].mxu0 %v2069
    %v6577 = vpop.f32.mrb[0].mxu0
    %v6578 = vadd.f32 0.0, %v6577
    %v6579 = vpop.f32.mrb[0].mxu0
    %v6580 = vpop.f32.mrb[0].mxu0
    %v6581 = vadd.f32 0.0, %v6580
    %v6582 = vpop.f32.mrb[0].mxu0
    %6583 = vmatprep.mubr.bf16.mxu0 %v2076
    %6584 = vmatmul.mubr.bf16.gmra.mrb[0].mxu0 %v2075
    %v6585 = vpop.f32.mrb[0].mxu0
    %v6586 = vadd.f32 0.0, %v6585
    %v6587 = vpop.f32.mrb[0].mxu0
    %v6588 = vpop.f32.mrb[0].mxu0
    %v6589 = vadd.f32 0.0, %v6588
    %v6590 = vpop.f32.mrb[0].mxu0
    %6591 = vmatprep.mubr.bf16.mxu0 %v2082
    %6592 = vmatmul.mubr.bf16.gmra.mrb[0].mxu0 %v2081
    %v6593 = vpop.f32.mrb[0].mxu0
    %v6594 = vadd.f32 0.0, %v6593
    %v6595 = vpop.f32.mrb[0].mxu0
    %v6596 = vpop.f32.mrb[0].mxu0
    %v6597 = vadd.f32 0.0, %v6596
    %v6598 = vpop.f32.mrb[0].mxu0
    %6599 = vmatprep.mubr.bf16.mxu0 %v2088
    %6600 = vmatmul.mubr.bf16.gmra.mrb[0].mxu0 %v2087
    %v6601 = vpop.f32.mrb[0].mxu0
    %v6602 = vadd.f32 0.0, %v6601
    %v6603 = vpop.f32.mrb[0].mxu0
    %v6604 = vpop.f32.mrb[0].mxu0
    %v6605 = vadd.f32 0.0, %v6604
    %v6606 = vpop.f32.mrb[0].mxu0
    %6607 = vmatprep.mubr.bf16.mxu0 %v2094
    %6608 = vmatmul.mubr.bf16.gmra.mrb[0].mxu0 %v2093
    %v6609 = vpop.f32.mrb[0].mxu0
    %v6610 = vadd.f32 0.0, %v6609
    %v6611 = vpop.f32.mrb[0].mxu0
    %v6612 = vpop.f32.mrb[0].mxu0
    %v6613 = vadd.f32 0.0, %v6612
    %v6614 = vpop.f32.mrb[0].mxu0
    %6615 = vmatprep.mubr.bf16.mxu0 %v2100
    %6616 = vmatmul.mubr.bf16.gmra.mrb[0].mxu0 %v2099
    %v6617 = vpop.f32.mrb[0].mxu0
    %v6618 = vadd.f32 0.0, %v6617
    %v6619 = vpop.f32.mrb[0].mxu0
    %v6620 = vpop.f32.mrb[0].mxu0
    %v6621 = vadd.f32 0.0, %v6620
    %v6622 = vpop.f32.mrb[0].mxu0
    %6623 = vmatprep.mubr.bf16.mxu0 %v2106
    %6624 = vmatmul.mubr.bf16.gmra.mrb[0].mxu0 %v2105
    %v6625 = vpop.f32.mrb[0].mxu0
    %v6626 = vadd.f32 0.0, %v6625
    %v6627 = vpop.f32.mrb[0].mxu0
    %v6628 = vpop.f32.mrb[0].mxu0
    %v6629 = vadd.f32 0.0, %v6628
    %v6630 = vpop.f32.mrb[0].mxu0
    %6631 = vmatprep.mubr.bf16.mxu0 %v2112
    %6632 = vmatmul.mubr.bf16.gmra.mrb[0].mxu0 %v2111
    %v6633 = vpop.f32.mrb[0].mxu0
    %v6634 = vadd.f32 0.0, %v6633
    %v6635 = vpop.f32.mrb[0].mxu0
    %v6636 = vpop.f32.mrb[0].mxu0
    %v6637 = vadd.f32 0.0, %v6636
    %v6638 = vpop.f32.mrb[0].mxu0
    %6639 = vmatprep.mubr.bf16.mxu0 %v2118
    %6640 = vmatmul.mubr.bf16.gmra.mrb[0].mxu0 %v2117
    %v6641 = vpop.f32.mrb[0].mxu0
    %v6642 = vadd.f32 0.0, %v6641
    %v6643 = vpop.f32.mrb[0].mxu0
    %v6644 = vpop.f32.mrb[0].mxu0
    %v6645 = vadd.f32 0.0, %v6644
    %v6646 = vpop.f32.mrb[0].mxu0
    %6647 = vmatprep.mubr.bf16.mxu0 %v2124
    %6648 = vmatmul.mubr.bf16.gmra.mrb[0].mxu0 %v2123
    %v6649 = vpop.f32.mrb[0].mxu0
    %v6650 = vadd.f32 0.0, %v6649
    %v6651 = vpop.f32.mrb[0].mxu0
    %v6652 = vpop.f32.mrb[0].mxu0
    %v6653 = vadd.f32 0.0, %v6652
    %v6654 = vpop.f32.mrb[0].mxu0
    %6655 = vmatprep.mubr.bf16.mxu0 %v2130
    %6656 = vmatmul.mubr.bf16.gmra.mrb[0].mxu0 %v2129
    %v6657 = vpop.f32.mrb[0].mxu0
    %v6658 = vadd.f32 0.0, %v6657
    %v6659 = vpop.f32.mrb[0].mxu0
    %v6660 = vpop.f32.mrb[0].mxu0
    %v6661 = vadd.f32 0.0, %v6660
    %v6662 = vpop.f32.mrb[0].mxu0
    %6663 = vmatprep.mubr.bf16.mxu0 %v2136
    %6664 = vmatmul.mubr.bf16.gmra.mrb[0].mxu0 %v2135
    %v6665 = vpop.f32.mrb[0].mxu0
    %v6666 = vadd.f32 0.0, %v6665
    %v6667 = vpop.f32.mrb[0].mxu0
    %v6668 = vpop.f32.mrb[0].mxu0
    %v6669 = vadd.f32 0.0, %v6668
    %v6670 = vpop.f32.mrb[0].mxu0
    %6671 = vmatprep.mubr.bf16.mxu0 %v2142
    %6672 = vmatmul.mubr.bf16.gmra.mrb[0].mxu0 %v2141
    %v6673 = vpop.f32.mrb[0].mxu0
    %v6674 = vadd.f32 0.0, %v6673
    %v6675 = vpop.f32.mrb[0].mxu0
    %v6676 = vpop.f32.mrb[0].mxu0
    %v6677 = vadd.f32 0.0, %v6676
    %v6678 = vpop.f32.mrb[0].mxu0
    %6679 = vmatprep.mubr.bf16.mxu0 %v2148
    %6680 = vmatmul.mubr.bf16.gmra.mrb[0].mxu0 %v2147
    %v6681 = vpop.f32.mrb[0].mxu0
    %v6682 = vadd.f32 0.0, %v6681
    %v6683 = vpop.f32.mrb[0].mxu0
    %v6684 = vpop.f32.mrb[0].mxu0
    %v6685 = vadd.f32 0.0, %v6684
    %v6686 = vpop.f32.mrb[0].mxu0
    %6687 = vmatprep.mubr.bf16.mxu0 %v2154
    %6688 = vmatmul.mubr.bf16.gmra.mrb[0].mxu0 %v2153
    %v6689 = vpop.f32.mrb[0].mxu0
    %v6690 = vadd.f32 0.0, %v6689
    %v6691 = vpop.f32.mrb[0].mxu0
    %v6692 = vpop.f32.mrb[0].mxu0
    %v6693 = vadd.f32 0.0, %v6692
    %v6694 = vpop.f32.mrb[0].mxu0
    %6695 = vmatprep.mubr.bf16.mxu0 %v2160
    %6696 = vmatmul.mubr.bf16.gmra.mrb[0].mxu0 %v2159
    %v6697 = vpop.f32.mrb[0].mxu0
    %v6698 = vadd.f32 0.0, %v6697
    %v6699 = vpop.f32.mrb[0].mxu0
    %v6700 = vpop.f32.mrb[0].mxu0
    %v6701 = vadd.f32 0.0, %v6700
    %v6702 = vpop.f32.mrb[0].mxu0
    %6703 = vmatprep.mubr.bf16.mxu0 %v2166
    %6704 = vmatmul.mubr.bf16.gmra.mrb[0].mxu0 %v2165
    %v6705 = vpop.f32.mrb[0].mxu0
    %v6706 = vadd.f32 0.0, %v6705
    %v6707 = vpop.f32.mrb[0].mxu0
    %v6708 = vpop.f32.mrb[0].mxu0
    %v6709 = vadd.f32 0.0, %v6708
    %v6710 = vpop.f32.mrb[0].mxu0
    %6711 = vmatprep.mubr.bf16.mxu0 %v2172
    %6712 = vmatmul.mubr.bf16.gmra.mrb[0].mxu0 %v2171
    %v6713 = vpop.f32.mrb[0].mxu0
    %v6714 = vadd.f32 0.0, %v6713
    %v6715 = vpop.f32.mrb[0].mxu0
    %v6716 = vpop.f32.mrb[0].mxu0
    %v6717 = vadd.f32 0.0, %v6716
    %v6718 = vpop.f32.mrb[0].mxu0
    %6719 = vmatprep.mubr.bf16.mxu0 %v2178
    %6720 = vmatmul.mubr.bf16.gmra.mrb[0].mxu0 %v2177
    %v6721 = vpop.f32.mrb[0].mxu0
    %v6722 = vadd.f32 0.0, %v6721
    %v6723 = vpop.f32.mrb[0].mxu0
    %v6724 = vpop.f32.mrb[0].mxu0
    %v6725 = vadd.f32 0.0, %v6724
    %v6726 = vpop.f32.mrb[0].mxu0
    %6727 = vmatprep.mubr.bf16.mxu0 %v2184
    %6728 = vmatmul.mubr.bf16.gmra.mrb[0].mxu0 %v2183
    %v6729 = vpop.f32.mrb[0].mxu0
    %v6730 = vadd.f32 0.0, %v6729
    %v6731 = vpop.f32.mrb[0].mxu0
    %v6732 = vpop.f32.mrb[0].mxu0
    %v6733 = vadd.f32 0.0, %v6732
    %v6734 = vpop.f32.mrb[0].mxu0
    %6735 = vmatprep.mubr.bf16.mxu0 %v2190
    %6736 = vmatmul.mubr.bf16.gmra.mrb[0].mxu0 %v2189
    %v6737 = vpop.f32.mrb[0].mxu0
    %v6738 = vadd.f32 0.0, %v6737
    %v6739 = vpop.f32.mrb[0].mxu0
    %v6740 = vpop.f32.mrb[0].mxu0
    %v6741 = vadd.f32 0.0, %v6740
    %v6742 = vpop.f32.mrb[0].mxu0
    %6743 = vmatprep.mubr.bf16.mxu0 %v2196
    %6744 = vmatmul.mubr.bf16.gmra.mrb[0].mxu0 %v2195
    %v6745 = vpop.f32.mrb[0].mxu0
    %v6746 = vadd.f32 0.0, %v6745
    %v6747 = vpop.f32.mrb[0].mxu0
    %v6748 = vpop.f32.mrb[0].mxu0
    %v6749 = vadd.f32 0.0, %v6748
    %v6750 = vpop.f32.mrb[0].mxu0
    %6751 = vmatprep.mubr.bf16.mxu0 %v2202
    %6752 = vmatmul.mubr.bf16.gmra.mrb[0].mxu0 %v2201
    %v6753 = vpop.f32.mrb[0].mxu0
    %v6754 = vadd.f32 0.0, %v6753
    %v6755 = vpop.f32.mrb[0].mxu0
    %v6756 = vpop.f32.mrb[0].mxu0
    %v6757 = vadd.f32 0.0, %v6756
    %v6758 = vpop.f32.mrb[0].mxu0
    %6759 = vmatprep.mubr.bf16.mxu0 %v2208
    %6760 = vmatmul.mubr.bf16.gmra.mrb[0].mxu0 %v2207
    %v6761 = vpop.f32.mrb[0].mxu0
    %v6762 = vadd.f32 0.0, %v6761
    %v6763 = vpop.f32.mrb[0].mxu0
    %v6764 = vpop.f32.mrb[0].mxu0
    %v6765 = vadd.f32 0.0, %v6764
    %v6766 = vpop.f32.mrb[0].mxu0
    %6767 = vmatprep.mubr.bf16.mxu0 %v2214
    %6768 = vmatmul.mubr.bf16.gmra.mrb[0].mxu0 %v2213
    %v6769 = vpop.f32.mrb[0].mxu0
    %v6770 = vadd.f32 0.0, %v6769
    %v6771 = vpop.f32.mrb[0].mxu0
    %v6772 = vpop.f32.mrb[0].mxu0
    %v6773 = vadd.f32 0.0, %v6772
    %v6774 = vpop.f32.mrb[0].mxu0
    %6775 = vmatprep.mubr.bf16.mxu0 %v2220
    %6776 = vmatmul.mubr.bf16.gmra.mrb[0].mxu0 %v2219
    %v6777 = vpop.f32.mrb[0].mxu0
    %v6778 = vadd.f32 0.0, %v6777
    %v6779 = vpop.f32.mrb[0].mxu0
    %v6780 = vpop.f32.mrb[0].mxu0
    %v6781 = vadd.f32 0.0, %v6780
    %v6782 = vpop.f32.mrb[0].mxu0
    %6783 = vmatprep.mubr.bf16.mxu0 %v2226
    %6784 = vmatmul.mubr.bf16.gmra.mrb[0].mxu0 %v2225
    %v6785 = vpop.f32.mrb[0].mxu0
    %v6786 = vadd.f32 0.0, %v6785
    %v6787 = vpop.f32.mrb[0].mxu0
    %v6788 = vpop.f32.mrb[0].mxu0
    %v6789 = vadd.f32 0.0, %v6788
    %v6790 = vpop.f32.mrb[0].mxu0
    %6791 = vmatprep.mubr.bf16.mxu0 %v2232
    %6792 = vmatmul.mubr.bf16.gmra.mrb[0].mxu0 %v2231
    %v6793 = vpop.f32.mrb[0].mxu0
    %v6794 = vadd.f32 0.0, %v6793
    %v6795 = vpop.f32.mrb[0].mxu0
    %v6796 = vpop.f32.mrb[0].mxu0
    %v6797 = vadd.f32 0.0, %v6796
    %v6798 = vpop.f32.mrb[0].mxu0
    %6799 = vmatprep.mubr.bf16.mxu0 %v2238
    %6800 = vmatmul.mubr.bf16.gmra.mrb[0].mxu0 %v2237
    %v6801 = vpop.f32.mrb[0].mxu0
    %v6802 = vadd.f32 0.0, %v6801
    %v6803 = vpop.f32.mrb[0].mxu0
    %v6804 = vpop.f32.mrb[0].mxu0
    %v6805 = vadd.f32 0.0, %v6804
    %v6806 = vpop.f32.mrb[0].mxu0
    %6807 = vmatprep.mubr.bf16.mxu0 %v2244
    %6808 = vmatmul.mubr.bf16.gmra.mrb[0].mxu0 %v2243
    %v6809 = vpop.f32.mrb[0].mxu0
    %v6810 = vadd.f32 0.0, %v6809
    %v6811 = vpop.f32.mrb[0].mxu0
    %v6812 = vpop.f32.mrb[0].mxu0
    %v6813 = vadd.f32 0.0, %v6812
    %v6814 = vpop.f32.mrb[0].mxu0
    %6815 = vmatprep.mubr.bf16.mxu0 %v2250
    %6816 = vmatmul.mubr.bf16.gmra.mrb[0].mxu0 %v2249
    %v6817 = vpop.f32.mrb[0].mxu0
    %v6818 = vadd.f32 0.0, %v6817
    %v6819 = vpop.f32.mrb[0].mxu0
    %v6820 = vpop.f32.mrb[0].mxu0
    %v6821 = vadd.f32 0.0, %v6820
    %v6822 = vpop.f32.mrb[0].mxu0
    %6823 = vmatprep.mubr.bf16.mxu0 %v2256
    %6824 = vmatmul.mubr.bf16.gmra.mrb[0].mxu0 %v2255
    %v6825 = vpop.f32.mrb[0].mxu0
    %v6826 = vadd.f32 0.0, %v6825
    %v6827 = vpop.f32.mrb[0].mxu0
    %v6828 = vpop.f32.mrb[0].mxu0
    %v6829 = vadd.f32 0.0, %v6828
    %v6830 = vpop.f32.mrb[0].mxu0
    %6831 = vmatprep.mubr.bf16.mxu0 %v2262
    %6832 = vmatmul.mubr.bf16.gmra.mrb[0].mxu0 %v2261
    %v6833 = vpop.f32.mrb[0].mxu0
    %v6834 = vadd.f32 0.0, %v6833
    %v6835 = vpop.f32.mrb[0].mxu0
    %v6836 = vpop.f32.mrb[0].mxu0
    %v6837 = vadd.f32 0.0, %v6836
    %v6838 = vpop.f32.mrb[0].mxu0
    %6839 = vdwg.mxu0
    %6840 = vmatprep.subr.bf16.mxu0 0
    %6841 = vmatpush1.bf16.msra.mxu0 %v1335
    %6842 = vmatprep.subr.bf16.mxu0 0
    %6843 = vmatpush1.bf16.msra.mxu0 %v1342
    %6844 = vmatprep.subr.bf16.mxu0 0
    %6845 = vmatpush1.bf16.msra.mxu0 %v1349
    %6846 = vmatprep.subr.bf16.mxu0 0
    %6847 = vmatpush1.bf16.msra.mxu0 %v1356
    %6848 = vmatprep.subr.bf16.mxu0 0
    %6849 = vmatpush1.bf16.msra.mxu0 %v1363
    %6850 = vmatprep.subr.bf16.mxu0 0
    %6851 = vmatpush1.bf16.msra.mxu0 %v1370
    %6852 = vmatprep.subr.bf16.mxu0 0
    %6853 = vmatpush1.bf16.msra.mxu0 %v1377
    %6854 = vmatprep.subr.bf16.mxu0 0
    %6855 = vmatpush1.bf16.msra.mxu0 %v1384
    %6856 = vmatprep.subr.bf16.mxu0 0
    %6857 = vmatpush1.bf16.msra.mxu0 %v1391
    %6858 = vmatprep.subr.bf16.mxu0 0
    %6859 = vmatpush1.bf16.msra.mxu0 %v1398
    %6860 = vmatprep.subr.bf16.mxu0 0
    %6861 = vmatpush1.bf16.msra.mxu0 %v1405
    %6862 = vmatprep.subr.bf16.mxu0 0
    %6863 = vmatpush1.bf16.msra.mxu0 %v1412
    %6864 = vmatprep.subr.bf16.mxu0 0
    %6865 = vmatpush1.bf16.msra.mxu0 %v1419
    %6866 = vmatprep.subr.bf16.mxu0 0
    %6867 = vmatpush1.bf16.msra.mxu0 %v1426
    %6868 = vmatprep.subr.bf16.mxu0 0
    %6869 = vmatpush1.bf16.msra.mxu0 %v1433
    %6870 = vmatprep.subr.bf16.mxu0 0
    %6871 = vmatpush1.bf16.msra.mxu0 %v1440
    %6872 = vmatprep.mubr.bf16.mxu0 %v2018
    %6873 = vmatmul.mubr.bf16.gmra.mrb[0].mxu0 %v2017
    %v6874 = vpop.f32.mrb[0].mxu0
    %v6875 = vadd.f32 %v6506, %v6874
    %v6876 = vpop.f32.mrb[0].mxu0
    %v6877 = vpop.f32.mrb[0].mxu0
    %v6878 = vadd.f32 %v6509, %v6877
    %v6879 = vpop.f32.mrb[0].mxu0
    %6880 = vmatprep.mubr.bf16.mxu0 %v2024
    %6881 = vmatmul.mubr.bf16.gmra.mrb[0].mxu0 %v2023
    %v6882 = vpop.f32.mrb[0].mxu0
    %v6883 = vadd.f32 %v6514, %v6882
    %v6884 = vpop.f32.mrb[0].mxu0
    %v6885 = vpop.f32.mrb[0].mxu0
    %v6886 = vadd.f32 %v6517, %v6885
    %v6887 = vpop.f32.mrb[0].mxu0
    %6888 = vmatprep.mubr.bf16.mxu0 %v2030
    %6889 = vmatmul.mubr.bf16.gmra.mrb[0].mxu0 %v2029
    %v6890 = vpop.f32.mrb[0].mxu0
    %v6891 = vadd.f32 %v6522, %v6890
    %v6892 = vpop.f32.mrb[0].mxu0
    %v6893 = vpop.f32.mrb[0].mxu0
    %v6894 = vadd.f32 %v6525, %v6893
    %v6895 = vpop.f32.mrb[0].mxu0
    %6896 = vmatprep.mubr.bf16.mxu0 %v2036
    %6897 = vmatmul.mubr.bf16.gmra.mrb[0].mxu0 %v2035
    %v6898 = vpop.f32.mrb[0].mxu0
    %v6899 = vadd.f32 %v6530, %v6898
    %v6900 = vpop.f32.mrb[0].mxu0
    %v6901 = vpop.f32.mrb[0].mxu0
    %v6902 = vadd.f32 %v6533, %v6901
    %v6903 = vpop.f32.mrb[0].mxu0
    %6904 = vmatprep.mubr.bf16.mxu0 %v2042
    %6905 = vmatmul.mubr.bf16.gmra.mrb[0].mxu0 %v2041
    %v6906 = vpop.f32.mrb[0].mxu0
    %v6907 = vadd.f32 %v6538, %v6906
    %v6908 = vpop.f32.mrb[0].mxu0
    %v6909 = vpop.f32.mrb[0].mxu0
    %v6910 = vadd.f32 %v6541, %v6909
    %v6911 = vpop.f32.mrb[0].mxu0
    %6912 = vmatprep.mubr.bf16.mxu0 %v2048
    %6913 = vmatmul.mubr.bf16.gmra.mrb[0].mxu0 %v2047
    %v6914 = vpop.f32.mrb[0].mxu0
    %v6915 = vadd.f32 %v6546, %v6914
    %v6916 = vpop.f32.mrb[0].mxu0
    %v6917 = vpop.f32.mrb[0].mxu0
    %v6918 = vadd.f32 %v6549, %v6917
    %v6919 = vpop.f32.mrb[0].mxu0
    %6920 = vmatprep.mubr.bf16.mxu0 %v2054
    %6921 = vmatmul.mubr.bf16.gmra.mrb[0].mxu0 %v2053
    %v6922 = vpop.f32.mrb[0].mxu0
    %v6923 = vadd.f32 %v6554, %v6922
    %v6924 = vpop.f32.mrb[0].mxu0
    %v6925 = vpop.f32.mrb[0].mxu0
    %v6926 = vadd.f32 %v6557, %v6925
    %v6927 = vpop.f32.mrb[0].mxu0
    %6928 = vmatprep.mubr.bf16.mxu0 %v2060
    %6929 = vmatmul.mubr.bf16.gmra.mrb[0].mxu0 %v2059
    %v6930 = vpop.f32.mrb[0].mxu0
    %v6931 = vadd.f32 %v6562, %v6930
    %v6932 = vpop.f32.mrb[0].mxu0
    %v6933 = vpop.f32.mrb[0].mxu0
    %v6934 = vadd.f32 %v6565, %v6933
    %v6935 = vpop.f32.mrb[0].mxu0
    %6936 = vmatprep.mubr.bf16.mxu0 %v2066
    %6937 = vmatmul.mubr.bf16.gmra.mrb[0].mxu0 %v2065
    %v6938 = vpop.f32.mrb[0].mxu0
    %v6939 = vadd.f32 %v6570, %v6938
    %v6940 = vpop.f32.mrb[0].mxu0
    %v6941 = vpop.f32.mrb[0].mxu0
    %v6942 = vadd.f32 %v6573, %v6941
    %v6943 = vpop.f32.mrb[0].mxu0
    %6944 = vmatprep.mubr.bf16.mxu0 %v2072
    %6945 = vmatmul.mubr.bf16.gmra.mrb[0].mxu0 %v2071
    %v6946 = vpop.f32.mrb[0].mxu0
    %v6947 = vadd.f32 %v6578, %v6946
    %v6948 = vpop.f32.mrb[0].mxu0
    %v6949 = vpop.f32.mrb[0].mxu0
    %v6950 = vadd.f32 %v6581, %v6949
    %v6951 = vpop.f32.mrb[0].mxu0
    %6952 = vmatprep.mubr.bf16.mxu0 %v2078
    %6953 = vmatmul.mubr.bf16.gmra.mrb[0].mxu0 %v2077
    %v6954 = vpop.f32.mrb[0].mxu0
    %v6955 = vadd.f32 %v6586, %v6954
    %v6956 = vpop.f32.mrb[0].mxu0
    %v6957 = vpop.f32.mrb[0].mxu0
    %v6958 = vadd.f32 %v6589, %v6957
    %v6959 = vpop.f32.mrb[0].mxu0
    %6960 = vmatprep.mubr.bf16.mxu0 %v2084
    %6961 = vmatmul.mubr.bf16.gmra.mrb[0].mxu0 %v2083
    %v6962 = vpop.f32.mrb[0].mxu0
    %v6963 = vadd.f32 %v6594, %v6962
    %v6964 = vpop.f32.mrb[0].mxu0
    %v6965 = vpop.f32.mrb[0].mxu0
    %v6966 = vadd.f32 %v6597, %v6965
    %v6967 = vpop.f32.mrb[0].mxu0
    %6968 = vmatprep.mubr.bf16.mxu0 %v2090
    %6969 = vmatmul.mubr.bf16.gmra.mrb[0].mxu0 %v2089
    %v6970 = vpop.f32.mrb[0].mxu0
    %v6971 = vadd.f32 %v6602, %v6970
    %v6972 = vpop.f32.mrb[0].mxu0
    %v6973 = vpop.f32.mrb[0].mxu0
    %v6974 = vadd.f32 %v6605, %v6973
    %v6975 = vpop.f32.mrb[0].mxu0
    %6976 = vmatprep.mubr.bf16.mxu0 %v2096
    %6977 = vmatmul.mubr.bf16.gmra.mrb[0].mxu0 %v2095
    %v6978 = vpop.f32.mrb[0].mxu0
    %v6979 = vadd.f32 %v6610, %v6978
    %v6980 = vpop.f32.mrb[0].mxu0
    %v6981 = vpop.f32.mrb[0].mxu0
    %v6982 = vadd.f32 %v6613, %v6981
    %v6983 = vpop.f32.mrb[0].mxu0
    %6984 = vmatprep.mubr.bf16.mxu0 %v2102
    %6985 = vmatmul.mubr.bf16.gmra.mrb[0].mxu0 %v2101
    %v6986 = vpop.f32.mrb[0].mxu0
    %v6987 = vadd.f32 %v6618, %v6986
    %v6988 = vpop.f32.mrb[0].mxu0
    %v6989 = vpop.f32.mrb[0].mxu0
    %v6990 = vadd.f32 %v6621, %v6989
    %v6991 = vpop.f32.mrb[0].mxu0
    %6992 = vmatprep.mubr.bf16.mxu0 %v2108
    %6993 = vmatmul.mubr.bf16.gmra.mrb[0].mxu0 %v2107
    %v6994 = vpop.f32.mrb[0].mxu0
    %v6995 = vadd.f32 %v6626, %v6994
    %v6996 = vpop.f32.mrb[0].mxu0
    %v6997 = vpop.f32.mrb[0].mxu0
    %v6998 = vadd.f32 %v6629, %v6997
    %v6999 = vpop.f32.mrb[0].mxu0
    %7000 = vmatprep.mubr.bf16.mxu0 %v2114
    %7001 = vmatmul.mubr.bf16.gmra.mrb[0].mxu0 %v2113
    %v7002 = vpop.f32.mrb[0].mxu0
    %v7003 = vadd.f32 %v6634, %v7002
    %v7004 = vpop.f32.mrb[0].mxu0
    %v7005 = vpop.f32.mrb[0].mxu0
    %v7006 = vadd.f32 %v6637, %v7005
    %v7007 = vpop.f32.mrb[0].mxu0
    %7008 = vmatprep.mubr.bf16.mxu0 %v2120
    %7009 = vmatmul.mubr.bf16.gmra.mrb[0].mxu0 %v2119
    %v7010 = vpop.f32.mrb[0].mxu0
    %v7011 = vadd.f32 %v6642, %v7010
    %v7012 = vpop.f32.mrb[0].mxu0
    %v7013 = vpop.f32.mrb[0].mxu0
    %v7014 = vadd.f32 %v6645, %v7013
    %v7015 = vpop.f32.mrb[0].mxu0
    %7016 = vmatprep.mubr.bf16.mxu0 %v2126
    %7017 = vmatmul.mubr.bf16.gmra.mrb[0].mxu0 %v2125
    %v7018 = vpop.f32.mrb[0].mxu0
    %v7019 = vadd.f32 %v6650, %v7018
    %v7020 = vpop.f32.mrb[0].mxu0
    %v7021 = vpop.f32.mrb[0].mxu0
    %v7022 = vadd.f32 %v6653, %v7021
    %v7023 = vpop.f32.mrb[0].mxu0
    %7024 = vmatprep.mubr.bf16.mxu0 %v2132
    %7025 = vmatmul.mubr.bf16.gmra.mrb[0].mxu0 %v2131
    %v7026 = vpop.f32.mrb[0].mxu0
    %v7027 = vadd.f32 %v6658, %v7026
    %v7028 = vpop.f32.mrb[0].mxu0
    %v7029 = vpop.f32.mrb[0].mxu0
    %v7030 = vadd.f32 %v6661, %v7029
    %v7031 = vpop.f32.mrb[0].mxu0
    %7032 = vmatprep.mubr.bf16.mxu0 %v2138
    %7033 = vmatmul.mubr.bf16.gmra.mrb[0].mxu0 %v2137
    %v7034 = vpop.f32.mrb[0].mxu0
    %v7035 = vadd.f32 %v6666, %v7034
    %v7036 = vpop.f32.mrb[0].mxu0
    %v7037 = vpop.f32.mrb[0].mxu0
    %v7038 = vadd.f32 %v6669, %v7037
    %v7039 = vpop.f32.mrb[0].mxu0
    %7040 = vmatprep.mubr.bf16.mxu0 %v2144
    %7041 = vmatmul.mubr.bf16.gmra.mrb[0].mxu0 %v2143
    %v7042 = vpop.f32.mrb[0].mxu0
    %v7043 = vadd.f32 %v6674, %v7042
    %v7044 = vpop.f32.mrb[0].mxu0
    %v7045 = vpop.f32.mrb[0].mxu0
    %v7046 = vadd.f32 %v6677, %v7045
    %v7047 = vpop.f32.mrb[0].mxu0
    %7048 = vmatprep.mubr.bf16.mxu0 %v2150
    %7049 = vmatmul.mubr.bf16.gmra.mrb[0].mxu0 %v2149
    %v7050 = vpop.f32.mrb[0].mxu0
    %v7051 = vadd.f32 %v6682, %v7050
    %v7052 = vpop.f32.mrb[0].mxu0
    %v7053 = vpop.f32.mrb[0].mxu0
    %v7054 = vadd.f32 %v6685, %v7053
    %v7055 = vpop.f32.mrb[0].mxu0
    %7056 = vmatprep.mubr.bf16.mxu0 %v2156
    %7057 = vmatmul.mubr.bf16.gmra.mrb[0].mxu0 %v2155
    %v7058 = vpop.f32.mrb[0].mxu0
    %v7059 = vadd.f32 %v6690, %v7058
    %v7060 = vpop.f32.mrb[0].mxu0
    %v7061 = vpop.f32.mrb[0].mxu0
    %v7062 = vadd.f32 %v6693, %v7061
    %v7063 = vpop.f32.mrb[0].mxu0
    %7064 = vmatprep.mubr.bf16.mxu0 %v2162
    %7065 = vmatmul.mubr.bf16.gmra.mrb[0].mxu0 %v2161
    %v7066 = vpop.f32.mrb[0].mxu0
    %v7067 = vadd.f32 %v6698, %v7066
    %v7068 = vpop.f32.mrb[0].mxu0
    %v7069 = vpop.f32.mrb[0].mxu0
    %v7070 = vadd.f32 %v6701, %v7069
    %v7071 = vpop.f32.mrb[0].mxu0
    %7072 = vmatprep.mubr.bf16.mxu0 %v2168
    %7073 = vmatmul.mubr.bf16.gmra.mrb[0].mxu0 %v2167
    %v7074 = vpop.f32.mrb[0].mxu0
    %v7075 = vadd.f32 %v6706, %v7074
    %v7076 = vpop.f32.mrb[0].mxu0
    %v7077 = vpop.f32.mrb[0].mxu0
    %v7078 = vadd.f32 %v6709, %v7077
    %v7079 = vpop.f32.mrb[0].mxu0
    %7080 = vmatprep.mubr.bf16.mxu0 %v2174
    %7081 = vmatmul.mubr.bf16.gmra.mrb[0].mxu0 %v2173
    %v7082 = vpop.f32.mrb[0].mxu0
    %v7083 = vadd.f32 %v6714, %v7082
    %v7084 = vpop.f32.mrb[0].mxu0
    %v7085 = vpop.f32.mrb[0].mxu0
    %v7086 = vadd.f32 %v6717, %v7085
    %v7087 = vpop.f32.mrb[0].mxu0
    %7088 = vmatprep.mubr.bf16.mxu0 %v2180
    %7089 = vmatmul.mubr.bf16.gmra.mrb[0].mxu0 %v2179
    %v7090 = vpop.f32.mrb[0].mxu0
    %v7091 = vadd.f32 %v6722, %v7090
    %v7092 = vpop.f32.mrb[0].mxu0
    %v7093 = vpop.f32.mrb[0].mxu0
    %v7094 = vadd.f32 %v6725, %v7093
    %v7095 = vpop.f32.mrb[0].mxu0
    %7096 = vmatprep.mubr.bf16.mxu0 %v2186
    %7097 = vmatmul.mubr.bf16.gmra.mrb[0].mxu0 %v2185
    %v7098 = vpop.f32.mrb[0].mxu0
    %v7099 = vadd.f32 %v6730, %v7098
    %v7100 = vpop.f32.mrb[0].mxu0
    %v7101 = vpop.f32.mrb[0].mxu0
    %v7102 = vadd.f32 %v6733, %v7101
    %v7103 = vpop.f32.mrb[0].mxu0
    %7104 = vmatprep.mubr.bf16.mxu0 %v2192
    %7105 = vmatmul.mubr.bf16.gmra.mrb[0].mxu0 %v2191
    %v7106 = vpop.f32.mrb[0].mxu0
    %v7107 = vadd.f32 %v6738, %v7106
    %v7108 = vpop.f32.mrb[0].mxu0
    %v7109 = vpop.f32.mrb[0].mxu0
    %v7110 = vadd.f32 %v6741, %v7109
    %v7111 = vpop.f32.mrb[0].mxu0
    %7112 = vmatprep.mubr.bf16.mxu0 %v2198
    %7113 = vmatmul.mubr.bf16.gmra.mrb[0].mxu0 %v2197
    %v7114 = vpop.f32.mrb[0].mxu0
    %v7115 = vadd.f32 %v6746, %v7114
    %v7116 = vpop.f32.mrb[0].mxu0
    %v7117 = vpop.f32.mrb[0].mxu0
    %v7118 = vadd.f32 %v6749, %v7117
    %v7119 = vpop.f32.mrb[0].mxu0
    %7120 = vmatprep.mubr.bf16.mxu0 %v2204
    %7121 = vmatmul.mubr.bf16.gmra.mrb[0].mxu0 %v2203
    %v7122 = vpop.f32.mrb[0].mxu0
    %v7123 = vadd.f32 %v6754, %v7122
    %v7124 = vpop.f32.mrb[0].mxu0
    %v7125 = vpop.f32.mrb[0].mxu0
    %v7126 = vadd.f32 %v6757, %v7125
    %v7127 = vpop.f32.mrb[0].mxu0
    %7128 = vmatprep.mubr.bf16.mxu0 %v2210
    %7129 = vmatmul.mubr.bf16.gmra.mrb[0].mxu0 %v2209
    %v7130 = vpop.f32.mrb[0].mxu0
    %v7131 = vadd.f32 %v6762, %v7130
    %v7132 = vpop.f32.mrb[0].mxu0
    %v7133 = vpop.f32.mrb[0].mxu0
    %v7134 = vadd.f32 %v6765, %v7133
    %v7135 = vpop.f32.mrb[0].mxu0
    %7136 = vmatprep.mubr.bf16.mxu0 %v2216
    %7137 = vmatmul.mubr.bf16.gmra.mrb[0].mxu0 %v2215
    %v7138 = vpop.f32.mrb[0].mxu0
    %v7139 = vadd.f32 %v6770, %v7138
    %v7140 = vpop.f32.mrb[0].mxu0
    %v7141 = vpop.f32.mrb[0].mxu0
    %v7142 = vadd.f32 %v6773, %v7141
    %v7143 = vpop.f32.mrb[0].mxu0
    %7144 = vmatprep.mubr.bf16.mxu0 %v2222
    %7145 = vmatmul.mubr.bf16.gmra.mrb[0].mxu0 %v2221
    %v7146 = vpop.f32.mrb[0].mxu0
    %v7147 = vadd.f32 %v6778, %v7146
    %v7148 = vpop.f32.mrb[0].mxu0
    %v7149 = vpop.f32.mrb[0].mxu0
    %v7150 = vadd.f32 %v6781, %v7149
    %v7151 = vpop.f32.mrb[0].mxu0
    %7152 = vmatprep.mubr.bf16.mxu0 %v2228
    %7153 = vmatmul.mubr.bf16.gmra.mrb[0].mxu0 %v2227
    %v7154 = vpop.f32.mrb[0].mxu0
    %v7155 = vadd.f32 %v6786, %v7154
    %v7156 = vpop.f32.mrb[0].mxu0
    %v7157 = vpop.f32.mrb[0].mxu0
    %v7158 = vadd.f32 %v6789, %v7157
    %v7159 = vpop.f32.mrb[0].mxu0
    %7160 = vmatprep.mubr.bf16.mxu0 %v2234
    %7161 = vmatmul.mubr.bf16.gmra.mrb[0].mxu0 %v2233
    %v7162 = vpop.f32.mrb[0].mxu0
    %v7163 = vadd.f32 %v6794, %v7162
    %v7164 = vpop.f32.mrb[0].mxu0
    %v7165 = vpop.f32.mrb[0].mxu0
    %v7166 = vadd.f32 %v6797, %v7165
    %v7167 = vpop.f32.mrb[0].mxu0
    %7168 = vmatprep.mubr.bf16.mxu0 %v2240
    %7169 = vmatmul.mubr.bf16.gmra.mrb[0].mxu0 %v2239
    %v7170 = vpop.f32.mrb[0].mxu0
    %v7171 = vadd.f32 %v6802, %v7170
    %v7172 = vpop.f32.mrb[0].mxu0
    %v7173 = vpop.f32.mrb[0].mxu0
    %v7174 = vadd.f32 %v6805, %v7173
    %v7175 = vpop.f32.mrb[0].mxu0
    %7176 = vmatprep.mubr.bf16.mxu0 %v2246
    %7177 = vmatmul.mubr.bf16.gmra.mrb[0].mxu0 %v2245
    %v7178 = vpop.f32.mrb[0].mxu0
    %v7179 = vadd.f32 %v6810, %v7178
    %v7180 = vpop.f32.mrb[0].mxu0
    %v7181 = vpop.f32.mrb[0].mxu0
    %v7182 = vadd.f32 %v6813, %v7181
    %v7183 = vpop.f32.mrb[0].mxu0
    %7184 = vmatprep.mubr.bf16.mxu0 %v2252
    %7185 = vmatmul.mubr.bf16.gmra.mrb[0].mxu0 %v2251
    %v7186 = vpop.f32.mrb[0].mxu0
    %v7187 = vadd.f32 %v6818, %v7186
    %v7188 = vpop.f32.mrb[0].mxu0
    %v7189 = vpop.f32.mrb[0].mxu0
    %v7190 = vadd.f32 %v6821, %v7189
    %v7191 = vpop.f32.mrb[0].mxu0
    %7192 = vmatprep.mubr.bf16.mxu0 %v2258
    %7193 = vmatmul.mubr.bf16.gmra.mrb[0].mxu0 %v2257
    %v7194 = vpop.f32.mrb[0].mxu0
    %v7195 = vadd.f32 %v6826, %v7194
    %v7196 = vpop.f32.mrb[0].mxu0
    %v7197 = vpop.f32.mrb[0].mxu0
    %v7198 = vadd.f32 %v6829, %v7197
    %v7199 = vpop.f32.mrb[0].mxu0
    %7200 = vmatprep.mubr.bf16.mxu0 %v2264
    %7201 = vmatmul.mubr.bf16.gmra.mrb[0].mxu0 %v2263
    %v7202 = vpop.f32.mrb[0].mxu0
    %v7203 = vadd.f32 %v6834, %v7202
    %v7204 = vpop.f32.mrb[0].mxu0
    %v7205 = vpop.f32.mrb[0].mxu0
    %v7206 = vadd.f32 %v6837, %v7205
    %v7207 = vpop.f32.mrb[0].mxu0
    %7208 = vdwg.mxu0
    %7209 = vmatprep.subr.bf16.mxu0 0
    %7210 = vmatpush1.bf16.msra.mxu0 %v1447
    %7211 = vmatprep.subr.bf16.mxu0 0
    %7212 = vmatpush1.bf16.msra.mxu0 %v1454
    %7213 = vmatprep.subr.bf16.mxu0 0
    %7214 = vmatpush1.bf16.msra.mxu0 %v1461
    %7215 = vmatprep.subr.bf16.mxu0 0
    %7216 = vmatpush1.bf16.msra.mxu0 %v1468
    %7217 = vmatprep.subr.bf16.mxu0 0
    %7218 = vmatpush1.bf16.msra.mxu0 %v1475
    %7219 = vmatprep.subr.bf16.mxu0 0
    %7220 = vmatpush1.bf16.msra.mxu0 %v1482
    %7221 = vmatprep.subr.bf16.mxu0 0
    %7222 = vmatpush1.bf16.msra.mxu0 %v1489
    %7223 = vmatprep.subr.bf16.mxu0 0
    %7224 = vmatpush1.bf16.msra.mxu0 %v1496
    %7225 = vmatprep.subr.bf16.mxu0 0
    %7226 = vmatpush1.bf16.msra.mxu0 %v1503
    %7227 = vmatprep.subr.bf16.mxu0 0
    %7228 = vmatpush1.bf16.msra.mxu0 %v1510
    %7229 = vmatprep.subr.bf16.mxu0 0
    %7230 = vmatpush1.bf16.msra.mxu0 0
    %7231 = vmatprep.subr.bf16.mxu0 0
    %7232 = vmatpush1.bf16.msra.mxu0 0
    %7233 = vmatprep.subr.bf16.mxu0 0
    %7234 = vmatpush1.bf16.msra.mxu0 0
    %7235 = vmatprep.subr.bf16.mxu0 0
    %7236 = vmatpush1.bf16.msra.mxu0 0
    %7237 = vmatprep.subr.bf16.mxu0 0
    %7238 = vmatpush1.bf16.msra.mxu0 0
    %7239 = vmatprep.subr.bf16.mxu0 0
    %7240 = vmatpush1.bf16.msra.mxu0 0
    %7241 = vmatprep.mubr.bf16.mxu0 %v2269
    %7242 = vmatmul.mubr.bf16.gmra.mrb[0].mxu0 %v2019
    %v7243 = vpop.f32.mrb[0].mxu0
    %v7244 = vadd.f32 %v6875, %v7243
    %v7245 = vpop.f32.mrb[0].mxu0
    %v7246 = vpop.f32.mrb[0].mxu0
    %v7247 = vadd.f32 %v6878, %v7246
    %v7248 = vpop.f32.mrb[0].mxu0
    %7249 = vmatprep.mubr.bf16.mxu0 %v2272
    %7250 = vmatmul.mubr.bf16.gmra.mrb[0].mxu0 %v2025
    %v7251 = vpop.f32.mrb[0].mxu0
    %v7252 = vadd.f32 %v6883, %v7251
    %v7253 = vpop.f32.mrb[0].mxu0
    %v7254 = vpop.f32.mrb[0].mxu0
    %v7255 = vadd.f32 %v6886, %v7254
    %v7256 = vpop.f32.mrb[0].mxu0
    %7257 = vmatprep.mubr.bf16.mxu0 %v2275
    %7258 = vmatmul.mubr.bf16.gmra.mrb[0].mxu0 %v2031
    %v7259 = vpop.f32.mrb[0].mxu0
    %v7260 = vadd.f32 %v6891, %v7259
    %v7261 = vpop.f32.mrb[0].mxu0
    %v7262 = vpop.f32.mrb[0].mxu0
    %v7263 = vadd.f32 %v6894, %v7262
    %v7264 = vpop.f32.mrb[0].mxu0
    %7265 = vmatprep.mubr.bf16.mxu0 %v2278
    %7266 = vmatmul.mubr.bf16.gmra.mrb[0].mxu0 %v2037
    %v7267 = vpop.f32.mrb[0].mxu0
    %v7268 = vadd.f32 %v6899, %v7267
    %v7269 = vpop.f32.mrb[0].mxu0
    %v7270 = vpop.f32.mrb[0].mxu0
    %v7271 = vadd.f32 %v6902, %v7270
    %v7272 = vpop.f32.mrb[0].mxu0
    %7273 = vmatprep.mubr.bf16.mxu0 %v2281
    %7274 = vmatmul.mubr.bf16.gmra.mrb[0].mxu0 %v2043
    %v7275 = vpop.f32.mrb[0].mxu0
    %v7276 = vadd.f32 %v6907, %v7275
    %v7277 = vpop.f32.mrb[0].mxu0
    %v7278 = vpop.f32.mrb[0].mxu0
    %v7279 = vadd.f32 %v6910, %v7278
    %v7280 = vpop.f32.mrb[0].mxu0
    %7281 = vmatprep.mubr.bf16.mxu0 %v2284
    %7282 = vmatmul.mubr.bf16.gmra.mrb[0].mxu0 %v2049
    %v7283 = vpop.f32.mrb[0].mxu0
    %v7284 = vadd.f32 %v6915, %v7283
    %v7285 = vpop.f32.mrb[0].mxu0
    %v7286 = vpop.f32.mrb[0].mxu0
    %v7287 = vadd.f32 %v6918, %v7286
    %v7288 = vpop.f32.mrb[0].mxu0
    %7289 = vmatprep.mubr.bf16.mxu0 %v2287
    %7290 = vmatmul.mubr.bf16.gmra.mrb[0].mxu0 %v2055
    %v7291 = vpop.f32.mrb[0].mxu0
    %v7292 = vadd.f32 %v6923, %v7291
    %v7293 = vpop.f32.mrb[0].mxu0
    %v7294 = vpop.f32.mrb[0].mxu0
    %v7295 = vadd.f32 %v6926, %v7294
    %v7296 = vpop.f32.mrb[0].mxu0
    %7297 = vmatprep.mubr.bf16.mxu0 %v2290
    %7298 = vmatmul.mubr.bf16.gmra.mrb[0].mxu0 %v2061
    %v7299 = vpop.f32.mrb[0].mxu0
    %v7300 = vadd.f32 %v6931, %v7299
    %v7301 = vpop.f32.mrb[0].mxu0
    %v7302 = vpop.f32.mrb[0].mxu0
    %v7303 = vadd.f32 %v6934, %v7302
    %v7304 = vpop.f32.mrb[0].mxu0
    %7305 = vmatprep.mubr.bf16.mxu0 %v2293
    %7306 = vmatmul.mubr.bf16.gmra.mrb[0].mxu0 %v2067
    %v7307 = vpop.f32.mrb[0].mxu0
    %v7308 = vadd.f32 %v6939, %v7307
    %v7309 = vpop.f32.mrb[0].mxu0
    %v7310 = vpop.f32.mrb[0].mxu0
    %v7311 = vadd.f32 %v6942, %v7310
    %v7312 = vpop.f32.mrb[0].mxu0
    %7313 = vmatprep.mubr.bf16.mxu0 %v2296
    %7314 = vmatmul.mubr.bf16.gmra.mrb[0].mxu0 %v2073
    %v7315 = vpop.f32.mrb[0].mxu0
    %v7316 = vadd.f32 %v6947, %v7315
    %v7317 = vpop.f32.mrb[0].mxu0
    %v7318 = vpop.f32.mrb[0].mxu0
    %v7319 = vadd.f32 %v6950, %v7318
    %v7320 = vpop.f32.mrb[0].mxu0
    %7321 = vmatprep.mubr.bf16.mxu0 %v2299
    %7322 = vmatmul.mubr.bf16.gmra.mrb[0].mxu0 %v2079
    %v7323 = vpop.f32.mrb[0].mxu0
    %v7324 = vadd.f32 %v6955, %v7323
    %v7325 = vpop.f32.mrb[0].mxu0
    %v7326 = vpop.f32.mrb[0].mxu0
    %v7327 = vadd.f32 %v6958, %v7326
    %v7328 = vpop.f32.mrb[0].mxu0
    %7329 = vmatprep.mubr.bf16.mxu0 %v2302
    %7330 = vmatmul.mubr.bf16.gmra.mrb[0].mxu0 %v2085
    %v7331 = vpop.f32.mrb[0].mxu0
    %v7332 = vadd.f32 %v6963, %v7331
    %v7333 = vpop.f32.mrb[0].mxu0
    %v7334 = vpop.f32.mrb[0].mxu0
    %v7335 = vadd.f32 %v6966, %v7334
    %v7336 = vpop.f32.mrb[0].mxu0
    %7337 = vmatprep.mubr.bf16.mxu0 %v2305
    %7338 = vmatmul.mubr.bf16.gmra.mrb[0].mxu0 %v2091
    %v7339 = vpop.f32.mrb[0].mxu0
    %v7340 = vadd.f32 %v6971, %v7339
    %v7341 = vpop.f32.mrb[0].mxu0
    %v7342 = vpop.f32.mrb[0].mxu0
    %v7343 = vadd.f32 %v6974, %v7342
    %v7344 = vpop.f32.mrb[0].mxu0
    %7345 = vmatprep.mubr.bf16.mxu0 %v2308
    %7346 = vmatmul.mubr.bf16.gmra.mrb[0].mxu0 %v2097
    %v7347 = vpop.f32.mrb[0].mxu0
    %v7348 = vadd.f32 %v6979, %v7347
    %v7349 = vpop.f32.mrb[0].mxu0
    %v7350 = vpop.f32.mrb[0].mxu0
    %v7351 = vadd.f32 %v6982, %v7350
    %v7352 = vpop.f32.mrb[0].mxu0
    %7353 = vmatprep.mubr.bf16.mxu0 %v2311
    %7354 = vmatmul.mubr.bf16.gmra.mrb[0].mxu0 %v2103
    %v7355 = vpop.f32.mrb[0].mxu0
    %v7356 = vadd.f32 %v6987, %v7355
    %v7357 = vpop.f32.mrb[0].mxu0
    %v7358 = vpop.f32.mrb[0].mxu0
    %v7359 = vadd.f32 %v6990, %v7358
    %v7360 = vpop.f32.mrb[0].mxu0
    %7361 = vmatprep.mubr.bf16.mxu0 %v2314
    %7362 = vmatmul.mubr.bf16.gmra.mrb[0].mxu0 %v2109
    %v7363 = vpop.f32.mrb[0].mxu0
    %v7364 = vadd.f32 %v6995, %v7363
    %v7365 = vpop.f32.mrb[0].mxu0
    %v7366 = vpop.f32.mrb[0].mxu0
    %v7367 = vadd.f32 %v6998, %v7366
    %v7368 = vpop.f32.mrb[0].mxu0
    %7369 = vmatprep.mubr.bf16.mxu0 %v2317
    %7370 = vmatmul.mubr.bf16.gmra.mrb[0].mxu0 %v2115
    %v7371 = vpop.f32.mrb[0].mxu0
    %v7372 = vadd.f32 %v7003, %v7371
    %v7373 = vpop.f32.mrb[0].mxu0
    %v7374 = vpop.f32.mrb[0].mxu0
    %v7375 = vadd.f32 %v7006, %v7374
    %v7376 = vpop.f32.mrb[0].mxu0
    %7377 = vmatprep.mubr.bf16.mxu0 %v2320
    %7378 = vmatmul.mubr.bf16.gmra.mrb[0].mxu0 %v2121
    %v7379 = vpop.f32.mrb[0].mxu0
    %v7380 = vadd.f32 %v7011, %v7379
    %v7381 = vpop.f32.mrb[0].mxu0
    %v7382 = vpop.f32.mrb[0].mxu0
    %v7383 = vadd.f32 %v7014, %v7382
    %v7384 = vpop.f32.mrb[0].mxu0
    %7385 = vmatprep.mubr.bf16.mxu0 %v2323
    %7386 = vmatmul.mubr.bf16.gmra.mrb[0].mxu0 %v2127
    %v7387 = vpop.f32.mrb[0].mxu0
    %v7388 = vadd.f32 %v7019, %v7387
    %v7389 = vpop.f32.mrb[0].mxu0
    %v7390 = vpop.f32.mrb[0].mxu0
    %v7391 = vadd.f32 %v7022, %v7390
    %v7392 = vpop.f32.mrb[0].mxu0
    %7393 = vmatprep.mubr.bf16.mxu0 %v2326
    %7394 = vmatmul.mubr.bf16.gmra.mrb[0].mxu0 %v2133
    %v7395 = vpop.f32.mrb[0].mxu0
    %v7396 = vadd.f32 %v7027, %v7395
    %v7397 = vpop.f32.mrb[0].mxu0
    %v7398 = vpop.f32.mrb[0].mxu0
    %v7399 = vadd.f32 %v7030, %v7398
    %v7400 = vpop.f32.mrb[0].mxu0
    %7401 = vmatprep.mubr.bf16.mxu0 %v2329
    %7402 = vmatmul.mubr.bf16.gmra.mrb[0].mxu0 %v2139
    %v7403 = vpop.f32.mrb[0].mxu0
    %v7404 = vadd.f32 %v7035, %v7403
    %v7405 = vpop.f32.mrb[0].mxu0
    %v7406 = vpop.f32.mrb[0].mxu0
    %v7407 = vadd.f32 %v7038, %v7406
    %v7408 = vpop.f32.mrb[0].mxu0
    %7409 = vmatprep.mubr.bf16.mxu0 %v2332
    %7410 = vmatmul.mubr.bf16.gmra.mrb[0].mxu0 %v2145
    %v7411 = vpop.f32.mrb[0].mxu0
    %v7412 = vadd.f32 %v7043, %v7411
    %v7413 = vpop.f32.mrb[0].mxu0
    %v7414 = vpop.f32.mrb[0].mxu0
    %v7415 = vadd.f32 %v7046, %v7414
    %v7416 = vpop.f32.mrb[0].mxu0
    %7417 = vmatprep.mubr.bf16.mxu0 %v2335
    %7418 = vmatmul.mubr.bf16.gmra.mrb[0].mxu0 %v2151
    %v7419 = vpop.f32.mrb[0].mxu0
    %v7420 = vadd.f32 %v7051, %v7419
    %v7421 = vpop.f32.mrb[0].mxu0
    %v7422 = vpop.f32.mrb[0].mxu0
    %v7423 = vadd.f32 %v7054, %v7422
    %v7424 = vpop.f32.mrb[0].mxu0
    %7425 = vmatprep.mubr.bf16.mxu0 %v2338
    %7426 = vmatmul.mubr.bf16.gmra.mrb[0].mxu0 %v2157
    %v7427 = vpop.f32.mrb[0].mxu0
    %v7428 = vadd.f32 %v7059, %v7427
    %v7429 = vpop.f32.mrb[0].mxu0
    %v7430 = vpop.f32.mrb[0].mxu0
    %v7431 = vadd.f32 %v7062, %v7430
    %v7432 = vpop.f32.mrb[0].mxu0
    %7433 = vmatprep.mubr.bf16.mxu0 %v2341
    %7434 = vmatmul.mubr.bf16.gmra.mrb[0].mxu0 %v2163
    %v7435 = vpop.f32.mrb[0].mxu0
    %v7436 = vadd.f32 %v7067, %v7435
    %v7437 = vpop.f32.mrb[0].mxu0
    %v7438 = vpop.f32.mrb[0].mxu0
    %v7439 = vadd.f32 %v7070, %v7438
    %v7440 = vpop.f32.mrb[0].mxu0
    %7441 = vmatprep.mubr.bf16.mxu0 %v2344
    %7442 = vmatmul.mubr.bf16.gmra.mrb[0].mxu0 %v2169
    %v7443 = vpop.f32.mrb[0].mxu0
    %v7444 = vadd.f32 %v7075, %v7443
    %v7445 = vpop.f32.mrb[0].mxu0
    %v7446 = vpop.f32.mrb[0].mxu0
    %v7447 = vadd.f32 %v7078, %v7446
    %v7448 = vpop.f32.mrb[0].mxu0
    %7449 = vmatprep.mubr.bf16.mxu0 %v2347
    %7450 = vmatmul.mubr.bf16.gmra.mrb[0].mxu0 %v2175
    %v7451 = vpop.f32.mrb[0].mxu0
    %v7452 = vadd.f32 %v7083, %v7451
    %v7453 = vpop.f32.mrb[0].mxu0
    %v7454 = vpop.f32.mrb[0].mxu0
    %v7455 = vadd.f32 %v7086, %v7454
    %v7456 = vpop.f32.mrb[0].mxu0
    %7457 = vmatprep.mubr.bf16.mxu0 %v2350
    %7458 = vmatmul.mubr.bf16.gmra.mrb[0].mxu0 %v2181
    %v7459 = vpop.f32.mrb[0].mxu0
    %v7460 = vadd.f32 %v7091, %v7459
    %v7461 = vpop.f32.mrb[0].mxu0
    %v7462 = vpop.f32.mrb[0].mxu0
    %v7463 = vadd.f32 %v7094, %v7462
    %v7464 = vpop.f32.mrb[0].mxu0
    %7465 = vmatprep.mubr.bf16.mxu0 %v2353
    %7466 = vmatmul.mubr.bf16.gmra.mrb[0].mxu0 %v2187
    %v7467 = vpop.f32.mrb[0].mxu0
    %v7468 = vadd.f32 %v7099, %v7467
    %v7469 = vpop.f32.mrb[0].mxu0
    %v7470 = vpop.f32.mrb[0].mxu0
    %v7471 = vadd.f32 %v7102, %v7470
    %v7472 = vpop.f32.mrb[0].mxu0
    %7473 = vmatprep.mubr.bf16.mxu0 %v2356
    %7474 = vmatmul.mubr.bf16.gmra.mrb[0].mxu0 %v2193
    %v7475 = vpop.f32.mrb[0].mxu0
    %v7476 = vadd.f32 %v7107, %v7475
    %v7477 = vpop.f32.mrb[0].mxu0
    %v7478 = vpop.f32.mrb[0].mxu0
    %v7479 = vadd.f32 %v7110, %v7478
    %v7480 = vpop.f32.mrb[0].mxu0
    %7481 = vmatprep.mubr.bf16.mxu0 %v2359
    %7482 = vmatmul.mubr.bf16.gmra.mrb[0].mxu0 %v2199
    %v7483 = vpop.f32.mrb[0].mxu0
    %v7484 = vadd.f32 %v7115, %v7483
    %v7485 = vpop.f32.mrb[0].mxu0
    %v7486 = vpop.f32.mrb[0].mxu0
    %v7487 = vadd.f32 %v7118, %v7486
    %v7488 = vpop.f32.mrb[0].mxu0
    %7489 = vmatprep.mubr.bf16.mxu0 %v2362
    %7490 = vmatmul.mubr.bf16.gmra.mrb[0].mxu0 %v2205
    %v7491 = vpop.f32.mrb[0].mxu0
    %v7492 = vadd.f32 %v7123, %v7491
    %v7493 = vpop.f32.mrb[0].mxu0
    %v7494 = vpop.f32.mrb[0].mxu0
    %v7495 = vadd.f32 %v7126, %v7494
    %v7496 = vpop.f32.mrb[0].mxu0
    %7497 = vmatprep.mubr.bf16.mxu0 %v2365
    %7498 = vmatmul.mubr.bf16.gmra.mrb[0].mxu0 %v2211
    %v7499 = vpop.f32.mrb[0].mxu0
    %v7500 = vadd.f32 %v7131, %v7499
    %v7501 = vpop.f32.mrb[0].mxu0
    %v7502 = vpop.f32.mrb[0].mxu0
    %v7503 = vadd.f32 %v7134, %v7502
    %v7504 = vpop.f32.mrb[0].mxu0
    %7505 = vmatprep.mubr.bf16.mxu0 %v2368
    %7506 = vmatmul.mubr.bf16.gmra.mrb[0].mxu0 %v2217
    %v7507 = vpop.f32.mrb[0].mxu0
    %v7508 = vadd.f32 %v7139, %v7507
    %v7509 = vpop.f32.mrb[0].mxu0
    %v7510 = vpop.f32.mrb[0].mxu0
    %v7511 = vadd.f32 %v7142, %v7510
    %v7512 = vpop.f32.mrb[0].mxu0
    %7513 = vmatprep.mubr.bf16.mxu0 %v2371
    %7514 = vmatmul.mubr.bf16.gmra.mrb[0].mxu0 %v2223
    %v7515 = vpop.f32.mrb[0].mxu0
    %v7516 = vadd.f32 %v7147, %v7515
    %v7517 = vpop.f32.mrb[0].mxu0
    %v7518 = vpop.f32.mrb[0].mxu0
    %v7519 = vadd.f32 %v7150, %v7518
    %v7520 = vpop.f32.mrb[0].mxu0
    %7521 = vmatprep.mubr.bf16.mxu0 %v2374
    %7522 = vmatmul.mubr.bf16.gmra.mrb[0].mxu0 %v2229
    %v7523 = vpop.f32.mrb[0].mxu0
    %v7524 = vadd.f32 %v7155, %v7523
    %v7525 = vpop.f32.mrb[0].mxu0
    %v7526 = vpop.f32.mrb[0].mxu0
    %v7527 = vadd.f32 %v7158, %v7526
    %v7528 = vpop.f32.mrb[0].mxu0
    %7529 = vmatprep.mubr.bf16.mxu0 %v2377
    %7530 = vmatmul.mubr.bf16.gmra.mrb[0].mxu0 %v2235
    %v7531 = vpop.f32.mrb[0].mxu0
    %v7532 = vadd.f32 %v7163, %v7531
    %v7533 = vpop.f32.mrb[0].mxu0
    %v7534 = vpop.f32.mrb[0].mxu0
    %v7535 = vadd.f32 %v7166, %v7534
    %v7536 = vpop.f32.mrb[0].mxu0
    %7537 = vmatprep.mubr.bf16.mxu0 %v2380
    %7538 = vmatmul.mubr.bf16.gmra.mrb[0].mxu0 %v2241
    %v7539 = vpop.f32.mrb[0].mxu0
    %v7540 = vadd.f32 %v7171, %v7539
    %v7541 = vpop.f32.mrb[0].mxu0
    %v7542 = vpop.f32.mrb[0].mxu0
    %v7543 = vadd.f32 %v7174, %v7542
    %v7544 = vpop.f32.mrb[0].mxu0
    %7545 = vmatprep.mubr.bf16.mxu0 %v2383
    %7546 = vmatmul.mubr.bf16.gmra.mrb[0].mxu0 %v2247
    %v7547 = vpop.f32.mrb[0].mxu0
    %v7548 = vadd.f32 %v7179, %v7547
    %v7549 = vpop.f32.mrb[0].mxu0
    %v7550 = vpop.f32.mrb[0].mxu0
    %v7551 = vadd.f32 %v7182, %v7550
    %v7552 = vpop.f32.mrb[0].mxu0
    %7553 = vmatprep.mubr.bf16.mxu0 %v2386
    %7554 = vmatmul.mubr.bf16.gmra.mrb[0].mxu0 %v2253
    %v7555 = vpop.f32.mrb[0].mxu0
    %v7556 = vadd.f32 %v7187, %v7555
    %v7557 = vpop.f32.mrb[0].mxu0
    %v7558 = vpop.f32.mrb[0].mxu0
    %v7559 = vadd.f32 %v7190, %v7558
    %v7560 = vpop.f32.mrb[0].mxu0
    %7561 = vmatprep.mubr.bf16.mxu0 %v2389
    %7562 = vmatmul.mubr.bf16.gmra.mrb[0].mxu0 %v2259
    %v7563 = vpop.f32.mrb[0].mxu0
    %v7564 = vadd.f32 %v7195, %v7563
    %v7565 = vpop.f32.mrb[0].mxu0
    %v7566 = vpop.f32.mrb[0].mxu0
    %v7567 = vadd.f32 %v7198, %v7566
    %v7568 = vpop.f32.mrb[0].mxu0
    %7569 = vmatprep.mubr.bf16.mxu0 %v2392
    %7570 = vmatmul.mubr.bf16.gmra.mrb[0].mxu0 %v2265
    %v7571 = vpop.f32.mrb[0].mxu0
    %v7572 = vadd.f32 %v7203, %v7571
    %v7573 = vpop.f32.mrb[0].mxu0
    %v7574 = vpop.f32.mrb[0].mxu0
    %v7575 = vadd.f32 %v7206, %v7574
    %v7576 = vpop.f32.mrb[0].mxu0
    %7577 = vdwg.mxu0
    %7578 = vst [vmem:[#allocation7] sm:$0xff] %v3335
    %7579 = vst [vmem:[#allocation7 + $0x8] sm:$0xff] %v3337
    %7580 = vst [vmem:[#allocation7 + $0x10] sm:$0xff] %v4694
    %7581 = vst [vmem:[#allocation7 + $0x18] sm:$0xff] %v4696
    %7582 = vst [vmem:[#allocation7 + $0x20] sm:$0xff] %v6053
    %7583 = vst [vmem:[#allocation7 + $0x28] sm:$0xff] %v6055
    %vm7584 = vcmask 130048
    %7585 = vst.msk [vmem:[#allocation7 + $0x30] sm:$0xff] %vm7584, %v7244
    %7586 = vst [vmem:[#allocation7 + $0x38] sm:$0xff] %v3339
    %7587 = vst [vmem:[#allocation7 + $0x40] sm:$0xff] %v3341
    %7588 = vst [vmem:[#allocation7 + $0x48] sm:$0xff] %v4698
    %7589 = vst [vmem:[#allocation7 + $0x50] sm:$0xff] %v4700
    %7590 = vst [vmem:[#allocation7 + $0x58] sm:$0xff] %v6057
    %7591 = vst [vmem:[#allocation7 + $0x60] sm:$0xff] %v6059
    %7592 = vst.msk [vmem:[#allocation7 + $0x68] sm:$0xff] %vm7584, %v7247
    %7593 = vst [vmem:[#allocation7 + $0x70] sm:$0xff] %v3345
    %7594 = vst [vmem:[#allocation7 + $0x78] sm:$0xff] %v3347
    %7595 = vst [vmem:[#allocation7 + $0x80] sm:$0xff] %v4704
    %7596 = vst [vmem:[#allocation7 + $0x88] sm:$0xff] %v4706
    %7597 = vst [vmem:[#allocation7 + $0x90] sm:$0xff] %v6063
    %7598 = vst [vmem:[#allocation7 + $0x98] sm:$0xff] %v6065
    %7599 = vst.msk [vmem:[#allocation7 + $0xa0] sm:$0xff] %vm7584, %v7252
    %7600 = vst [vmem:[#allocation7 + $0xa8] sm:$0xff] %v3349
    %7601 = vst [vmem:[#allocation7 + $0xb0] sm:$0xff] %v3351
    %7602 = vst [vmem:[#allocation7 + $0xb8] sm:$0xff] %v4708
    %7603 = vst [vmem:[#allocation7 + $0xc0] sm:$0xff] %v4710
    %7604 = vst [vmem:[#allocation7 + $0xc8] sm:$0xff] %v6067
    %7605 = vst [vmem:[#allocation7 + $0xd0] sm:$0xff] %v6069
    %7606 = vst.msk [vmem:[#allocation7 + $0xd8] sm:$0xff] %vm7584, %v7255
    %7607 = vst [vmem:[#allocation7 + $0xe0] sm:$0xff] %v3355
    %7608 = vst [vmem:[#allocation7 + $0xe8] sm:$0xff] %v3357
    %7609 = vst [vmem:[#allocation7 + $0xf0] sm:$0xff] %v4714
    %7610 = vst [vmem:[#allocation7 + $0xf8] sm:$0xff] %v4716
    %7611 = vst [vmem:[#allocation7 + $0x100] sm:$0xff] %v6073
    %7612 = vst [vmem:[#allocation7 + $0x108] sm:$0xff] %v6075
    %7613 = vst.msk [vmem:[#allocation7 + $0x110] sm:$0xff] %vm7584, %v7260
    %7614 = vst [vmem:[#allocation7 + $0x118] sm:$0xff] %v3359
    %7615 = vst [vmem:[#allocation7 + $0x120] sm:$0xff] %v3361
    %7616 = vst [vmem:[#allocation7 + $0x128] sm:$0xff] %v4718
    %7617 = vst [vmem:[#allocation7 + $0x130] sm:$0xff] %v4720
    %7618 = vst [vmem:[#allocation7 + $0x138] sm:$0xff] %v6077
    %7619 = vst [vmem:[#allocation7 + $0x140] sm:$0xff] %v6079
    %7620 = vst.msk [vmem:[#allocation7 + $0x148] sm:$0xff] %vm7584, %v7263
    %7621 = vst [vmem:[#allocation7 + $0x150] sm:$0xff] %v3365
    %7622 = vst [vmem:[#allocation7 + $0x158] sm:$0xff] %v3367
    %7623 = vst [vmem:[#allocation7 + $0x160] sm:$0xff] %v4724
    %7624 = vst [vmem:[#allocation7 + $0x168] sm:$0xff] %v4726
    %7625 = vst [vmem:[#allocation7 + $0x170] sm:$0xff] %v6083
    %7626 = vst [vmem:[#allocation7 + $0x178] sm:$0xff] %v6085
    %7627 = vst.msk [vmem:[#allocation7 + $0x180] sm:$0xff] %vm7584, %v7268
    %7628 = vst [vmem:[#allocation7 + $0x188] sm:$0xff] %v3369
    %7629 = vst [vmem:[#allocation7 + $0x190] sm:$0xff] %v3371
    %7630 = vst [vmem:[#allocation7 + $0x198] sm:$0xff] %v4728
    %7631 = vst [vmem:[#allocation7 + $0x1a0] sm:$0xff] %v4730
    %7632 = vst [vmem:[#allocation7 + $0x1a8] sm:$0xff] %v6087
    %7633 = vst [vmem:[#allocation7 + $0x1b0] sm:$0xff] %v6089
    %7634 = vst.msk [vmem:[#allocation7 + $0x1b8] sm:$0xff] %vm7584, %v7271
    %7635 = vst [vmem:[#allocation7 + $0x1c0] sm:$0xff] %v3375
    %7636 = vst [vmem:[#allocation7 + $0x1c8] sm:$0xff] %v3377
    %7637 = vst [vmem:[#allocation7 + $0x1d0] sm:$0xff] %v4734
    %7638 = vst [vmem:[#allocation7 + $0x1d8] sm:$0xff] %v4736
    %7639 = vst [vmem:[#allocation7 + $0x1e0] sm:$0xff] %v6093
    %7640 = vst [vmem:[#allocation7 + $0x1e8] sm:$0xff] %v6095
    %7641 = vst.msk [vmem:[#allocation7 + $0x1f0] sm:$0xff] %vm7584, %v7276
    %7642 = vst [vmem:[#allocation7 + $0x1f8] sm:$0xff] %v3379
    %7643 = vst [vmem:[#allocation7 + $0x200] sm:$0xff] %v3381
    %7644 = vst [vmem:[#allocation7 + $0x208] sm:$0xff] %v4738
    %7645 = vst [vmem:[#allocation7 + $0x210] sm:$0xff] %v4740
    %7646 = vst [vmem:[#allocation7 + $0x218] sm:$0xff] %v6097
    %7647 = vst [vmem:[#allocation7 + $0x220] sm:$0xff] %v6099
    %7648 = vst.msk [vmem:[#allocation7 + $0x228] sm:$0xff] %vm7584, %v7279
    %7649 = vst [vmem:[#allocation7 + $0x230] sm:$0xff] %v3385
    %7650 = vst [vmem:[#allocation7 + $0x238] sm:$0xff] %v3387
    %7651 = vst [vmem:[#allocation7 + $0x240] sm:$0xff] %v4744
    %7652 = vst [vmem:[#allocation7 + $0x248] sm:$0xff] %v4746
    %7653 = vst [vmem:[#allocation7 + $0x250] sm:$0xff] %v6103
    %7654 = vst [vmem:[#allocation7 + $0x258] sm:$0xff] %v6105
    %7655 = vst.msk [vmem:[#allocation7 + $0x260] sm:$0xff] %vm7584, %v7284
    %7656 = vst [vmem:[#allocation7 + $0x268] sm:$0xff] %v3389
    %7657 = vst [vmem:[#allocation7 + $0x270] sm:$0xff] %v3391
    %7658 = vst [vmem:[#allocation7 + $0x278] sm:$0xff] %v4748
    %7659 = vst [vmem:[#allocation7 + $0x280] sm:$0xff] %v4750
    %7660 = vst [vmem:[#allocation7 + $0x288] sm:$0xff] %v6107
    %7661 = vst [vmem:[#allocation7 + $0x290] sm:$0xff] %v6109
    %7662 = vst.msk [vmem:[#allocation7 + $0x298] sm:$0xff] %vm7584, %v7287
    %7663 = vst [vmem:[#allocation7 + $0x2a0] sm:$0xff] %v3395
    %7664 = vst [vmem:[#allocation7 + $0x2a8] sm:$0xff] %v3397
    %7665 = vst [vmem:[#allocation7 + $0x2b0] sm:$0xff] %v4754
    %7666 = vst [vmem:[#allocation7 + $0x2b8] sm:$0xff] %v4756
    %7667 = vst [vmem:[#allocation7 + $0x2c0] sm:$0xff] %v6113
    %7668 = vst [vmem:[#allocation7 + $0x2c8] sm:$0xff] %v6115
    %7669 = vst.msk [vmem:[#allocation7 + $0x2d0] sm:$0xff] %vm7584, %v7292
    %7670 = vst [vmem:[#allocation7 + $0x2d8] sm:$0xff] %v3399
    %7671 = vst [vmem:[#allocation7 + $0x2e0] sm:$0xff] %v3401
    %7672 = vst [vmem:[#allocation7 + $0x2e8] sm:$0xff] %v4758
    %7673 = vst [vmem:[#allocation7 + $0x2f0] sm:$0xff] %v4760
    %7674 = vst [vmem:[#allocation7 + $0x2f8] sm:$0xff] %v6117
    %7675 = vst [vmem:[#allocation7 + $0x300] sm:$0xff] %v6119
    %7676 = vst.msk [vmem:[#allocation7 + $0x308] sm:$0xff] %vm7584, %v7295
    %7677 = vst [vmem:[#allocation7 + $0x310] sm:$0xff] %v3405
    %7678 = vst [vmem:[#allocation7 + $0x318] sm:$0xff] %v3407
    %7679 = vst [vmem:[#allocation7 + $0x320] sm:$0xff] %v4764
    %7680 = vst [vmem:[#allocation7 + $0x328] sm:$0xff] %v4766
    %7681 = vst [vmem:[#allocation7 + $0x330] sm:$0xff] %v6123
    %7682 = vst [vmem:[#allocation7 + $0x338] sm:$0xff] %v6125
    %7683 = vst.msk [vmem:[#allocation7 + $0x340] sm:$0xff] %vm7584, %v7300
    %7684 = vst [vmem:[#allocation7 + $0x348] sm:$0xff] %v3409
    %7685 = vst [vmem:[#allocation7 + $0x350] sm:$0xff] %v3411
    %7686 = vst [vmem:[#allocation7 + $0x358] sm:$0xff] %v4768
    %7687 = vst [vmem:[#allocation7 + $0x360] sm:$0xff] %v4770
    %7688 = vst [vmem:[#allocation7 + $0x368] sm:$0xff] %v6127
    %7689 = vst [vmem:[#allocation7 + $0x370] sm:$0xff] %v6129
    %7690 = vst.msk [vmem:[#allocation7 + $0x378] sm:$0xff] %vm7584, %v7303
    %7691 = vst [vmem:[#allocation7 + $0x380] sm:$0xff] %v3415
    %7692 = vst [vmem:[#allocation7 + $0x388] sm:$0xff] %v3417
    %7693 = vst [vmem:[#allocation7 + $0x390] sm:$0xff] %v4774
    %7694 = vst [vmem:[#allocation7 + $0x398] sm:$0xff] %v4776
    %7695 = vst [vmem:[#allocation7 + $0x3a0] sm:$0xff] %v6133
    %7696 = vst [vmem:[#allocation7 + $0x3a8] sm:$0xff] %v6135
    %7697 = vst.msk [vmem:[#allocation7 + $0x3b0] sm:$0xff] %vm7584, %v7308
    %7698 = vst [vmem:[#allocation7 + $0x3b8] sm:$0xff] %v3419
    %7699 = vst [vmem:[#allocation7 + $0x3c0] sm:$0xff] %v3421
    %7700 = vst [vmem:[#allocation7 + $0x3c8] sm:$0xff] %v4778
    %7701 = vst [vmem:[#allocation7 + $0x3d0] sm:$0xff] %v4780
    %7702 = vst [vmem:[#allocation7 + $0x3d8] sm:$0xff] %v6137
    %7703 = vst [vmem:[#allocation7 + $0x3e0] sm:$0xff] %v6139
    %7704 = vst.msk [vmem:[#allocation7 + $0x3e8] sm:$0xff] %vm7584, %v7311
    %7705 = vst [vmem:[#allocation7 + $0x3f0] sm:$0xff] %v3425
    %7706 = vst [vmem:[#allocation7 + $0x3f8] sm:$0xff] %v3427
    %7707 = vst [vmem:[#allocation7 + $0x400] sm:$0xff] %v4784
    %7708 = vst [vmem:[#allocation7 + $0x408] sm:$0xff] %v4786
    %7709 = vst [vmem:[#allocation7 + $0x410] sm:$0xff] %v6143
    %7710 = vst [vmem:[#allocation7 + $0x418] sm:$0xff] %v6145
    %7711 = vst.msk [vmem:[#allocation7 + $0x420] sm:$0xff] %vm7584, %v7316
    %7712 = vst [vmem:[#allocation7 + $0x428] sm:$0xff] %v3429
    %7713 = vst [vmem:[#allocation7 + $0x430] sm:$0xff] %v3431
    %7714 = vst [vmem:[#allocation7 + $0x438] sm:$0xff] %v4788
    %7715 = vst [vmem:[#allocation7 + $0x440] sm:$0xff] %v4790
    %7716 = vst [vmem:[#allocation7 + $0x448] sm:$0xff] %v6147
    %7717 = vst [vmem:[#allocation7 + $0x450] sm:$0xff] %v6149
    %7718 = vst.msk [vmem:[#allocation7 + $0x458] sm:$0xff] %vm7584, %v7319
    %7719 = vst [vmem:[#allocation7 + $0x460] sm:$0xff] %v3435
    %7720 = vst [vmem:[#allocation7 + $0x468] sm:$0xff] %v3437
    %7721 = vst [vmem:[#allocation7 + $0x470] sm:$0xff] %v4794
    %7722 = vst [vmem:[#allocation7 + $0x478] sm:$0xff] %v4796
    %7723 = vst [vmem:[#allocation7 + $0x480] sm:$0xff] %v6153
    %7724 = vst [vmem:[#allocation7 + $0x488] sm:$0xff] %v6155
    %7725 = vst.msk [vmem:[#allocation7 + $0x490] sm:$0xff] %vm7584, %v7324
    %7726 = vst [vmem:[#allocation7 + $0x498] sm:$0xff] %v3439
    %7727 = vst [vmem:[#allocation7 + $0x4a0] sm:$0xff] %v3441
    %7728 = vst [vmem:[#allocation7 + $0x4a8] sm:$0xff] %v4798
    %7729 = vst [vmem:[#allocation7 + $0x4b0] sm:$0xff] %v4800
    %7730 = vst [vmem:[#allocation7 + $0x4b8] sm:$0xff] %v6157
    %7731 = vst [vmem:[#allocation7 + $0x4c0] sm:$0xff] %v6159
    %7732 = vst.msk [vmem:[#allocation7 + $0x4c8] sm:$0xff] %vm7584, %v7327
    %7733 = vst [vmem:[#allocation7 + $0x4d0] sm:$0xff] %v3445
    %7734 = vst [vmem:[#allocation7 + $0x4d8] sm:$0xff] %v3447
    %7735 = vst [vmem:[#allocation7 + $0x4e0] sm:$0xff] %v4804
    %7736 = vst [vmem:[#allocation7 + $0x4e8] sm:$0xff] %v4806
    %7737 = vst [vmem:[#allocation7 + $0x4f0] sm:$0xff] %v6163
    %7738 = vst [vmem:[#allocation7 + $0x4f8] sm:$0xff] %v6165
    %7739 = vst.msk [vmem:[#allocation7 + $0x500] sm:$0xff] %vm7584, %v7332
    %7740 = vst [vmem:[#allocation7 + $0x508] sm:$0xff] %v3449
    %7741 = vst [vmem:[#allocation7 + $0x510] sm:$0xff] %v3451
    %7742 = vst [vmem:[#allocation7 + $0x518] sm:$0xff] %v4808
    %7743 = vst [vmem:[#allocation7 + $0x520] sm:$0xff] %v4810
    %7744 = vst [vmem:[#allocation7 + $0x528] sm:$0xff] %v6167
    %7745 = vst [vmem:[#allocation7 + $0x530] sm:$0xff] %v6169
    %7746 = vst.msk [vmem:[#allocation7 + $0x538] sm:$0xff] %vm7584, %v7335
    %7747 = vst [vmem:[#allocation7 + $0x540] sm:$0xff] %v3455
    %7748 = vst [vmem:[#allocation7 + $0x548] sm:$0xff] %v3457
    %7749 = vst [vmem:[#allocation7 + $0x550] sm:$0xff] %v4814
    %7750 = vst [vmem:[#allocation7 + $0x558] sm:$0xff] %v4816
    %7751 = vst [vmem:[#allocation7 + $0x560] sm:$0xff] %v6173
    %7752 = vst [vmem:[#allocation7 + $0x568] sm:$0xff] %v6175
    %7753 = vst.msk [vmem:[#allocation7 + $0x570] sm:$0xff] %vm7584, %v7340
    %7754 = vst [vmem:[#allocation7 + $0x578] sm:$0xff] %v3459
    %7755 = vst [vmem:[#allocation7 + $0x580] sm:$0xff] %v3461
    %7756 = vst [vmem:[#allocation7 + $0x588] sm:$0xff] %v4818
    %7757 = vst [vmem:[#allocation7 + $0x590] sm:$0xff] %v4820
    %7758 = vst [vmem:[#allocation7 + $0x598] sm:$0xff] %v6177
    %7759 = vst [vmem:[#allocation7 + $0x5a0] sm:$0xff] %v6179
    %7760 = vst.msk [vmem:[#allocation7 + $0x5a8] sm:$0xff] %vm7584, %v7343
    %7761 = vst [vmem:[#allocation7 + $0x5b0] sm:$0xff] %v3465
    %7762 = vst [vmem:[#allocation7 + $0x5b8] sm:$0xff] %v3467
    %7763 = vst [vmem:[#allocation7 + $0x5c0] sm:$0xff] %v4824
    %7764 = vst [vmem:[#allocation7 + $0x5c8] sm:$0xff] %v4826
    %7765 = vst [vmem:[#allocation7 + $0x5d0] sm:$0xff] %v6183
    %7766 = vst [vmem:[#allocation7 + $0x5d8] sm:$0xff] %v6185
    %7767 = vst.msk [vmem:[#allocation7 + $0x5e0] sm:$0xff] %vm7584, %v7348
    %7768 = vst [vmem:[#allocation7 + $0x5e8] sm:$0xff] %v3469
    %7769 = vst [vmem:[#allocation7 + $0x5f0] sm:$0xff] %v3471
    %7770 = vst [vmem:[#allocation7 + $0x5f8] sm:$0xff] %v4828
    %7771 = vst [vmem:[#allocation7 + $0x600] sm:$0xff] %v4830
    %7772 = vst [vmem:[#allocation7 + $0x608] sm:$0xff] %v6187
    %7773 = vst [vmem:[#allocation7 + $0x610] sm:$0xff] %v6189
    %7774 = vst.msk [vmem:[#allocation7 + $0x618] sm:$0xff] %vm7584, %v7351
    %7775 = vst [vmem:[#allocation7 + $0x620] sm:$0xff] %v3475
    %7776 = vst [vmem:[#allocation7 + $0x628] sm:$0xff] %v3477
    %7777 = vst [vmem:[#allocation7 + $0x630] sm:$0xff] %v4834
    %7778 = vst [vmem:[#allocation7 + $0x638] sm:$0xff] %v4836
    %7779 = vst [vmem:[#allocation7 + $0x640] sm:$0xff] %v6193
    %7780 = vst [vmem:[#allocation7 + $0x648] sm:$0xff] %v6195
    %7781 = vst.msk [vmem:[#allocation7 + $0x650] sm:$0xff] %vm7584, %v7356
    %7782 = vst [vmem:[#allocation7 + $0x658] sm:$0xff] %v3479
    %7783 = vst [vmem:[#allocation7 + $0x660] sm:$0xff] %v3481
    %7784 = vst [vmem:[#allocation7 + $0x668] sm:$0xff] %v4838
    %7785 = vst [vmem:[#allocation7 + $0x670] sm:$0xff] %v4840
    %7786 = vst [vmem:[#allocation7 + $0x678] sm:$0xff] %v6197
    %7787 = vst [vmem:[#allocation7 + $0x680] sm:$0xff] %v6199
    %7788 = vst.msk [vmem:[#allocation7 + $0x688] sm:$0xff] %vm7584, %v7359
    %7789 = vst [vmem:[#allocation7 + $0x690] sm:$0xff] %v3485
    %7790 = vst [vmem:[#allocation7 + $0x698] sm:$0xff] %v3487
    %7791 = vst [vmem:[#allocation7 + $0x6a0] sm:$0xff] %v4844
    %7792 = vst [vmem:[#allocation7 + $0x6a8] sm:$0xff] %v4846
    %7793 = vst [vmem:[#allocation7 + $0x6b0] sm:$0xff] %v6203
    %7794 = vst [vmem:[#allocation7 + $0x6b8] sm:$0xff] %v6205
    %7795 = vst.msk [vmem:[#allocation7 + $0x6c0] sm:$0xff] %vm7584, %v7364
    %7796 = vst [vmem:[#allocation7 + $0x6c8] sm:$0xff] %v3489
    %7797 = vst [vmem:[#allocation7 + $0x6d0] sm:$0xff] %v3491
    %7798 = vst [vmem:[#allocation7 + $0x6d8] sm:$0xff] %v4848
    %7799 = vst [vmem:[#allocation7 + $0x6e0] sm:$0xff] %v4850
    %7800 = vst [vmem:[#allocation7 + $0x6e8] sm:$0xff] %v6207
    %7801 = vst [vmem:[#allocation7 + $0x6f0] sm:$0xff] %v6209
    %7802 = vst.msk [vmem:[#allocation7 + $0x6f8] sm:$0xff] %vm7584, %v7367
    %7803 = vst [vmem:[#allocation7 + $0x700] sm:$0xff] %v3495
    %7804 = vst [vmem:[#allocation7 + $0x708] sm:$0xff] %v3497
    %7805 = vst [vmem:[#allocation7 + $0x710] sm:$0xff] %v4854
    %7806 = vst [vmem:[#allocation7 + $0x718] sm:$0xff] %v4856
    %7807 = vst [vmem:[#allocation7 + $0x720] sm:$0xff] %v6213
    %7808 = vst [vmem:[#allocation7 + $0x728] sm:$0xff] %v6215
    %7809 = vst.msk [vmem:[#allocation7 + $0x730] sm:$0xff] %vm7584, %v7372
    %7810 = vst [vmem:[#allocation7 + $0x738] sm:$0xff] %v3499
    %7811 = vst [vmem:[#allocation7 + $0x740] sm:$0xff] %v3501
    %7812 = vst [vmem:[#allocation7 + $0x748] sm:$0xff] %v4858
    %7813 = vst [vmem:[#allocation7 + $0x750] sm:$0xff] %v4860
    %7814 = vst [vmem:[#allocation7 + $0x758] sm:$0xff] %v6217
    %7815 = vst [vmem:[#allocation7 + $0x760] sm:$0xff] %v6219
    %7816 = vst.msk [vmem:[#allocation7 + $0x768] sm:$0xff] %vm7584, %v7375
    %7817 = vst [vmem:[#allocation7 + $0x770] sm:$0xff] %v3505
    %7818 = vst [vmem:[#allocation7 + $0x778] sm:$0xff] %v3507
    %7819 = vst [vmem:[#allocation7 + $0x780] sm:$0xff] %v4864
    %7820 = vst [vmem:[#allocation7 + $0x788] sm:$0xff] %v4866
    %7821 = vst [vmem:[#allocation7 + $0x790] sm:$0xff] %v6223
    %7822 = vst [vmem:[#allocation7 + $0x798] sm:$0xff] %v6225
    %7823 = vst.msk [vmem:[#allocation7 + $0x7a0] sm:$0xff] %vm7584, %v7380
    %7824 = vst [vmem:[#allocation7 + $0x7a8] sm:$0xff] %v3509
    %7825 = vst [vmem:[#allocation7 + $0x7b0] sm:$0xff] %v3511
    %7826 = vst [vmem:[#allocation7 + $0x7b8] sm:$0xff] %v4868
    %7827 = vst [vmem:[#allocation7 + $0x7c0] sm:$0xff] %v4870
    %7828 = vst [vmem:[#allocation7 + $0x7c8] sm:$0xff] %v6227
    %7829 = vst [vmem:[#allocation7 + $0x7d0] sm:$0xff] %v6229
    %7830 = vst.msk [vmem:[#allocation7 + $0x7d8] sm:$0xff] %vm7584, %v7383
    %7831 = vst [vmem:[#allocation7 + $0x7e0] sm:$0xff] %v3515
    %7832 = vst [vmem:[#allocation7 + $0x7e8] sm:$0xff] %v3517
    %7833 = vst [vmem:[#allocation7 + $0x7f0] sm:$0xff] %v4874
    %7834 = vst [vmem:[#allocation7 + $0x7f8] sm:$0xff] %v4876
    %7835 = vst [vmem:[#allocation7 + $0x800] sm:$0xff] %v6233
    %7836 = vst [vmem:[#allocation7 + $0x808] sm:$0xff] %v6235
    %7837 = vst.msk [vmem:[#allocation7 + $0x810] sm:$0xff] %vm7584, %v7388
    %7838 = vst [vmem:[#allocation7 + $0x818] sm:$0xff] %v3519
    %7839 = vst [vmem:[#allocation7 + $0x820] sm:$0xff] %v3521
    %7840 = vst [vmem:[#allocation7 + $0x828] sm:$0xff] %v4878
    %7841 = vst [vmem:[#allocation7 + $0x830] sm:$0xff] %v4880
    %7842 = vst [vmem:[#allocation7 + $0x838] sm:$0xff] %v6237
    %7843 = vst [vmem:[#allocation7 + $0x840] sm:$0xff] %v6239
    %7844 = vst.msk [vmem:[#allocation7 + $0x848] sm:$0xff] %vm7584, %v7391
    %7845 = vst [vmem:[#allocation7 + $0x850] sm:$0xff] %v3525
    %7846 = vst [vmem:[#allocation7 + $0x858] sm:$0xff] %v3527
    %7847 = vst [vmem:[#allocation7 + $0x860] sm:$0xff] %v4884
    %7848 = vst [vmem:[#allocation7 + $0x868] sm:$0xff] %v4886
    %7849 = vst [vmem:[#allocation7 + $0x870] sm:$0xff] %v6243
    %7850 = vst [vmem:[#allocation7 + $0x878] sm:$0xff] %v6245
    %7851 = vst.msk [vmem:[#allocation7 + $0x880] sm:$0xff] %vm7584, %v7396
    %7852 = vst [vmem:[#allocation7 + $0x888] sm:$0xff] %v3529
    %7853 = vst [vmem:[#allocation7 + $0x890] sm:$0xff] %v3531
    %7854 = vst [vmem:[#allocation7 + $0x898] sm:$0xff] %v4888
    %7855 = vst [vmem:[#allocation7 + $0x8a0] sm:$0xff] %v4890
    %7856 = vst [vmem:[#allocation7 + $0x8a8] sm:$0xff] %v6247
    %7857 = vst [vmem:[#allocation7 + $0x8b0] sm:$0xff] %v6249
    %7858 = vst.msk [vmem:[#allocation7 + $0x8b8] sm:$0xff] %vm7584, %v7399
    %7859 = vst [vmem:[#allocation7 + $0x8c0] sm:$0xff] %v3535
    %7860 = vst [vmem:[#allocation7 + $0x8c8] sm:$0xff] %v3537
    %7861 = vst [vmem:[#allocation7 + $0x8d0] sm:$0xff] %v4894
    %7862 = vst [vmem:[#allocation7 + $0x8d8] sm:$0xff] %v4896
    %7863 = vst [vmem:[#allocation7 + $0x8e0] sm:$0xff] %v6253
    %7864 = vst [vmem:[#allocation7 + $0x8e8] sm:$0xff] %v6255
    %7865 = vst.msk [vmem:[#allocation7 + $0x8f0] sm:$0xff] %vm7584, %v7404
    %7866 = vst [vmem:[#allocation7 + $0x8f8] sm:$0xff] %v3539
    %7867 = vst [vmem:[#allocation7 + $0x900] sm:$0xff] %v3541
    %7868 = vst [vmem:[#allocation7 + $0x908] sm:$0xff] %v4898
    %7869 = vst [vmem:[#allocation7 + $0x910] sm:$0xff] %v4900
    %7870 = vst [vmem:[#allocation7 + $0x918] sm:$0xff] %v6257
    %7871 = vst [vmem:[#allocation7 + $0x920] sm:$0xff] %v6259
    %7872 = vst.msk [vmem:[#allocation7 + $0x928] sm:$0xff] %vm7584, %v7407
    %7873 = vst [vmem:[#allocation7 + $0x930] sm:$0xff] %v3545
    %7874 = vst [vmem:[#allocation7 + $0x938] sm:$0xff] %v3547
    %7875 = vst [vmem:[#allocation7 + $0x940] sm:$0xff] %v4904
    %7876 = vst [vmem:[#allocation7 + $0x948] sm:$0xff] %v4906
    %7877 = vst [vmem:[#allocation7 + $0x950] sm:$0xff] %v6263
    %7878 = vst [vmem:[#allocation7 + $0x958] sm:$0xff] %v6265
    %7879 = vst.msk [vmem:[#allocation7 + $0x960] sm:$0xff] %vm7584, %v7412
    %7880 = vst [vmem:[#allocation7 + $0x968] sm:$0xff] %v3549
    %7881 = vst [vmem:[#allocation7 + $0x970] sm:$0xff] %v3551
    %7882 = vst [vmem:[#allocation7 + $0x978] sm:$0xff] %v4908
    %7883 = vst [vmem:[#allocation7 + $0x980] sm:$0xff] %v4910
    %7884 = vst [vmem:[#allocation7 + $0x988] sm:$0xff] %v6267
    %7885 = vst [vmem:[#allocation7 + $0x990] sm:$0xff] %v6269
    %7886 = vst.msk [vmem:[#allocation7 + $0x998] sm:$0xff] %vm7584, %v7415
    %7887 = vst [vmem:[#allocation7 + $0x9a0] sm:$0xff] %v3555
    %7888 = vst [vmem:[#allocation7 + $0x9a8] sm:$0xff] %v3557
    %7889 = vst [vmem:[#allocation7 + $0x9b0] sm:$0xff] %v4914
    %7890 = vst [vmem:[#allocation7 + $0x9b8] sm:$0xff] %v4916
    %7891 = vst [vmem:[#allocation7 + $0x9c0] sm:$0xff] %v6273
    %7892 = vst [vmem:[#allocation7 + $0x9c8] sm:$0xff] %v6275
    %7893 = vst.msk [vmem:[#allocation7 + $0x9d0] sm:$0xff] %vm7584, %v7420
    %7894 = vst [vmem:[#allocation7 + $0x9d8] sm:$0xff] %v3559
    %7895 = vst [vmem:[#allocation7 + $0x9e0] sm:$0xff] %v3561
    %7896 = vst [vmem:[#allocation7 + $0x9e8] sm:$0xff] %v4918
    %7897 = vst [vmem:[#allocation7 + $0x9f0] sm:$0xff] %v4920
    %7898 = vst [vmem:[#allocation7 + $0x9f8] sm:$0xff] %v6277
    %7899 = vst [vmem:[#allocation7 + $0xa00] sm:$0xff] %v6279
    %7900 = vst.msk [vmem:[#allocation7 + $0xa08] sm:$0xff] %vm7584, %v7423
    %7901 = vst [vmem:[#allocation7 + $0xa10] sm:$0xff] %v3565
    %7902 = vst [vmem:[#allocation7 + $0xa18] sm:$0xff] %v3567
    %7903 = vst [vmem:[#allocation7 + $0xa20] sm:$0xff] %v4924
    %7904 = vst [vmem:[#allocation7 + $0xa28] sm:$0xff] %v4926
    %7905 = vst [vmem:[#allocation7 + $0xa30] sm:$0xff] %v6283
    %7906 = vst [vmem:[#allocation7 + $0xa38] sm:$0xff] %v6285
    %7907 = vst.msk [vmem:[#allocation7 + $0xa40] sm:$0xff] %vm7584, %v7428
    %7908 = vst [vmem:[#allocation7 + $0xa48] sm:$0xff] %v3569
    %7909 = vst [vmem:[#allocation7 + $0xa50] sm:$0xff] %v3571
    %7910 = vst [vmem:[#allocation7 + $0xa58] sm:$0xff] %v4928
    %7911 = vst [vmem:[#allocation7 + $0xa60] sm:$0xff] %v4930
    %7912 = vst [vmem:[#allocation7 + $0xa68] sm:$0xff] %v6287
    %7913 = vst [vmem:[#allocation7 + $0xa70] sm:$0xff] %v6289
    %7914 = vst.msk [vmem:[#allocation7 + $0xa78] sm:$0xff] %vm7584, %v7431
    %7915 = vst [vmem:[#allocation7 + $0xa80] sm:$0xff] %v3575
    %7916 = vst [vmem:[#allocation7 + $0xa88] sm:$0xff] %v3577
    %7917 = vst [vmem:[#allocation7 + $0xa90] sm:$0xff] %v4934
    %7918 = vst [vmem:[#allocation7 + $0xa98] sm:$0xff] %v4936
    %7919 = vst [vmem:[#allocation7 + $0xaa0] sm:$0xff] %v6293
    %7920 = vst [vmem:[#allocation7 + $0xaa8] sm:$0xff] %v6295
    %7921 = vst.msk [vmem:[#allocation7 + $0xab0] sm:$0xff] %vm7584, %v7436
    %7922 = vst [vmem:[#allocation7 + $0xab8] sm:$0xff] %v3579
    %7923 = vst [vmem:[#allocation7 + $0xac0] sm:$0xff] %v3581
    %7924 = vst [vmem:[#allocation7 + $0xac8] sm:$0xff] %v4938
    %7925 = vst [vmem:[#allocation7 + $0xad0] sm:$0xff] %v4940
    %7926 = vst [vmem:[#allocation7 + $0xad8] sm:$0xff] %v6297
    %7927 = vst [vmem:[#allocation7 + $0xae0] sm:$0xff] %v6299
    %7928 = vst.msk [vmem:[#allocation7 + $0xae8] sm:$0xff] %vm7584, %v7439
    %7929 = vst [vmem:[#allocation7 + $0xaf0] sm:$0xff] %v3585
    %7930 = vst [vmem:[#allocation7 + $0xaf8] sm:$0xff] %v3587
    %7931 = vst [vmem:[#allocation7 + $0xb00] sm:$0xff] %v4944
    %7932 = vst [vmem:[#allocation7 + $0xb08] sm:$0xff] %v4946
    %7933 = vst [vmem:[#allocation7 + $0xb10] sm:$0xff] %v6303
    %7934 = vst [vmem:[#allocation7 + $0xb18] sm:$0xff] %v6305
    %7935 = vst.msk [vmem:[#allocation7 + $0xb20] sm:$0xff] %vm7584, %v7444
    %7936 = vst [vmem:[#allocation7 + $0xb28] sm:$0xff] %v3589
    %7937 = vst [vmem:[#allocation7 + $0xb30] sm:$0xff] %v3591
    %7938 = vst [vmem:[#allocation7 + $0xb38] sm:$0xff] %v4948
    %7939 = vst [vmem:[#allocation7 + $0xb40] sm:$0xff] %v4950
    %7940 = vst [vmem:[#allocation7 + $0xb48] sm:$0xff] %v6307
    %7941 = vst [vmem:[#allocation7 + $0xb50] sm:$0xff] %v6309
    %7942 = vst.msk [vmem:[#allocation7 + $0xb58] sm:$0xff] %vm7584, %v7447
    %7943 = vst [vmem:[#allocation7 + $0xb60] sm:$0xff] %v3595
    %7944 = vst [vmem:[#allocation7 + $0xb68] sm:$0xff] %v3597
    %7945 = vst [vmem:[#allocation7 + $0xb70] sm:$0xff] %v4954
    %7946 = vst [vmem:[#allocation7 + $0xb78] sm:$0xff] %v4956
    %7947 = vst [vmem:[#allocation7 + $0xb80] sm:$0xff] %v6313
    %7948 = vst [vmem:[#allocation7 + $0xb88] sm:$0xff] %v6315
    %7949 = vst.msk [vmem:[#allocation7 + $0xb90] sm:$0xff] %vm7584, %v7452
    %7950 = vst [vmem:[#allocation7 + $0xb98] sm:$0xff] %v3599
    %7951 = vst [vmem:[#allocation7 + $0xba0] sm:$0xff] %v3601
    %7952 = vst [vmem:[#allocation7 + $0xba8] sm:$0xff] %v4958
    %7953 = vst [vmem:[#allocation7 + $0xbb0] sm:$0xff] %v4960
    %7954 = vst [vmem:[#allocation7 + $0xbb8] sm:$0xff] %v6317
    %7955 = vst [vmem:[#allocation7 + $0xbc0] sm:$0xff] %v6319
    %7956 = vst.msk [vmem:[#allocation7 + $0xbc8] sm:$0xff] %vm7584, %v7455
    %7957 = vst [vmem:[#allocation7 + $0xbd0] sm:$0xff] %v3605
    %7958 = vst [vmem:[#allocation7 + $0xbd8] sm:$0xff] %v3607
    %7959 = vst [vmem:[#allocation7 + $0xbe0] sm:$0xff] %v4964
    %7960 = vst [vmem:[#allocation7 + $0xbe8] sm:$0xff] %v4966
    %7961 = vst [vmem:[#allocation7 + $0xbf0] sm:$0xff] %v6323
    %7962 = vst [vmem:[#allocation7 + $0xbf8] sm:$0xff] %v6325
    %7963 = vst.msk [vmem:[#allocation7 + $0xc00] sm:$0xff] %vm7584, %v7460
    %7964 = vst [vmem:[#allocation7 + $0xc08] sm:$0xff] %v3609
    %7965 = vst [vmem:[#allocation7 + $0xc10] sm:$0xff] %v3611
    %7966 = vst [vmem:[#allocation7 + $0xc18] sm:$0xff] %v4968
    %7967 = vst [vmem:[#allocation7 + $0xc20] sm:$0xff] %v4970
    %7968 = vst [vmem:[#allocation7 + $0xc28] sm:$0xff] %v6327
    %7969 = vst [vmem:[#allocation7 + $0xc30] sm:$0xff] %v6329
    %7970 = vst.msk [vmem:[#allocation7 + $0xc38] sm:$0xff] %vm7584, %v7463
    %7971 = vst [vmem:[#allocation7 + $0xc40] sm:$0xff] %v3615
    %7972 = vst [vmem:[#allocation7 + $0xc48] sm:$0xff] %v3617
    %7973 = vst [vmem:[#allocation7 + $0xc50] sm:$0xff] %v4974
    %7974 = vst [vmem:[#allocation7 + $0xc58] sm:$0xff] %v4976
    %7975 = vst [vmem:[#allocation7 + $0xc60] sm:$0xff] %v6333
    %7976 = vst [vmem:[#allocation7 + $0xc68] sm:$0xff] %v6335
    %7977 = vst.msk [vmem:[#allocation7 + $0xc70] sm:$0xff] %vm7584, %v7468
    %7978 = vst [vmem:[#allocation7 + $0xc78] sm:$0xff] %v3619
    %7979 = vst [vmem:[#allocation7 + $0xc80] sm:$0xff] %v3621
    %7980 = vst [vmem:[#allocation7 + $0xc88] sm:$0xff] %v4978
    %7981 = vst [vmem:[#allocation7 + $0xc90] sm:$0xff] %v4980
    %7982 = vst [vmem:[#allocation7 + $0xc98] sm:$0xff] %v6337
    %7983 = vst [vmem:[#allocation7 + $0xca0] sm:$0xff] %v6339
    %7984 = vst.msk [vmem:[#allocation7 + $0xca8] sm:$0xff] %vm7584, %v7471
    %7985 = vst [vmem:[#allocation7 + $0xcb0] sm:$0xff] %v3625
    %7986 = vst [vmem:[#allocation7 + $0xcb8] sm:$0xff] %v3627
    %7987 = vst [vmem:[#allocation7 + $0xcc0] sm:$0xff] %v4984
    %7988 = vst [vmem:[#allocation7 + $0xcc8] sm:$0xff] %v4986
    %7989 = vst [vmem:[#allocation7 + $0xcd0] sm:$0xff] %v6343
    %7990 = vst [vmem:[#allocation7 + $0xcd8] sm:$0xff] %v6345
    %7991 = vst.msk [vmem:[#allocation7 + $0xce0] sm:$0xff] %vm7584, %v7476
    %7992 = vst [vmem:[#allocation7 + $0xce8] sm:$0xff] %v3629
    %7993 = vst [vmem:[#allocation7 + $0xcf0] sm:$0xff] %v3631
    %7994 = vst [vmem:[#allocation7 + $0xcf8] sm:$0xff] %v4988
    %7995 = vst [vmem:[#allocation7 + $0xd00] sm:$0xff] %v4990
    %7996 = vst [vmem:[#allocation7 + $0xd08] sm:$0xff] %v6347
    %7997 = vst [vmem:[#allocation7 + $0xd10] sm:$0xff] %v6349
    %7998 = vst.msk [vmem:[#allocation7 + $0xd18] sm:$0xff] %vm7584, %v7479
    %7999 = vst [vmem:[#allocation7 + $0xd20] sm:$0xff] %v3635
    %8000 = vst [vmem:[#allocation7 + $0xd28] sm:$0xff] %v3637
    %8001 = vst [vmem:[#allocation7 + $0xd30] sm:$0xff] %v4994
    %8002 = vst [vmem:[#allocation7 + $0xd38] sm:$0xff] %v4996
    %8003 = vst [vmem:[#allocation7 + $0xd40] sm:$0xff] %v6353
    %8004 = vst [vmem:[#allocation7 + $0xd48] sm:$0xff] %v6355
    %8005 = vst.msk [vmem:[#allocation7 + $0xd50] sm:$0xff] %vm7584, %v7484
    %8006 = vst [vmem:[#allocation7 + $0xd58] sm:$0xff] %v3639
    %8007 = vst [vmem:[#allocation7 + $0xd60] sm:$0xff] %v3641
    %8008 = vst [vmem:[#allocation7 + $0xd68] sm:$0xff] %v4998
    %8009 = vst [vmem:[#allocation7 + $0xd70] sm:$0xff] %v5000
    %8010 = vst [vmem:[#allocation7 + $0xd78] sm:$0xff] %v6357
    %8011 = vst [vmem:[#allocation7 + $0xd80] sm:$0xff] %v6359
    %8012 = vst.msk [vmem:[#allocation7 + $0xd88] sm:$0xff] %vm7584, %v7487
    %8013 = vst [vmem:[#allocation7 + $0xd90] sm:$0xff] %v3645
    %8014 = vst [vmem:[#allocation7 + $0xd98] sm:$0xff] %v3647
    %8015 = vst [vmem:[#allocation7 + $0xda0] sm:$0xff] %v5004
    %8016 = vst [vmem:[#allocation7 + $0xda8] sm:$0xff] %v5006
    %8017 = vst [vmem:[#allocation7 + $0xdb0] sm:$0xff] %v6363
    %8018 = vst [vmem:[#allocation7 + $0xdb8] sm:$0xff] %v6365
    %8019 = vst.msk [vmem:[#allocation7 + $0xdc0] sm:$0xff] %vm7584, %v7492
    %8020 = vst [vmem:[#allocation7 + $0xdc8] sm:$0xff] %v3649
    %8021 = vst [vmem:[#allocation7 + $0xdd0] sm:$0xff] %v3651
    %8022 = vst [vmem:[#allocation7 + $0xdd8] sm:$0xff] %v5008
    %8023 = vst [vmem:[#allocation7 + $0xde0] sm:$0xff] %v5010
    %8024 = vst [vmem:[#allocation7 + $0xde8] sm:$0xff] %v6367
    %8025 = vst [vmem:[#allocation7 + $0xdf0] sm:$0xff] %v6369
    %8026 = vst.msk [vmem:[#allocation7 + $0xdf8] sm:$0xff] %vm7584, %v7495
    %8027 = vst [vmem:[#allocation7 + $0xe00] sm:$0xff] %v3655
    %8028 = vst [vmem:[#allocation7 + $0xe08] sm:$0xff] %v3657
    %8029 = vst [vmem:[#allocation7 + $0xe10] sm:$0xff] %v5014
    %8030 = vst [vmem:[#allocation7 + $0xe18] sm:$0xff] %v5016
    %8031 = vst [vmem:[#allocation7 + $0xe20] sm:$0xff] %v6373
    %8032 = vst [vmem:[#allocation7 + $0xe28] sm:$0xff] %v6375
    %8033 = vst.msk [vmem:[#allocation7 + $0xe30] sm:$0xff] %vm7584, %v7500
    %8034 = vst [vmem:[#allocation7 + $0xe38] sm:$0xff] %v3659
    %8035 = vst [vmem:[#allocation7 + $0xe40] sm:$0xff] %v3661
    %8036 = vst [vmem:[#allocation7 + $0xe48] sm:$0xff] %v5018
    %8037 = vst [vmem:[#allocation7 + $0xe50] sm:$0xff] %v5020
    %8038 = vst [vmem:[#allocation7 + $0xe58] sm:$0xff] %v6377
    %8039 = vst [vmem:[#allocation7 + $0xe60] sm:$0xff] %v6379
    %8040 = vst.msk [vmem:[#allocation7 + $0xe68] sm:$0xff] %vm7584, %v7503
    %8041 = vst [vmem:[#allocation7 + $0xe70] sm:$0xff] %v3665
    %8042 = vst [vmem:[#allocation7 + $0xe78] sm:$0xff] %v3667
    %8043 = vst [vmem:[#allocation7 + $0xe80] sm:$0xff] %v5024
    %8044 = vst [vmem:[#allocation7 + $0xe88] sm:$0xff] %v5026
    %8045 = vst [vmem:[#allocation7 + $0xe90] sm:$0xff] %v6383
    %8046 = vst [vmem:[#allocation7 + $0xe98] sm:$0xff] %v6385
    %8047 = vst.msk [vmem:[#allocation7 + $0xea0] sm:$0xff] %vm7584, %v7508
    %8048 = vst [vmem:[#allocation7 + $0xea8] sm:$0xff] %v3669
    %8049 = vst [vmem:[#allocation7 + $0xeb0] sm:$0xff] %v3671
    %8050 = vst [vmem:[#allocation7 + $0xeb8] sm:$0xff] %v5028
    %8051 = vst [vmem:[#allocation7 + $0xec0] sm:$0xff] %v5030
    %8052 = vst [vmem:[#allocation7 + $0xec8] sm:$0xff] %v6387
    %8053 = vst [vmem:[#allocation7 + $0xed0] sm:$0xff] %v6389
    %8054 = vst.msk [vmem:[#allocation7 + $0xed8] sm:$0xff] %vm7584, %v7511
    %8055 = vst [vmem:[#allocation7 + $0xee0] sm:$0xff] %v3675
    %8056 = vst [vmem:[#allocation7 + $0xee8] sm:$0xff] %v3677
    %8057 = vst [vmem:[#allocation7 + $0xef0] sm:$0xff] %v5034
    %8058 = vst [vmem:[#allocation7 + $0xef8] sm:$0xff] %v5036
    %8059 = vst [vmem:[#allocation7 + $0xf00] sm:$0xff] %v6393
    %8060 = vst [vmem:[#allocation7 + $0xf08] sm:$0xff] %v6395
    %8061 = vst.msk [vmem:[#allocation7 + $0xf10] sm:$0xff] %vm7584, %v7516
    %8062 = vst [vmem:[#allocation7 + $0xf18] sm:$0xff] %v3679
    %8063 = vst [vmem:[#allocation7 + $0xf20] sm:$0xff] %v3681
    %8064 = vst [vmem:[#allocation7 + $0xf28] sm:$0xff] %v5038
    %8065 = vst [vmem:[#allocation7 + $0xf30] sm:$0xff] %v5040
    %8066 = vst [vmem:[#allocation7 + $0xf38] sm:$0xff] %v6397
    %8067 = vst [vmem:[#allocation7 + $0xf40] sm:$0xff] %v6399
    %8068 = vst.msk [vmem:[#allocation7 + $0xf48] sm:$0xff] %vm7584, %v7519
    %8069 = vst [vmem:[#allocation7 + $0xf50] sm:$0xff] %v3685
    %8070 = vst [vmem:[#allocation7 + $0xf58] sm:$0xff] %v3687
    %8071 = vst [vmem:[#allocation7 + $0xf60] sm:$0xff] %v5044
    %8072 = vst [vmem:[#allocation7 + $0xf68] sm:$0xff] %v5046
    %8073 = vst [vmem:[#allocation7 + $0xf70] sm:$0xff] %v6403
    %8074 = vst [vmem:[#allocation7 + $0xf78] sm:$0xff] %v6405
    %8075 = vst.msk [vmem:[#allocation7 + $0xf80] sm:$0xff] %vm7584, %v7524
    %8076 = vst [vmem:[#allocation7 + $0xf88] sm:$0xff] %v3689
    %8077 = vst [vmem:[#allocation7 + $0xf90] sm:$0xff] %v3691
    %8078 = vst [vmem:[#allocation7 + $0xf98] sm:$0xff] %v5048
    %8079 = vst [vmem:[#allocation7 + $0xfa0] sm:$0xff] %v5050
    %8080 = vst [vmem:[#allocation7 + $0xfa8] sm:$0xff] %v6407
    %8081 = vst [vmem:[#allocation7 + $0xfb0] sm:$0xff] %v6409
    %8082 = vst.msk [vmem:[#allocation7 + $0xfb8] sm:$0xff] %vm7584, %v7527
    %8083 = vst [vmem:[#allocation7 + $0xfc0] sm:$0xff] %v3695
    %8084 = vst [vmem:[#allocation7 + $0xfc8] sm:$0xff] %v3697
    %8085 = vst [vmem:[#allocation7 + $0xfd0] sm:$0xff] %v5054
    %8086 = vst [vmem:[#allocation7 + $0xfd8] sm:$0xff] %v5056
    %8087 = vst [vmem:[#allocation7 + $0xfe0] sm:$0xff] %v6413
    %8088 = vst [vmem:[#allocation7 + $0xfe8] sm:$0xff] %v6415
    %8089 = vst.msk [vmem:[#allocation7 + $0xff0] sm:$0xff] %vm7584, %v7532
    %8090 = vst [vmem:[#allocation7 + $0xff8] sm:$0xff] %v3699
    %8091 = vst [vmem:[#allocation7 + $0x1000] sm:$0xff] %v3701
    %8092 = vst [vmem:[#allocation7 + $0x1008] sm:$0xff] %v5058
    %8093 = vst [vmem:[#allocation7 + $0x1010] sm:$0xff] %v5060
    %8094 = vst [vmem:[#allocation7 + $0x1018] sm:$0xff] %v6417
    %8095 = vst [vmem:[#allocation7 + $0x1020] sm:$0xff] %v6419
    %8096 = vst.msk [vmem:[#allocation7 + $0x1028] sm:$0xff] %vm7584, %v7535
    %8097 = vst [vmem:[#allocation7 + $0x1030] sm:$0xff] %v3705
    %8098 = vst [vmem:[#allocation7 + $0x1038] sm:$0xff] %v3707
    %8099 = vst [vmem:[#allocation7 + $0x1040] sm:$0xff] %v5064
    %8100 = vst [vmem:[#allocation7 + $0x1048] sm:$0xff] %v5066
    %8101 = vst [vmem:[#allocation7 + $0x1050] sm:$0xff] %v6423
    %8102 = vst [vmem:[#allocation7 + $0x1058] sm:$0xff] %v6425
    %8103 = vst.msk [vmem:[#allocation7 + $0x1060] sm:$0xff] %vm7584, %v7540
    %8104 = vst [vmem:[#allocation7 + $0x1068] sm:$0xff] %v3709
    %8105 = vst [vmem:[#allocation7 + $0x1070] sm:$0xff] %v3711
    %8106 = vst [vmem:[#allocation7 + $0x1078] sm:$0xff] %v5068
    %8107 = vst [vmem:[#allocation7 + $0x1080] sm:$0xff] %v5070
    %8108 = vst [vmem:[#allocation7 + $0x1088] sm:$0xff] %v6427
    %8109 = vst [vmem:[#allocation7 + $0x1090] sm:$0xff] %v6429
    %8110 = vst.msk [vmem:[#allocation7 + $0x1098] sm:$0xff] %vm7584, %v7543
    %8111 = vst [vmem:[#allocation7 + $0x10a0] sm:$0xff] %v3715
    %8112 = vst [vmem:[#allocation7 + $0x10a8] sm:$0xff] %v3717
    %8113 = vst [vmem:[#allocation7 + $0x10b0] sm:$0xff] %v5074
    %8114 = vst [vmem:[#allocation7 + $0x10b8] sm:$0xff] %v5076
    %8115 = vst [vmem:[#allocation7 + $0x10c0] sm:$0xff] %v6433
    %8116 = vst [vmem:[#allocation7 + $0x10c8] sm:$0xff] %v6435
    %8117 = vst.msk [vmem:[#allocation7 + $0x10d0] sm:$0xff] %vm7584, %v7548
    %8118 = vst [vmem:[#allocation7 + $0x10d8] sm:$0xff] %v3719
    %8119 = vst [vmem:[#allocation7 + $0x10e0] sm:$0xff] %v3721
    %8120 = vst [vmem:[#allocation7 + $0x10e8] sm:$0xff] %v5078
    %8121 = vst [vmem:[#allocation7 + $0x10f0] sm:$0xff] %v5080
    %8122 = vst [vmem:[#allocation7 + $0x10f8] sm:$0xff] %v6437
    %8123 = vst [vmem:[#allocation7 + $0x1100] sm:$0xff] %v6439
    %8124 = vst.msk [vmem:[#allocation7 + $0x1108] sm:$0xff] %vm7584, %v7551
    %8125 = vst [vmem:[#allocation7 + $0x1110] sm:$0xff] %v3725
    %8126 = vst [vmem:[#allocation7 + $0x1118] sm:$0xff] %v3727
    %8127 = vst [vmem:[#allocation7 + $0x1120] sm:$0xff] %v5084
    %8128 = vst [vmem:[#allocation7 + $0x1128] sm:$0xff] %v5086
    %8129 = vst [vmem:[#allocation7 + $0x1130] sm:$0xff] %v6443
    %8130 = vst [vmem:[#allocation7 + $0x1138] sm:$0xff] %v6445
    %8131 = vst.msk [vmem:[#allocation7 + $0x1140] sm:$0xff] %vm7584, %v7556
    %8132 = vst [vmem:[#allocation7 + $0x1148] sm:$0xff] %v3729
    %8133 = vst [vmem:[#allocation7 + $0x1150] sm:$0xff] %v3731
    %8134 = vst [vmem:[#allocation7 + $0x1158] sm:$0xff] %v5088
    %8135 = vst [vmem:[#allocation7 + $0x1160] sm:$0xff] %v5090
    %8136 = vst [vmem:[#allocation7 + $0x1168] sm:$0xff] %v6447
    %8137 = vst [vmem:[#allocation7 + $0x1170] sm:$0xff] %v6449
    %8138 = vst.msk [vmem:[#allocation7 + $0x1178] sm:$0xff] %vm7584, %v7559
    %8139 = vst [vmem:[#allocation7 + $0x1180] sm:$0xff] %v3735
    %8140 = vst [vmem:[#allocation7 + $0x1188] sm:$0xff] %v3737
    %8141 = vst [vmem:[#allocation7 + $0x1190] sm:$0xff] %v5094
    %8142 = vst [vmem:[#allocation7 + $0x1198] sm:$0xff] %v5096
    %8143 = vst [vmem:[#allocation7 + $0x11a0] sm:$0xff] %v6453
    %8144 = vst [vmem:[#allocation7 + $0x11a8] sm:$0xff] %v6455
    %8145 = vst.msk [vmem:[#allocation7 + $0x11b0] sm:$0xff] %vm7584, %v7564
    %8146 = vst [vmem:[#allocation7 + $0x11b8] sm:$0xff] %v3739
    %8147 = vst [vmem:[#allocation7 + $0x11c0] sm:$0xff] %v3741
    %8148 = vst [vmem:[#allocation7 + $0x11c8] sm:$0xff] %v5098
    %8149 = vst [vmem:[#allocation7 + $0x11d0] sm:$0xff] %v5100
    %8150 = vst [vmem:[#allocation7 + $0x11d8] sm:$0xff] %v6457
    %8151 = vst [vmem:[#allocation7 + $0x11e0] sm:$0xff] %v6459
    %8152 = vst.msk [vmem:[#allocation7 + $0x11e8] sm:$0xff] %vm7584, %v7567
    %8153 = vst [vmem:[#allocation7 + $0x11f0] sm:$0xff] %v3745
    %8154 = vst [vmem:[#allocation7 + $0x11f8] sm:$0xff] %v3747
    %8155 = vst [vmem:[#allocation7 + $0x1200] sm:$0xff] %v5104
    %8156 = vst [vmem:[#allocation7 + $0x1208] sm:$0xff] %v5106
    %8157 = vst [vmem:[#allocation7 + $0x1210] sm:$0xff] %v6463
    %8158 = vst [vmem:[#allocation7 + $0x1218] sm:$0xff] %v6465
    %8159 = vst.msk [vmem:[#allocation7 + $0x1220] sm:$0xff] %vm7584, %v7572
    %8160 = vst [vmem:[#allocation7 + $0x1228] sm:$0xff] %v3749
    %8161 = vst [vmem:[#allocation7 + $0x1230] sm:$0xff] %v3751
    %8162 = vst [vmem:[#allocation7 + $0x1238] sm:$0xff] %v5108
    %8163 = vst [vmem:[#allocation7 + $0x1240] sm:$0xff] %v5110
    %8164 = vst [vmem:[#allocation7 + $0x1248] sm:$0xff] %v6467
    %8165 = vst [vmem:[#allocation7 + $0x1250] sm:$0xff] %v6469
    %8166 = vst.msk [vmem:[#allocation7 + $0x1258] sm:$0xff] %vm7584, %v7575
    // Predicated region
    $region18: #{tpu_custom_call.1} parent=1 // pred_check
      _
    $region19: #{tpu_custom_call.1} parent=1 // pred_check_branch
      %8168 = sbr.rel (0) target = $region21
    $region20: #{tpu_custom_call.1} parent=1 // pred_region
      %s8170 = ssub.s32 75264, 75264
      %8171 = vsyncadd [#allocation4], %s8170
      %s8172 = sshll.u32 [#allocation7], 4
      %s8173 = int_to_ptr.vmem [resolvable:$true] %s8172
      %8178 = dma.vmem_to_hbm [thread:$0]  %s8173, 75264, %s2, [#allocation4], 896, 896, 56
    $region21: #{tpu_custom_call.1} parent=1 // pred_fallthru
      _
    // Predicated region
    $region22: #{tpu_custom_call.1} parent=1 // pred_check
      _
    $region23: #{tpu_custom_call.1} parent=1 // pred_check_branch
      %8180 = sbr.rel (0) target = $region25
    $region24: #{tpu_custom_call.1} parent=1 // pred_region
      %8181 = dma.done [#allocation4], 75264
    $region25: #{tpu_custom_call.1} parent=1 // pred_fallthru
      _
    %8182 = vsyncpa [#allocation3], 1
    %8183 = vsyncpa [#allocation6], 1
    %8184 = vsyncpa [#allocation4], 1

</llo_original>
